<compile_context>
chip_gen: v6e
topology: v6e:2x2x1
jax: 0.10.0
libtpu: 0.0.40
codegen_flags: <defaults>
</compile_context>

<pallas_src>
import jax
import jax.numpy as jnp
from jax import lax
from jax.experimental import pallas as pl
from jax.experimental.pallas import tpu as pltpu

P = 7                      # max dilation == halo radius in every direction
DILATIONS = (1, 3, 5, 7)   # branch1..branch4 (padding == dilation => 'same')
DXPAD = 8                  # horizontal pad per packed image row (>= P)


def _fold_weights(params):
    """Fold the per-branch 1x1 convs, all biases, and the shortcut into a flat
    list of (dy, dx) taps with effective (Cin, Cout) matrices. Exact rewrite."""
    offsets, weights = [], []
    w_ctr = params["ws"]                       # (Cin, Cout) shortcut
    bias = params["bs"]                        # (Cout,)
    for b, d in enumerate(DILATIONS):
        # w3[b]: (3,3,Cin,Cmid), w1[b]: (Cmid,Cout) -> effective (3,3,Cin,Cout)
        w_eff = jnp.einsum("hwio,oj->hwij", params["w3"][b], params["w1"][b])
        bias = bias + params["b3"][b] @ params["w1"][b] + params["b1"][b]
        for ky in range(3):
            for kx in range(3):
                if ky == 1 and kx == 1:
                    w_ctr = w_ctr + w_eff[ky, kx]        # merge center taps
                else:
                    offsets.append(((ky - 1) * d, (kx - 1) * d))
                    weights.append(w_eff[ky, kx])
    offsets.append((0, 0))                     # merged center tap + shortcut
    weights.append(w_ctr)
    taps_w = jnp.stack(weights).astype(jnp.float32)      # (T, Cin, Cout), T=33
    return tuple(offsets), taps_w, bias.astype(jnp.float32)


def _pow2_floor(v):
    p = 1
    while p * 2 <= v:
        p *= 2
    return p


def _make_kernel(offsets, C, S, G, R_S, n_strips):
    GS = G * S

    def kernel(src_ref, w_ref, b_ref, out_ref):
        # src_ref: (1, C, R_T, L_src)  VMEM  packed input (halo baked per row)
        # w_ref:   (T*C*C,)            SMEM  folded tap weights
        # b_ref:   (C,)                SMEM  folded bias
        # out_ref: (1, C, R_T, G*S)    VMEM  packed, lane-dense output
        def strip(r0):
            # Fresh per-strip accumulators (bounded register working set).
            accs = [jnp.full((R_S, GS), b_ref[co], jnp.float32)
                    for co in range(C)]
            # Fully unrolled tap loop: one lane-offset ref-slice load per
            # (ci, tap) and C scalar-x-vector FMAs per load.
            for ci in range(C):
                for t, (dy, dx) in enumerate(offsets):
                    off = (dy + P) * S + (dx + P)        # static lane offset
                    patch = src_ref[0, ci, pl.ds(r0, R_S), pl.ds(off, GS)]
                    for co in range(C):
                        w = w_ref[t * C * C + ci * C + co]   # scalar from SMEM
                        accs[co] = accs[co] + w * patch      # VPU FMA
            for co in range(C):
                out_ref[0, co, pl.ds(r0, R_S), :] = accs[co]

        if n_strips == 1:
            strip(0)
        else:
            def body(si, carry):
                strip(pl.multiple_of(si * R_S, R_S))
                return carry
            lax.fori_loop(0, n_strips, body, 0)

    return kernel


def mcdc_forward(x_nchw, params):
    """x_nchw: (N, C, H, W) float32 -> (N, C, H, W) float32 (PyTorch semantics)."""
    x = x_nchw.astype(jnp.float32)
    N, C, H, W = x.shape
    offsets, taps_w, bias = _fold_weights(params)

    # ---- Packed row-group layout --------------------------------------------
    S = W + 2 * DXPAD                    # columns per packed image row
    # Rows per group: make the lane dim >= 128 while keeping several group-rows
    # alive on sublanes for small H.  Halo duplication factor is (G+14)/G.
    G = max(-(-128 // S), min(8, max(1, H // 8)))
    G = max(1, min(G, H))
    GS = G * S                           # lane width of compute/output tiles
    L_src = (G + 2 * P) * S + 2 * P      # lane width of packed source rows
    R = -(-H // G)                       # group-rows needed

    # Inner strip size (group-rows): accumulators <= ~16 vregs.
    R_S = _pow2_floor(max(1, min(8, R, (16 * 4096) // (C * GS * 4))))
    # Grid block (group-rows per step): keep in+out block around <= 2 MiB so
    # double-buffered VMEM fits v7x comfortably (and v5e/v6e trivially).
    bytes_per_row = C * (L_src + GS) * 4
    max_rows = max(R_S, (2 << 20) // bytes_per_row)
    if R <= max_rows:
        n_strips = -(-R // R_S)
        R_T = R_S * n_strips             # one block covers the whole row axis
        n_r = 1
    else:
        R_T = max(8, (min(max_rows, 64) // 8) * 8)   # multiple of 8 sublanes
        n_strips = R_T // R_S
        n_r = -(-R // R_T)
    R_pad = n_r * R_T
    Hcov = R_pad * G                     # image rows covered (>= H)

    # ---- Wrapper-side packing (one gather; replaces pad+stack+transpose) ----
    xp = jnp.pad(x, ((0, 0), (0, 0), (P, P + Hcov - H), (DXPAD, DXPAD)))
    row_idx = jnp.arange(R_pad)[:, None] * G + jnp.arange(G + 2 * P)[None, :]
    src = xp[:, :, row_idx, :]                       # (N, C, R_pad, G+2P, S)
    src = src.reshape(N, C, R_pad, (G + 2 * P) * S)
    src = jnp.pad(src, ((0, 0), (0, 0), (0, 0), (P, P)))   # (N, C, R_pad, L_src)

    kernel = _make_kernel(offsets, C, S, G, R_S, n_strips)

    in_block = C * R_T * L_src * 4
    out_block = C * R_T * GS * 4
    vmem_limit = int(max(16 << 20, 3 * (in_block + out_block) + (2 << 20)))

    out_packed = pl.pallas_call(
        kernel,
        out_shape=jax.ShapeDtypeStruct((N, C, R_pad, GS), jnp.float32),
        grid=(N, n_r),
        in_specs=[
            pl.BlockSpec((1, C, R_T, L_src), lambda n, r: (n, 0, r, 0)),
            pl.BlockSpec(memory_space=pltpu.MemorySpace.SMEM),   # folded weights
            pl.BlockSpec(memory_space=pltpu.MemorySpace.SMEM),   # folded bias
        ],
        out_specs=pl.BlockSpec((1, C, R_T, GS), lambda n, r: (n, 0, r, 0)),
        compiler_params=pltpu.CompilerParams(
            dimension_semantics=("parallel", "parallel"),
            vmem_limit_bytes=vmem_limit),
    )(src, taps_w.reshape(-1), bias)

    # Strip the per-row padding columns and the padded rows (cheap slices).
    out = out_packed.reshape(N, C, R_pad, G, S)[..., DXPAD:DXPAD + W]
    out = out.reshape(N, C, Hcov, W)[:, :, :H, :]
    return out


def init_params(key, c):
    """Deterministic synthetic parameters (shapes match the PyTorch module)."""
    keys = jax.random.split(key, 6)
    s3 = 1.0 / float(c * 9) ** 0.5    # 3x3 conv fan-in bound
    s1 = 1.0 / float(c) ** 0.5        # 1x1 conv fan-in bound
    return dict(
        w3=jax.random.uniform(keys[0], (4, 3, 3, c, c), jnp.float32, -s3, s3),
        b3=jax.random.uniform(keys[1], (4, c), jnp.float32, -s3, s3),
        w1=jax.random.uniform(keys[2], (4, c, c), jnp.float32, -s1, s1),
        b1=jax.random.uniform(keys[3], (4, c), jnp.float32, -s1, s1),
        ws=jax.random.uniform(keys[4], (c, c), jnp.float32, -s1, s1),
        bs=jax.random.uniform(keys[5], (c,), jnp.float32, -s1, s1),
    )


def reference_forward(x_nchw, params):
    """Pure-JAX reference (lax convs, unfused) for validation."""
    x = jnp.transpose(x_nchw, (0, 2, 3, 1)).astype(jnp.float32)   # NHWC
    out = jnp.zeros_like(x)
    for b, d in enumerate(DILATIONS):
        y = lax.conv_general_dilated(
            x, params["w3"][b], window_strides=(1, 1),
            padding=[(d, d), (d, d)], rhs_dilation=(d, d),
            dimension_numbers=("NHWC", "HWIO", "NHWC"))
        y = y + params["b3"][b]
        y = jnp.einsum("nhwc,cd->nhwd", y, params["w1"][b]) + params["b1"][b]
        out = out + y
    out = out + jnp.einsum("nhwc,cd->nhwd", x, params["ws"]) + params["bs"]
    return jnp.transpose(out, (0, 3, 1, 2))


if __name__ == "__main__":
    key = jax.random.PRNGKey(0)
    kx, kp = jax.random.split(key)

    N, C, H, W = 2, 4, 16, 16
    x = jax.random.normal(kx, (N, C, H, W), jnp.float32)
    params = init_params(kp, C)

    out = jax.block_until_ready(mcdc_forward(x, params))
    ref = jax.block_until_ready(reference_forward(x, params))

    assert out.shape == (N, C, H, W)
    err = float(jnp.max(jnp.abs(out - ref)))
    assert jnp.allclose(out, ref, atol=1e-4, rtol=1e-4), err
    print("KERNEL_OK")
</pallas_src>

<mosaic_0001>
module attributes {stable_mosaic.version = 11 : i64} {
  func.func @kernel(%arg0: i32, %arg1: i32, %arg2: memref<1x4x4x590xf32, #tpu.memory_space<vmem>>, %arg3: memref<528xf32, #tpu.memory_space<smem>>, %arg4: memref<4xf32, #tpu.memory_space<smem>>, %arg5: memref<1x4x4x128xf32, #tpu.memory_space<vmem>>) attributes {dimension_semantics = [#tpu.dimension_semantics<parallel>, #tpu.dimension_semantics<parallel>], iteration_bounds = array<i64: 2, 1>, scalar_prefetch = 0 : i64, scratch_operands = 0 : i64, tpu.core_type = #tpu.core_type<tc>, window_params = [{transform_indices = @transform_0, window_bounds = array<i64: 1, 4, 4, 590>}, {transform_indices = @transform_1, window_bounds = array<i64: 528>}, {transform_indices = @transform_2, window_bounds = array<i64: 4>}, {transform_indices = @transform_3, window_bounds = array<i64: 1, 4, 4, 128>}]} {
    %c0 = arith.constant 0 : index
    %0 = memref.load %arg4[%c0] : memref<4xf32, #tpu.memory_space<smem>>
    %1 = vector.broadcast %0 : f32 to vector<4x128xf32>
    %c1 = arith.constant 1 : index
    %2 = memref.load %arg4[%c1] : memref<4xf32, #tpu.memory_space<smem>>
    %3 = vector.broadcast %2 : f32 to vector<4x128xf32>
    %c2 = arith.constant 2 : index
    %4 = memref.load %arg4[%c2] : memref<4xf32, #tpu.memory_space<smem>>
    %5 = vector.broadcast %4 : f32 to vector<4x128xf32>
    %c3 = arith.constant 3 : index
    %6 = memref.load %arg4[%c3] : memref<4xf32, #tpu.memory_space<smem>>
    %7 = vector.broadcast %6 : f32 to vector<4x128xf32>
    %c0_0 = arith.constant 0 : index
    %c0_1 = arith.constant 0 : index
    %c0_2 = arith.constant 0 : index
    %c198 = arith.constant 198 : index
    %8 = vector.load %arg2[%c0_0, %c0_1, %c0_2, %c198] : memref<1x4x4x590xf32, #tpu.memory_space<vmem>>, vector<1x1x4x128xf32>
    %9 = vector.shape_cast %8 : vector<1x1x4x128xf32> to vector<4x128xf32>
    %c0_3 = arith.constant 0 : index
    %10 = memref.load %arg3[%c0_3] : memref<528xf32, #tpu.memory_space<smem>>
    %11 = vector.broadcast %10 : f32 to vector<4x128xf32>
    %12 = arith.mulf %11, %9 : vector<4x128xf32>
    %13 = arith.addf %1, %12 : vector<4x128xf32>
    %c1_4 = arith.constant 1 : index
    %14 = memref.load %arg3[%c1_4] : memref<528xf32, #tpu.memory_space<smem>>
    %15 = vector.broadcast %14 : f32 to vector<4x128xf32>
    %16 = arith.mulf %15, %9 : vector<4x128xf32>
    %17 = arith.addf %3, %16 : vector<4x128xf32>
    %c2_5 = arith.constant 2 : index
    %18 = memref.load %arg3[%c2_5] : memref<528xf32, #tpu.memory_space<smem>>
    %19 = vector.broadcast %18 : f32 to vector<4x128xf32>
    %20 = arith.mulf %19, %9 : vector<4x128xf32>
    %21 = arith.addf %5, %20 : vector<4x128xf32>
    %c3_6 = arith.constant 3 : index
    %22 = memref.load %arg3[%c3_6] : memref<528xf32, #tpu.memory_space<smem>>
    %23 = vector.broadcast %22 : f32 to vector<4x128xf32>
    %24 = arith.mulf %23, %9 : vector<4x128xf32>
    %25 = arith.addf %7, %24 : vector<4x128xf32>
    %c0_7 = arith.constant 0 : index
    %c0_8 = arith.constant 0 : index
    %c0_9 = arith.constant 0 : index
    %c199 = arith.constant 199 : index
    %26 = vector.load %arg2[%c0_7, %c0_8, %c0_9, %c199] : memref<1x4x4x590xf32, #tpu.memory_space<vmem>>, vector<1x1x4x128xf32>
    %27 = vector.shape_cast %26 : vector<1x1x4x128xf32> to vector<4x128xf32>
    %c16 = arith.constant 16 : index
    %28 = memref.load %arg3[%c16] : memref<528xf32, #tpu.memory_space<smem>>
    %29 = vector.broadcast %28 : f32 to vector<4x128xf32>
    %30 = arith.mulf %29, %27 : vector<4x128xf32>
    %31 = arith.addf %13, %30 : vector<4x128xf32>
    %c17 = arith.constant 17 : index
    %32 = memref.load %arg3[%c17] : memref<528xf32, #tpu.memory_space<smem>>
    %33 = vector.broadcast %32 : f32 to vector<4x128xf32>
    %34 = arith.mulf %33, %27 : vector<4x128xf32>
    %35 = arith.addf %17, %34 : vector<4x128xf32>
    %c18 = arith.constant 18 : index
    %36 = memref.load %arg3[%c18] : memref<528xf32, #tpu.memory_space<smem>>
    %37 = vector.broadcast %36 : f32 to vector<4x128xf32>
    %38 = arith.mulf %37, %27 : vector<4x128xf32>
    %39 = arith.addf %21, %38 : vector<4x128xf32>
    %c19 = arith.constant 19 : index
    %40 = memref.load %arg3[%c19] : memref<528xf32, #tpu.memory_space<smem>>
    %41 = vector.broadcast %40 : f32 to vector<4x128xf32>
    %42 = arith.mulf %41, %27 : vector<4x128xf32>
    %43 = arith.addf %25, %42 : vector<4x128xf32>
    %c0_10 = arith.constant 0 : index
    %c0_11 = arith.constant 0 : index
    %c0_12 = arith.constant 0 : index
    %c200 = arith.constant 200 : index
    %44 = vector.load %arg2[%c0_10, %c0_11, %c0_12, %c200] : memref<1x4x4x590xf32, #tpu.memory_space<vmem>>, vector<1x1x4x128xf32>
    %45 = vector.shape_cast %44 : vector<1x1x4x128xf32> to vector<4x128xf32>
    %c32 = arith.constant 32 : index
    %46 = memref.load %arg3[%c32] : memref<528xf32, #tpu.memory_space<smem>>
    %47 = vector.broadcast %46 : f32 to vector<4x128xf32>
    %48 = arith.mulf %47, %45 : vector<4x128xf32>
    %49 = arith.addf %31, %48 : vector<4x128xf32>
    %c33 = arith.constant 33 : index
    %50 = memref.load %arg3[%c33] : memref<528xf32, #tpu.memory_space<smem>>
    %51 = vector.broadcast %50 : f32 to vector<4x128xf32>
    %52 = arith.mulf %51, %45 : vector<4x128xf32>
    %53 = arith.addf %35, %52 : vector<4x128xf32>
    %c34 = arith.constant 34 : index
    %54 = memref.load %arg3[%c34] : memref<528xf32, #tpu.memory_space<smem>>
    %55 = vector.broadcast %54 : f32 to vector<4x128xf32>
    %56 = arith.mulf %55, %45 : vector<4x128xf32>
    %57 = arith.addf %39, %56 : vector<4x128xf32>
    %c35 = arith.constant 35 : index
    %58 = memref.load %arg3[%c35] : memref<528xf32, #tpu.memory_space<smem>>
    %59 = vector.broadcast %58 : f32 to vector<4x128xf32>
    %60 = arith.mulf %59, %45 : vector<4x128xf32>
    %61 = arith.addf %43, %60 : vector<4x128xf32>
    %c0_13 = arith.constant 0 : index
    %c0_14 = arith.constant 0 : index
    %c0_15 = arith.constant 0 : index
    %c230 = arith.constant 230 : index
    %62 = vector.load %arg2[%c0_13, %c0_14, %c0_15, %c230] : memref<1x4x4x590xf32, #tpu.memory_space<vmem>>, vector<1x1x4x128xf32>
    %63 = vector.shape_cast %62 : vector<1x1x4x128xf32> to vector<4x128xf32>
    %c48 = arith.constant 48 : index
    %64 = memref.load %arg3[%c48] : memref<528xf32, #tpu.memory_space<smem>>
    %65 = vector.broadcast %64 : f32 to vector<4x128xf32>
    %66 = arith.mulf %65, %63 : vector<4x128xf32>
    %67 = arith.addf %49, %66 : vector<4x128xf32>
    %c49 = arith.constant 49 : index
    %68 = memref.load %arg3[%c49] : memref<528xf32, #tpu.memory_space<smem>>
    %69 = vector.broadcast %68 : f32 to vector<4x128xf32>
    %70 = arith.mulf %69, %63 : vector<4x128xf32>
    %71 = arith.addf %53, %70 : vector<4x128xf32>
    %c50 = arith.constant 50 : index
    %72 = memref.load %arg3[%c50] : memref<528xf32, #tpu.memory_space<smem>>
    %73 = vector.broadcast %72 : f32 to vector<4x128xf32>
    %74 = arith.mulf %73, %63 : vector<4x128xf32>
    %75 = arith.addf %57, %74 : vector<4x128xf32>
    %c51 = arith.constant 51 : index
    %76 = memref.load %arg3[%c51] : memref<528xf32, #tpu.memory_space<smem>>
    %77 = vector.broadcast %76 : f32 to vector<4x128xf32>
    %78 = arith.mulf %77, %63 : vector<4x128xf32>
    %79 = arith.addf %61, %78 : vector<4x128xf32>
    %c0_16 = arith.constant 0 : index
    %c0_17 = arith.constant 0 : index
    %c0_18 = arith.constant 0 : index
    %c232 = arith.constant 232 : index
    %80 = vector.load %arg2[%c0_16, %c0_17, %c0_18, %c232] : memref<1x4x4x590xf32, #tpu.memory_space<vmem>>, vector<1x1x4x128xf32>
    %81 = vector.shape_cast %80 : vector<1x1x4x128xf32> to vector<4x128xf32>
    %c64 = arith.constant 64 : index
    %82 = memref.load %arg3[%c64] : memref<528xf32, #tpu.memory_space<smem>>
    %83 = vector.broadcast %82 : f32 to vector<4x128xf32>
    %84 = arith.mulf %83, %81 : vector<4x128xf32>
    %85 = arith.addf %67, %84 : vector<4x128xf32>
    %c65 = arith.constant 65 : index
    %86 = memref.load %arg3[%c65] : memref<528xf32, #tpu.memory_space<smem>>
    %87 = vector.broadcast %86 : f32 to vector<4x128xf32>
    %88 = arith.mulf %87, %81 : vector<4x128xf32>
    %89 = arith.addf %71, %88 : vector<4x128xf32>
    %c66 = arith.constant 66 : index
    %90 = memref.load %arg3[%c66] : memref<528xf32, #tpu.memory_space<smem>>
    %91 = vector.broadcast %90 : f32 to vector<4x128xf32>
    %92 = arith.mulf %91, %81 : vector<4x128xf32>
    %93 = arith.addf %75, %92 : vector<4x128xf32>
    %c67 = arith.constant 67 : index
    %94 = memref.load %arg3[%c67] : memref<528xf32, #tpu.memory_space<smem>>
    %95 = vector.broadcast %94 : f32 to vector<4x128xf32>
    %96 = arith.mulf %95, %81 : vector<4x128xf32>
    %97 = arith.addf %79, %96 : vector<4x128xf32>
    %c0_19 = arith.constant 0 : index
    %c0_20 = arith.constant 0 : index
    %c0_21 = arith.constant 0 : index
    %c262 = arith.constant 262 : index
    %98 = vector.load %arg2[%c0_19, %c0_20, %c0_21, %c262] : memref<1x4x4x590xf32, #tpu.memory_space<vmem>>, vector<1x1x4x128xf32>
    %99 = vector.shape_cast %98 : vector<1x1x4x128xf32> to vector<4x128xf32>
    %c80 = arith.constant 80 : index
    %100 = memref.load %arg3[%c80] : memref<528xf32, #tpu.memory_space<smem>>
    %101 = vector.broadcast %100 : f32 to vector<4x128xf32>
    %102 = arith.mulf %101, %99 : vector<4x128xf32>
    %103 = arith.addf %85, %102 : vector<4x128xf32>
    %c81 = arith.constant 81 : index
    %104 = memref.load %arg3[%c81] : memref<528xf32, #tpu.memory_space<smem>>
    %105 = vector.broadcast %104 : f32 to vector<4x128xf32>
    %106 = arith.mulf %105, %99 : vector<4x128xf32>
    %107 = arith.addf %89, %106 : vector<4x128xf32>
    %c82 = arith.constant 82 : index
    %108 = memref.load %arg3[%c82] : memref<528xf32, #tpu.memory_space<smem>>
    %109 = vector.broadcast %108 : f32 to vector<4x128xf32>
    %110 = arith.mulf %109, %99 : vector<4x128xf32>
    %111 = arith.addf %93, %110 : vector<4x128xf32>
    %c83 = arith.constant 83 : index
    %112 = memref.load %arg3[%c83] : memref<528xf32, #tpu.memory_space<smem>>
    %113 = vector.broadcast %112 : f32 to vector<4x128xf32>
    %114 = arith.mulf %113, %99 : vector<4x128xf32>
    %115 = arith.addf %97, %114 : vector<4x128xf32>
    %c0_22 = arith.constant 0 : index
    %c0_23 = arith.constant 0 : index
    %c0_24 = arith.constant 0 : index
    %c263 = arith.constant 263 : index
    %116 = vector.load %arg2[%c0_22, %c0_23, %c0_24, %c263] : memref<1x4x4x590xf32, #tpu.memory_space<vmem>>, vector<1x1x4x128xf32>
    %117 = vector.shape_cast %116 : vector<1x1x4x128xf32> to vector<4x128xf32>
    %c96 = arith.constant 96 : index
    %118 = memref.load %arg3[%c96] : memref<528xf32, #tpu.memory_space<smem>>
    %119 = vector.broadcast %118 : f32 to vector<4x128xf32>
    %120 = arith.mulf %119, %117 : vector<4x128xf32>
    %121 = arith.addf %103, %120 : vector<4x128xf32>
    %c97 = arith.constant 97 : index
    %122 = memref.load %arg3[%c97] : memref<528xf32, #tpu.memory_space<smem>>
    %123 = vector.broadcast %122 : f32 to vector<4x128xf32>
    %124 = arith.mulf %123, %117 : vector<4x128xf32>
    %125 = arith.addf %107, %124 : vector<4x128xf32>
    %c98 = arith.constant 98 : index
    %126 = memref.load %arg3[%c98] : memref<528xf32, #tpu.memory_space<smem>>
    %127 = vector.broadcast %126 : f32 to vector<4x128xf32>
    %128 = arith.mulf %127, %117 : vector<4x128xf32>
    %129 = arith.addf %111, %128 : vector<4x128xf32>
    %c99 = arith.constant 99 : index
    %130 = memref.load %arg3[%c99] : memref<528xf32, #tpu.memory_space<smem>>
    %131 = vector.broadcast %130 : f32 to vector<4x128xf32>
    %132 = arith.mulf %131, %117 : vector<4x128xf32>
    %133 = arith.addf %115, %132 : vector<4x128xf32>
    %c0_25 = arith.constant 0 : index
    %c0_26 = arith.constant 0 : index
    %c0_27 = arith.constant 0 : index
    %c264 = arith.constant 264 : index
    %134 = vector.load %arg2[%c0_25, %c0_26, %c0_27, %c264] : memref<1x4x4x590xf32, #tpu.memory_space<vmem>>, vector<1x1x4x128xf32>
    %135 = vector.shape_cast %134 : vector<1x1x4x128xf32> to vector<4x128xf32>
    %c112 = arith.constant 112 : index
    %136 = memref.load %arg3[%c112] : memref<528xf32, #tpu.memory_space<smem>>
    %137 = vector.broadcast %136 : f32 to vector<4x128xf32>
    %138 = arith.mulf %137, %135 : vector<4x128xf32>
    %139 = arith.addf %121, %138 : vector<4x128xf32>
    %c113 = arith.constant 113 : index
    %140 = memref.load %arg3[%c113] : memref<528xf32, #tpu.memory_space<smem>>
    %141 = vector.broadcast %140 : f32 to vector<4x128xf32>
    %142 = arith.mulf %141, %135 : vector<4x128xf32>
    %143 = arith.addf %125, %142 : vector<4x128xf32>
    %c114 = arith.constant 114 : index
    %144 = memref.load %arg3[%c114] : memref<528xf32, #tpu.memory_space<smem>>
    %145 = vector.broadcast %144 : f32 to vector<4x128xf32>
    %146 = arith.mulf %145, %135 : vector<4x128xf32>
    %147 = arith.addf %129, %146 : vector<4x128xf32>
    %c115 = arith.constant 115 : index
    %148 = memref.load %arg3[%c115] : memref<528xf32, #tpu.memory_space<smem>>
    %149 = vector.broadcast %148 : f32 to vector<4x128xf32>
    %150 = arith.mulf %149, %135 : vector<4x128xf32>
    %151 = arith.addf %133, %150 : vector<4x128xf32>
    %c0_28 = arith.constant 0 : index
    %c0_29 = arith.constant 0 : index
    %c0_30 = arith.constant 0 : index
    %c132 = arith.constant 132 : index
    %152 = vector.load %arg2[%c0_28, %c0_29, %c0_30, %c132] : memref<1x4x4x590xf32, #tpu.memory_space<vmem>>, vector<1x1x4x128xf32>
    %153 = vector.shape_cast %152 : vector<1x1x4x128xf32> to vector<4x128xf32>
    %c128 = arith.constant 128 : index
    %154 = memref.load %arg3[%c128] : memref<528xf32, #tpu.memory_space<smem>>
    %155 = vector.broadcast %154 : f32 to vector<4x128xf32>
    %156 = arith.mulf %155, %153 : vector<4x128xf32>
    %157 = arith.addf %139, %156 : vector<4x128xf32>
    %c129 = arith.constant 129 : index
    %158 = memref.load %arg3[%c129] : memref<528xf32, #tpu.memory_space<smem>>
    %159 = vector.broadcast %158 : f32 to vector<4x128xf32>
    %160 = arith.mulf %159, %153 : vector<4x128xf32>
    %161 = arith.addf %143, %160 : vector<4x128xf32>
    %c130 = arith.constant 130 : index
    %162 = memref.load %arg3[%c130] : memref<528xf32, #tpu.memory_space<smem>>
    %163 = vector.broadcast %162 : f32 to vector<4x128xf32>
    %164 = arith.mulf %163, %153 : vector<4x128xf32>
    %165 = arith.addf %147, %164 : vector<4x128xf32>
    %c131 = arith.constant 131 : index
    %166 = memref.load %arg3[%c131] : memref<528xf32, #tpu.memory_space<smem>>
    %167 = vector.broadcast %166 : f32 to vector<4x128xf32>
    %168 = arith.mulf %167, %153 : vector<4x128xf32>
    %169 = arith.addf %151, %168 : vector<4x128xf32>
    %c0_31 = arith.constant 0 : index
    %c0_32 = arith.constant 0 : index
    %c0_33 = arith.constant 0 : index
    %c135 = arith.constant 135 : index
    %170 = vector.load %arg2[%c0_31, %c0_32, %c0_33, %c135] : memref<1x4x4x590xf32, #tpu.memory_space<vmem>>, vector<1x1x4x128xf32>
    %171 = vector.shape_cast %170 : vector<1x1x4x128xf32> to vector<4x128xf32>
    %c144 = arith.constant 144 : index
    %172 = memref.load %arg3[%c144] : memref<528xf32, #tpu.memory_space<smem>>
    %173 = vector.broadcast %172 : f32 to vector<4x128xf32>
    %174 = arith.mulf %173, %171 : vector<4x128xf32>
    %175 = arith.addf %157, %174 : vector<4x128xf32>
    %c145 = arith.constant 145 : index
    %176 = memref.load %arg3[%c145] : memref<528xf32, #tpu.memory_space<smem>>
    %177 = vector.broadcast %176 : f32 to vector<4x128xf32>
    %178 = arith.mulf %177, %171 : vector<4x128xf32>
    %179 = arith.addf %161, %178 : vector<4x128xf32>
    %c146 = arith.constant 146 : index
    %180 = memref.load %arg3[%c146] : memref<528xf32, #tpu.memory_space<smem>>
    %181 = vector.broadcast %180 : f32 to vector<4x128xf32>
    %182 = arith.mulf %181, %171 : vector<4x128xf32>
    %183 = arith.addf %165, %182 : vector<4x128xf32>
    %c147 = arith.constant 147 : index
    %184 = memref.load %arg3[%c147] : memref<528xf32, #tpu.memory_space<smem>>
    %185 = vector.broadcast %184 : f32 to vector<4x128xf32>
    %186 = arith.mulf %185, %171 : vector<4x128xf32>
    %187 = arith.addf %169, %186 : vector<4x128xf32>
    %c0_34 = arith.constant 0 : index
    %c0_35 = arith.constant 0 : index
    %c0_36 = arith.constant 0 : index
    %c138 = arith.constant 138 : index
    %188 = vector.load %arg2[%c0_34, %c0_35, %c0_36, %c138] : memref<1x4x4x590xf32, #tpu.memory_space<vmem>>, vector<1x1x4x128xf32>
    %189 = vector.shape_cast %188 : vector<1x1x4x128xf32> to vector<4x128xf32>
    %c160 = arith.constant 160 : index
    %190 = memref.load %arg3[%c160] : memref<528xf32, #tpu.memory_space<smem>>
    %191 = vector.broadcast %190 : f32 to vector<4x128xf32>
    %192 = arith.mulf %191, %189 : vector<4x128xf32>
    %193 = arith.addf %175, %192 : vector<4x128xf32>
    %c161 = arith.constant 161 : index
    %194 = memref.load %arg3[%c161] : memref<528xf32, #tpu.memory_space<smem>>
    %195 = vector.broadcast %194 : f32 to vector<4x128xf32>
    %196 = arith.mulf %195, %189 : vector<4x128xf32>
    %197 = arith.addf %179, %196 : vector<4x128xf32>
    %c162 = arith.constant 162 : index
    %198 = memref.load %arg3[%c162] : memref<528xf32, #tpu.memory_space<smem>>
    %199 = vector.broadcast %198 : f32 to vector<4x128xf32>
    %200 = arith.mulf %199, %189 : vector<4x128xf32>
    %201 = arith.addf %183, %200 : vector<4x128xf32>
    %c163 = arith.constant 163 : index
    %202 = memref.load %arg3[%c163] : memref<528xf32, #tpu.memory_space<smem>>
    %203 = vector.broadcast %202 : f32 to vector<4x128xf32>
    %204 = arith.mulf %203, %189 : vector<4x128xf32>
    %205 = arith.addf %187, %204 : vector<4x128xf32>
    %c0_37 = arith.constant 0 : index
    %c0_38 = arith.constant 0 : index
    %c0_39 = arith.constant 0 : index
    %c228 = arith.constant 228 : index
    %206 = vector.load %arg2[%c0_37, %c0_38, %c0_39, %c228] : memref<1x4x4x590xf32, #tpu.memory_space<vmem>>, vector<1x1x4x128xf32>
    %207 = vector.shape_cast %206 : vector<1x1x4x128xf32> to vector<4x128xf32>
    %c176 = arith.constant 176 : index
    %208 = memref.load %arg3[%c176] : memref<528xf32, #tpu.memory_space<smem>>
    %209 = vector.broadcast %208 : f32 to vector<4x128xf32>
    %210 = arith.mulf %209, %207 : vector<4x128xf32>
    %211 = arith.addf %193, %210 : vector<4x128xf32>
    %c177 = arith.constant 177 : index
    %212 = memref.load %arg3[%c177] : memref<528xf32, #tpu.memory_space<smem>>
    %213 = vector.broadcast %212 : f32 to vector<4x128xf32>
    %214 = arith.mulf %213, %207 : vector<4x128xf32>
    %215 = arith.addf %197, %214 : vector<4x128xf32>
    %c178 = arith.constant 178 : index
    %216 = memref.load %arg3[%c178] : memref<528xf32, #tpu.memory_space<smem>>
    %217 = vector.broadcast %216 : f32 to vector<4x128xf32>
    %218 = arith.mulf %217, %207 : vector<4x128xf32>
    %219 = arith.addf %201, %218 : vector<4x128xf32>
    %c179 = arith.constant 179 : index
    %220 = memref.load %arg3[%c179] : memref<528xf32, #tpu.memory_space<smem>>
    %221 = vector.broadcast %220 : f32 to vector<4x128xf32>
    %222 = arith.mulf %221, %207 : vector<4x128xf32>
    %223 = arith.addf %205, %222 : vector<4x128xf32>
    %c0_40 = arith.constant 0 : index
    %c0_41 = arith.constant 0 : index
    %c0_42 = arith.constant 0 : index
    %c234 = arith.constant 234 : index
    %224 = vector.load %arg2[%c0_40, %c0_41, %c0_42, %c234] : memref<1x4x4x590xf32, #tpu.memory_space<vmem>>, vector<1x1x4x128xf32>
    %225 = vector.shape_cast %224 : vector<1x1x4x128xf32> to vector<4x128xf32>
    %c192 = arith.constant 192 : index
    %226 = memref.load %arg3[%c192] : memref<528xf32, #tpu.memory_space<smem>>
    %227 = vector.broadcast %226 : f32 to vector<4x128xf32>
    %228 = arith.mulf %227, %225 : vector<4x128xf32>
    %229 = arith.addf %211, %228 : vector<4x128xf32>
    %c193 = arith.constant 193 : index
    %230 = memref.load %arg3[%c193] : memref<528xf32, #tpu.memory_space<smem>>
    %231 = vector.broadcast %230 : f32 to vector<4x128xf32>
    %232 = arith.mulf %231, %225 : vector<4x128xf32>
    %233 = arith.addf %215, %232 : vector<4x128xf32>
    %c194 = arith.constant 194 : index
    %234 = memref.load %arg3[%c194] : memref<528xf32, #tpu.memory_space<smem>>
    %235 = vector.broadcast %234 : f32 to vector<4x128xf32>
    %236 = arith.mulf %235, %225 : vector<4x128xf32>
    %237 = arith.addf %219, %236 : vector<4x128xf32>
    %c195 = arith.constant 195 : index
    %238 = memref.load %arg3[%c195] : memref<528xf32, #tpu.memory_space<smem>>
    %239 = vector.broadcast %238 : f32 to vector<4x128xf32>
    %240 = arith.mulf %239, %225 : vector<4x128xf32>
    %241 = arith.addf %223, %240 : vector<4x128xf32>
    %c0_43 = arith.constant 0 : index
    %c0_44 = arith.constant 0 : index
    %c0_45 = arith.constant 0 : index
    %c324 = arith.constant 324 : index
    %242 = vector.load %arg2[%c0_43, %c0_44, %c0_45, %c324] : memref<1x4x4x590xf32, #tpu.memory_space<vmem>>, vector<1x1x4x128xf32>
    %243 = vector.shape_cast %242 : vector<1x1x4x128xf32> to vector<4x128xf32>
    %c208 = arith.constant 208 : index
    %244 = memref.load %arg3[%c208] : memref<528xf32, #tpu.memory_space<smem>>
    %245 = vector.broadcast %244 : f32 to vector<4x128xf32>
    %246 = arith.mulf %245, %243 : vector<4x128xf32>
    %247 = arith.addf %229, %246 : vector<4x128xf32>
    %c209 = arith.constant 209 : index
    %248 = memref.load %arg3[%c209] : memref<528xf32, #tpu.memory_space<smem>>
    %249 = vector.broadcast %248 : f32 to vector<4x128xf32>
    %250 = arith.mulf %249, %243 : vector<4x128xf32>
    %251 = arith.addf %233, %250 : vector<4x128xf32>
    %c210 = arith.constant 210 : index
    %252 = memref.load %arg3[%c210] : memref<528xf32, #tpu.memory_space<smem>>
    %253 = vector.broadcast %252 : f32 to vector<4x128xf32>
    %254 = arith.mulf %253, %243 : vector<4x128xf32>
    %255 = arith.addf %237, %254 : vector<4x128xf32>
    %c211 = arith.constant 211 : index
    %256 = memref.load %arg3[%c211] : memref<528xf32, #tpu.memory_space<smem>>
    %257 = vector.broadcast %256 : f32 to vector<4x128xf32>
    %258 = arith.mulf %257, %243 : vector<4x128xf32>
    %259 = arith.addf %241, %258 : vector<4x128xf32>
    %c0_46 = arith.constant 0 : index
    %c0_47 = arith.constant 0 : index
    %c0_48 = arith.constant 0 : index
    %c327 = arith.constant 327 : index
    %260 = vector.load %arg2[%c0_46, %c0_47, %c0_48, %c327] : memref<1x4x4x590xf32, #tpu.memory_space<vmem>>, vector<1x1x4x128xf32>
    %261 = vector.shape_cast %260 : vector<1x1x4x128xf32> to vector<4x128xf32>
    %c224 = arith.constant 224 : index
    %262 = memref.load %arg3[%c224] : memref<528xf32, #tpu.memory_space<smem>>
    %263 = vector.broadcast %262 : f32 to vector<4x128xf32>
    %264 = arith.mulf %263, %261 : vector<4x128xf32>
    %265 = arith.addf %247, %264 : vector<4x128xf32>
    %c225 = arith.constant 225 : index
    %266 = memref.load %arg3[%c225] : memref<528xf32, #tpu.memory_space<smem>>
    %267 = vector.broadcast %266 : f32 to vector<4x128xf32>
    %268 = arith.mulf %267, %261 : vector<4x128xf32>
    %269 = arith.addf %251, %268 : vector<4x128xf32>
    %c226 = arith.constant 226 : index
    %270 = memref.load %arg3[%c226] : memref<528xf32, #tpu.memory_space<smem>>
    %271 = vector.broadcast %270 : f32 to vector<4x128xf32>
    %272 = arith.mulf %271, %261 : vector<4x128xf32>
    %273 = arith.addf %255, %272 : vector<4x128xf32>
    %c227 = arith.constant 227 : index
    %274 = memref.load %arg3[%c227] : memref<528xf32, #tpu.memory_space<smem>>
    %275 = vector.broadcast %274 : f32 to vector<4x128xf32>
    %276 = arith.mulf %275, %261 : vector<4x128xf32>
    %277 = arith.addf %259, %276 : vector<4x128xf32>
    %c0_49 = arith.constant 0 : index
    %c0_50 = arith.constant 0 : index
    %c0_51 = arith.constant 0 : index
    %c330 = arith.constant 330 : index
    %278 = vector.load %arg2[%c0_49, %c0_50, %c0_51, %c330] : memref<1x4x4x590xf32, #tpu.memory_space<vmem>>, vector<1x1x4x128xf32>
    %279 = vector.shape_cast %278 : vector<1x1x4x128xf32> to vector<4x128xf32>
    %c240 = arith.constant 240 : index
    %280 = memref.load %arg3[%c240] : memref<528xf32, #tpu.memory_space<smem>>
    %281 = vector.broadcast %280 : f32 to vector<4x128xf32>
    %282 = arith.mulf %281, %279 : vector<4x128xf32>
    %283 = arith.addf %265, %282 : vector<4x128xf32>
    %c241 = arith.constant 241 : index
    %284 = memref.load %arg3[%c241] : memref<528xf32, #tpu.memory_space<smem>>
    %285 = vector.broadcast %284 : f32 to vector<4x128xf32>
    %286 = arith.mulf %285, %279 : vector<4x128xf32>
    %287 = arith.addf %269, %286 : vector<4x128xf32>
    %c242 = arith.constant 242 : index
    %288 = memref.load %arg3[%c242] : memref<528xf32, #tpu.memory_space<smem>>
    %289 = vector.broadcast %288 : f32 to vector<4x128xf32>
    %290 = arith.mulf %289, %279 : vector<4x128xf32>
    %291 = arith.addf %273, %290 : vector<4x128xf32>
    %c243 = arith.constant 243 : index
    %292 = memref.load %arg3[%c243] : memref<528xf32, #tpu.memory_space<smem>>
    %293 = vector.broadcast %292 : f32 to vector<4x128xf32>
    %294 = arith.mulf %293, %279 : vector<4x128xf32>
    %295 = arith.addf %277, %294 : vector<4x128xf32>
    %c0_52 = arith.constant 0 : index
    %c0_53 = arith.constant 0 : index
    %c0_54 = arith.constant 0 : index
    %c66_55 = arith.constant 66 : index
    %296 = vector.load %arg2[%c0_52, %c0_53, %c0_54, %c66_55] : memref<1x4x4x590xf32, #tpu.memory_space<vmem>>, vector<1x1x4x128xf32>
    %297 = vector.shape_cast %296 : vector<1x1x4x128xf32> to vector<4x128xf32>
    %c256 = arith.constant 256 : index
    %298 = memref.load %arg3[%c256] : memref<528xf32, #tpu.memory_space<smem>>
    %299 = vector.broadcast %298 : f32 to vector<4x128xf32>
    %300 = arith.mulf %299, %297 : vector<4x128xf32>
    %301 = arith.addf %283, %300 : vector<4x128xf32>
    %c257 = arith.constant 257 : index
    %302 = memref.load %arg3[%c257] : memref<528xf32, #tpu.memory_space<smem>>
    %303 = vector.broadcast %302 : f32 to vector<4x128xf32>
    %304 = arith.mulf %303, %297 : vector<4x128xf32>
    %305 = arith.addf %287, %304 : vector<4x128xf32>
    %c258 = arith.constant 258 : index
    %306 = memref.load %arg3[%c258] : memref<528xf32, #tpu.memory_space<smem>>
    %307 = vector.broadcast %306 : f32 to vector<4x128xf32>
    %308 = arith.mulf %307, %297 : vector<4x128xf32>
    %309 = arith.addf %291, %308 : vector<4x128xf32>
    %c259 = arith.constant 259 : index
    %310 = memref.load %arg3[%c259] : memref<528xf32, #tpu.memory_space<smem>>
    %311 = vector.broadcast %310 : f32 to vector<4x128xf32>
    %312 = arith.mulf %311, %297 : vector<4x128xf32>
    %313 = arith.addf %295, %312 : vector<4x128xf32>
    %c0_56 = arith.constant 0 : index
    %c0_57 = arith.constant 0 : index
    %c0_58 = arith.constant 0 : index
    %c71 = arith.constant 71 : index
    %314 = vector.load %arg2[%c0_56, %c0_57, %c0_58, %c71] : memref<1x4x4x590xf32, #tpu.memory_space<vmem>>, vector<1x1x4x128xf32>
    %315 = vector.shape_cast %314 : vector<1x1x4x128xf32> to vector<4x128xf32>
    %c272 = arith.constant 272 : index
    %316 = memref.load %arg3[%c272] : memref<528xf32, #tpu.memory_space<smem>>
    %317 = vector.broadcast %316 : f32 to vector<4x128xf32>
    %318 = arith.mulf %317, %315 : vector<4x128xf32>
    %319 = arith.addf %301, %318 : vector<4x128xf32>
    %c273 = arith.constant 273 : index
    %320 = memref.load %arg3[%c273] : memref<528xf32, #tpu.memory_space<smem>>
    %321 = vector.broadcast %320 : f32 to vector<4x128xf32>
    %322 = arith.mulf %321, %315 : vector<4x128xf32>
    %323 = arith.addf %305, %322 : vector<4x128xf32>
    %c274 = arith.constant 274 : index
    %324 = memref.load %arg3[%c274] : memref<528xf32, #tpu.memory_space<smem>>
    %325 = vector.broadcast %324 : f32 to vector<4x128xf32>
    %326 = arith.mulf %325, %315 : vector<4x128xf32>
    %327 = arith.addf %309, %326 : vector<4x128xf32>
    %c275 = arith.constant 275 : index
    %328 = memref.load %arg3[%c275] : memref<528xf32, #tpu.memory_space<smem>>
    %329 = vector.broadcast %328 : f32 to vector<4x128xf32>
    %330 = arith.mulf %329, %315 : vector<4x128xf32>
    %331 = arith.addf %313, %330 : vector<4x128xf32>
    %c0_59 = arith.constant 0 : index
    %c0_60 = arith.constant 0 : index
    %c0_61 = arith.constant 0 : index
    %c76 = arith.constant 76 : index
    %332 = vector.load %arg2[%c0_59, %c0_60, %c0_61, %c76] : memref<1x4x4x590xf32, #tpu.memory_space<vmem>>, vector<1x1x4x128xf32>
    %333 = vector.shape_cast %332 : vector<1x1x4x128xf32> to vector<4x128xf32>
    %c288 = arith.constant 288 : index
    %334 = memref.load %arg3[%c288] : memref<528xf32, #tpu.memory_space<smem>>
    %335 = vector.broadcast %334 : f32 to vector<4x128xf32>
    %336 = arith.mulf %335, %333 : vector<4x128xf32>
    %337 = arith.addf %319, %336 : vector<4x128xf32>
    %c289 = arith.constant 289 : index
    %338 = memref.load %arg3[%c289] : memref<528xf32, #tpu.memory_space<smem>>
    %339 = vector.broadcast %338 : f32 to vector<4x128xf32>
    %340 = arith.mulf %339, %333 : vector<4x128xf32>
    %341 = arith.addf %323, %340 : vector<4x128xf32>
    %c290 = arith.constant 290 : index
    %342 = memref.load %arg3[%c290] : memref<528xf32, #tpu.memory_space<smem>>
    %343 = vector.broadcast %342 : f32 to vector<4x128xf32>
    %344 = arith.mulf %343, %333 : vector<4x128xf32>
    %345 = arith.addf %327, %344 : vector<4x128xf32>
    %c291 = arith.constant 291 : index
    %346 = memref.load %arg3[%c291] : memref<528xf32, #tpu.memory_space<smem>>
    %347 = vector.broadcast %346 : f32 to vector<4x128xf32>
    %348 = arith.mulf %347, %333 : vector<4x128xf32>
    %349 = arith.addf %331, %348 : vector<4x128xf32>
    %c0_62 = arith.constant 0 : index
    %c0_63 = arith.constant 0 : index
    %c0_64 = arith.constant 0 : index
    %c226_65 = arith.constant 226 : index
    %350 = vector.load %arg2[%c0_62, %c0_63, %c0_64, %c226_65] : memref<1x4x4x590xf32, #tpu.memory_space<vmem>>, vector<1x1x4x128xf32>
    %351 = vector.shape_cast %350 : vector<1x1x4x128xf32> to vector<4x128xf32>
    %c304 = arith.constant 304 : index
    %352 = memref.load %arg3[%c304] : memref<528xf32, #tpu.memory_space<smem>>
    %353 = vector.broadcast %352 : f32 to vector<4x128xf32>
    %354 = arith.mulf %353, %351 : vector<4x128xf32>
    %355 = arith.addf %337, %354 : vector<4x128xf32>
    %c305 = arith.constant 305 : index
    %356 = memref.load %arg3[%c305] : memref<528xf32, #tpu.memory_space<smem>>
    %357 = vector.broadcast %356 : f32 to vector<4x128xf32>
    %358 = arith.mulf %357, %351 : vector<4x128xf32>
    %359 = arith.addf %341, %358 : vector<4x128xf32>
    %c306 = arith.constant 306 : index
    %360 = memref.load %arg3[%c306] : memref<528xf32, #tpu.memory_space<smem>>
    %361 = vector.broadcast %360 : f32 to vector<4x128xf32>
    %362 = arith.mulf %361, %351 : vector<4x128xf32>
    %363 = arith.addf %345, %362 : vector<4x128xf32>
    %c307 = arith.constant 307 : index
    %364 = memref.load %arg3[%c307] : memref<528xf32, #tpu.memory_space<smem>>
    %365 = vector.broadcast %364 : f32 to vector<4x128xf32>
    %366 = arith.mulf %365, %351 : vector<4x128xf32>
    %367 = arith.addf %349, %366 : vector<4x128xf32>
    %c0_66 = arith.constant 0 : index
    %c0_67 = arith.constant 0 : index
    %c0_68 = arith.constant 0 : index
    %c236 = arith.constant 236 : index
    %368 = vector.load %arg2[%c0_66, %c0_67, %c0_68, %c236] : memref<1x4x4x590xf32, #tpu.memory_space<vmem>>, vector<1x1x4x128xf32>
    %369 = vector.shape_cast %368 : vector<1x1x4x128xf32> to vector<4x128xf32>
    %c320 = arith.constant 320 : index
    %370 = memref.load %arg3[%c320] : memref<528xf32, #tpu.memory_space<smem>>
    %371 = vector.broadcast %370 : f32 to vector<4x128xf32>
    %372 = arith.mulf %371, %369 : vector<4x128xf32>
    %373 = arith.addf %355, %372 : vector<4x128xf32>
    %c321 = arith.constant 321 : index
    %374 = memref.load %arg3[%c321] : memref<528xf32, #tpu.memory_space<smem>>
    %375 = vector.broadcast %374 : f32 to vector<4x128xf32>
    %376 = arith.mulf %375, %369 : vector<4x128xf32>
    %377 = arith.addf %359, %376 : vector<4x128xf32>
    %c322 = arith.constant 322 : index
    %378 = memref.load %arg3[%c322] : memref<528xf32, #tpu.memory_space<smem>>
    %379 = vector.broadcast %378 : f32 to vector<4x128xf32>
    %380 = arith.mulf %379, %369 : vector<4x128xf32>
    %381 = arith.addf %363, %380 : vector<4x128xf32>
    %c323 = arith.constant 323 : index
    %382 = memref.load %arg3[%c323] : memref<528xf32, #tpu.memory_space<smem>>
    %383 = vector.broadcast %382 : f32 to vector<4x128xf32>
    %384 = arith.mulf %383, %369 : vector<4x128xf32>
    %385 = arith.addf %367, %384 : vector<4x128xf32>
    %c0_69 = arith.constant 0 : index
    %c0_70 = arith.constant 0 : index
    %c0_71 = arith.constant 0 : index
    %c386 = arith.constant 386 : index
    %386 = vector.load %arg2[%c0_69, %c0_70, %c0_71, %c386] : memref<1x4x4x590xf32, #tpu.memory_space<vmem>>, vector<1x1x4x128xf32>
    %387 = vector.shape_cast %386 : vector<1x1x4x128xf32> to vector<4x128xf32>
    %c336 = arith.constant 336 : index
    %388 = memref.load %arg3[%c336] : memref<528xf32, #tpu.memory_space<smem>>
    %389 = vector.broadcast %388 : f32 to vector<4x128xf32>
    %390 = arith.mulf %389, %387 : vector<4x128xf32>
    %391 = arith.addf %373, %390 : vector<4x128xf32>
    %c337 = arith.constant 337 : index
    %392 = memref.load %arg3[%c337] : memref<528xf32, #tpu.memory_space<smem>>
    %393 = vector.broadcast %392 : f32 to vector<4x128xf32>
    %394 = arith.mulf %393, %387 : vector<4x128xf32>
    %395 = arith.addf %377, %394 : vector<4x128xf32>
    %c338 = arith.constant 338 : index
    %396 = memref.load %arg3[%c338] : memref<528xf32, #tpu.memory_space<smem>>
    %397 = vector.broadcast %396 : f32 to vector<4x128xf32>
    %398 = arith.mulf %397, %387 : vector<4x128xf32>
    %399 = arith.addf %381, %398 : vector<4x128xf32>
    %c339 = arith.constant 339 : index
    %400 = memref.load %arg3[%c339] : memref<528xf32, #tpu.memory_space<smem>>
    %401 = vector.broadcast %400 : f32 to vector<4x128xf32>
    %402 = arith.mulf %401, %387 : vector<4x128xf32>
    %403 = arith.addf %385, %402 : vector<4x128xf32>
    %c0_72 = arith.constant 0 : index
    %c0_73 = arith.constant 0 : index
    %c0_74 = arith.constant 0 : index
    %c391 = arith.constant 391 : index
    %404 = vector.load %arg2[%c0_72, %c0_73, %c0_74, %c391] : memref<1x4x4x590xf32, #tpu.memory_space<vmem>>, vector<1x1x4x128xf32>
    %405 = vector.shape_cast %404 : vector<1x1x4x128xf32> to vector<4x128xf32>
    %c352 = arith.constant 352 : index
    %406 = memref.load %arg3[%c352] : memref<528xf32, #tpu.memory_space<smem>>
    %407 = vector.broadcast %406 : f32 to vector<4x128xf32>
    %408 = arith.mulf %407, %405 : vector<4x128xf32>
    %409 = arith.addf %391, %408 : vector<4x128xf32>
    %c353 = arith.constant 353 : index
    %410 = memref.load %arg3[%c353] : memref<528xf32, #tpu.memory_space<smem>>
    %411 = vector.broadcast %410 : f32 to vector<4x128xf32>
    %412 = arith.mulf %411, %405 : vector<4x128xf32>
    %413 = arith.addf %395, %412 : vector<4x128xf32>
    %c354 = arith.constant 354 : index
    %414 = memref.load %arg3[%c354] : memref<528xf32, #tpu.memory_space<smem>>
    %415 = vector.broadcast %414 : f32 to vector<4x128xf32>
    %416 = arith.mulf %415, %405 : vector<4x128xf32>
    %417 = arith.addf %399, %416 : vector<4x128xf32>
    %c355 = arith.constant 355 : index
    %418 = memref.load %arg3[%c355] : memref<528xf32, #tpu.memory_space<smem>>
    %419 = vector.broadcast %418 : f32 to vector<4x128xf32>
    %420 = arith.mulf %419, %405 : vector<4x128xf32>
    %421 = arith.addf %403, %420 : vector<4x128xf32>
    %c0_75 = arith.constant 0 : index
    %c0_76 = arith.constant 0 : index
    %c0_77 = arith.constant 0 : index
    %c396 = arith.constant 396 : index
    %422 = vector.load %arg2[%c0_75, %c0_76, %c0_77, %c396] : memref<1x4x4x590xf32, #tpu.memory_space<vmem>>, vector<1x1x4x128xf32>
    %423 = vector.shape_cast %422 : vector<1x1x4x128xf32> to vector<4x128xf32>
    %c368 = arith.constant 368 : index
    %424 = memref.load %arg3[%c368] : memref<528xf32, #tpu.memory_space<smem>>
    %425 = vector.broadcast %424 : f32 to vector<4x128xf32>
    %426 = arith.mulf %425, %423 : vector<4x128xf32>
    %427 = arith.addf %409, %426 : vector<4x128xf32>
    %c369 = arith.constant 369 : index
    %428 = memref.load %arg3[%c369] : memref<528xf32, #tpu.memory_space<smem>>
    %429 = vector.broadcast %428 : f32 to vector<4x128xf32>
    %430 = arith.mulf %429, %423 : vector<4x128xf32>
    %431 = arith.addf %413, %430 : vector<4x128xf32>
    %c370 = arith.constant 370 : index
    %432 = memref.load %arg3[%c370] : memref<528xf32, #tpu.memory_space<smem>>
    %433 = vector.broadcast %432 : f32 to vector<4x128xf32>
    %434 = arith.mulf %433, %423 : vector<4x128xf32>
    %435 = arith.addf %417, %434 : vector<4x128xf32>
    %c371 = arith.constant 371 : index
    %436 = memref.load %arg3[%c371] : memref<528xf32, #tpu.memory_space<smem>>
    %437 = vector.broadcast %436 : f32 to vector<4x128xf32>
    %438 = arith.mulf %437, %423 : vector<4x128xf32>
    %439 = arith.addf %421, %438 : vector<4x128xf32>
    %c0_78 = arith.constant 0 : index
    %c0_79 = arith.constant 0 : index
    %c0_80 = arith.constant 0 : index
    %c0_81 = arith.constant 0 : index
    %440 = vector.load %arg2[%c0_78, %c0_79, %c0_80, %c0_81] : memref<1x4x4x590xf32, #tpu.memory_space<vmem>>, vector<1x1x4x128xf32>
    %441 = vector.shape_cast %440 : vector<1x1x4x128xf32> to vector<4x128xf32>
    %c384 = arith.constant 384 : index
    %442 = memref.load %arg3[%c384] : memref<528xf32, #tpu.memory_space<smem>>
    %443 = vector.broadcast %442 : f32 to vector<4x128xf32>
    %444 = arith.mulf %443, %441 : vector<4x128xf32>
    %445 = arith.addf %427, %444 : vector<4x128xf32>
    %c385 = arith.constant 385 : index
    %446 = memref.load %arg3[%c385] : memref<528xf32, #tpu.memory_space<smem>>
    %447 = vector.broadcast %446 : f32 to vector<4x128xf32>
    %448 = arith.mulf %447, %441 : vector<4x128xf32>
    %449 = arith.addf %431, %448 : vector<4x128xf32>
    %c386_82 = arith.constant 386 : index
    %450 = memref.load %arg3[%c386_82] : memref<528xf32, #tpu.memory_space<smem>>
    %451 = vector.broadcast %450 : f32 to vector<4x128xf32>
    %452 = arith.mulf %451, %441 : vector<4x128xf32>
    %453 = arith.addf %435, %452 : vector<4x128xf32>
    %c387 = arith.constant 387 : index
    %454 = memref.load %arg3[%c387] : memref<528xf32, #tpu.memory_space<smem>>
    %455 = vector.broadcast %454 : f32 to vector<4x128xf32>
    %456 = arith.mulf %455, %441 : vector<4x128xf32>
    %457 = arith.addf %439, %456 : vector<4x128xf32>
    %c0_83 = arith.constant 0 : index
    %c0_84 = arith.constant 0 : index
    %c0_85 = arith.constant 0 : index
    %c7 = arith.constant 7 : index
    %458 = vector.load %arg2[%c0_83, %c0_84, %c0_85, %c7] : memref<1x4x4x590xf32, #tpu.memory_space<vmem>>, vector<1x1x4x128xf32>
    %459 = vector.shape_cast %458 : vector<1x1x4x128xf32> to vector<4x128xf32>
    %c400 = arith.constant 400 : index
    %460 = memref.load %arg3[%c400] : memref<528xf32, #tpu.memory_space<smem>>
    %461 = vector.broadcast %460 : f32 to vector<4x128xf32>
    %462 = arith.mulf %461, %459 : vector<4x128xf32>
    %463 = arith.addf %445, %462 : vector<4x128xf32>
    %c401 = arith.constant 401 : index
    %464 = memref.load %arg3[%c401] : memref<528xf32, #tpu.memory_space<smem>>
    %465 = vector.broadcast %464 : f32 to vector<4x128xf32>
    %466 = arith.mulf %465, %459 : vector<4x128xf32>
    %467 = arith.addf %449, %466 : vector<4x128xf32>
    %c402 = arith.constant 402 : index
    %468 = memref.load %arg3[%c402] : memref<528xf32, #tpu.memory_space<smem>>
    %469 = vector.broadcast %468 : f32 to vector<4x128xf32>
    %470 = arith.mulf %469, %459 : vector<4x128xf32>
    %471 = arith.addf %453, %470 : vector<4x128xf32>
    %c403 = arith.constant 403 : index
    %472 = memref.load %arg3[%c403] : memref<528xf32, #tpu.memory_space<smem>>
    %473 = vector.broadcast %472 : f32 to vector<4x128xf32>
    %474 = arith.mulf %473, %459 : vector<4x128xf32>
    %475 = arith.addf %457, %474 : vector<4x128xf32>
    %c0_86 = arith.constant 0 : index
    %c0_87 = arith.constant 0 : index
    %c0_88 = arith.constant 0 : index
    %c14 = arith.constant 14 : index
    %476 = vector.load %arg2[%c0_86, %c0_87, %c0_88, %c14] : memref<1x4x4x590xf32, #tpu.memory_space<vmem>>, vector<1x1x4x128xf32>
    %477 = vector.shape_cast %476 : vector<1x1x4x128xf32> to vector<4x128xf32>
    %c416 = arith.constant 416 : index
    %478 = memref.load %arg3[%c416] : memref<528xf32, #tpu.memory_space<smem>>
    %479 = vector.broadcast %478 : f32 to vector<4x128xf32>
    %480 = arith.mulf %479, %477 : vector<4x128xf32>
    %481 = arith.addf %463, %480 : vector<4x128xf32>
    %c417 = arith.constant 417 : index
    %482 = memref.load %arg3[%c417] : memref<528xf32, #tpu.memory_space<smem>>
    %483 = vector.broadcast %482 : f32 to vector<4x128xf32>
    %484 = arith.mulf %483, %477 : vector<4x128xf32>
    %485 = arith.addf %467, %484 : vector<4x128xf32>
    %c418 = arith.constant 418 : index
    %486 = memref.load %arg3[%c418] : memref<528xf32, #tpu.memory_space<smem>>
    %487 = vector.broadcast %486 : f32 to vector<4x128xf32>
    %488 = arith.mulf %487, %477 : vector<4x128xf32>
    %489 = arith.addf %471, %488 : vector<4x128xf32>
    %c419 = arith.constant 419 : index
    %490 = memref.load %arg3[%c419] : memref<528xf32, #tpu.memory_space<smem>>
    %491 = vector.broadcast %490 : f32 to vector<4x128xf32>
    %492 = arith.mulf %491, %477 : vector<4x128xf32>
    %493 = arith.addf %475, %492 : vector<4x128xf32>
    %c0_89 = arith.constant 0 : index
    %c0_90 = arith.constant 0 : index
    %c0_91 = arith.constant 0 : index
    %c224_92 = arith.constant 224 : index
    %494 = vector.load %arg2[%c0_89, %c0_90, %c0_91, %c224_92] : memref<1x4x4x590xf32, #tpu.memory_space<vmem>>, vector<1x1x4x128xf32>
    %495 = vector.shape_cast %494 : vector<1x1x4x128xf32> to vector<4x128xf32>
    %c432 = arith.constant 432 : index
    %496 = memref.load %arg3[%c432] : memref<528xf32, #tpu.memory_space<smem>>
    %497 = vector.broadcast %496 : f32 to vector<4x128xf32>
    %498 = arith.mulf %497, %495 : vector<4x128xf32>
    %499 = arith.addf %481, %498 : vector<4x128xf32>
    %c433 = arith.constant 433 : index
    %500 = memref.load %arg3[%c433] : memref<528xf32, #tpu.memory_space<smem>>
    %501 = vector.broadcast %500 : f32 to vector<4x128xf32>
    %502 = arith.mulf %501, %495 : vector<4x128xf32>
    %503 = arith.addf %485, %502 : vector<4x128xf32>
    %c434 = arith.constant 434 : index
    %504 = memref.load %arg3[%c434] : memref<528xf32, #tpu.memory_space<smem>>
    %505 = vector.broadcast %504 : f32 to vector<4x128xf32>
    %506 = arith.mulf %505, %495 : vector<4x128xf32>
    %507 = arith.addf %489, %506 : vector<4x128xf32>
    %c435 = arith.constant 435 : index
    %508 = memref.load %arg3[%c435] : memref<528xf32, #tpu.memory_space<smem>>
    %509 = vector.broadcast %508 : f32 to vector<4x128xf32>
    %510 = arith.mulf %509, %495 : vector<4x128xf32>
    %511 = arith.addf %493, %510 : vector<4x128xf32>
    %c0_93 = arith.constant 0 : index
    %c0_94 = arith.constant 0 : index
    %c0_95 = arith.constant 0 : index
    %c238 = arith.constant 238 : index
    %512 = vector.load %arg2[%c0_93, %c0_94, %c0_95, %c238] : memref<1x4x4x590xf32, #tpu.memory_space<vmem>>, vector<1x1x4x128xf32>
    %513 = vector.shape_cast %512 : vector<1x1x4x128xf32> to vector<4x128xf32>
    %c448 = arith.constant 448 : index
    %514 = memref.load %arg3[%c448] : memref<528xf32, #tpu.memory_space<smem>>
    %515 = vector.broadcast %514 : f32 to vector<4x128xf32>
    %516 = arith.mulf %515, %513 : vector<4x128xf32>
    %517 = arith.addf %499, %516 : vector<4x128xf32>
    %c449 = arith.constant 449 : index
    %518 = memref.load %arg3[%c449] : memref<528xf32, #tpu.memory_space<smem>>
    %519 = vector.broadcast %518 : f32 to vector<4x128xf32>
    %520 = arith.mulf %519, %513 : vector<4x128xf32>
    %521 = arith.addf %503, %520 : vector<4x128xf32>
    %c450 = arith.constant 450 : index
    %522 = memref.load %arg3[%c450] : memref<528xf32, #tpu.memory_space<smem>>
    %523 = vector.broadcast %522 : f32 to vector<4x128xf32>
    %524 = arith.mulf %523, %513 : vector<4x128xf32>
    %525 = arith.addf %507, %524 : vector<4x128xf32>
    %c451 = arith.constant 451 : index
    %526 = memref.load %arg3[%c451] : memref<528xf32, #tpu.memory_space<smem>>
    %527 = vector.broadcast %526 : f32 to vector<4x128xf32>
    %528 = arith.mulf %527, %513 : vector<4x128xf32>
    %529 = arith.addf %511, %528 : vector<4x128xf32>
    %c0_96 = arith.constant 0 : index
    %c0_97 = arith.constant 0 : index
    %c0_98 = arith.constant 0 : index
    %c448_99 = arith.constant 448 : index
    %530 = vector.load %arg2[%c0_96, %c0_97, %c0_98, %c448_99] : memref<1x4x4x590xf32, #tpu.memory_space<vmem>>, vector<1x1x4x128xf32>
    %531 = vector.shape_cast %530 : vector<1x1x4x128xf32> to vector<4x128xf32>
    %c464 = arith.constant 464 : index
    %532 = memref.load %arg3[%c464] : memref<528xf32, #tpu.memory_space<smem>>
    %533 = vector.broadcast %532 : f32 to vector<4x128xf32>
    %534 = arith.mulf %533, %531 : vector<4x128xf32>
    %535 = arith.addf %517, %534 : vector<4x128xf32>
    %c465 = arith.constant 465 : index
    %536 = memref.load %arg3[%c465] : memref<528xf32, #tpu.memory_space<smem>>
    %537 = vector.broadcast %536 : f32 to vector<4x128xf32>
    %538 = arith.mulf %537, %531 : vector<4x128xf32>
    %539 = arith.addf %521, %538 : vector<4x128xf32>
    %c466 = arith.constant 466 : index
    %540 = memref.load %arg3[%c466] : memref<528xf32, #tpu.memory_space<smem>>
    %541 = vector.broadcast %540 : f32 to vector<4x128xf32>
    %542 = arith.mulf %541, %531 : vector<4x128xf32>
    %543 = arith.addf %525, %542 : vector<4x128xf32>
    %c467 = arith.constant 467 : index
    %544 = memref.load %arg3[%c467] : memref<528xf32, #tpu.memory_space<smem>>
    %545 = vector.broadcast %544 : f32 to vector<4x128xf32>
    %546 = arith.mulf %545, %531 : vector<4x128xf32>
    %547 = arith.addf %529, %546 : vector<4x128xf32>
    %c0_100 = arith.constant 0 : index
    %c0_101 = arith.constant 0 : index
    %c0_102 = arith.constant 0 : index
    %c455 = arith.constant 455 : index
    %548 = vector.load %arg2[%c0_100, %c0_101, %c0_102, %c455] : memref<1x4x4x590xf32, #tpu.memory_space<vmem>>, vector<1x1x4x128xf32>
    %549 = vector.shape_cast %548 : vector<1x1x4x128xf32> to vector<4x128xf32>
    %c480 = arith.constant 480 : index
    %550 = memref.load %arg3[%c480] : memref<528xf32, #tpu.memory_space<smem>>
    %551 = vector.broadcast %550 : f32 to vector<4x128xf32>
    %552 = arith.mulf %551, %549 : vector<4x128xf32>
    %553 = arith.addf %535, %552 : vector<4x128xf32>
    %c481 = arith.constant 481 : index
    %554 = memref.load %arg3[%c481] : memref<528xf32, #tpu.memory_space<smem>>
    %555 = vector.broadcast %554 : f32 to vector<4x128xf32>
    %556 = arith.mulf %555, %549 : vector<4x128xf32>
    %557 = arith.addf %539, %556 : vector<4x128xf32>
    %c482 = arith.constant 482 : index
    %558 = memref.load %arg3[%c482] : memref<528xf32, #tpu.memory_space<smem>>
    %559 = vector.broadcast %558 : f32 to vector<4x128xf32>
    %560 = arith.mulf %559, %549 : vector<4x128xf32>
    %561 = arith.addf %543, %560 : vector<4x128xf32>
    %c483 = arith.constant 483 : index
    %562 = memref.load %arg3[%c483] : memref<528xf32, #tpu.memory_space<smem>>
    %563 = vector.broadcast %562 : f32 to vector<4x128xf32>
    %564 = arith.mulf %563, %549 : vector<4x128xf32>
    %565 = arith.addf %547, %564 : vector<4x128xf32>
    %c0_103 = arith.constant 0 : index
    %c0_104 = arith.constant 0 : index
    %c0_105 = arith.constant 0 : index
    %c462 = arith.constant 462 : index
    %566 = vector.load %arg2[%c0_103, %c0_104, %c0_105, %c462] : memref<1x4x4x590xf32, #tpu.memory_space<vmem>>, vector<1x1x4x128xf32>
    %567 = vector.shape_cast %566 : vector<1x1x4x128xf32> to vector<4x128xf32>
    %c496 = arith.constant 496 : index
    %568 = memref.load %arg3[%c496] : memref<528xf32, #tpu.memory_space<smem>>
    %569 = vector.broadcast %568 : f32 to vector<4x128xf32>
    %570 = arith.mulf %569, %567 : vector<4x128xf32>
    %571 = arith.addf %553, %570 : vector<4x128xf32>
    %c497 = arith.constant 497 : index
    %572 = memref.load %arg3[%c497] : memref<528xf32, #tpu.memory_space<smem>>
    %573 = vector.broadcast %572 : f32 to vector<4x128xf32>
    %574 = arith.mulf %573, %567 : vector<4x128xf32>
    %575 = arith.addf %557, %574 : vector<4x128xf32>
    %c498 = arith.constant 498 : index
    %576 = memref.load %arg3[%c498] : memref<528xf32, #tpu.memory_space<smem>>
    %577 = vector.broadcast %576 : f32 to vector<4x128xf32>
    %578 = arith.mulf %577, %567 : vector<4x128xf32>
    %579 = arith.addf %561, %578 : vector<4x128xf32>
    %c499 = arith.constant 499 : index
    %580 = memref.load %arg3[%c499] : memref<528xf32, #tpu.memory_space<smem>>
    %581 = vector.broadcast %580 : f32 to vector<4x128xf32>
    %582 = arith.mulf %581, %567 : vector<4x128xf32>
    %583 = arith.addf %565, %582 : vector<4x128xf32>
    %c0_106 = arith.constant 0 : index
    %c0_107 = arith.constant 0 : index
    %c0_108 = arith.constant 0 : index
    %c231 = arith.constant 231 : index
    %584 = vector.load %arg2[%c0_106, %c0_107, %c0_108, %c231] : memref<1x4x4x590xf32, #tpu.memory_space<vmem>>, vector<1x1x4x128xf32>
    %585 = vector.shape_cast %584 : vector<1x1x4x128xf32> to vector<4x128xf32>
    %c512 = arith.constant 512 : index
    %586 = memref.load %arg3[%c512] : memref<528xf32, #tpu.memory_space<smem>>
    %587 = vector.broadcast %586 : f32 to vector<4x128xf32>
    %588 = arith.mulf %587, %585 : vector<4x128xf32>
    %589 = arith.addf %571, %588 : vector<4x128xf32>
    %c513 = arith.constant 513 : index
    %590 = memref.load %arg3[%c513] : memref<528xf32, #tpu.memory_space<smem>>
    %591 = vector.broadcast %590 : f32 to vector<4x128xf32>
    %592 = arith.mulf %591, %585 : vector<4x128xf32>
    %593 = arith.addf %575, %592 : vector<4x128xf32>
    %c514 = arith.constant 514 : index
    %594 = memref.load %arg3[%c514] : memref<528xf32, #tpu.memory_space<smem>>
    %595 = vector.broadcast %594 : f32 to vector<4x128xf32>
    %596 = arith.mulf %595, %585 : vector<4x128xf32>
    %597 = arith.addf %579, %596 : vector<4x128xf32>
    %c515 = arith.constant 515 : index
    %598 = memref.load %arg3[%c515] : memref<528xf32, #tpu.memory_space<smem>>
    %599 = vector.broadcast %598 : f32 to vector<4x128xf32>
    %600 = arith.mulf %599, %585 : vector<4x128xf32>
    %601 = arith.addf %583, %600 : vector<4x128xf32>
    %c0_109 = arith.constant 0 : index
    %c1_110 = arith.constant 1 : index
    %c0_111 = arith.constant 0 : index
    %c198_112 = arith.constant 198 : index
    %602 = vector.load %arg2[%c0_109, %c1_110, %c0_111, %c198_112] : memref<1x4x4x590xf32, #tpu.memory_space<vmem>>, vector<1x1x4x128xf32>
    %603 = vector.shape_cast %602 : vector<1x1x4x128xf32> to vector<4x128xf32>
    %c4 = arith.constant 4 : index
    %604 = memref.load %arg3[%c4] : memref<528xf32, #tpu.memory_space<smem>>
    %605 = vector.broadcast %604 : f32 to vector<4x128xf32>
    %606 = arith.mulf %605, %603 : vector<4x128xf32>
    %607 = arith.addf %589, %606 : vector<4x128xf32>
    %c5 = arith.constant 5 : index
    %608 = memref.load %arg3[%c5] : memref<528xf32, #tpu.memory_space<smem>>
    %609 = vector.broadcast %608 : f32 to vector<4x128xf32>
    %610 = arith.mulf %609, %603 : vector<4x128xf32>
    %611 = arith.addf %593, %610 : vector<4x128xf32>
    %c6 = arith.constant 6 : index
    %612 = memref.load %arg3[%c6] : memref<528xf32, #tpu.memory_space<smem>>
    %613 = vector.broadcast %612 : f32 to vector<4x128xf32>
    %614 = arith.mulf %613, %603 : vector<4x128xf32>
    %615 = arith.addf %597, %614 : vector<4x128xf32>
    %c7_113 = arith.constant 7 : index
    %616 = memref.load %arg3[%c7_113] : memref<528xf32, #tpu.memory_space<smem>>
    %617 = vector.broadcast %616 : f32 to vector<4x128xf32>
    %618 = arith.mulf %617, %603 : vector<4x128xf32>
    %619 = arith.addf %601, %618 : vector<4x128xf32>
    %c0_114 = arith.constant 0 : index
    %c1_115 = arith.constant 1 : index
    %c0_116 = arith.constant 0 : index
    %c199_117 = arith.constant 199 : index
    %620 = vector.load %arg2[%c0_114, %c1_115, %c0_116, %c199_117] : memref<1x4x4x590xf32, #tpu.memory_space<vmem>>, vector<1x1x4x128xf32>
    %621 = vector.shape_cast %620 : vector<1x1x4x128xf32> to vector<4x128xf32>
    %c20 = arith.constant 20 : index
    %622 = memref.load %arg3[%c20] : memref<528xf32, #tpu.memory_space<smem>>
    %623 = vector.broadcast %622 : f32 to vector<4x128xf32>
    %624 = arith.mulf %623, %621 : vector<4x128xf32>
    %625 = arith.addf %607, %624 : vector<4x128xf32>
    %c21 = arith.constant 21 : index
    %626 = memref.load %arg3[%c21] : memref<528xf32, #tpu.memory_space<smem>>
    %627 = vector.broadcast %626 : f32 to vector<4x128xf32>
    %628 = arith.mulf %627, %621 : vector<4x128xf32>
    %629 = arith.addf %611, %628 : vector<4x128xf32>
    %c22 = arith.constant 22 : index
    %630 = memref.load %arg3[%c22] : memref<528xf32, #tpu.memory_space<smem>>
    %631 = vector.broadcast %630 : f32 to vector<4x128xf32>
    %632 = arith.mulf %631, %621 : vector<4x128xf32>
    %633 = arith.addf %615, %632 : vector<4x128xf32>
    %c23 = arith.constant 23 : index
    %634 = memref.load %arg3[%c23] : memref<528xf32, #tpu.memory_space<smem>>
    %635 = vector.broadcast %634 : f32 to vector<4x128xf32>
    %636 = arith.mulf %635, %621 : vector<4x128xf32>
    %637 = arith.addf %619, %636 : vector<4x128xf32>
    %c0_118 = arith.constant 0 : index
    %c1_119 = arith.constant 1 : index
    %c0_120 = arith.constant 0 : index
    %c200_121 = arith.constant 200 : index
    %638 = vector.load %arg2[%c0_118, %c1_119, %c0_120, %c200_121] : memref<1x4x4x590xf32, #tpu.memory_space<vmem>>, vector<1x1x4x128xf32>
    %639 = vector.shape_cast %638 : vector<1x1x4x128xf32> to vector<4x128xf32>
    %c36 = arith.constant 36 : index
    %640 = memref.load %arg3[%c36] : memref<528xf32, #tpu.memory_space<smem>>
    %641 = vector.broadcast %640 : f32 to vector<4x128xf32>
    %642 = arith.mulf %641, %639 : vector<4x128xf32>
    %643 = arith.addf %625, %642 : vector<4x128xf32>
    %c37 = arith.constant 37 : index
    %644 = memref.load %arg3[%c37] : memref<528xf32, #tpu.memory_space<smem>>
    %645 = vector.broadcast %644 : f32 to vector<4x128xf32>
    %646 = arith.mulf %645, %639 : vector<4x128xf32>
    %647 = arith.addf %629, %646 : vector<4x128xf32>
    %c38 = arith.constant 38 : index
    %648 = memref.load %arg3[%c38] : memref<528xf32, #tpu.memory_space<smem>>
    %649 = vector.broadcast %648 : f32 to vector<4x128xf32>
    %650 = arith.mulf %649, %639 : vector<4x128xf32>
    %651 = arith.addf %633, %650 : vector<4x128xf32>
    %c39 = arith.constant 39 : index
    %652 = memref.load %arg3[%c39] : memref<528xf32, #tpu.memory_space<smem>>
    %653 = vector.broadcast %652 : f32 to vector<4x128xf32>
    %654 = arith.mulf %653, %639 : vector<4x128xf32>
    %655 = arith.addf %637, %654 : vector<4x128xf32>
    %c0_122 = arith.constant 0 : index
    %c1_123 = arith.constant 1 : index
    %c0_124 = arith.constant 0 : index
    %c230_125 = arith.constant 230 : index
    %656 = vector.load %arg2[%c0_122, %c1_123, %c0_124, %c230_125] : memref<1x4x4x590xf32, #tpu.memory_space<vmem>>, vector<1x1x4x128xf32>
    %657 = vector.shape_cast %656 : vector<1x1x4x128xf32> to vector<4x128xf32>
    %c52 = arith.constant 52 : index
    %658 = memref.load %arg3[%c52] : memref<528xf32, #tpu.memory_space<smem>>
    %659 = vector.broadcast %658 : f32 to vector<4x128xf32>
    %660 = arith.mulf %659, %657 : vector<4x128xf32>
    %661 = arith.addf %643, %660 : vector<4x128xf32>
    %c53 = arith.constant 53 : index
    %662 = memref.load %arg3[%c53] : memref<528xf32, #tpu.memory_space<smem>>
    %663 = vector.broadcast %662 : f32 to vector<4x128xf32>
    %664 = arith.mulf %663, %657 : vector<4x128xf32>
    %665 = arith.addf %647, %664 : vector<4x128xf32>
    %c54 = arith.constant 54 : index
    %666 = memref.load %arg3[%c54] : memref<528xf32, #tpu.memory_space<smem>>
    %667 = vector.broadcast %666 : f32 to vector<4x128xf32>
    %668 = arith.mulf %667, %657 : vector<4x128xf32>
    %669 = arith.addf %651, %668 : vector<4x128xf32>
    %c55 = arith.constant 55 : index
    %670 = memref.load %arg3[%c55] : memref<528xf32, #tpu.memory_space<smem>>
    %671 = vector.broadcast %670 : f32 to vector<4x128xf32>
    %672 = arith.mulf %671, %657 : vector<4x128xf32>
    %673 = arith.addf %655, %672 : vector<4x128xf32>
    %c0_126 = arith.constant 0 : index
    %c1_127 = arith.constant 1 : index
    %c0_128 = arith.constant 0 : index
    %c232_129 = arith.constant 232 : index
    %674 = vector.load %arg2[%c0_126, %c1_127, %c0_128, %c232_129] : memref<1x4x4x590xf32, #tpu.memory_space<vmem>>, vector<1x1x4x128xf32>
    %675 = vector.shape_cast %674 : vector<1x1x4x128xf32> to vector<4x128xf32>
    %c68 = arith.constant 68 : index
    %676 = memref.load %arg3[%c68] : memref<528xf32, #tpu.memory_space<smem>>
    %677 = vector.broadcast %676 : f32 to vector<4x128xf32>
    %678 = arith.mulf %677, %675 : vector<4x128xf32>
    %679 = arith.addf %661, %678 : vector<4x128xf32>
    %c69 = arith.constant 69 : index
    %680 = memref.load %arg3[%c69] : memref<528xf32, #tpu.memory_space<smem>>
    %681 = vector.broadcast %680 : f32 to vector<4x128xf32>
    %682 = arith.mulf %681, %675 : vector<4x128xf32>
    %683 = arith.addf %665, %682 : vector<4x128xf32>
    %c70 = arith.constant 70 : index
    %684 = memref.load %arg3[%c70] : memref<528xf32, #tpu.memory_space<smem>>
    %685 = vector.broadcast %684 : f32 to vector<4x128xf32>
    %686 = arith.mulf %685, %675 : vector<4x128xf32>
    %687 = arith.addf %669, %686 : vector<4x128xf32>
    %c71_130 = arith.constant 71 : index
    %688 = memref.load %arg3[%c71_130] : memref<528xf32, #tpu.memory_space<smem>>
    %689 = vector.broadcast %688 : f32 to vector<4x128xf32>
    %690 = arith.mulf %689, %675 : vector<4x128xf32>
    %691 = arith.addf %673, %690 : vector<4x128xf32>
    %c0_131 = arith.constant 0 : index
    %c1_132 = arith.constant 1 : index
    %c0_133 = arith.constant 0 : index
    %c262_134 = arith.constant 262 : index
    %692 = vector.load %arg2[%c0_131, %c1_132, %c0_133, %c262_134] : memref<1x4x4x590xf32, #tpu.memory_space<vmem>>, vector<1x1x4x128xf32>
    %693 = vector.shape_cast %692 : vector<1x1x4x128xf32> to vector<4x128xf32>
    %c84 = arith.constant 84 : index
    %694 = memref.load %arg3[%c84] : memref<528xf32, #tpu.memory_space<smem>>
    %695 = vector.broadcast %694 : f32 to vector<4x128xf32>
    %696 = arith.mulf %695, %693 : vector<4x128xf32>
    %697 = arith.addf %679, %696 : vector<4x128xf32>
    %c85 = arith.constant 85 : index
    %698 = memref.load %arg3[%c85] : memref<528xf32, #tpu.memory_space<smem>>
    %699 = vector.broadcast %698 : f32 to vector<4x128xf32>
    %700 = arith.mulf %699, %693 : vector<4x128xf32>
    %701 = arith.addf %683, %700 : vector<4x128xf32>
    %c86 = arith.constant 86 : index
    %702 = memref.load %arg3[%c86] : memref<528xf32, #tpu.memory_space<smem>>
    %703 = vector.broadcast %702 : f32 to vector<4x128xf32>
    %704 = arith.mulf %703, %693 : vector<4x128xf32>
    %705 = arith.addf %687, %704 : vector<4x128xf32>
    %c87 = arith.constant 87 : index
    %706 = memref.load %arg3[%c87] : memref<528xf32, #tpu.memory_space<smem>>
    %707 = vector.broadcast %706 : f32 to vector<4x128xf32>
    %708 = arith.mulf %707, %693 : vector<4x128xf32>
    %709 = arith.addf %691, %708 : vector<4x128xf32>
    %c0_135 = arith.constant 0 : index
    %c1_136 = arith.constant 1 : index
    %c0_137 = arith.constant 0 : index
    %c263_138 = arith.constant 263 : index
    %710 = vector.load %arg2[%c0_135, %c1_136, %c0_137, %c263_138] : memref<1x4x4x590xf32, #tpu.memory_space<vmem>>, vector<1x1x4x128xf32>
    %711 = vector.shape_cast %710 : vector<1x1x4x128xf32> to vector<4x128xf32>
    %c100 = arith.constant 100 : index
    %712 = memref.load %arg3[%c100] : memref<528xf32, #tpu.memory_space<smem>>
    %713 = vector.broadcast %712 : f32 to vector<4x128xf32>
    %714 = arith.mulf %713, %711 : vector<4x128xf32>
    %715 = arith.addf %697, %714 : vector<4x128xf32>
    %c101 = arith.constant 101 : index
    %716 = memref.load %arg3[%c101] : memref<528xf32, #tpu.memory_space<smem>>
    %717 = vector.broadcast %716 : f32 to vector<4x128xf32>
    %718 = arith.mulf %717, %711 : vector<4x128xf32>
    %719 = arith.addf %701, %718 : vector<4x128xf32>
    %c102 = arith.constant 102 : index
    %720 = memref.load %arg3[%c102] : memref<528xf32, #tpu.memory_space<smem>>
    %721 = vector.broadcast %720 : f32 to vector<4x128xf32>
    %722 = arith.mulf %721, %711 : vector<4x128xf32>
    %723 = arith.addf %705, %722 : vector<4x128xf32>
    %c103 = arith.constant 103 : index
    %724 = memref.load %arg3[%c103] : memref<528xf32, #tpu.memory_space<smem>>
    %725 = vector.broadcast %724 : f32 to vector<4x128xf32>
    %726 = arith.mulf %725, %711 : vector<4x128xf32>
    %727 = arith.addf %709, %726 : vector<4x128xf32>
    %c0_139 = arith.constant 0 : index
    %c1_140 = arith.constant 1 : index
    %c0_141 = arith.constant 0 : index
    %c264_142 = arith.constant 264 : index
    %728 = vector.load %arg2[%c0_139, %c1_140, %c0_141, %c264_142] : memref<1x4x4x590xf32, #tpu.memory_space<vmem>>, vector<1x1x4x128xf32>
    %729 = vector.shape_cast %728 : vector<1x1x4x128xf32> to vector<4x128xf32>
    %c116 = arith.constant 116 : index
    %730 = memref.load %arg3[%c116] : memref<528xf32, #tpu.memory_space<smem>>
    %731 = vector.broadcast %730 : f32 to vector<4x128xf32>
    %732 = arith.mulf %731, %729 : vector<4x128xf32>
    %733 = arith.addf %715, %732 : vector<4x128xf32>
    %c117 = arith.constant 117 : index
    %734 = memref.load %arg3[%c117] : memref<528xf32, #tpu.memory_space<smem>>
    %735 = vector.broadcast %734 : f32 to vector<4x128xf32>
    %736 = arith.mulf %735, %729 : vector<4x128xf32>
    %737 = arith.addf %719, %736 : vector<4x128xf32>
    %c118 = arith.constant 118 : index
    %738 = memref.load %arg3[%c118] : memref<528xf32, #tpu.memory_space<smem>>
    %739 = vector.broadcast %738 : f32 to vector<4x128xf32>
    %740 = arith.mulf %739, %729 : vector<4x128xf32>
    %741 = arith.addf %723, %740 : vector<4x128xf32>
    %c119 = arith.constant 119 : index
    %742 = memref.load %arg3[%c119] : memref<528xf32, #tpu.memory_space<smem>>
    %743 = vector.broadcast %742 : f32 to vector<4x128xf32>
    %744 = arith.mulf %743, %729 : vector<4x128xf32>
    %745 = arith.addf %727, %744 : vector<4x128xf32>
    %c0_143 = arith.constant 0 : index
    %c1_144 = arith.constant 1 : index
    %c0_145 = arith.constant 0 : index
    %c132_146 = arith.constant 132 : index
    %746 = vector.load %arg2[%c0_143, %c1_144, %c0_145, %c132_146] : memref<1x4x4x590xf32, #tpu.memory_space<vmem>>, vector<1x1x4x128xf32>
    %747 = vector.shape_cast %746 : vector<1x1x4x128xf32> to vector<4x128xf32>
    %c132_147 = arith.constant 132 : index
    %748 = memref.load %arg3[%c132_147] : memref<528xf32, #tpu.memory_space<smem>>
    %749 = vector.broadcast %748 : f32 to vector<4x128xf32>
    %750 = arith.mulf %749, %747 : vector<4x128xf32>
    %751 = arith.addf %733, %750 : vector<4x128xf32>
    %c133 = arith.constant 133 : index
    %752 = memref.load %arg3[%c133] : memref<528xf32, #tpu.memory_space<smem>>
    %753 = vector.broadcast %752 : f32 to vector<4x128xf32>
    %754 = arith.mulf %753, %747 : vector<4x128xf32>
    %755 = arith.addf %737, %754 : vector<4x128xf32>
    %c134 = arith.constant 134 : index
    %756 = memref.load %arg3[%c134] : memref<528xf32, #tpu.memory_space<smem>>
    %757 = vector.broadcast %756 : f32 to vector<4x128xf32>
    %758 = arith.mulf %757, %747 : vector<4x128xf32>
    %759 = arith.addf %741, %758 : vector<4x128xf32>
    %c135_148 = arith.constant 135 : index
    %760 = memref.load %arg3[%c135_148] : memref<528xf32, #tpu.memory_space<smem>>
    %761 = vector.broadcast %760 : f32 to vector<4x128xf32>
    %762 = arith.mulf %761, %747 : vector<4x128xf32>
    %763 = arith.addf %745, %762 : vector<4x128xf32>
    %c0_149 = arith.constant 0 : index
    %c1_150 = arith.constant 1 : index
    %c0_151 = arith.constant 0 : index
    %c135_152 = arith.constant 135 : index
    %764 = vector.load %arg2[%c0_149, %c1_150, %c0_151, %c135_152] : memref<1x4x4x590xf32, #tpu.memory_space<vmem>>, vector<1x1x4x128xf32>
    %765 = vector.shape_cast %764 : vector<1x1x4x128xf32> to vector<4x128xf32>
    %c148 = arith.constant 148 : index
    %766 = memref.load %arg3[%c148] : memref<528xf32, #tpu.memory_space<smem>>
    %767 = vector.broadcast %766 : f32 to vector<4x128xf32>
    %768 = arith.mulf %767, %765 : vector<4x128xf32>
    %769 = arith.addf %751, %768 : vector<4x128xf32>
    %c149 = arith.constant 149 : index
    %770 = memref.load %arg3[%c149] : memref<528xf32, #tpu.memory_space<smem>>
    %771 = vector.broadcast %770 : f32 to vector<4x128xf32>
    %772 = arith.mulf %771, %765 : vector<4x128xf32>
    %773 = arith.addf %755, %772 : vector<4x128xf32>
    %c150 = arith.constant 150 : index
    %774 = memref.load %arg3[%c150] : memref<528xf32, #tpu.memory_space<smem>>
    %775 = vector.broadcast %774 : f32 to vector<4x128xf32>
    %776 = arith.mulf %775, %765 : vector<4x128xf32>
    %777 = arith.addf %759, %776 : vector<4x128xf32>
    %c151 = arith.constant 151 : index
    %778 = memref.load %arg3[%c151] : memref<528xf32, #tpu.memory_space<smem>>
    %779 = vector.broadcast %778 : f32 to vector<4x128xf32>
    %780 = arith.mulf %779, %765 : vector<4x128xf32>
    %781 = arith.addf %763, %780 : vector<4x128xf32>
    %c0_153 = arith.constant 0 : index
    %c1_154 = arith.constant 1 : index
    %c0_155 = arith.constant 0 : index
    %c138_156 = arith.constant 138 : index
    %782 = vector.load %arg2[%c0_153, %c1_154, %c0_155, %c138_156] : memref<1x4x4x590xf32, #tpu.memory_space<vmem>>, vector<1x1x4x128xf32>
    %783 = vector.shape_cast %782 : vector<1x1x4x128xf32> to vector<4x128xf32>
    %c164 = arith.constant 164 : index
    %784 = memref.load %arg3[%c164] : memref<528xf32, #tpu.memory_space<smem>>
    %785 = vector.broadcast %784 : f32 to vector<4x128xf32>
    %786 = arith.mulf %785, %783 : vector<4x128xf32>
    %787 = arith.addf %769, %786 : vector<4x128xf32>
    %c165 = arith.constant 165 : index
    %788 = memref.load %arg3[%c165] : memref<528xf32, #tpu.memory_space<smem>>
    %789 = vector.broadcast %788 : f32 to vector<4x128xf32>
    %790 = arith.mulf %789, %783 : vector<4x128xf32>
    %791 = arith.addf %773, %790 : vector<4x128xf32>
    %c166 = arith.constant 166 : index
    %792 = memref.load %arg3[%c166] : memref<528xf32, #tpu.memory_space<smem>>
    %793 = vector.broadcast %792 : f32 to vector<4x128xf32>
    %794 = arith.mulf %793, %783 : vector<4x128xf32>
    %795 = arith.addf %777, %794 : vector<4x128xf32>
    %c167 = arith.constant 167 : index
    %796 = memref.load %arg3[%c167] : memref<528xf32, #tpu.memory_space<smem>>
    %797 = vector.broadcast %796 : f32 to vector<4x128xf32>
    %798 = arith.mulf %797, %783 : vector<4x128xf32>
    %799 = arith.addf %781, %798 : vector<4x128xf32>
    %c0_157 = arith.constant 0 : index
    %c1_158 = arith.constant 1 : index
    %c0_159 = arith.constant 0 : index
    %c228_160 = arith.constant 228 : index
    %800 = vector.load %arg2[%c0_157, %c1_158, %c0_159, %c228_160] : memref<1x4x4x590xf32, #tpu.memory_space<vmem>>, vector<1x1x4x128xf32>
    %801 = vector.shape_cast %800 : vector<1x1x4x128xf32> to vector<4x128xf32>
    %c180 = arith.constant 180 : index
    %802 = memref.load %arg3[%c180] : memref<528xf32, #tpu.memory_space<smem>>
    %803 = vector.broadcast %802 : f32 to vector<4x128xf32>
    %804 = arith.mulf %803, %801 : vector<4x128xf32>
    %805 = arith.addf %787, %804 : vector<4x128xf32>
    %c181 = arith.constant 181 : index
    %806 = memref.load %arg3[%c181] : memref<528xf32, #tpu.memory_space<smem>>
    %807 = vector.broadcast %806 : f32 to vector<4x128xf32>
    %808 = arith.mulf %807, %801 : vector<4x128xf32>
    %809 = arith.addf %791, %808 : vector<4x128xf32>
    %c182 = arith.constant 182 : index
    %810 = memref.load %arg3[%c182] : memref<528xf32, #tpu.memory_space<smem>>
    %811 = vector.broadcast %810 : f32 to vector<4x128xf32>
    %812 = arith.mulf %811, %801 : vector<4x128xf32>
    %813 = arith.addf %795, %812 : vector<4x128xf32>
    %c183 = arith.constant 183 : index
    %814 = memref.load %arg3[%c183] : memref<528xf32, #tpu.memory_space<smem>>
    %815 = vector.broadcast %814 : f32 to vector<4x128xf32>
    %816 = arith.mulf %815, %801 : vector<4x128xf32>
    %817 = arith.addf %799, %816 : vector<4x128xf32>
    %c0_161 = arith.constant 0 : index
    %c1_162 = arith.constant 1 : index
    %c0_163 = arith.constant 0 : index
    %c234_164 = arith.constant 234 : index
    %818 = vector.load %arg2[%c0_161, %c1_162, %c0_163, %c234_164] : memref<1x4x4x590xf32, #tpu.memory_space<vmem>>, vector<1x1x4x128xf32>
    %819 = vector.shape_cast %818 : vector<1x1x4x128xf32> to vector<4x128xf32>
    %c196 = arith.constant 196 : index
    %820 = memref.load %arg3[%c196] : memref<528xf32, #tpu.memory_space<smem>>
    %821 = vector.broadcast %820 : f32 to vector<4x128xf32>
    %822 = arith.mulf %821, %819 : vector<4x128xf32>
    %823 = arith.addf %805, %822 : vector<4x128xf32>
    %c197 = arith.constant 197 : index
    %824 = memref.load %arg3[%c197] : memref<528xf32, #tpu.memory_space<smem>>
    %825 = vector.broadcast %824 : f32 to vector<4x128xf32>
    %826 = arith.mulf %825, %819 : vector<4x128xf32>
    %827 = arith.addf %809, %826 : vector<4x128xf32>
    %c198_165 = arith.constant 198 : index
    %828 = memref.load %arg3[%c198_165] : memref<528xf32, #tpu.memory_space<smem>>
    %829 = vector.broadcast %828 : f32 to vector<4x128xf32>
    %830 = arith.mulf %829, %819 : vector<4x128xf32>
    %831 = arith.addf %813, %830 : vector<4x128xf32>
    %c199_166 = arith.constant 199 : index
    %832 = memref.load %arg3[%c199_166] : memref<528xf32, #tpu.memory_space<smem>>
    %833 = vector.broadcast %832 : f32 to vector<4x128xf32>
    %834 = arith.mulf %833, %819 : vector<4x128xf32>
    %835 = arith.addf %817, %834 : vector<4x128xf32>
    %c0_167 = arith.constant 0 : index
    %c1_168 = arith.constant 1 : index
    %c0_169 = arith.constant 0 : index
    %c324_170 = arith.constant 324 : index
    %836 = vector.load %arg2[%c0_167, %c1_168, %c0_169, %c324_170] : memref<1x4x4x590xf32, #tpu.memory_space<vmem>>, vector<1x1x4x128xf32>
    %837 = vector.shape_cast %836 : vector<1x1x4x128xf32> to vector<4x128xf32>
    %c212 = arith.constant 212 : index
    %838 = memref.load %arg3[%c212] : memref<528xf32, #tpu.memory_space<smem>>
    %839 = vector.broadcast %838 : f32 to vector<4x128xf32>
    %840 = arith.mulf %839, %837 : vector<4x128xf32>
    %841 = arith.addf %823, %840 : vector<4x128xf32>
    %c213 = arith.constant 213 : index
    %842 = memref.load %arg3[%c213] : memref<528xf32, #tpu.memory_space<smem>>
    %843 = vector.broadcast %842 : f32 to vector<4x128xf32>
    %844 = arith.mulf %843, %837 : vector<4x128xf32>
    %845 = arith.addf %827, %844 : vector<4x128xf32>
    %c214 = arith.constant 214 : index
    %846 = memref.load %arg3[%c214] : memref<528xf32, #tpu.memory_space<smem>>
    %847 = vector.broadcast %846 : f32 to vector<4x128xf32>
    %848 = arith.mulf %847, %837 : vector<4x128xf32>
    %849 = arith.addf %831, %848 : vector<4x128xf32>
    %c215 = arith.constant 215 : index
    %850 = memref.load %arg3[%c215] : memref<528xf32, #tpu.memory_space<smem>>
    %851 = vector.broadcast %850 : f32 to vector<4x128xf32>
    %852 = arith.mulf %851, %837 : vector<4x128xf32>
    %853 = arith.addf %835, %852 : vector<4x128xf32>
    %c0_171 = arith.constant 0 : index
    %c1_172 = arith.constant 1 : index
    %c0_173 = arith.constant 0 : index
    %c327_174 = arith.constant 327 : index
    %854 = vector.load %arg2[%c0_171, %c1_172, %c0_173, %c327_174] : memref<1x4x4x590xf32, #tpu.memory_space<vmem>>, vector<1x1x4x128xf32>
    %855 = vector.shape_cast %854 : vector<1x1x4x128xf32> to vector<4x128xf32>
    %c228_175 = arith.constant 228 : index
    %856 = memref.load %arg3[%c228_175] : memref<528xf32, #tpu.memory_space<smem>>
    %857 = vector.broadcast %856 : f32 to vector<4x128xf32>
    %858 = arith.mulf %857, %855 : vector<4x128xf32>
    %859 = arith.addf %841, %858 : vector<4x128xf32>
    %c229 = arith.constant 229 : index
    %860 = memref.load %arg3[%c229] : memref<528xf32, #tpu.memory_space<smem>>
    %861 = vector.broadcast %860 : f32 to vector<4x128xf32>
    %862 = arith.mulf %861, %855 : vector<4x128xf32>
    %863 = arith.addf %845, %862 : vector<4x128xf32>
    %c230_176 = arith.constant 230 : index
    %864 = memref.load %arg3[%c230_176] : memref<528xf32, #tpu.memory_space<smem>>
    %865 = vector.broadcast %864 : f32 to vector<4x128xf32>
    %866 = arith.mulf %865, %855 : vector<4x128xf32>
    %867 = arith.addf %849, %866 : vector<4x128xf32>
    %c231_177 = arith.constant 231 : index
    %868 = memref.load %arg3[%c231_177] : memref<528xf32, #tpu.memory_space<smem>>
    %869 = vector.broadcast %868 : f32 to vector<4x128xf32>
    %870 = arith.mulf %869, %855 : vector<4x128xf32>
    %871 = arith.addf %853, %870 : vector<4x128xf32>
    %c0_178 = arith.constant 0 : index
    %c1_179 = arith.constant 1 : index
    %c0_180 = arith.constant 0 : index
    %c330_181 = arith.constant 330 : index
    %872 = vector.load %arg2[%c0_178, %c1_179, %c0_180, %c330_181] : memref<1x4x4x590xf32, #tpu.memory_space<vmem>>, vector<1x1x4x128xf32>
    %873 = vector.shape_cast %872 : vector<1x1x4x128xf32> to vector<4x128xf32>
    %c244 = arith.constant 244 : index
    %874 = memref.load %arg3[%c244] : memref<528xf32, #tpu.memory_space<smem>>
    %875 = vector.broadcast %874 : f32 to vector<4x128xf32>
    %876 = arith.mulf %875, %873 : vector<4x128xf32>
    %877 = arith.addf %859, %876 : vector<4x128xf32>
    %c245 = arith.constant 245 : index
    %878 = memref.load %arg3[%c245] : memref<528xf32, #tpu.memory_space<smem>>
    %879 = vector.broadcast %878 : f32 to vector<4x128xf32>
    %880 = arith.mulf %879, %873 : vector<4x128xf32>
    %881 = arith.addf %863, %880 : vector<4x128xf32>
    %c246 = arith.constant 246 : index
    %882 = memref.load %arg3[%c246] : memref<528xf32, #tpu.memory_space<smem>>
    %883 = vector.broadcast %882 : f32 to vector<4x128xf32>
    %884 = arith.mulf %883, %873 : vector<4x128xf32>
    %885 = arith.addf %867, %884 : vector<4x128xf32>
    %c247 = arith.constant 247 : index
    %886 = memref.load %arg3[%c247] : memref<528xf32, #tpu.memory_space<smem>>
    %887 = vector.broadcast %886 : f32 to vector<4x128xf32>
    %888 = arith.mulf %887, %873 : vector<4x128xf32>
    %889 = arith.addf %871, %888 : vector<4x128xf32>
    %c0_182 = arith.constant 0 : index
    %c1_183 = arith.constant 1 : index
    %c0_184 = arith.constant 0 : index
    %c66_185 = arith.constant 66 : index
    %890 = vector.load %arg2[%c0_182, %c1_183, %c0_184, %c66_185] : memref<1x4x4x590xf32, #tpu.memory_space<vmem>>, vector<1x1x4x128xf32>
    %891 = vector.shape_cast %890 : vector<1x1x4x128xf32> to vector<4x128xf32>
    %c260 = arith.constant 260 : index
    %892 = memref.load %arg3[%c260] : memref<528xf32, #tpu.memory_space<smem>>
    %893 = vector.broadcast %892 : f32 to vector<4x128xf32>
    %894 = arith.mulf %893, %891 : vector<4x128xf32>
    %895 = arith.addf %877, %894 : vector<4x128xf32>
    %c261 = arith.constant 261 : index
    %896 = memref.load %arg3[%c261] : memref<528xf32, #tpu.memory_space<smem>>
    %897 = vector.broadcast %896 : f32 to vector<4x128xf32>
    %898 = arith.mulf %897, %891 : vector<4x128xf32>
    %899 = arith.addf %881, %898 : vector<4x128xf32>
    %c262_186 = arith.constant 262 : index
    %900 = memref.load %arg3[%c262_186] : memref<528xf32, #tpu.memory_space<smem>>
    %901 = vector.broadcast %900 : f32 to vector<4x128xf32>
    %902 = arith.mulf %901, %891 : vector<4x128xf32>
    %903 = arith.addf %885, %902 : vector<4x128xf32>
    %c263_187 = arith.constant 263 : index
    %904 = memref.load %arg3[%c263_187] : memref<528xf32, #tpu.memory_space<smem>>
    %905 = vector.broadcast %904 : f32 to vector<4x128xf32>
    %906 = arith.mulf %905, %891 : vector<4x128xf32>
    %907 = arith.addf %889, %906 : vector<4x128xf32>
    %c0_188 = arith.constant 0 : index
    %c1_189 = arith.constant 1 : index
    %c0_190 = arith.constant 0 : index
    %c71_191 = arith.constant 71 : index
    %908 = vector.load %arg2[%c0_188, %c1_189, %c0_190, %c71_191] : memref<1x4x4x590xf32, #tpu.memory_space<vmem>>, vector<1x1x4x128xf32>
    %909 = vector.shape_cast %908 : vector<1x1x4x128xf32> to vector<4x128xf32>
    %c276 = arith.constant 276 : index
    %910 = memref.load %arg3[%c276] : memref<528xf32, #tpu.memory_space<smem>>
    %911 = vector.broadcast %910 : f32 to vector<4x128xf32>
    %912 = arith.mulf %911, %909 : vector<4x128xf32>
    %913 = arith.addf %895, %912 : vector<4x128xf32>
    %c277 = arith.constant 277 : index
    %914 = memref.load %arg3[%c277] : memref<528xf32, #tpu.memory_space<smem>>
    %915 = vector.broadcast %914 : f32 to vector<4x128xf32>
    %916 = arith.mulf %915, %909 : vector<4x128xf32>
    %917 = arith.addf %899, %916 : vector<4x128xf32>
    %c278 = arith.constant 278 : index
    %918 = memref.load %arg3[%c278] : memref<528xf32, #tpu.memory_space<smem>>
    %919 = vector.broadcast %918 : f32 to vector<4x128xf32>
    %920 = arith.mulf %919, %909 : vector<4x128xf32>
    %921 = arith.addf %903, %920 : vector<4x128xf32>
    %c279 = arith.constant 279 : index
    %922 = memref.load %arg3[%c279] : memref<528xf32, #tpu.memory_space<smem>>
    %923 = vector.broadcast %922 : f32 to vector<4x128xf32>
    %924 = arith.mulf %923, %909 : vector<4x128xf32>
    %925 = arith.addf %907, %924 : vector<4x128xf32>
    %c0_192 = arith.constant 0 : index
    %c1_193 = arith.constant 1 : index
    %c0_194 = arith.constant 0 : index
    %c76_195 = arith.constant 76 : index
    %926 = vector.load %arg2[%c0_192, %c1_193, %c0_194, %c76_195] : memref<1x4x4x590xf32, #tpu.memory_space<vmem>>, vector<1x1x4x128xf32>
    %927 = vector.shape_cast %926 : vector<1x1x4x128xf32> to vector<4x128xf32>
    %c292 = arith.constant 292 : index
    %928 = memref.load %arg3[%c292] : memref<528xf32, #tpu.memory_space<smem>>
    %929 = vector.broadcast %928 : f32 to vector<4x128xf32>
    %930 = arith.mulf %929, %927 : vector<4x128xf32>
    %931 = arith.addf %913, %930 : vector<4x128xf32>
    %c293 = arith.constant 293 : index
    %932 = memref.load %arg3[%c293] : memref<528xf32, #tpu.memory_space<smem>>
    %933 = vector.broadcast %932 : f32 to vector<4x128xf32>
    %934 = arith.mulf %933, %927 : vector<4x128xf32>
    %935 = arith.addf %917, %934 : vector<4x128xf32>
    %c294 = arith.constant 294 : index
    %936 = memref.load %arg3[%c294] : memref<528xf32, #tpu.memory_space<smem>>
    %937 = vector.broadcast %936 : f32 to vector<4x128xf32>
    %938 = arith.mulf %937, %927 : vector<4x128xf32>
    %939 = arith.addf %921, %938 : vector<4x128xf32>
    %c295 = arith.constant 295 : index
    %940 = memref.load %arg3[%c295] : memref<528xf32, #tpu.memory_space<smem>>
    %941 = vector.broadcast %940 : f32 to vector<4x128xf32>
    %942 = arith.mulf %941, %927 : vector<4x128xf32>
    %943 = arith.addf %925, %942 : vector<4x128xf32>
    %c0_196 = arith.constant 0 : index
    %c1_197 = arith.constant 1 : index
    %c0_198 = arith.constant 0 : index
    %c226_199 = arith.constant 226 : index
    %944 = vector.load %arg2[%c0_196, %c1_197, %c0_198, %c226_199] : memref<1x4x4x590xf32, #tpu.memory_space<vmem>>, vector<1x1x4x128xf32>
    %945 = vector.shape_cast %944 : vector<1x1x4x128xf32> to vector<4x128xf32>
    %c308 = arith.constant 308 : index
    %946 = memref.load %arg3[%c308] : memref<528xf32, #tpu.memory_space<smem>>
    %947 = vector.broadcast %946 : f32 to vector<4x128xf32>
    %948 = arith.mulf %947, %945 : vector<4x128xf32>
    %949 = arith.addf %931, %948 : vector<4x128xf32>
    %c309 = arith.constant 309 : index
    %950 = memref.load %arg3[%c309] : memref<528xf32, #tpu.memory_space<smem>>
    %951 = vector.broadcast %950 : f32 to vector<4x128xf32>
    %952 = arith.mulf %951, %945 : vector<4x128xf32>
    %953 = arith.addf %935, %952 : vector<4x128xf32>
    %c310 = arith.constant 310 : index
    %954 = memref.load %arg3[%c310] : memref<528xf32, #tpu.memory_space<smem>>
    %955 = vector.broadcast %954 : f32 to vector<4x128xf32>
    %956 = arith.mulf %955, %945 : vector<4x128xf32>
    %957 = arith.addf %939, %956 : vector<4x128xf32>
    %c311 = arith.constant 311 : index
    %958 = memref.load %arg3[%c311] : memref<528xf32, #tpu.memory_space<smem>>
    %959 = vector.broadcast %958 : f32 to vector<4x128xf32>
    %960 = arith.mulf %959, %945 : vector<4x128xf32>
    %961 = arith.addf %943, %960 : vector<4x128xf32>
    %c0_200 = arith.constant 0 : index
    %c1_201 = arith.constant 1 : index
    %c0_202 = arith.constant 0 : index
    %c236_203 = arith.constant 236 : index
    %962 = vector.load %arg2[%c0_200, %c1_201, %c0_202, %c236_203] : memref<1x4x4x590xf32, #tpu.memory_space<vmem>>, vector<1x1x4x128xf32>
    %963 = vector.shape_cast %962 : vector<1x1x4x128xf32> to vector<4x128xf32>
    %c324_204 = arith.constant 324 : index
    %964 = memref.load %arg3[%c324_204] : memref<528xf32, #tpu.memory_space<smem>>
    %965 = vector.broadcast %964 : f32 to vector<4x128xf32>
    %966 = arith.mulf %965, %963 : vector<4x128xf32>
    %967 = arith.addf %949, %966 : vector<4x128xf32>
    %c325 = arith.constant 325 : index
    %968 = memref.load %arg3[%c325] : memref<528xf32, #tpu.memory_space<smem>>
    %969 = vector.broadcast %968 : f32 to vector<4x128xf32>
    %970 = arith.mulf %969, %963 : vector<4x128xf32>
    %971 = arith.addf %953, %970 : vector<4x128xf32>
    %c326 = arith.constant 326 : index
    %972 = memref.load %arg3[%c326] : memref<528xf32, #tpu.memory_space<smem>>
    %973 = vector.broadcast %972 : f32 to vector<4x128xf32>
    %974 = arith.mulf %973, %963 : vector<4x128xf32>
    %975 = arith.addf %957, %974 : vector<4x128xf32>
    %c327_205 = arith.constant 327 : index
    %976 = memref.load %arg3[%c327_205] : memref<528xf32, #tpu.memory_space<smem>>
    %977 = vector.broadcast %976 : f32 to vector<4x128xf32>
    %978 = arith.mulf %977, %963 : vector<4x128xf32>
    %979 = arith.addf %961, %978 : vector<4x128xf32>
    %c0_206 = arith.constant 0 : index
    %c1_207 = arith.constant 1 : index
    %c0_208 = arith.constant 0 : index
    %c386_209 = arith.constant 386 : index
    %980 = vector.load %arg2[%c0_206, %c1_207, %c0_208, %c386_209] : memref<1x4x4x590xf32, #tpu.memory_space<vmem>>, vector<1x1x4x128xf32>
    %981 = vector.shape_cast %980 : vector<1x1x4x128xf32> to vector<4x128xf32>
    %c340 = arith.constant 340 : index
    %982 = memref.load %arg3[%c340] : memref<528xf32, #tpu.memory_space<smem>>
    %983 = vector.broadcast %982 : f32 to vector<4x128xf32>
    %984 = arith.mulf %983, %981 : vector<4x128xf32>
    %985 = arith.addf %967, %984 : vector<4x128xf32>
    %c341 = arith.constant 341 : index
    %986 = memref.load %arg3[%c341] : memref<528xf32, #tpu.memory_space<smem>>
    %987 = vector.broadcast %986 : f32 to vector<4x128xf32>
    %988 = arith.mulf %987, %981 : vector<4x128xf32>
    %989 = arith.addf %971, %988 : vector<4x128xf32>
    %c342 = arith.constant 342 : index
    %990 = memref.load %arg3[%c342] : memref<528xf32, #tpu.memory_space<smem>>
    %991 = vector.broadcast %990 : f32 to vector<4x128xf32>
    %992 = arith.mulf %991, %981 : vector<4x128xf32>
    %993 = arith.addf %975, %992 : vector<4x128xf32>
    %c343 = arith.constant 343 : index
    %994 = memref.load %arg3[%c343] : memref<528xf32, #tpu.memory_space<smem>>
    %995 = vector.broadcast %994 : f32 to vector<4x128xf32>
    %996 = arith.mulf %995, %981 : vector<4x128xf32>
    %997 = arith.addf %979, %996 : vector<4x128xf32>
    %c0_210 = arith.constant 0 : index
    %c1_211 = arith.constant 1 : index
    %c0_212 = arith.constant 0 : index
    %c391_213 = arith.constant 391 : index
    %998 = vector.load %arg2[%c0_210, %c1_211, %c0_212, %c391_213] : memref<1x4x4x590xf32, #tpu.memory_space<vmem>>, vector<1x1x4x128xf32>
    %999 = vector.shape_cast %998 : vector<1x1x4x128xf32> to vector<4x128xf32>
    %c356 = arith.constant 356 : index
    %1000 = memref.load %arg3[%c356] : memref<528xf32, #tpu.memory_space<smem>>
    %1001 = vector.broadcast %1000 : f32 to vector<4x128xf32>
    %1002 = arith.mulf %1001, %999 : vector<4x128xf32>
    %1003 = arith.addf %985, %1002 : vector<4x128xf32>
    %c357 = arith.constant 357 : index
    %1004 = memref.load %arg3[%c357] : memref<528xf32, #tpu.memory_space<smem>>
    %1005 = vector.broadcast %1004 : f32 to vector<4x128xf32>
    %1006 = arith.mulf %1005, %999 : vector<4x128xf32>
    %1007 = arith.addf %989, %1006 : vector<4x128xf32>
    %c358 = arith.constant 358 : index
    %1008 = memref.load %arg3[%c358] : memref<528xf32, #tpu.memory_space<smem>>
    %1009 = vector.broadcast %1008 : f32 to vector<4x128xf32>
    %1010 = arith.mulf %1009, %999 : vector<4x128xf32>
    %1011 = arith.addf %993, %1010 : vector<4x128xf32>
    %c359 = arith.constant 359 : index
    %1012 = memref.load %arg3[%c359] : memref<528xf32, #tpu.memory_space<smem>>
    %1013 = vector.broadcast %1012 : f32 to vector<4x128xf32>
    %1014 = arith.mulf %1013, %999 : vector<4x128xf32>
    %1015 = arith.addf %997, %1014 : vector<4x128xf32>
    %c0_214 = arith.constant 0 : index
    %c1_215 = arith.constant 1 : index
    %c0_216 = arith.constant 0 : index
    %c396_217 = arith.constant 396 : index
    %1016 = vector.load %arg2[%c0_214, %c1_215, %c0_216, %c396_217] : memref<1x4x4x590xf32, #tpu.memory_space<vmem>>, vector<1x1x4x128xf32>
    %1017 = vector.shape_cast %1016 : vector<1x1x4x128xf32> to vector<4x128xf32>
    %c372 = arith.constant 372 : index
    %1018 = memref.load %arg3[%c372] : memref<528xf32, #tpu.memory_space<smem>>
    %1019 = vector.broadcast %1018 : f32 to vector<4x128xf32>
    %1020 = arith.mulf %1019, %1017 : vector<4x128xf32>
    %1021 = arith.addf %1003, %1020 : vector<4x128xf32>
    %c373 = arith.constant 373 : index
    %1022 = memref.load %arg3[%c373] : memref<528xf32, #tpu.memory_space<smem>>
    %1023 = vector.broadcast %1022 : f32 to vector<4x128xf32>
    %1024 = arith.mulf %1023, %1017 : vector<4x128xf32>
    %1025 = arith.addf %1007, %1024 : vector<4x128xf32>
    %c374 = arith.constant 374 : index
    %1026 = memref.load %arg3[%c374] : memref<528xf32, #tpu.memory_space<smem>>
    %1027 = vector.broadcast %1026 : f32 to vector<4x128xf32>
    %1028 = arith.mulf %1027, %1017 : vector<4x128xf32>
    %1029 = arith.addf %1011, %1028 : vector<4x128xf32>
    %c375 = arith.constant 375 : index
    %1030 = memref.load %arg3[%c375] : memref<528xf32, #tpu.memory_space<smem>>
    %1031 = vector.broadcast %1030 : f32 to vector<4x128xf32>
    %1032 = arith.mulf %1031, %1017 : vector<4x128xf32>
    %1033 = arith.addf %1015, %1032 : vector<4x128xf32>
    %c0_218 = arith.constant 0 : index
    %c1_219 = arith.constant 1 : index
    %c0_220 = arith.constant 0 : index
    %c0_221 = arith.constant 0 : index
    %1034 = vector.load %arg2[%c0_218, %c1_219, %c0_220, %c0_221] : memref<1x4x4x590xf32, #tpu.memory_space<vmem>>, vector<1x1x4x128xf32>
    %1035 = vector.shape_cast %1034 : vector<1x1x4x128xf32> to vector<4x128xf32>
    %c388 = arith.constant 388 : index
    %1036 = memref.load %arg3[%c388] : memref<528xf32, #tpu.memory_space<smem>>
    %1037 = vector.broadcast %1036 : f32 to vector<4x128xf32>
    %1038 = arith.mulf %1037, %1035 : vector<4x128xf32>
    %1039 = arith.addf %1021, %1038 : vector<4x128xf32>
    %c389 = arith.constant 389 : index
    %1040 = memref.load %arg3[%c389] : memref<528xf32, #tpu.memory_space<smem>>
    %1041 = vector.broadcast %1040 : f32 to vector<4x128xf32>
    %1042 = arith.mulf %1041, %1035 : vector<4x128xf32>
    %1043 = arith.addf %1025, %1042 : vector<4x128xf32>
    %c390 = arith.constant 390 : index
    %1044 = memref.load %arg3[%c390] : memref<528xf32, #tpu.memory_space<smem>>
    %1045 = vector.broadcast %1044 : f32 to vector<4x128xf32>
    %1046 = arith.mulf %1045, %1035 : vector<4x128xf32>
    %1047 = arith.addf %1029, %1046 : vector<4x128xf32>
    %c391_222 = arith.constant 391 : index
    %1048 = memref.load %arg3[%c391_222] : memref<528xf32, #tpu.memory_space<smem>>
    %1049 = vector.broadcast %1048 : f32 to vector<4x128xf32>
    %1050 = arith.mulf %1049, %1035 : vector<4x128xf32>
    %1051 = arith.addf %1033, %1050 : vector<4x128xf32>
    %c0_223 = arith.constant 0 : index
    %c1_224 = arith.constant 1 : index
    %c0_225 = arith.constant 0 : index
    %c7_226 = arith.constant 7 : index
    %1052 = vector.load %arg2[%c0_223, %c1_224, %c0_225, %c7_226] : memref<1x4x4x590xf32, #tpu.memory_space<vmem>>, vector<1x1x4x128xf32>
    %1053 = vector.shape_cast %1052 : vector<1x1x4x128xf32> to vector<4x128xf32>
    %c404 = arith.constant 404 : index
    %1054 = memref.load %arg3[%c404] : memref<528xf32, #tpu.memory_space<smem>>
    %1055 = vector.broadcast %1054 : f32 to vector<4x128xf32>
    %1056 = arith.mulf %1055, %1053 : vector<4x128xf32>
    %1057 = arith.addf %1039, %1056 : vector<4x128xf32>
    %c405 = arith.constant 405 : index
    %1058 = memref.load %arg3[%c405] : memref<528xf32, #tpu.memory_space<smem>>
    %1059 = vector.broadcast %1058 : f32 to vector<4x128xf32>
    %1060 = arith.mulf %1059, %1053 : vector<4x128xf32>
    %1061 = arith.addf %1043, %1060 : vector<4x128xf32>
    %c406 = arith.constant 406 : index
    %1062 = memref.load %arg3[%c406] : memref<528xf32, #tpu.memory_space<smem>>
    %1063 = vector.broadcast %1062 : f32 to vector<4x128xf32>
    %1064 = arith.mulf %1063, %1053 : vector<4x128xf32>
    %1065 = arith.addf %1047, %1064 : vector<4x128xf32>
    %c407 = arith.constant 407 : index
    %1066 = memref.load %arg3[%c407] : memref<528xf32, #tpu.memory_space<smem>>
    %1067 = vector.broadcast %1066 : f32 to vector<4x128xf32>
    %1068 = arith.mulf %1067, %1053 : vector<4x128xf32>
    %1069 = arith.addf %1051, %1068 : vector<4x128xf32>
    %c0_227 = arith.constant 0 : index
    %c1_228 = arith.constant 1 : index
    %c0_229 = arith.constant 0 : index
    %c14_230 = arith.constant 14 : index
    %1070 = vector.load %arg2[%c0_227, %c1_228, %c0_229, %c14_230] : memref<1x4x4x590xf32, #tpu.memory_space<vmem>>, vector<1x1x4x128xf32>
    %1071 = vector.shape_cast %1070 : vector<1x1x4x128xf32> to vector<4x128xf32>
    %c420 = arith.constant 420 : index
    %1072 = memref.load %arg3[%c420] : memref<528xf32, #tpu.memory_space<smem>>
    %1073 = vector.broadcast %1072 : f32 to vector<4x128xf32>
    %1074 = arith.mulf %1073, %1071 : vector<4x128xf32>
    %1075 = arith.addf %1057, %1074 : vector<4x128xf32>
    %c421 = arith.constant 421 : index
    %1076 = memref.load %arg3[%c421] : memref<528xf32, #tpu.memory_space<smem>>
    %1077 = vector.broadcast %1076 : f32 to vector<4x128xf32>
    %1078 = arith.mulf %1077, %1071 : vector<4x128xf32>
    %1079 = arith.addf %1061, %1078 : vector<4x128xf32>
    %c422 = arith.constant 422 : index
    %1080 = memref.load %arg3[%c422] : memref<528xf32, #tpu.memory_space<smem>>
    %1081 = vector.broadcast %1080 : f32 to vector<4x128xf32>
    %1082 = arith.mulf %1081, %1071 : vector<4x128xf32>
    %1083 = arith.addf %1065, %1082 : vector<4x128xf32>
    %c423 = arith.constant 423 : index
    %1084 = memref.load %arg3[%c423] : memref<528xf32, #tpu.memory_space<smem>>
    %1085 = vector.broadcast %1084 : f32 to vector<4x128xf32>
    %1086 = arith.mulf %1085, %1071 : vector<4x128xf32>
    %1087 = arith.addf %1069, %1086 : vector<4x128xf32>
    %c0_231 = arith.constant 0 : index
    %c1_232 = arith.constant 1 : index
    %c0_233 = arith.constant 0 : index
    %c224_234 = arith.constant 224 : index
    %1088 = vector.load %arg2[%c0_231, %c1_232, %c0_233, %c224_234] : memref<1x4x4x590xf32, #tpu.memory_space<vmem>>, vector<1x1x4x128xf32>
    %1089 = vector.shape_cast %1088 : vector<1x1x4x128xf32> to vector<4x128xf32>
    %c436 = arith.constant 436 : index
    %1090 = memref.load %arg3[%c436] : memref<528xf32, #tpu.memory_space<smem>>
    %1091 = vector.broadcast %1090 : f32 to vector<4x128xf32>
    %1092 = arith.mulf %1091, %1089 : vector<4x128xf32>
    %1093 = arith.addf %1075, %1092 : vector<4x128xf32>
    %c437 = arith.constant 437 : index
    %1094 = memref.load %arg3[%c437] : memref<528xf32, #tpu.memory_space<smem>>
    %1095 = vector.broadcast %1094 : f32 to vector<4x128xf32>
    %1096 = arith.mulf %1095, %1089 : vector<4x128xf32>
    %1097 = arith.addf %1079, %1096 : vector<4x128xf32>
    %c438 = arith.constant 438 : index
    %1098 = memref.load %arg3[%c438] : memref<528xf32, #tpu.memory_space<smem>>
    %1099 = vector.broadcast %1098 : f32 to vector<4x128xf32>
    %1100 = arith.mulf %1099, %1089 : vector<4x128xf32>
    %1101 = arith.addf %1083, %1100 : vector<4x128xf32>
    %c439 = arith.constant 439 : index
    %1102 = memref.load %arg3[%c439] : memref<528xf32, #tpu.memory_space<smem>>
    %1103 = vector.broadcast %1102 : f32 to vector<4x128xf32>
    %1104 = arith.mulf %1103, %1089 : vector<4x128xf32>
    %1105 = arith.addf %1087, %1104 : vector<4x128xf32>
    %c0_235 = arith.constant 0 : index
    %c1_236 = arith.constant 1 : index
    %c0_237 = arith.constant 0 : index
    %c238_238 = arith.constant 238 : index
    %1106 = vector.load %arg2[%c0_235, %c1_236, %c0_237, %c238_238] : memref<1x4x4x590xf32, #tpu.memory_space<vmem>>, vector<1x1x4x128xf32>
    %1107 = vector.shape_cast %1106 : vector<1x1x4x128xf32> to vector<4x128xf32>
    %c452 = arith.constant 452 : index
    %1108 = memref.load %arg3[%c452] : memref<528xf32, #tpu.memory_space<smem>>
    %1109 = vector.broadcast %1108 : f32 to vector<4x128xf32>
    %1110 = arith.mulf %1109, %1107 : vector<4x128xf32>
    %1111 = arith.addf %1093, %1110 : vector<4x128xf32>
    %c453 = arith.constant 453 : index
    %1112 = memref.load %arg3[%c453] : memref<528xf32, #tpu.memory_space<smem>>
    %1113 = vector.broadcast %1112 : f32 to vector<4x128xf32>
    %1114 = arith.mulf %1113, %1107 : vector<4x128xf32>
    %1115 = arith.addf %1097, %1114 : vector<4x128xf32>
    %c454 = arith.constant 454 : index
    %1116 = memref.load %arg3[%c454] : memref<528xf32, #tpu.memory_space<smem>>
    %1117 = vector.broadcast %1116 : f32 to vector<4x128xf32>
    %1118 = arith.mulf %1117, %1107 : vector<4x128xf32>
    %1119 = arith.addf %1101, %1118 : vector<4x128xf32>
    %c455_239 = arith.constant 455 : index
    %1120 = memref.load %arg3[%c455_239] : memref<528xf32, #tpu.memory_space<smem>>
    %1121 = vector.broadcast %1120 : f32 to vector<4x128xf32>
    %1122 = arith.mulf %1121, %1107 : vector<4x128xf32>
    %1123 = arith.addf %1105, %1122 : vector<4x128xf32>
    %c0_240 = arith.constant 0 : index
    %c1_241 = arith.constant 1 : index
    %c0_242 = arith.constant 0 : index
    %c448_243 = arith.constant 448 : index
    %1124 = vector.load %arg2[%c0_240, %c1_241, %c0_242, %c448_243] : memref<1x4x4x590xf32, #tpu.memory_space<vmem>>, vector<1x1x4x128xf32>
    %1125 = vector.shape_cast %1124 : vector<1x1x4x128xf32> to vector<4x128xf32>
    %c468 = arith.constant 468 : index
    %1126 = memref.load %arg3[%c468] : memref<528xf32, #tpu.memory_space<smem>>
    %1127 = vector.broadcast %1126 : f32 to vector<4x128xf32>
    %1128 = arith.mulf %1127, %1125 : vector<4x128xf32>
    %1129 = arith.addf %1111, %1128 : vector<4x128xf32>
    %c469 = arith.constant 469 : index
    %1130 = memref.load %arg3[%c469] : memref<528xf32, #tpu.memory_space<smem>>
    %1131 = vector.broadcast %1130 : f32 to vector<4x128xf32>
    %1132 = arith.mulf %1131, %1125 : vector<4x128xf32>
    %1133 = arith.addf %1115, %1132 : vector<4x128xf32>
    %c470 = arith.constant 470 : index
    %1134 = memref.load %arg3[%c470] : memref<528xf32, #tpu.memory_space<smem>>
    %1135 = vector.broadcast %1134 : f32 to vector<4x128xf32>
    %1136 = arith.mulf %1135, %1125 : vector<4x128xf32>
    %1137 = arith.addf %1119, %1136 : vector<4x128xf32>
    %c471 = arith.constant 471 : index
    %1138 = memref.load %arg3[%c471] : memref<528xf32, #tpu.memory_space<smem>>
    %1139 = vector.broadcast %1138 : f32 to vector<4x128xf32>
    %1140 = arith.mulf %1139, %1125 : vector<4x128xf32>
    %1141 = arith.addf %1123, %1140 : vector<4x128xf32>
    %c0_244 = arith.constant 0 : index
    %c1_245 = arith.constant 1 : index
    %c0_246 = arith.constant 0 : index
    %c455_247 = arith.constant 455 : index
    %1142 = vector.load %arg2[%c0_244, %c1_245, %c0_246, %c455_247] : memref<1x4x4x590xf32, #tpu.memory_space<vmem>>, vector<1x1x4x128xf32>
    %1143 = vector.shape_cast %1142 : vector<1x1x4x128xf32> to vector<4x128xf32>
    %c484 = arith.constant 484 : index
    %1144 = memref.load %arg3[%c484] : memref<528xf32, #tpu.memory_space<smem>>
    %1145 = vector.broadcast %1144 : f32 to vector<4x128xf32>
    %1146 = arith.mulf %1145, %1143 : vector<4x128xf32>
    %1147 = arith.addf %1129, %1146 : vector<4x128xf32>
    %c485 = arith.constant 485 : index
    %1148 = memref.load %arg3[%c485] : memref<528xf32, #tpu.memory_space<smem>>
    %1149 = vector.broadcast %1148 : f32 to vector<4x128xf32>
    %1150 = arith.mulf %1149, %1143 : vector<4x128xf32>
    %1151 = arith.addf %1133, %1150 : vector<4x128xf32>
    %c486 = arith.constant 486 : index
    %1152 = memref.load %arg3[%c486] : memref<528xf32, #tpu.memory_space<smem>>
    %1153 = vector.broadcast %1152 : f32 to vector<4x128xf32>
    %1154 = arith.mulf %1153, %1143 : vector<4x128xf32>
    %1155 = arith.addf %1137, %1154 : vector<4x128xf32>
    %c487 = arith.constant 487 : index
    %1156 = memref.load %arg3[%c487] : memref<528xf32, #tpu.memory_space<smem>>
    %1157 = vector.broadcast %1156 : f32 to vector<4x128xf32>
    %1158 = arith.mulf %1157, %1143 : vector<4x128xf32>
    %1159 = arith.addf %1141, %1158 : vector<4x128xf32>
    %c0_248 = arith.constant 0 : index
    %c1_249 = arith.constant 1 : index
    %c0_250 = arith.constant 0 : index
    %c462_251 = arith.constant 462 : index
    %1160 = vector.load %arg2[%c0_248, %c1_249, %c0_250, %c462_251] : memref<1x4x4x590xf32, #tpu.memory_space<vmem>>, vector<1x1x4x128xf32>
    %1161 = vector.shape_cast %1160 : vector<1x1x4x128xf32> to vector<4x128xf32>
    %c500 = arith.constant 500 : index
    %1162 = memref.load %arg3[%c500] : memref<528xf32, #tpu.memory_space<smem>>
    %1163 = vector.broadcast %1162 : f32 to vector<4x128xf32>
    %1164 = arith.mulf %1163, %1161 : vector<4x128xf32>
    %1165 = arith.addf %1147, %1164 : vector<4x128xf32>
    %c501 = arith.constant 501 : index
    %1166 = memref.load %arg3[%c501] : memref<528xf32, #tpu.memory_space<smem>>
    %1167 = vector.broadcast %1166 : f32 to vector<4x128xf32>
    %1168 = arith.mulf %1167, %1161 : vector<4x128xf32>
    %1169 = arith.addf %1151, %1168 : vector<4x128xf32>
    %c502 = arith.constant 502 : index
    %1170 = memref.load %arg3[%c502] : memref<528xf32, #tpu.memory_space<smem>>
    %1171 = vector.broadcast %1170 : f32 to vector<4x128xf32>
    %1172 = arith.mulf %1171, %1161 : vector<4x128xf32>
    %1173 = arith.addf %1155, %1172 : vector<4x128xf32>
    %c503 = arith.constant 503 : index
    %1174 = memref.load %arg3[%c503] : memref<528xf32, #tpu.memory_space<smem>>
    %1175 = vector.broadcast %1174 : f32 to vector<4x128xf32>
    %1176 = arith.mulf %1175, %1161 : vector<4x128xf32>
    %1177 = arith.addf %1159, %1176 : vector<4x128xf32>
    %c0_252 = arith.constant 0 : index
    %c1_253 = arith.constant 1 : index
    %c0_254 = arith.constant 0 : index
    %c231_255 = arith.constant 231 : index
    %1178 = vector.load %arg2[%c0_252, %c1_253, %c0_254, %c231_255] : memref<1x4x4x590xf32, #tpu.memory_space<vmem>>, vector<1x1x4x128xf32>
    %1179 = vector.shape_cast %1178 : vector<1x1x4x128xf32> to vector<4x128xf32>
    %c516 = arith.constant 516 : index
    %1180 = memref.load %arg3[%c516] : memref<528xf32, #tpu.memory_space<smem>>
    %1181 = vector.broadcast %1180 : f32 to vector<4x128xf32>
    %1182 = arith.mulf %1181, %1179 : vector<4x128xf32>
    %1183 = arith.addf %1165, %1182 : vector<4x128xf32>
    %c517 = arith.constant 517 : index
    %1184 = memref.load %arg3[%c517] : memref<528xf32, #tpu.memory_space<smem>>
    %1185 = vector.broadcast %1184 : f32 to vector<4x128xf32>
    %1186 = arith.mulf %1185, %1179 : vector<4x128xf32>
    %1187 = arith.addf %1169, %1186 : vector<4x128xf32>
    %c518 = arith.constant 518 : index
    %1188 = memref.load %arg3[%c518] : memref<528xf32, #tpu.memory_space<smem>>
    %1189 = vector.broadcast %1188 : f32 to vector<4x128xf32>
    %1190 = arith.mulf %1189, %1179 : vector<4x128xf32>
    %1191 = arith.addf %1173, %1190 : vector<4x128xf32>
    %c519 = arith.constant 519 : index
    %1192 = memref.load %arg3[%c519] : memref<528xf32, #tpu.memory_space<smem>>
    %1193 = vector.broadcast %1192 : f32 to vector<4x128xf32>
    %1194 = arith.mulf %1193, %1179 : vector<4x128xf32>
    %1195 = arith.addf %1177, %1194 : vector<4x128xf32>
    %c0_256 = arith.constant 0 : index
    %c2_257 = arith.constant 2 : index
    %c0_258 = arith.constant 0 : index
    %c198_259 = arith.constant 198 : index
    %1196 = vector.load %arg2[%c0_256, %c2_257, %c0_258, %c198_259] : memref<1x4x4x590xf32, #tpu.memory_space<vmem>>, vector<1x1x4x128xf32>
    %1197 = vector.shape_cast %1196 : vector<1x1x4x128xf32> to vector<4x128xf32>
    %c8 = arith.constant 8 : index
    %1198 = memref.load %arg3[%c8] : memref<528xf32, #tpu.memory_space<smem>>
    %1199 = vector.broadcast %1198 : f32 to vector<4x128xf32>
    %1200 = arith.mulf %1199, %1197 : vector<4x128xf32>
    %1201 = arith.addf %1183, %1200 : vector<4x128xf32>
    %c9 = arith.constant 9 : index
    %1202 = memref.load %arg3[%c9] : memref<528xf32, #tpu.memory_space<smem>>
    %1203 = vector.broadcast %1202 : f32 to vector<4x128xf32>
    %1204 = arith.mulf %1203, %1197 : vector<4x128xf32>
    %1205 = arith.addf %1187, %1204 : vector<4x128xf32>
    %c10 = arith.constant 10 : index
    %1206 = memref.load %arg3[%c10] : memref<528xf32, #tpu.memory_space<smem>>
    %1207 = vector.broadcast %1206 : f32 to vector<4x128xf32>
    %1208 = arith.mulf %1207, %1197 : vector<4x128xf32>
    %1209 = arith.addf %1191, %1208 : vector<4x128xf32>
    %c11 = arith.constant 11 : index
    %1210 = memref.load %arg3[%c11] : memref<528xf32, #tpu.memory_space<smem>>
    %1211 = vector.broadcast %1210 : f32 to vector<4x128xf32>
    %1212 = arith.mulf %1211, %1197 : vector<4x128xf32>
    %1213 = arith.addf %1195, %1212 : vector<4x128xf32>
    %c0_260 = arith.constant 0 : index
    %c2_261 = arith.constant 2 : index
    %c0_262 = arith.constant 0 : index
    %c199_263 = arith.constant 199 : index
    %1214 = vector.load %arg2[%c0_260, %c2_261, %c0_262, %c199_263] : memref<1x4x4x590xf32, #tpu.memory_space<vmem>>, vector<1x1x4x128xf32>
    %1215 = vector.shape_cast %1214 : vector<1x1x4x128xf32> to vector<4x128xf32>
    %c24 = arith.constant 24 : index
    %1216 = memref.load %arg3[%c24] : memref<528xf32, #tpu.memory_space<smem>>
    %1217 = vector.broadcast %1216 : f32 to vector<4x128xf32>
    %1218 = arith.mulf %1217, %1215 : vector<4x128xf32>
    %1219 = arith.addf %1201, %1218 : vector<4x128xf32>
    %c25 = arith.constant 25 : index
    %1220 = memref.load %arg3[%c25] : memref<528xf32, #tpu.memory_space<smem>>
    %1221 = vector.broadcast %1220 : f32 to vector<4x128xf32>
    %1222 = arith.mulf %1221, %1215 : vector<4x128xf32>
    %1223 = arith.addf %1205, %1222 : vector<4x128xf32>
    %c26 = arith.constant 26 : index
    %1224 = memref.load %arg3[%c26] : memref<528xf32, #tpu.memory_space<smem>>
    %1225 = vector.broadcast %1224 : f32 to vector<4x128xf32>
    %1226 = arith.mulf %1225, %1215 : vector<4x128xf32>
    %1227 = arith.addf %1209, %1226 : vector<4x128xf32>
    %c27 = arith.constant 27 : index
    %1228 = memref.load %arg3[%c27] : memref<528xf32, #tpu.memory_space<smem>>
    %1229 = vector.broadcast %1228 : f32 to vector<4x128xf32>
    %1230 = arith.mulf %1229, %1215 : vector<4x128xf32>
    %1231 = arith.addf %1213, %1230 : vector<4x128xf32>
    %c0_264 = arith.constant 0 : index
    %c2_265 = arith.constant 2 : index
    %c0_266 = arith.constant 0 : index
    %c200_267 = arith.constant 200 : index
    %1232 = vector.load %arg2[%c0_264, %c2_265, %c0_266, %c200_267] : memref<1x4x4x590xf32, #tpu.memory_space<vmem>>, vector<1x1x4x128xf32>
    %1233 = vector.shape_cast %1232 : vector<1x1x4x128xf32> to vector<4x128xf32>
    %c40 = arith.constant 40 : index
    %1234 = memref.load %arg3[%c40] : memref<528xf32, #tpu.memory_space<smem>>
    %1235 = vector.broadcast %1234 : f32 to vector<4x128xf32>
    %1236 = arith.mulf %1235, %1233 : vector<4x128xf32>
    %1237 = arith.addf %1219, %1236 : vector<4x128xf32>
    %c41 = arith.constant 41 : index
    %1238 = memref.load %arg3[%c41] : memref<528xf32, #tpu.memory_space<smem>>
    %1239 = vector.broadcast %1238 : f32 to vector<4x128xf32>
    %1240 = arith.mulf %1239, %1233 : vector<4x128xf32>
    %1241 = arith.addf %1223, %1240 : vector<4x128xf32>
    %c42 = arith.constant 42 : index
    %1242 = memref.load %arg3[%c42] : memref<528xf32, #tpu.memory_space<smem>>
    %1243 = vector.broadcast %1242 : f32 to vector<4x128xf32>
    %1244 = arith.mulf %1243, %1233 : vector<4x128xf32>
    %1245 = arith.addf %1227, %1244 : vector<4x128xf32>
    %c43 = arith.constant 43 : index
    %1246 = memref.load %arg3[%c43] : memref<528xf32, #tpu.memory_space<smem>>
    %1247 = vector.broadcast %1246 : f32 to vector<4x128xf32>
    %1248 = arith.mulf %1247, %1233 : vector<4x128xf32>
    %1249 = arith.addf %1231, %1248 : vector<4x128xf32>
    %c0_268 = arith.constant 0 : index
    %c2_269 = arith.constant 2 : index
    %c0_270 = arith.constant 0 : index
    %c230_271 = arith.constant 230 : index
    %1250 = vector.load %arg2[%c0_268, %c2_269, %c0_270, %c230_271] : memref<1x4x4x590xf32, #tpu.memory_space<vmem>>, vector<1x1x4x128xf32>
    %1251 = vector.shape_cast %1250 : vector<1x1x4x128xf32> to vector<4x128xf32>
    %c56 = arith.constant 56 : index
    %1252 = memref.load %arg3[%c56] : memref<528xf32, #tpu.memory_space<smem>>
    %1253 = vector.broadcast %1252 : f32 to vector<4x128xf32>
    %1254 = arith.mulf %1253, %1251 : vector<4x128xf32>
    %1255 = arith.addf %1237, %1254 : vector<4x128xf32>
    %c57 = arith.constant 57 : index
    %1256 = memref.load %arg3[%c57] : memref<528xf32, #tpu.memory_space<smem>>
    %1257 = vector.broadcast %1256 : f32 to vector<4x128xf32>
    %1258 = arith.mulf %1257, %1251 : vector<4x128xf32>
    %1259 = arith.addf %1241, %1258 : vector<4x128xf32>
    %c58 = arith.constant 58 : index
    %1260 = memref.load %arg3[%c58] : memref<528xf32, #tpu.memory_space<smem>>
    %1261 = vector.broadcast %1260 : f32 to vector<4x128xf32>
    %1262 = arith.mulf %1261, %1251 : vector<4x128xf32>
    %1263 = arith.addf %1245, %1262 : vector<4x128xf32>
    %c59 = arith.constant 59 : index
    %1264 = memref.load %arg3[%c59] : memref<528xf32, #tpu.memory_space<smem>>
    %1265 = vector.broadcast %1264 : f32 to vector<4x128xf32>
    %1266 = arith.mulf %1265, %1251 : vector<4x128xf32>
    %1267 = arith.addf %1249, %1266 : vector<4x128xf32>
    %c0_272 = arith.constant 0 : index
    %c2_273 = arith.constant 2 : index
    %c0_274 = arith.constant 0 : index
    %c232_275 = arith.constant 232 : index
    %1268 = vector.load %arg2[%c0_272, %c2_273, %c0_274, %c232_275] : memref<1x4x4x590xf32, #tpu.memory_space<vmem>>, vector<1x1x4x128xf32>
    %1269 = vector.shape_cast %1268 : vector<1x1x4x128xf32> to vector<4x128xf32>
    %c72 = arith.constant 72 : index
    %1270 = memref.load %arg3[%c72] : memref<528xf32, #tpu.memory_space<smem>>
    %1271 = vector.broadcast %1270 : f32 to vector<4x128xf32>
    %1272 = arith.mulf %1271, %1269 : vector<4x128xf32>
    %1273 = arith.addf %1255, %1272 : vector<4x128xf32>
    %c73 = arith.constant 73 : index
    %1274 = memref.load %arg3[%c73] : memref<528xf32, #tpu.memory_space<smem>>
    %1275 = vector.broadcast %1274 : f32 to vector<4x128xf32>
    %1276 = arith.mulf %1275, %1269 : vector<4x128xf32>
    %1277 = arith.addf %1259, %1276 : vector<4x128xf32>
    %c74 = arith.constant 74 : index
    %1278 = memref.load %arg3[%c74] : memref<528xf32, #tpu.memory_space<smem>>
    %1279 = vector.broadcast %1278 : f32 to vector<4x128xf32>
    %1280 = arith.mulf %1279, %1269 : vector<4x128xf32>
    %1281 = arith.addf %1263, %1280 : vector<4x128xf32>
    %c75 = arith.constant 75 : index
    %1282 = memref.load %arg3[%c75] : memref<528xf32, #tpu.memory_space<smem>>
    %1283 = vector.broadcast %1282 : f32 to vector<4x128xf32>
    %1284 = arith.mulf %1283, %1269 : vector<4x128xf32>
    %1285 = arith.addf %1267, %1284 : vector<4x128xf32>
    %c0_276 = arith.constant 0 : index
    %c2_277 = arith.constant 2 : index
    %c0_278 = arith.constant 0 : index
    %c262_279 = arith.constant 262 : index
    %1286 = vector.load %arg2[%c0_276, %c2_277, %c0_278, %c262_279] : memref<1x4x4x590xf32, #tpu.memory_space<vmem>>, vector<1x1x4x128xf32>
    %1287 = vector.shape_cast %1286 : vector<1x1x4x128xf32> to vector<4x128xf32>
    %c88 = arith.constant 88 : index
    %1288 = memref.load %arg3[%c88] : memref<528xf32, #tpu.memory_space<smem>>
    %1289 = vector.broadcast %1288 : f32 to vector<4x128xf32>
    %1290 = arith.mulf %1289, %1287 : vector<4x128xf32>
    %1291 = arith.addf %1273, %1290 : vector<4x128xf32>
    %c89 = arith.constant 89 : index
    %1292 = memref.load %arg3[%c89] : memref<528xf32, #tpu.memory_space<smem>>
    %1293 = vector.broadcast %1292 : f32 to vector<4x128xf32>
    %1294 = arith.mulf %1293, %1287 : vector<4x128xf32>
    %1295 = arith.addf %1277, %1294 : vector<4x128xf32>
    %c90 = arith.constant 90 : index
    %1296 = memref.load %arg3[%c90] : memref<528xf32, #tpu.memory_space<smem>>
    %1297 = vector.broadcast %1296 : f32 to vector<4x128xf32>
    %1298 = arith.mulf %1297, %1287 : vector<4x128xf32>
    %1299 = arith.addf %1281, %1298 : vector<4x128xf32>
    %c91 = arith.constant 91 : index
    %1300 = memref.load %arg3[%c91] : memref<528xf32, #tpu.memory_space<smem>>
    %1301 = vector.broadcast %1300 : f32 to vector<4x128xf32>
    %1302 = arith.mulf %1301, %1287 : vector<4x128xf32>
    %1303 = arith.addf %1285, %1302 : vector<4x128xf32>
    %c0_280 = arith.constant 0 : index
    %c2_281 = arith.constant 2 : index
    %c0_282 = arith.constant 0 : index
    %c263_283 = arith.constant 263 : index
    %1304 = vector.load %arg2[%c0_280, %c2_281, %c0_282, %c263_283] : memref<1x4x4x590xf32, #tpu.memory_space<vmem>>, vector<1x1x4x128xf32>
    %1305 = vector.shape_cast %1304 : vector<1x1x4x128xf32> to vector<4x128xf32>
    %c104 = arith.constant 104 : index
    %1306 = memref.load %arg3[%c104] : memref<528xf32, #tpu.memory_space<smem>>
    %1307 = vector.broadcast %1306 : f32 to vector<4x128xf32>
    %1308 = arith.mulf %1307, %1305 : vector<4x128xf32>
    %1309 = arith.addf %1291, %1308 : vector<4x128xf32>
    %c105 = arith.constant 105 : index
    %1310 = memref.load %arg3[%c105] : memref<528xf32, #tpu.memory_space<smem>>
    %1311 = vector.broadcast %1310 : f32 to vector<4x128xf32>
    %1312 = arith.mulf %1311, %1305 : vector<4x128xf32>
    %1313 = arith.addf %1295, %1312 : vector<4x128xf32>
    %c106 = arith.constant 106 : index
    %1314 = memref.load %arg3[%c106] : memref<528xf32, #tpu.memory_space<smem>>
    %1315 = vector.broadcast %1314 : f32 to vector<4x128xf32>
    %1316 = arith.mulf %1315, %1305 : vector<4x128xf32>
    %1317 = arith.addf %1299, %1316 : vector<4x128xf32>
    %c107 = arith.constant 107 : index
    %1318 = memref.load %arg3[%c107] : memref<528xf32, #tpu.memory_space<smem>>
    %1319 = vector.broadcast %1318 : f32 to vector<4x128xf32>
    %1320 = arith.mulf %1319, %1305 : vector<4x128xf32>
    %1321 = arith.addf %1303, %1320 : vector<4x128xf32>
    %c0_284 = arith.constant 0 : index
    %c2_285 = arith.constant 2 : index
    %c0_286 = arith.constant 0 : index
    %c264_287 = arith.constant 264 : index
    %1322 = vector.load %arg2[%c0_284, %c2_285, %c0_286, %c264_287] : memref<1x4x4x590xf32, #tpu.memory_space<vmem>>, vector<1x1x4x128xf32>
    %1323 = vector.shape_cast %1322 : vector<1x1x4x128xf32> to vector<4x128xf32>
    %c120 = arith.constant 120 : index
    %1324 = memref.load %arg3[%c120] : memref<528xf32, #tpu.memory_space<smem>>
    %1325 = vector.broadcast %1324 : f32 to vector<4x128xf32>
    %1326 = arith.mulf %1325, %1323 : vector<4x128xf32>
    %1327 = arith.addf %1309, %1326 : vector<4x128xf32>
    %c121 = arith.constant 121 : index
    %1328 = memref.load %arg3[%c121] : memref<528xf32, #tpu.memory_space<smem>>
    %1329 = vector.broadcast %1328 : f32 to vector<4x128xf32>
    %1330 = arith.mulf %1329, %1323 : vector<4x128xf32>
    %1331 = arith.addf %1313, %1330 : vector<4x128xf32>
    %c122 = arith.constant 122 : index
    %1332 = memref.load %arg3[%c122] : memref<528xf32, #tpu.memory_space<smem>>
    %1333 = vector.broadcast %1332 : f32 to vector<4x128xf32>
    %1334 = arith.mulf %1333, %1323 : vector<4x128xf32>
    %1335 = arith.addf %1317, %1334 : vector<4x128xf32>
    %c123 = arith.constant 123 : index
    %1336 = memref.load %arg3[%c123] : memref<528xf32, #tpu.memory_space<smem>>
    %1337 = vector.broadcast %1336 : f32 to vector<4x128xf32>
    %1338 = arith.mulf %1337, %1323 : vector<4x128xf32>
    %1339 = arith.addf %1321, %1338 : vector<4x128xf32>
    %c0_288 = arith.constant 0 : index
    %c2_289 = arith.constant 2 : index
    %c0_290 = arith.constant 0 : index
    %c132_291 = arith.constant 132 : index
    %1340 = vector.load %arg2[%c0_288, %c2_289, %c0_290, %c132_291] : memref<1x4x4x590xf32, #tpu.memory_space<vmem>>, vector<1x1x4x128xf32>
    %1341 = vector.shape_cast %1340 : vector<1x1x4x128xf32> to vector<4x128xf32>
    %c136 = arith.constant 136 : index
    %1342 = memref.load %arg3[%c136] : memref<528xf32, #tpu.memory_space<smem>>
    %1343 = vector.broadcast %1342 : f32 to vector<4x128xf32>
    %1344 = arith.mulf %1343, %1341 : vector<4x128xf32>
    %1345 = arith.addf %1327, %1344 : vector<4x128xf32>
    %c137 = arith.constant 137 : index
    %1346 = memref.load %arg3[%c137] : memref<528xf32, #tpu.memory_space<smem>>
    %1347 = vector.broadcast %1346 : f32 to vector<4x128xf32>
    %1348 = arith.mulf %1347, %1341 : vector<4x128xf32>
    %1349 = arith.addf %1331, %1348 : vector<4x128xf32>
    %c138_292 = arith.constant 138 : index
    %1350 = memref.load %arg3[%c138_292] : memref<528xf32, #tpu.memory_space<smem>>
    %1351 = vector.broadcast %1350 : f32 to vector<4x128xf32>
    %1352 = arith.mulf %1351, %1341 : vector<4x128xf32>
    %1353 = arith.addf %1335, %1352 : vector<4x128xf32>
    %c139 = arith.constant 139 : index
    %1354 = memref.load %arg3[%c139] : memref<528xf32, #tpu.memory_space<smem>>
    %1355 = vector.broadcast %1354 : f32 to vector<4x128xf32>
    %1356 = arith.mulf %1355, %1341 : vector<4x128xf32>
    %1357 = arith.addf %1339, %1356 : vector<4x128xf32>
    %c0_293 = arith.constant 0 : index
    %c2_294 = arith.constant 2 : index
    %c0_295 = arith.constant 0 : index
    %c135_296 = arith.constant 135 : index
    %1358 = vector.load %arg2[%c0_293, %c2_294, %c0_295, %c135_296] : memref<1x4x4x590xf32, #tpu.memory_space<vmem>>, vector<1x1x4x128xf32>
    %1359 = vector.shape_cast %1358 : vector<1x1x4x128xf32> to vector<4x128xf32>
    %c152 = arith.constant 152 : index
    %1360 = memref.load %arg3[%c152] : memref<528xf32, #tpu.memory_space<smem>>
    %1361 = vector.broadcast %1360 : f32 to vector<4x128xf32>
    %1362 = arith.mulf %1361, %1359 : vector<4x128xf32>
    %1363 = arith.addf %1345, %1362 : vector<4x128xf32>
    %c153 = arith.constant 153 : index
    %1364 = memref.load %arg3[%c153] : memref<528xf32, #tpu.memory_space<smem>>
    %1365 = vector.broadcast %1364 : f32 to vector<4x128xf32>
    %1366 = arith.mulf %1365, %1359 : vector<4x128xf32>
    %1367 = arith.addf %1349, %1366 : vector<4x128xf32>
    %c154 = arith.constant 154 : index
    %1368 = memref.load %arg3[%c154] : memref<528xf32, #tpu.memory_space<smem>>
    %1369 = vector.broadcast %1368 : f32 to vector<4x128xf32>
    %1370 = arith.mulf %1369, %1359 : vector<4x128xf32>
    %1371 = arith.addf %1353, %1370 : vector<4x128xf32>
    %c155 = arith.constant 155 : index
    %1372 = memref.load %arg3[%c155] : memref<528xf32, #tpu.memory_space<smem>>
    %1373 = vector.broadcast %1372 : f32 to vector<4x128xf32>
    %1374 = arith.mulf %1373, %1359 : vector<4x128xf32>
    %1375 = arith.addf %1357, %1374 : vector<4x128xf32>
    %c0_297 = arith.constant 0 : index
    %c2_298 = arith.constant 2 : index
    %c0_299 = arith.constant 0 : index
    %c138_300 = arith.constant 138 : index
    %1376 = vector.load %arg2[%c0_297, %c2_298, %c0_299, %c138_300] : memref<1x4x4x590xf32, #tpu.memory_space<vmem>>, vector<1x1x4x128xf32>
    %1377 = vector.shape_cast %1376 : vector<1x1x4x128xf32> to vector<4x128xf32>
    %c168 = arith.constant 168 : index
    %1378 = memref.load %arg3[%c168] : memref<528xf32, #tpu.memory_space<smem>>
    %1379 = vector.broadcast %1378 : f32 to vector<4x128xf32>
    %1380 = arith.mulf %1379, %1377 : vector<4x128xf32>
    %1381 = arith.addf %1363, %1380 : vector<4x128xf32>
    %c169 = arith.constant 169 : index
    %1382 = memref.load %arg3[%c169] : memref<528xf32, #tpu.memory_space<smem>>
    %1383 = vector.broadcast %1382 : f32 to vector<4x128xf32>
    %1384 = arith.mulf %1383, %1377 : vector<4x128xf32>
    %1385 = arith.addf %1367, %1384 : vector<4x128xf32>
    %c170 = arith.constant 170 : index
    %1386 = memref.load %arg3[%c170] : memref<528xf32, #tpu.memory_space<smem>>
    %1387 = vector.broadcast %1386 : f32 to vector<4x128xf32>
    %1388 = arith.mulf %1387, %1377 : vector<4x128xf32>
    %1389 = arith.addf %1371, %1388 : vector<4x128xf32>
    %c171 = arith.constant 171 : index
    %1390 = memref.load %arg3[%c171] : memref<528xf32, #tpu.memory_space<smem>>
    %1391 = vector.broadcast %1390 : f32 to vector<4x128xf32>
    %1392 = arith.mulf %1391, %1377 : vector<4x128xf32>
    %1393 = arith.addf %1375, %1392 : vector<4x128xf32>
    %c0_301 = arith.constant 0 : index
    %c2_302 = arith.constant 2 : index
    %c0_303 = arith.constant 0 : index
    %c228_304 = arith.constant 228 : index
    %1394 = vector.load %arg2[%c0_301, %c2_302, %c0_303, %c228_304] : memref<1x4x4x590xf32, #tpu.memory_space<vmem>>, vector<1x1x4x128xf32>
    %1395 = vector.shape_cast %1394 : vector<1x1x4x128xf32> to vector<4x128xf32>
    %c184 = arith.constant 184 : index
    %1396 = memref.load %arg3[%c184] : memref<528xf32, #tpu.memory_space<smem>>
    %1397 = vector.broadcast %1396 : f32 to vector<4x128xf32>
    %1398 = arith.mulf %1397, %1395 : vector<4x128xf32>
    %1399 = arith.addf %1381, %1398 : vector<4x128xf32>
    %c185 = arith.constant 185 : index
    %1400 = memref.load %arg3[%c185] : memref<528xf32, #tpu.memory_space<smem>>
    %1401 = vector.broadcast %1400 : f32 to vector<4x128xf32>
    %1402 = arith.mulf %1401, %1395 : vector<4x128xf32>
    %1403 = arith.addf %1385, %1402 : vector<4x128xf32>
    %c186 = arith.constant 186 : index
    %1404 = memref.load %arg3[%c186] : memref<528xf32, #tpu.memory_space<smem>>
    %1405 = vector.broadcast %1404 : f32 to vector<4x128xf32>
    %1406 = arith.mulf %1405, %1395 : vector<4x128xf32>
    %1407 = arith.addf %1389, %1406 : vector<4x128xf32>
    %c187 = arith.constant 187 : index
    %1408 = memref.load %arg3[%c187] : memref<528xf32, #tpu.memory_space<smem>>
    %1409 = vector.broadcast %1408 : f32 to vector<4x128xf32>
    %1410 = arith.mulf %1409, %1395 : vector<4x128xf32>
    %1411 = arith.addf %1393, %1410 : vector<4x128xf32>
    %c0_305 = arith.constant 0 : index
    %c2_306 = arith.constant 2 : index
    %c0_307 = arith.constant 0 : index
    %c234_308 = arith.constant 234 : index
    %1412 = vector.load %arg2[%c0_305, %c2_306, %c0_307, %c234_308] : memref<1x4x4x590xf32, #tpu.memory_space<vmem>>, vector<1x1x4x128xf32>
    %1413 = vector.shape_cast %1412 : vector<1x1x4x128xf32> to vector<4x128xf32>
    %c200_309 = arith.constant 200 : index
    %1414 = memref.load %arg3[%c200_309] : memref<528xf32, #tpu.memory_space<smem>>
    %1415 = vector.broadcast %1414 : f32 to vector<4x128xf32>
    %1416 = arith.mulf %1415, %1413 : vector<4x128xf32>
    %1417 = arith.addf %1399, %1416 : vector<4x128xf32>
    %c201 = arith.constant 201 : index
    %1418 = memref.load %arg3[%c201] : memref<528xf32, #tpu.memory_space<smem>>
    %1419 = vector.broadcast %1418 : f32 to vector<4x128xf32>
    %1420 = arith.mulf %1419, %1413 : vector<4x128xf32>
    %1421 = arith.addf %1403, %1420 : vector<4x128xf32>
    %c202 = arith.constant 202 : index
    %1422 = memref.load %arg3[%c202] : memref<528xf32, #tpu.memory_space<smem>>
    %1423 = vector.broadcast %1422 : f32 to vector<4x128xf32>
    %1424 = arith.mulf %1423, %1413 : vector<4x128xf32>
    %1425 = arith.addf %1407, %1424 : vector<4x128xf32>
    %c203 = arith.constant 203 : index
    %1426 = memref.load %arg3[%c203] : memref<528xf32, #tpu.memory_space<smem>>
    %1427 = vector.broadcast %1426 : f32 to vector<4x128xf32>
    %1428 = arith.mulf %1427, %1413 : vector<4x128xf32>
    %1429 = arith.addf %1411, %1428 : vector<4x128xf32>
    %c0_310 = arith.constant 0 : index
    %c2_311 = arith.constant 2 : index
    %c0_312 = arith.constant 0 : index
    %c324_313 = arith.constant 324 : index
    %1430 = vector.load %arg2[%c0_310, %c2_311, %c0_312, %c324_313] : memref<1x4x4x590xf32, #tpu.memory_space<vmem>>, vector<1x1x4x128xf32>
    %1431 = vector.shape_cast %1430 : vector<1x1x4x128xf32> to vector<4x128xf32>
    %c216 = arith.constant 216 : index
    %1432 = memref.load %arg3[%c216] : memref<528xf32, #tpu.memory_space<smem>>
    %1433 = vector.broadcast %1432 : f32 to vector<4x128xf32>
    %1434 = arith.mulf %1433, %1431 : vector<4x128xf32>
    %1435 = arith.addf %1417, %1434 : vector<4x128xf32>
    %c217 = arith.constant 217 : index
    %1436 = memref.load %arg3[%c217] : memref<528xf32, #tpu.memory_space<smem>>
    %1437 = vector.broadcast %1436 : f32 to vector<4x128xf32>
    %1438 = arith.mulf %1437, %1431 : vector<4x128xf32>
    %1439 = arith.addf %1421, %1438 : vector<4x128xf32>
    %c218 = arith.constant 218 : index
    %1440 = memref.load %arg3[%c218] : memref<528xf32, #tpu.memory_space<smem>>
    %1441 = vector.broadcast %1440 : f32 to vector<4x128xf32>
    %1442 = arith.mulf %1441, %1431 : vector<4x128xf32>
    %1443 = arith.addf %1425, %1442 : vector<4x128xf32>
    %c219 = arith.constant 219 : index
    %1444 = memref.load %arg3[%c219] : memref<528xf32, #tpu.memory_space<smem>>
    %1445 = vector.broadcast %1444 : f32 to vector<4x128xf32>
    %1446 = arith.mulf %1445, %1431 : vector<4x128xf32>
    %1447 = arith.addf %1429, %1446 : vector<4x128xf32>
    %c0_314 = arith.constant 0 : index
    %c2_315 = arith.constant 2 : index
    %c0_316 = arith.constant 0 : index
    %c327_317 = arith.constant 327 : index
    %1448 = vector.load %arg2[%c0_314, %c2_315, %c0_316, %c327_317] : memref<1x4x4x590xf32, #tpu.memory_space<vmem>>, vector<1x1x4x128xf32>
    %1449 = vector.shape_cast %1448 : vector<1x1x4x128xf32> to vector<4x128xf32>
    %c232_318 = arith.constant 232 : index
    %1450 = memref.load %arg3[%c232_318] : memref<528xf32, #tpu.memory_space<smem>>
    %1451 = vector.broadcast %1450 : f32 to vector<4x128xf32>
    %1452 = arith.mulf %1451, %1449 : vector<4x128xf32>
    %1453 = arith.addf %1435, %1452 : vector<4x128xf32>
    %c233 = arith.constant 233 : index
    %1454 = memref.load %arg3[%c233] : memref<528xf32, #tpu.memory_space<smem>>
    %1455 = vector.broadcast %1454 : f32 to vector<4x128xf32>
    %1456 = arith.mulf %1455, %1449 : vector<4x128xf32>
    %1457 = arith.addf %1439, %1456 : vector<4x128xf32>
    %c234_319 = arith.constant 234 : index
    %1458 = memref.load %arg3[%c234_319] : memref<528xf32, #tpu.memory_space<smem>>
    %1459 = vector.broadcast %1458 : f32 to vector<4x128xf32>
    %1460 = arith.mulf %1459, %1449 : vector<4x128xf32>
    %1461 = arith.addf %1443, %1460 : vector<4x128xf32>
    %c235 = arith.constant 235 : index
    %1462 = memref.load %arg3[%c235] : memref<528xf32, #tpu.memory_space<smem>>
    %1463 = vector.broadcast %1462 : f32 to vector<4x128xf32>
    %1464 = arith.mulf %1463, %1449 : vector<4x128xf32>
    %1465 = arith.addf %1447, %1464 : vector<4x128xf32>
    %c0_320 = arith.constant 0 : index
    %c2_321 = arith.constant 2 : index
    %c0_322 = arith.constant 0 : index
    %c330_323 = arith.constant 330 : index
    %1466 = vector.load %arg2[%c0_320, %c2_321, %c0_322, %c330_323] : memref<1x4x4x590xf32, #tpu.memory_space<vmem>>, vector<1x1x4x128xf32>
    %1467 = vector.shape_cast %1466 : vector<1x1x4x128xf32> to vector<4x128xf32>
    %c248 = arith.constant 248 : index
    %1468 = memref.load %arg3[%c248] : memref<528xf32, #tpu.memory_space<smem>>
    %1469 = vector.broadcast %1468 : f32 to vector<4x128xf32>
    %1470 = arith.mulf %1469, %1467 : vector<4x128xf32>
    %1471 = arith.addf %1453, %1470 : vector<4x128xf32>
    %c249 = arith.constant 249 : index
    %1472 = memref.load %arg3[%c249] : memref<528xf32, #tpu.memory_space<smem>>
    %1473 = vector.broadcast %1472 : f32 to vector<4x128xf32>
    %1474 = arith.mulf %1473, %1467 : vector<4x128xf32>
    %1475 = arith.addf %1457, %1474 : vector<4x128xf32>
    %c250 = arith.constant 250 : index
    %1476 = memref.load %arg3[%c250] : memref<528xf32, #tpu.memory_space<smem>>
    %1477 = vector.broadcast %1476 : f32 to vector<4x128xf32>
    %1478 = arith.mulf %1477, %1467 : vector<4x128xf32>
    %1479 = arith.addf %1461, %1478 : vector<4x128xf32>
    %c251 = arith.constant 251 : index
    %1480 = memref.load %arg3[%c251] : memref<528xf32, #tpu.memory_space<smem>>
    %1481 = vector.broadcast %1480 : f32 to vector<4x128xf32>
    %1482 = arith.mulf %1481, %1467 : vector<4x128xf32>
    %1483 = arith.addf %1465, %1482 : vector<4x128xf32>
    %c0_324 = arith.constant 0 : index
    %c2_325 = arith.constant 2 : index
    %c0_326 = arith.constant 0 : index
    %c66_327 = arith.constant 66 : index
    %1484 = vector.load %arg2[%c0_324, %c2_325, %c0_326, %c66_327] : memref<1x4x4x590xf32, #tpu.memory_space<vmem>>, vector<1x1x4x128xf32>
    %1485 = vector.shape_cast %1484 : vector<1x1x4x128xf32> to vector<4x128xf32>
    %c264_328 = arith.constant 264 : index
    %1486 = memref.load %arg3[%c264_328] : memref<528xf32, #tpu.memory_space<smem>>
    %1487 = vector.broadcast %1486 : f32 to vector<4x128xf32>
    %1488 = arith.mulf %1487, %1485 : vector<4x128xf32>
    %1489 = arith.addf %1471, %1488 : vector<4x128xf32>
    %c265 = arith.constant 265 : index
    %1490 = memref.load %arg3[%c265] : memref<528xf32, #tpu.memory_space<smem>>
    %1491 = vector.broadcast %1490 : f32 to vector<4x128xf32>
    %1492 = arith.mulf %1491, %1485 : vector<4x128xf32>
    %1493 = arith.addf %1475, %1492 : vector<4x128xf32>
    %c266 = arith.constant 266 : index
    %1494 = memref.load %arg3[%c266] : memref<528xf32, #tpu.memory_space<smem>>
    %1495 = vector.broadcast %1494 : f32 to vector<4x128xf32>
    %1496 = arith.mulf %1495, %1485 : vector<4x128xf32>
    %1497 = arith.addf %1479, %1496 : vector<4x128xf32>
    %c267 = arith.constant 267 : index
    %1498 = memref.load %arg3[%c267] : memref<528xf32, #tpu.memory_space<smem>>
    %1499 = vector.broadcast %1498 : f32 to vector<4x128xf32>
    %1500 = arith.mulf %1499, %1485 : vector<4x128xf32>
    %1501 = arith.addf %1483, %1500 : vector<4x128xf32>
    %c0_329 = arith.constant 0 : index
    %c2_330 = arith.constant 2 : index
    %c0_331 = arith.constant 0 : index
    %c71_332 = arith.constant 71 : index
    %1502 = vector.load %arg2[%c0_329, %c2_330, %c0_331, %c71_332] : memref<1x4x4x590xf32, #tpu.memory_space<vmem>>, vector<1x1x4x128xf32>
    %1503 = vector.shape_cast %1502 : vector<1x1x4x128xf32> to vector<4x128xf32>
    %c280 = arith.constant 280 : index
    %1504 = memref.load %arg3[%c280] : memref<528xf32, #tpu.memory_space<smem>>
    %1505 = vector.broadcast %1504 : f32 to vector<4x128xf32>
    %1506 = arith.mulf %1505, %1503 : vector<4x128xf32>
    %1507 = arith.addf %1489, %1506 : vector<4x128xf32>
    %c281 = arith.constant 281 : index
    %1508 = memref.load %arg3[%c281] : memref<528xf32, #tpu.memory_space<smem>>
    %1509 = vector.broadcast %1508 : f32 to vector<4x128xf32>
    %1510 = arith.mulf %1509, %1503 : vector<4x128xf32>
    %1511 = arith.addf %1493, %1510 : vector<4x128xf32>
    %c282 = arith.constant 282 : index
    %1512 = memref.load %arg3[%c282] : memref<528xf32, #tpu.memory_space<smem>>
    %1513 = vector.broadcast %1512 : f32 to vector<4x128xf32>
    %1514 = arith.mulf %1513, %1503 : vector<4x128xf32>
    %1515 = arith.addf %1497, %1514 : vector<4x128xf32>
    %c283 = arith.constant 283 : index
    %1516 = memref.load %arg3[%c283] : memref<528xf32, #tpu.memory_space<smem>>
    %1517 = vector.broadcast %1516 : f32 to vector<4x128xf32>
    %1518 = arith.mulf %1517, %1503 : vector<4x128xf32>
    %1519 = arith.addf %1501, %1518 : vector<4x128xf32>
    %c0_333 = arith.constant 0 : index
    %c2_334 = arith.constant 2 : index
    %c0_335 = arith.constant 0 : index
    %c76_336 = arith.constant 76 : index
    %1520 = vector.load %arg2[%c0_333, %c2_334, %c0_335, %c76_336] : memref<1x4x4x590xf32, #tpu.memory_space<vmem>>, vector<1x1x4x128xf32>
    %1521 = vector.shape_cast %1520 : vector<1x1x4x128xf32> to vector<4x128xf32>
    %c296 = arith.constant 296 : index
    %1522 = memref.load %arg3[%c296] : memref<528xf32, #tpu.memory_space<smem>>
    %1523 = vector.broadcast %1522 : f32 to vector<4x128xf32>
    %1524 = arith.mulf %1523, %1521 : vector<4x128xf32>
    %1525 = arith.addf %1507, %1524 : vector<4x128xf32>
    %c297 = arith.constant 297 : index
    %1526 = memref.load %arg3[%c297] : memref<528xf32, #tpu.memory_space<smem>>
    %1527 = vector.broadcast %1526 : f32 to vector<4x128xf32>
    %1528 = arith.mulf %1527, %1521 : vector<4x128xf32>
    %1529 = arith.addf %1511, %1528 : vector<4x128xf32>
    %c298 = arith.constant 298 : index
    %1530 = memref.load %arg3[%c298] : memref<528xf32, #tpu.memory_space<smem>>
    %1531 = vector.broadcast %1530 : f32 to vector<4x128xf32>
    %1532 = arith.mulf %1531, %1521 : vector<4x128xf32>
    %1533 = arith.addf %1515, %1532 : vector<4x128xf32>
    %c299 = arith.constant 299 : index
    %1534 = memref.load %arg3[%c299] : memref<528xf32, #tpu.memory_space<smem>>
    %1535 = vector.broadcast %1534 : f32 to vector<4x128xf32>
    %1536 = arith.mulf %1535, %1521 : vector<4x128xf32>
    %1537 = arith.addf %1519, %1536 : vector<4x128xf32>
    %c0_337 = arith.constant 0 : index
    %c2_338 = arith.constant 2 : index
    %c0_339 = arith.constant 0 : index
    %c226_340 = arith.constant 226 : index
    %1538 = vector.load %arg2[%c0_337, %c2_338, %c0_339, %c226_340] : memref<1x4x4x590xf32, #tpu.memory_space<vmem>>, vector<1x1x4x128xf32>
    %1539 = vector.shape_cast %1538 : vector<1x1x4x128xf32> to vector<4x128xf32>
    %c312 = arith.constant 312 : index
    %1540 = memref.load %arg3[%c312] : memref<528xf32, #tpu.memory_space<smem>>
    %1541 = vector.broadcast %1540 : f32 to vector<4x128xf32>
    %1542 = arith.mulf %1541, %1539 : vector<4x128xf32>
    %1543 = arith.addf %1525, %1542 : vector<4x128xf32>
    %c313 = arith.constant 313 : index
    %1544 = memref.load %arg3[%c313] : memref<528xf32, #tpu.memory_space<smem>>
    %1545 = vector.broadcast %1544 : f32 to vector<4x128xf32>
    %1546 = arith.mulf %1545, %1539 : vector<4x128xf32>
    %1547 = arith.addf %1529, %1546 : vector<4x128xf32>
    %c314 = arith.constant 314 : index
    %1548 = memref.load %arg3[%c314] : memref<528xf32, #tpu.memory_space<smem>>
    %1549 = vector.broadcast %1548 : f32 to vector<4x128xf32>
    %1550 = arith.mulf %1549, %1539 : vector<4x128xf32>
    %1551 = arith.addf %1533, %1550 : vector<4x128xf32>
    %c315 = arith.constant 315 : index
    %1552 = memref.load %arg3[%c315] : memref<528xf32, #tpu.memory_space<smem>>
    %1553 = vector.broadcast %1552 : f32 to vector<4x128xf32>
    %1554 = arith.mulf %1553, %1539 : vector<4x128xf32>
    %1555 = arith.addf %1537, %1554 : vector<4x128xf32>
    %c0_341 = arith.constant 0 : index
    %c2_342 = arith.constant 2 : index
    %c0_343 = arith.constant 0 : index
    %c236_344 = arith.constant 236 : index
    %1556 = vector.load %arg2[%c0_341, %c2_342, %c0_343, %c236_344] : memref<1x4x4x590xf32, #tpu.memory_space<vmem>>, vector<1x1x4x128xf32>
    %1557 = vector.shape_cast %1556 : vector<1x1x4x128xf32> to vector<4x128xf32>
    %c328 = arith.constant 328 : index
    %1558 = memref.load %arg3[%c328] : memref<528xf32, #tpu.memory_space<smem>>
    %1559 = vector.broadcast %1558 : f32 to vector<4x128xf32>
    %1560 = arith.mulf %1559, %1557 : vector<4x128xf32>
    %1561 = arith.addf %1543, %1560 : vector<4x128xf32>
    %c329 = arith.constant 329 : index
    %1562 = memref.load %arg3[%c329] : memref<528xf32, #tpu.memory_space<smem>>
    %1563 = vector.broadcast %1562 : f32 to vector<4x128xf32>
    %1564 = arith.mulf %1563, %1557 : vector<4x128xf32>
    %1565 = arith.addf %1547, %1564 : vector<4x128xf32>
    %c330_345 = arith.constant 330 : index
    %1566 = memref.load %arg3[%c330_345] : memref<528xf32, #tpu.memory_space<smem>>
    %1567 = vector.broadcast %1566 : f32 to vector<4x128xf32>
    %1568 = arith.mulf %1567, %1557 : vector<4x128xf32>
    %1569 = arith.addf %1551, %1568 : vector<4x128xf32>
    %c331 = arith.constant 331 : index
    %1570 = memref.load %arg3[%c331] : memref<528xf32, #tpu.memory_space<smem>>
    %1571 = vector.broadcast %1570 : f32 to vector<4x128xf32>
    %1572 = arith.mulf %1571, %1557 : vector<4x128xf32>
    %1573 = arith.addf %1555, %1572 : vector<4x128xf32>
    %c0_346 = arith.constant 0 : index
    %c2_347 = arith.constant 2 : index
    %c0_348 = arith.constant 0 : index
    %c386_349 = arith.constant 386 : index
    %1574 = vector.load %arg2[%c0_346, %c2_347, %c0_348, %c386_349] : memref<1x4x4x590xf32, #tpu.memory_space<vmem>>, vector<1x1x4x128xf32>
    %1575 = vector.shape_cast %1574 : vector<1x1x4x128xf32> to vector<4x128xf32>
    %c344 = arith.constant 344 : index
    %1576 = memref.load %arg3[%c344] : memref<528xf32, #tpu.memory_space<smem>>
    %1577 = vector.broadcast %1576 : f32 to vector<4x128xf32>
    %1578 = arith.mulf %1577, %1575 : vector<4x128xf32>
    %1579 = arith.addf %1561, %1578 : vector<4x128xf32>
    %c345 = arith.constant 345 : index
    %1580 = memref.load %arg3[%c345] : memref<528xf32, #tpu.memory_space<smem>>
    %1581 = vector.broadcast %1580 : f32 to vector<4x128xf32>
    %1582 = arith.mulf %1581, %1575 : vector<4x128xf32>
    %1583 = arith.addf %1565, %1582 : vector<4x128xf32>
    %c346 = arith.constant 346 : index
    %1584 = memref.load %arg3[%c346] : memref<528xf32, #tpu.memory_space<smem>>
    %1585 = vector.broadcast %1584 : f32 to vector<4x128xf32>
    %1586 = arith.mulf %1585, %1575 : vector<4x128xf32>
    %1587 = arith.addf %1569, %1586 : vector<4x128xf32>
    %c347 = arith.constant 347 : index
    %1588 = memref.load %arg3[%c347] : memref<528xf32, #tpu.memory_space<smem>>
    %1589 = vector.broadcast %1588 : f32 to vector<4x128xf32>
    %1590 = arith.mulf %1589, %1575 : vector<4x128xf32>
    %1591 = arith.addf %1573, %1590 : vector<4x128xf32>
    %c0_350 = arith.constant 0 : index
    %c2_351 = arith.constant 2 : index
    %c0_352 = arith.constant 0 : index
    %c391_353 = arith.constant 391 : index
    %1592 = vector.load %arg2[%c0_350, %c2_351, %c0_352, %c391_353] : memref<1x4x4x590xf32, #tpu.memory_space<vmem>>, vector<1x1x4x128xf32>
    %1593 = vector.shape_cast %1592 : vector<1x1x4x128xf32> to vector<4x128xf32>
    %c360 = arith.constant 360 : index
    %1594 = memref.load %arg3[%c360] : memref<528xf32, #tpu.memory_space<smem>>
    %1595 = vector.broadcast %1594 : f32 to vector<4x128xf32>
    %1596 = arith.mulf %1595, %1593 : vector<4x128xf32>
    %1597 = arith.addf %1579, %1596 : vector<4x128xf32>
    %c361 = arith.constant 361 : index
    %1598 = memref.load %arg3[%c361] : memref<528xf32, #tpu.memory_space<smem>>
    %1599 = vector.broadcast %1598 : f32 to vector<4x128xf32>
    %1600 = arith.mulf %1599, %1593 : vector<4x128xf32>
    %1601 = arith.addf %1583, %1600 : vector<4x128xf32>
    %c362 = arith.constant 362 : index
    %1602 = memref.load %arg3[%c362] : memref<528xf32, #tpu.memory_space<smem>>
    %1603 = vector.broadcast %1602 : f32 to vector<4x128xf32>
    %1604 = arith.mulf %1603, %1593 : vector<4x128xf32>
    %1605 = arith.addf %1587, %1604 : vector<4x128xf32>
    %c363 = arith.constant 363 : index
    %1606 = memref.load %arg3[%c363] : memref<528xf32, #tpu.memory_space<smem>>
    %1607 = vector.broadcast %1606 : f32 to vector<4x128xf32>
    %1608 = arith.mulf %1607, %1593 : vector<4x128xf32>
    %1609 = arith.addf %1591, %1608 : vector<4x128xf32>
    %c0_354 = arith.constant 0 : index
    %c2_355 = arith.constant 2 : index
    %c0_356 = arith.constant 0 : index
    %c396_357 = arith.constant 396 : index
    %1610 = vector.load %arg2[%c0_354, %c2_355, %c0_356, %c396_357] : memref<1x4x4x590xf32, #tpu.memory_space<vmem>>, vector<1x1x4x128xf32>
    %1611 = vector.shape_cast %1610 : vector<1x1x4x128xf32> to vector<4x128xf32>
    %c376 = arith.constant 376 : index
    %1612 = memref.load %arg3[%c376] : memref<528xf32, #tpu.memory_space<smem>>
    %1613 = vector.broadcast %1612 : f32 to vector<4x128xf32>
    %1614 = arith.mulf %1613, %1611 : vector<4x128xf32>
    %1615 = arith.addf %1597, %1614 : vector<4x128xf32>
    %c377 = arith.constant 377 : index
    %1616 = memref.load %arg3[%c377] : memref<528xf32, #tpu.memory_space<smem>>
    %1617 = vector.broadcast %1616 : f32 to vector<4x128xf32>
    %1618 = arith.mulf %1617, %1611 : vector<4x128xf32>
    %1619 = arith.addf %1601, %1618 : vector<4x128xf32>
    %c378 = arith.constant 378 : index
    %1620 = memref.load %arg3[%c378] : memref<528xf32, #tpu.memory_space<smem>>
    %1621 = vector.broadcast %1620 : f32 to vector<4x128xf32>
    %1622 = arith.mulf %1621, %1611 : vector<4x128xf32>
    %1623 = arith.addf %1605, %1622 : vector<4x128xf32>
    %c379 = arith.constant 379 : index
    %1624 = memref.load %arg3[%c379] : memref<528xf32, #tpu.memory_space<smem>>
    %1625 = vector.broadcast %1624 : f32 to vector<4x128xf32>
    %1626 = arith.mulf %1625, %1611 : vector<4x128xf32>
    %1627 = arith.addf %1609, %1626 : vector<4x128xf32>
    %c0_358 = arith.constant 0 : index
    %c2_359 = arith.constant 2 : index
    %c0_360 = arith.constant 0 : index
    %c0_361 = arith.constant 0 : index
    %1628 = vector.load %arg2[%c0_358, %c2_359, %c0_360, %c0_361] : memref<1x4x4x590xf32, #tpu.memory_space<vmem>>, vector<1x1x4x128xf32>
    %1629 = vector.shape_cast %1628 : vector<1x1x4x128xf32> to vector<4x128xf32>
    %c392 = arith.constant 392 : index
    %1630 = memref.load %arg3[%c392] : memref<528xf32, #tpu.memory_space<smem>>
    %1631 = vector.broadcast %1630 : f32 to vector<4x128xf32>
    %1632 = arith.mulf %1631, %1629 : vector<4x128xf32>
    %1633 = arith.addf %1615, %1632 : vector<4x128xf32>
    %c393 = arith.constant 393 : index
    %1634 = memref.load %arg3[%c393] : memref<528xf32, #tpu.memory_space<smem>>
    %1635 = vector.broadcast %1634 : f32 to vector<4x128xf32>
    %1636 = arith.mulf %1635, %1629 : vector<4x128xf32>
    %1637 = arith.addf %1619, %1636 : vector<4x128xf32>
    %c394 = arith.constant 394 : index
    %1638 = memref.load %arg3[%c394] : memref<528xf32, #tpu.memory_space<smem>>
    %1639 = vector.broadcast %1638 : f32 to vector<4x128xf32>
    %1640 = arith.mulf %1639, %1629 : vector<4x128xf32>
    %1641 = arith.addf %1623, %1640 : vector<4x128xf32>
    %c395 = arith.constant 395 : index
    %1642 = memref.load %arg3[%c395] : memref<528xf32, #tpu.memory_space<smem>>
    %1643 = vector.broadcast %1642 : f32 to vector<4x128xf32>
    %1644 = arith.mulf %1643, %1629 : vector<4x128xf32>
    %1645 = arith.addf %1627, %1644 : vector<4x128xf32>
    %c0_362 = arith.constant 0 : index
    %c2_363 = arith.constant 2 : index
    %c0_364 = arith.constant 0 : index
    %c7_365 = arith.constant 7 : index
    %1646 = vector.load %arg2[%c0_362, %c2_363, %c0_364, %c7_365] : memref<1x4x4x590xf32, #tpu.memory_space<vmem>>, vector<1x1x4x128xf32>
    %1647 = vector.shape_cast %1646 : vector<1x1x4x128xf32> to vector<4x128xf32>
    %c408 = arith.constant 408 : index
    %1648 = memref.load %arg3[%c408] : memref<528xf32, #tpu.memory_space<smem>>
    %1649 = vector.broadcast %1648 : f32 to vector<4x128xf32>
    %1650 = arith.mulf %1649, %1647 : vector<4x128xf32>
    %1651 = arith.addf %1633, %1650 : vector<4x128xf32>
    %c409 = arith.constant 409 : index
    %1652 = memref.load %arg3[%c409] : memref<528xf32, #tpu.memory_space<smem>>
    %1653 = vector.broadcast %1652 : f32 to vector<4x128xf32>
    %1654 = arith.mulf %1653, %1647 : vector<4x128xf32>
    %1655 = arith.addf %1637, %1654 : vector<4x128xf32>
    %c410 = arith.constant 410 : index
    %1656 = memref.load %arg3[%c410] : memref<528xf32, #tpu.memory_space<smem>>
    %1657 = vector.broadcast %1656 : f32 to vector<4x128xf32>
    %1658 = arith.mulf %1657, %1647 : vector<4x128xf32>
    %1659 = arith.addf %1641, %1658 : vector<4x128xf32>
    %c411 = arith.constant 411 : index
    %1660 = memref.load %arg3[%c411] : memref<528xf32, #tpu.memory_space<smem>>
    %1661 = vector.broadcast %1660 : f32 to vector<4x128xf32>
    %1662 = arith.mulf %1661, %1647 : vector<4x128xf32>
    %1663 = arith.addf %1645, %1662 : vector<4x128xf32>
    %c0_366 = arith.constant 0 : index
    %c2_367 = arith.constant 2 : index
    %c0_368 = arith.constant 0 : index
    %c14_369 = arith.constant 14 : index
    %1664 = vector.load %arg2[%c0_366, %c2_367, %c0_368, %c14_369] : memref<1x4x4x590xf32, #tpu.memory_space<vmem>>, vector<1x1x4x128xf32>
    %1665 = vector.shape_cast %1664 : vector<1x1x4x128xf32> to vector<4x128xf32>
    %c424 = arith.constant 424 : index
    %1666 = memref.load %arg3[%c424] : memref<528xf32, #tpu.memory_space<smem>>
    %1667 = vector.broadcast %1666 : f32 to vector<4x128xf32>
    %1668 = arith.mulf %1667, %1665 : vector<4x128xf32>
    %1669 = arith.addf %1651, %1668 : vector<4x128xf32>
    %c425 = arith.constant 425 : index
    %1670 = memref.load %arg3[%c425] : memref<528xf32, #tpu.memory_space<smem>>
    %1671 = vector.broadcast %1670 : f32 to vector<4x128xf32>
    %1672 = arith.mulf %1671, %1665 : vector<4x128xf32>
    %1673 = arith.addf %1655, %1672 : vector<4x128xf32>
    %c426 = arith.constant 426 : index
    %1674 = memref.load %arg3[%c426] : memref<528xf32, #tpu.memory_space<smem>>
    %1675 = vector.broadcast %1674 : f32 to vector<4x128xf32>
    %1676 = arith.mulf %1675, %1665 : vector<4x128xf32>
    %1677 = arith.addf %1659, %1676 : vector<4x128xf32>
    %c427 = arith.constant 427 : index
    %1678 = memref.load %arg3[%c427] : memref<528xf32, #tpu.memory_space<smem>>
    %1679 = vector.broadcast %1678 : f32 to vector<4x128xf32>
    %1680 = arith.mulf %1679, %1665 : vector<4x128xf32>
    %1681 = arith.addf %1663, %1680 : vector<4x128xf32>
    %c0_370 = arith.constant 0 : index
    %c2_371 = arith.constant 2 : index
    %c0_372 = arith.constant 0 : index
    %c224_373 = arith.constant 224 : index
    %1682 = vector.load %arg2[%c0_370, %c2_371, %c0_372, %c224_373] : memref<1x4x4x590xf32, #tpu.memory_space<vmem>>, vector<1x1x4x128xf32>
    %1683 = vector.shape_cast %1682 : vector<1x1x4x128xf32> to vector<4x128xf32>
    %c440 = arith.constant 440 : index
    %1684 = memref.load %arg3[%c440] : memref<528xf32, #tpu.memory_space<smem>>
    %1685 = vector.broadcast %1684 : f32 to vector<4x128xf32>
    %1686 = arith.mulf %1685, %1683 : vector<4x128xf32>
    %1687 = arith.addf %1669, %1686 : vector<4x128xf32>
    %c441 = arith.constant 441 : index
    %1688 = memref.load %arg3[%c441] : memref<528xf32, #tpu.memory_space<smem>>
    %1689 = vector.broadcast %1688 : f32 to vector<4x128xf32>
    %1690 = arith.mulf %1689, %1683 : vector<4x128xf32>
    %1691 = arith.addf %1673, %1690 : vector<4x128xf32>
    %c442 = arith.constant 442 : index
    %1692 = memref.load %arg3[%c442] : memref<528xf32, #tpu.memory_space<smem>>
    %1693 = vector.broadcast %1692 : f32 to vector<4x128xf32>
    %1694 = arith.mulf %1693, %1683 : vector<4x128xf32>
    %1695 = arith.addf %1677, %1694 : vector<4x128xf32>
    %c443 = arith.constant 443 : index
    %1696 = memref.load %arg3[%c443] : memref<528xf32, #tpu.memory_space<smem>>
    %1697 = vector.broadcast %1696 : f32 to vector<4x128xf32>
    %1698 = arith.mulf %1697, %1683 : vector<4x128xf32>
    %1699 = arith.addf %1681, %1698 : vector<4x128xf32>
    %c0_374 = arith.constant 0 : index
    %c2_375 = arith.constant 2 : index
    %c0_376 = arith.constant 0 : index
    %c238_377 = arith.constant 238 : index
    %1700 = vector.load %arg2[%c0_374, %c2_375, %c0_376, %c238_377] : memref<1x4x4x590xf32, #tpu.memory_space<vmem>>, vector<1x1x4x128xf32>
    %1701 = vector.shape_cast %1700 : vector<1x1x4x128xf32> to vector<4x128xf32>
    %c456 = arith.constant 456 : index
    %1702 = memref.load %arg3[%c456] : memref<528xf32, #tpu.memory_space<smem>>
    %1703 = vector.broadcast %1702 : f32 to vector<4x128xf32>
    %1704 = arith.mulf %1703, %1701 : vector<4x128xf32>
    %1705 = arith.addf %1687, %1704 : vector<4x128xf32>
    %c457 = arith.constant 457 : index
    %1706 = memref.load %arg3[%c457] : memref<528xf32, #tpu.memory_space<smem>>
    %1707 = vector.broadcast %1706 : f32 to vector<4x128xf32>
    %1708 = arith.mulf %1707, %1701 : vector<4x128xf32>
    %1709 = arith.addf %1691, %1708 : vector<4x128xf32>
    %c458 = arith.constant 458 : index
    %1710 = memref.load %arg3[%c458] : memref<528xf32, #tpu.memory_space<smem>>
    %1711 = vector.broadcast %1710 : f32 to vector<4x128xf32>
    %1712 = arith.mulf %1711, %1701 : vector<4x128xf32>
    %1713 = arith.addf %1695, %1712 : vector<4x128xf32>
    %c459 = arith.constant 459 : index
    %1714 = memref.load %arg3[%c459] : memref<528xf32, #tpu.memory_space<smem>>
    %1715 = vector.broadcast %1714 : f32 to vector<4x128xf32>
    %1716 = arith.mulf %1715, %1701 : vector<4x128xf32>
    %1717 = arith.addf %1699, %1716 : vector<4x128xf32>
    %c0_378 = arith.constant 0 : index
    %c2_379 = arith.constant 2 : index
    %c0_380 = arith.constant 0 : index
    %c448_381 = arith.constant 448 : index
    %1718 = vector.load %arg2[%c0_378, %c2_379, %c0_380, %c448_381] : memref<1x4x4x590xf32, #tpu.memory_space<vmem>>, vector<1x1x4x128xf32>
    %1719 = vector.shape_cast %1718 : vector<1x1x4x128xf32> to vector<4x128xf32>
    %c472 = arith.constant 472 : index
    %1720 = memref.load %arg3[%c472] : memref<528xf32, #tpu.memory_space<smem>>
    %1721 = vector.broadcast %1720 : f32 to vector<4x128xf32>
    %1722 = arith.mulf %1721, %1719 : vector<4x128xf32>
    %1723 = arith.addf %1705, %1722 : vector<4x128xf32>
    %c473 = arith.constant 473 : index
    %1724 = memref.load %arg3[%c473] : memref<528xf32, #tpu.memory_space<smem>>
    %1725 = vector.broadcast %1724 : f32 to vector<4x128xf32>
    %1726 = arith.mulf %1725, %1719 : vector<4x128xf32>
    %1727 = arith.addf %1709, %1726 : vector<4x128xf32>
    %c474 = arith.constant 474 : index
    %1728 = memref.load %arg3[%c474] : memref<528xf32, #tpu.memory_space<smem>>
    %1729 = vector.broadcast %1728 : f32 to vector<4x128xf32>
    %1730 = arith.mulf %1729, %1719 : vector<4x128xf32>
    %1731 = arith.addf %1713, %1730 : vector<4x128xf32>
    %c475 = arith.constant 475 : index
    %1732 = memref.load %arg3[%c475] : memref<528xf32, #tpu.memory_space<smem>>
    %1733 = vector.broadcast %1732 : f32 to vector<4x128xf32>
    %1734 = arith.mulf %1733, %1719 : vector<4x128xf32>
    %1735 = arith.addf %1717, %1734 : vector<4x128xf32>
    %c0_382 = arith.constant 0 : index
    %c2_383 = arith.constant 2 : index
    %c0_384 = arith.constant 0 : index
    %c455_385 = arith.constant 455 : index
    %1736 = vector.load %arg2[%c0_382, %c2_383, %c0_384, %c455_385] : memref<1x4x4x590xf32, #tpu.memory_space<vmem>>, vector<1x1x4x128xf32>
    %1737 = vector.shape_cast %1736 : vector<1x1x4x128xf32> to vector<4x128xf32>
    %c488 = arith.constant 488 : index
    %1738 = memref.load %arg3[%c488] : memref<528xf32, #tpu.memory_space<smem>>
    %1739 = vector.broadcast %1738 : f32 to vector<4x128xf32>
    %1740 = arith.mulf %1739, %1737 : vector<4x128xf32>
    %1741 = arith.addf %1723, %1740 : vector<4x128xf32>
    %c489 = arith.constant 489 : index
    %1742 = memref.load %arg3[%c489] : memref<528xf32, #tpu.memory_space<smem>>
    %1743 = vector.broadcast %1742 : f32 to vector<4x128xf32>
    %1744 = arith.mulf %1743, %1737 : vector<4x128xf32>
    %1745 = arith.addf %1727, %1744 : vector<4x128xf32>
    %c490 = arith.constant 490 : index
    %1746 = memref.load %arg3[%c490] : memref<528xf32, #tpu.memory_space<smem>>
    %1747 = vector.broadcast %1746 : f32 to vector<4x128xf32>
    %1748 = arith.mulf %1747, %1737 : vector<4x128xf32>
    %1749 = arith.addf %1731, %1748 : vector<4x128xf32>
    %c491 = arith.constant 491 : index
    %1750 = memref.load %arg3[%c491] : memref<528xf32, #tpu.memory_space<smem>>
    %1751 = vector.broadcast %1750 : f32 to vector<4x128xf32>
    %1752 = arith.mulf %1751, %1737 : vector<4x128xf32>
    %1753 = arith.addf %1735, %1752 : vector<4x128xf32>
    %c0_386 = arith.constant 0 : index
    %c2_387 = arith.constant 2 : index
    %c0_388 = arith.constant 0 : index
    %c462_389 = arith.constant 462 : index
    %1754 = vector.load %arg2[%c0_386, %c2_387, %c0_388, %c462_389] : memref<1x4x4x590xf32, #tpu.memory_space<vmem>>, vector<1x1x4x128xf32>
    %1755 = vector.shape_cast %1754 : vector<1x1x4x128xf32> to vector<4x128xf32>
    %c504 = arith.constant 504 : index
    %1756 = memref.load %arg3[%c504] : memref<528xf32, #tpu.memory_space<smem>>
    %1757 = vector.broadcast %1756 : f32 to vector<4x128xf32>
    %1758 = arith.mulf %1757, %1755 : vector<4x128xf32>
    %1759 = arith.addf %1741, %1758 : vector<4x128xf32>
    %c505 = arith.constant 505 : index
    %1760 = memref.load %arg3[%c505] : memref<528xf32, #tpu.memory_space<smem>>
    %1761 = vector.broadcast %1760 : f32 to vector<4x128xf32>
    %1762 = arith.mulf %1761, %1755 : vector<4x128xf32>
    %1763 = arith.addf %1745, %1762 : vector<4x128xf32>
    %c506 = arith.constant 506 : index
    %1764 = memref.load %arg3[%c506] : memref<528xf32, #tpu.memory_space<smem>>
    %1765 = vector.broadcast %1764 : f32 to vector<4x128xf32>
    %1766 = arith.mulf %1765, %1755 : vector<4x128xf32>
    %1767 = arith.addf %1749, %1766 : vector<4x128xf32>
    %c507 = arith.constant 507 : index
    %1768 = memref.load %arg3[%c507] : memref<528xf32, #tpu.memory_space<smem>>
    %1769 = vector.broadcast %1768 : f32 to vector<4x128xf32>
    %1770 = arith.mulf %1769, %1755 : vector<4x128xf32>
    %1771 = arith.addf %1753, %1770 : vector<4x128xf32>
    %c0_390 = arith.constant 0 : index
    %c2_391 = arith.constant 2 : index
    %c0_392 = arith.constant 0 : index
    %c231_393 = arith.constant 231 : index
    %1772 = vector.load %arg2[%c0_390, %c2_391, %c0_392, %c231_393] : memref<1x4x4x590xf32, #tpu.memory_space<vmem>>, vector<1x1x4x128xf32>
    %1773 = vector.shape_cast %1772 : vector<1x1x4x128xf32> to vector<4x128xf32>
    %c520 = arith.constant 520 : index
    %1774 = memref.load %arg3[%c520] : memref<528xf32, #tpu.memory_space<smem>>
    %1775 = vector.broadcast %1774 : f32 to vector<4x128xf32>
    %1776 = arith.mulf %1775, %1773 : vector<4x128xf32>
    %1777 = arith.addf %1759, %1776 : vector<4x128xf32>
    %c521 = arith.constant 521 : index
    %1778 = memref.load %arg3[%c521] : memref<528xf32, #tpu.memory_space<smem>>
    %1779 = vector.broadcast %1778 : f32 to vector<4x128xf32>
    %1780 = arith.mulf %1779, %1773 : vector<4x128xf32>
    %1781 = arith.addf %1763, %1780 : vector<4x128xf32>
    %c522 = arith.constant 522 : index
    %1782 = memref.load %arg3[%c522] : memref<528xf32, #tpu.memory_space<smem>>
    %1783 = vector.broadcast %1782 : f32 to vector<4x128xf32>
    %1784 = arith.mulf %1783, %1773 : vector<4x128xf32>
    %1785 = arith.addf %1767, %1784 : vector<4x128xf32>
    %c523 = arith.constant 523 : index
    %1786 = memref.load %arg3[%c523] : memref<528xf32, #tpu.memory_space<smem>>
    %1787 = vector.broadcast %1786 : f32 to vector<4x128xf32>
    %1788 = arith.mulf %1787, %1773 : vector<4x128xf32>
    %1789 = arith.addf %1771, %1788 : vector<4x128xf32>
    %c0_394 = arith.constant 0 : index
    %c3_395 = arith.constant 3 : index
    %c0_396 = arith.constant 0 : index
    %c198_397 = arith.constant 198 : index
    %1790 = vector.load %arg2[%c0_394, %c3_395, %c0_396, %c198_397] : memref<1x4x4x590xf32, #tpu.memory_space<vmem>>, vector<1x1x4x128xf32>
    %1791 = vector.shape_cast %1790 : vector<1x1x4x128xf32> to vector<4x128xf32>
    %c12 = arith.constant 12 : index
    %1792 = memref.load %arg3[%c12] : memref<528xf32, #tpu.memory_space<smem>>
    %1793 = vector.broadcast %1792 : f32 to vector<4x128xf32>
    %1794 = arith.mulf %1793, %1791 : vector<4x128xf32>
    %1795 = arith.addf %1777, %1794 : vector<4x128xf32>
    %c13 = arith.constant 13 : index
    %1796 = memref.load %arg3[%c13] : memref<528xf32, #tpu.memory_space<smem>>
    %1797 = vector.broadcast %1796 : f32 to vector<4x128xf32>
    %1798 = arith.mulf %1797, %1791 : vector<4x128xf32>
    %1799 = arith.addf %1781, %1798 : vector<4x128xf32>
    %c14_398 = arith.constant 14 : index
    %1800 = memref.load %arg3[%c14_398] : memref<528xf32, #tpu.memory_space<smem>>
    %1801 = vector.broadcast %1800 : f32 to vector<4x128xf32>
    %1802 = arith.mulf %1801, %1791 : vector<4x128xf32>
    %1803 = arith.addf %1785, %1802 : vector<4x128xf32>
    %c15 = arith.constant 15 : index
    %1804 = memref.load %arg3[%c15] : memref<528xf32, #tpu.memory_space<smem>>
    %1805 = vector.broadcast %1804 : f32 to vector<4x128xf32>
    %1806 = arith.mulf %1805, %1791 : vector<4x128xf32>
    %1807 = arith.addf %1789, %1806 : vector<4x128xf32>
    %c0_399 = arith.constant 0 : index
    %c3_400 = arith.constant 3 : index
    %c0_401 = arith.constant 0 : index
    %c199_402 = arith.constant 199 : index
    %1808 = vector.load %arg2[%c0_399, %c3_400, %c0_401, %c199_402] : memref<1x4x4x590xf32, #tpu.memory_space<vmem>>, vector<1x1x4x128xf32>
    %1809 = vector.shape_cast %1808 : vector<1x1x4x128xf32> to vector<4x128xf32>
    %c28 = arith.constant 28 : index
    %1810 = memref.load %arg3[%c28] : memref<528xf32, #tpu.memory_space<smem>>
    %1811 = vector.broadcast %1810 : f32 to vector<4x128xf32>
    %1812 = arith.mulf %1811, %1809 : vector<4x128xf32>
    %1813 = arith.addf %1795, %1812 : vector<4x128xf32>
    %c29 = arith.constant 29 : index
    %1814 = memref.load %arg3[%c29] : memref<528xf32, #tpu.memory_space<smem>>
    %1815 = vector.broadcast %1814 : f32 to vector<4x128xf32>
    %1816 = arith.mulf %1815, %1809 : vector<4x128xf32>
    %1817 = arith.addf %1799, %1816 : vector<4x128xf32>
    %c30 = arith.constant 30 : index
    %1818 = memref.load %arg3[%c30] : memref<528xf32, #tpu.memory_space<smem>>
    %1819 = vector.broadcast %1818 : f32 to vector<4x128xf32>
    %1820 = arith.mulf %1819, %1809 : vector<4x128xf32>
    %1821 = arith.addf %1803, %1820 : vector<4x128xf32>
    %c31 = arith.constant 31 : index
    %1822 = memref.load %arg3[%c31] : memref<528xf32, #tpu.memory_space<smem>>
    %1823 = vector.broadcast %1822 : f32 to vector<4x128xf32>
    %1824 = arith.mulf %1823, %1809 : vector<4x128xf32>
    %1825 = arith.addf %1807, %1824 : vector<4x128xf32>
    %c0_403 = arith.constant 0 : index
    %c3_404 = arith.constant 3 : index
    %c0_405 = arith.constant 0 : index
    %c200_406 = arith.constant 200 : index
    %1826 = vector.load %arg2[%c0_403, %c3_404, %c0_405, %c200_406] : memref<1x4x4x590xf32, #tpu.memory_space<vmem>>, vector<1x1x4x128xf32>
    %1827 = vector.shape_cast %1826 : vector<1x1x4x128xf32> to vector<4x128xf32>
    %c44 = arith.constant 44 : index
    %1828 = memref.load %arg3[%c44] : memref<528xf32, #tpu.memory_space<smem>>
    %1829 = vector.broadcast %1828 : f32 to vector<4x128xf32>
    %1830 = arith.mulf %1829, %1827 : vector<4x128xf32>
    %1831 = arith.addf %1813, %1830 : vector<4x128xf32>
    %c45 = arith.constant 45 : index
    %1832 = memref.load %arg3[%c45] : memref<528xf32, #tpu.memory_space<smem>>
    %1833 = vector.broadcast %1832 : f32 to vector<4x128xf32>
    %1834 = arith.mulf %1833, %1827 : vector<4x128xf32>
    %1835 = arith.addf %1817, %1834 : vector<4x128xf32>
    %c46 = arith.constant 46 : index
    %1836 = memref.load %arg3[%c46] : memref<528xf32, #tpu.memory_space<smem>>
    %1837 = vector.broadcast %1836 : f32 to vector<4x128xf32>
    %1838 = arith.mulf %1837, %1827 : vector<4x128xf32>
    %1839 = arith.addf %1821, %1838 : vector<4x128xf32>
    %c47 = arith.constant 47 : index
    %1840 = memref.load %arg3[%c47] : memref<528xf32, #tpu.memory_space<smem>>
    %1841 = vector.broadcast %1840 : f32 to vector<4x128xf32>
    %1842 = arith.mulf %1841, %1827 : vector<4x128xf32>
    %1843 = arith.addf %1825, %1842 : vector<4x128xf32>
    %c0_407 = arith.constant 0 : index
    %c3_408 = arith.constant 3 : index
    %c0_409 = arith.constant 0 : index
    %c230_410 = arith.constant 230 : index
    %1844 = vector.load %arg2[%c0_407, %c3_408, %c0_409, %c230_410] : memref<1x4x4x590xf32, #tpu.memory_space<vmem>>, vector<1x1x4x128xf32>
    %1845 = vector.shape_cast %1844 : vector<1x1x4x128xf32> to vector<4x128xf32>
    %c60 = arith.constant 60 : index
    %1846 = memref.load %arg3[%c60] : memref<528xf32, #tpu.memory_space<smem>>
    %1847 = vector.broadcast %1846 : f32 to vector<4x128xf32>
    %1848 = arith.mulf %1847, %1845 : vector<4x128xf32>
    %1849 = arith.addf %1831, %1848 : vector<4x128xf32>
    %c61 = arith.constant 61 : index
    %1850 = memref.load %arg3[%c61] : memref<528xf32, #tpu.memory_space<smem>>
    %1851 = vector.broadcast %1850 : f32 to vector<4x128xf32>
    %1852 = arith.mulf %1851, %1845 : vector<4x128xf32>
    %1853 = arith.addf %1835, %1852 : vector<4x128xf32>
    %c62 = arith.constant 62 : index
    %1854 = memref.load %arg3[%c62] : memref<528xf32, #tpu.memory_space<smem>>
    %1855 = vector.broadcast %1854 : f32 to vector<4x128xf32>
    %1856 = arith.mulf %1855, %1845 : vector<4x128xf32>
    %1857 = arith.addf %1839, %1856 : vector<4x128xf32>
    %c63 = arith.constant 63 : index
    %1858 = memref.load %arg3[%c63] : memref<528xf32, #tpu.memory_space<smem>>
    %1859 = vector.broadcast %1858 : f32 to vector<4x128xf32>
    %1860 = arith.mulf %1859, %1845 : vector<4x128xf32>
    %1861 = arith.addf %1843, %1860 : vector<4x128xf32>
    %c0_411 = arith.constant 0 : index
    %c3_412 = arith.constant 3 : index
    %c0_413 = arith.constant 0 : index
    %c232_414 = arith.constant 232 : index
    %1862 = vector.load %arg2[%c0_411, %c3_412, %c0_413, %c232_414] : memref<1x4x4x590xf32, #tpu.memory_space<vmem>>, vector<1x1x4x128xf32>
    %1863 = vector.shape_cast %1862 : vector<1x1x4x128xf32> to vector<4x128xf32>
    %c76_415 = arith.constant 76 : index
    %1864 = memref.load %arg3[%c76_415] : memref<528xf32, #tpu.memory_space<smem>>
    %1865 = vector.broadcast %1864 : f32 to vector<4x128xf32>
    %1866 = arith.mulf %1865, %1863 : vector<4x128xf32>
    %1867 = arith.addf %1849, %1866 : vector<4x128xf32>
    %c77 = arith.constant 77 : index
    %1868 = memref.load %arg3[%c77] : memref<528xf32, #tpu.memory_space<smem>>
    %1869 = vector.broadcast %1868 : f32 to vector<4x128xf32>
    %1870 = arith.mulf %1869, %1863 : vector<4x128xf32>
    %1871 = arith.addf %1853, %1870 : vector<4x128xf32>
    %c78 = arith.constant 78 : index
    %1872 = memref.load %arg3[%c78] : memref<528xf32, #tpu.memory_space<smem>>
    %1873 = vector.broadcast %1872 : f32 to vector<4x128xf32>
    %1874 = arith.mulf %1873, %1863 : vector<4x128xf32>
    %1875 = arith.addf %1857, %1874 : vector<4x128xf32>
    %c79 = arith.constant 79 : index
    %1876 = memref.load %arg3[%c79] : memref<528xf32, #tpu.memory_space<smem>>
    %1877 = vector.broadcast %1876 : f32 to vector<4x128xf32>
    %1878 = arith.mulf %1877, %1863 : vector<4x128xf32>
    %1879 = arith.addf %1861, %1878 : vector<4x128xf32>
    %c0_416 = arith.constant 0 : index
    %c3_417 = arith.constant 3 : index
    %c0_418 = arith.constant 0 : index
    %c262_419 = arith.constant 262 : index
    %1880 = vector.load %arg2[%c0_416, %c3_417, %c0_418, %c262_419] : memref<1x4x4x590xf32, #tpu.memory_space<vmem>>, vector<1x1x4x128xf32>
    %1881 = vector.shape_cast %1880 : vector<1x1x4x128xf32> to vector<4x128xf32>
    %c92 = arith.constant 92 : index
    %1882 = memref.load %arg3[%c92] : memref<528xf32, #tpu.memory_space<smem>>
    %1883 = vector.broadcast %1882 : f32 to vector<4x128xf32>
    %1884 = arith.mulf %1883, %1881 : vector<4x128xf32>
    %1885 = arith.addf %1867, %1884 : vector<4x128xf32>
    %c93 = arith.constant 93 : index
    %1886 = memref.load %arg3[%c93] : memref<528xf32, #tpu.memory_space<smem>>
    %1887 = vector.broadcast %1886 : f32 to vector<4x128xf32>
    %1888 = arith.mulf %1887, %1881 : vector<4x128xf32>
    %1889 = arith.addf %1871, %1888 : vector<4x128xf32>
    %c94 = arith.constant 94 : index
    %1890 = memref.load %arg3[%c94] : memref<528xf32, #tpu.memory_space<smem>>
    %1891 = vector.broadcast %1890 : f32 to vector<4x128xf32>
    %1892 = arith.mulf %1891, %1881 : vector<4x128xf32>
    %1893 = arith.addf %1875, %1892 : vector<4x128xf32>
    %c95 = arith.constant 95 : index
    %1894 = memref.load %arg3[%c95] : memref<528xf32, #tpu.memory_space<smem>>
    %1895 = vector.broadcast %1894 : f32 to vector<4x128xf32>
    %1896 = arith.mulf %1895, %1881 : vector<4x128xf32>
    %1897 = arith.addf %1879, %1896 : vector<4x128xf32>
    %c0_420 = arith.constant 0 : index
    %c3_421 = arith.constant 3 : index
    %c0_422 = arith.constant 0 : index
    %c263_423 = arith.constant 263 : index
    %1898 = vector.load %arg2[%c0_420, %c3_421, %c0_422, %c263_423] : memref<1x4x4x590xf32, #tpu.memory_space<vmem>>, vector<1x1x4x128xf32>
    %1899 = vector.shape_cast %1898 : vector<1x1x4x128xf32> to vector<4x128xf32>
    %c108 = arith.constant 108 : index
    %1900 = memref.load %arg3[%c108] : memref<528xf32, #tpu.memory_space<smem>>
    %1901 = vector.broadcast %1900 : f32 to vector<4x128xf32>
    %1902 = arith.mulf %1901, %1899 : vector<4x128xf32>
    %1903 = arith.addf %1885, %1902 : vector<4x128xf32>
    %c109 = arith.constant 109 : index
    %1904 = memref.load %arg3[%c109] : memref<528xf32, #tpu.memory_space<smem>>
    %1905 = vector.broadcast %1904 : f32 to vector<4x128xf32>
    %1906 = arith.mulf %1905, %1899 : vector<4x128xf32>
    %1907 = arith.addf %1889, %1906 : vector<4x128xf32>
    %c110 = arith.constant 110 : index
    %1908 = memref.load %arg3[%c110] : memref<528xf32, #tpu.memory_space<smem>>
    %1909 = vector.broadcast %1908 : f32 to vector<4x128xf32>
    %1910 = arith.mulf %1909, %1899 : vector<4x128xf32>
    %1911 = arith.addf %1893, %1910 : vector<4x128xf32>
    %c111 = arith.constant 111 : index
    %1912 = memref.load %arg3[%c111] : memref<528xf32, #tpu.memory_space<smem>>
    %1913 = vector.broadcast %1912 : f32 to vector<4x128xf32>
    %1914 = arith.mulf %1913, %1899 : vector<4x128xf32>
    %1915 = arith.addf %1897, %1914 : vector<4x128xf32>
    %c0_424 = arith.constant 0 : index
    %c3_425 = arith.constant 3 : index
    %c0_426 = arith.constant 0 : index
    %c264_427 = arith.constant 264 : index
    %1916 = vector.load %arg2[%c0_424, %c3_425, %c0_426, %c264_427] : memref<1x4x4x590xf32, #tpu.memory_space<vmem>>, vector<1x1x4x128xf32>
    %1917 = vector.shape_cast %1916 : vector<1x1x4x128xf32> to vector<4x128xf32>
    %c124 = arith.constant 124 : index
    %1918 = memref.load %arg3[%c124] : memref<528xf32, #tpu.memory_space<smem>>
    %1919 = vector.broadcast %1918 : f32 to vector<4x128xf32>
    %1920 = arith.mulf %1919, %1917 : vector<4x128xf32>
    %1921 = arith.addf %1903, %1920 : vector<4x128xf32>
    %c125 = arith.constant 125 : index
    %1922 = memref.load %arg3[%c125] : memref<528xf32, #tpu.memory_space<smem>>
    %1923 = vector.broadcast %1922 : f32 to vector<4x128xf32>
    %1924 = arith.mulf %1923, %1917 : vector<4x128xf32>
    %1925 = arith.addf %1907, %1924 : vector<4x128xf32>
    %c126 = arith.constant 126 : index
    %1926 = memref.load %arg3[%c126] : memref<528xf32, #tpu.memory_space<smem>>
    %1927 = vector.broadcast %1926 : f32 to vector<4x128xf32>
    %1928 = arith.mulf %1927, %1917 : vector<4x128xf32>
    %1929 = arith.addf %1911, %1928 : vector<4x128xf32>
    %c127 = arith.constant 127 : index
    %1930 = memref.load %arg3[%c127] : memref<528xf32, #tpu.memory_space<smem>>
    %1931 = vector.broadcast %1930 : f32 to vector<4x128xf32>
    %1932 = arith.mulf %1931, %1917 : vector<4x128xf32>
    %1933 = arith.addf %1915, %1932 : vector<4x128xf32>
    %c0_428 = arith.constant 0 : index
    %c3_429 = arith.constant 3 : index
    %c0_430 = arith.constant 0 : index
    %c132_431 = arith.constant 132 : index
    %1934 = vector.load %arg2[%c0_428, %c3_429, %c0_430, %c132_431] : memref<1x4x4x590xf32, #tpu.memory_space<vmem>>, vector<1x1x4x128xf32>
    %1935 = vector.shape_cast %1934 : vector<1x1x4x128xf32> to vector<4x128xf32>
    %c140 = arith.constant 140 : index
    %1936 = memref.load %arg3[%c140] : memref<528xf32, #tpu.memory_space<smem>>
    %1937 = vector.broadcast %1936 : f32 to vector<4x128xf32>
    %1938 = arith.mulf %1937, %1935 : vector<4x128xf32>
    %1939 = arith.addf %1921, %1938 : vector<4x128xf32>
    %c141 = arith.constant 141 : index
    %1940 = memref.load %arg3[%c141] : memref<528xf32, #tpu.memory_space<smem>>
    %1941 = vector.broadcast %1940 : f32 to vector<4x128xf32>
    %1942 = arith.mulf %1941, %1935 : vector<4x128xf32>
    %1943 = arith.addf %1925, %1942 : vector<4x128xf32>
    %c142 = arith.constant 142 : index
    %1944 = memref.load %arg3[%c142] : memref<528xf32, #tpu.memory_space<smem>>
    %1945 = vector.broadcast %1944 : f32 to vector<4x128xf32>
    %1946 = arith.mulf %1945, %1935 : vector<4x128xf32>
    %1947 = arith.addf %1929, %1946 : vector<4x128xf32>
    %c143 = arith.constant 143 : index
    %1948 = memref.load %arg3[%c143] : memref<528xf32, #tpu.memory_space<smem>>
    %1949 = vector.broadcast %1948 : f32 to vector<4x128xf32>
    %1950 = arith.mulf %1949, %1935 : vector<4x128xf32>
    %1951 = arith.addf %1933, %1950 : vector<4x128xf32>
    %c0_432 = arith.constant 0 : index
    %c3_433 = arith.constant 3 : index
    %c0_434 = arith.constant 0 : index
    %c135_435 = arith.constant 135 : index
    %1952 = vector.load %arg2[%c0_432, %c3_433, %c0_434, %c135_435] : memref<1x4x4x590xf32, #tpu.memory_space<vmem>>, vector<1x1x4x128xf32>
    %1953 = vector.shape_cast %1952 : vector<1x1x4x128xf32> to vector<4x128xf32>
    %c156 = arith.constant 156 : index
    %1954 = memref.load %arg3[%c156] : memref<528xf32, #tpu.memory_space<smem>>
    %1955 = vector.broadcast %1954 : f32 to vector<4x128xf32>
    %1956 = arith.mulf %1955, %1953 : vector<4x128xf32>
    %1957 = arith.addf %1939, %1956 : vector<4x128xf32>
    %c157 = arith.constant 157 : index
    %1958 = memref.load %arg3[%c157] : memref<528xf32, #tpu.memory_space<smem>>
    %1959 = vector.broadcast %1958 : f32 to vector<4x128xf32>
    %1960 = arith.mulf %1959, %1953 : vector<4x128xf32>
    %1961 = arith.addf %1943, %1960 : vector<4x128xf32>
    %c158 = arith.constant 158 : index
    %1962 = memref.load %arg3[%c158] : memref<528xf32, #tpu.memory_space<smem>>
    %1963 = vector.broadcast %1962 : f32 to vector<4x128xf32>
    %1964 = arith.mulf %1963, %1953 : vector<4x128xf32>
    %1965 = arith.addf %1947, %1964 : vector<4x128xf32>
    %c159 = arith.constant 159 : index
    %1966 = memref.load %arg3[%c159] : memref<528xf32, #tpu.memory_space<smem>>
    %1967 = vector.broadcast %1966 : f32 to vector<4x128xf32>
    %1968 = arith.mulf %1967, %1953 : vector<4x128xf32>
    %1969 = arith.addf %1951, %1968 : vector<4x128xf32>
    %c0_436 = arith.constant 0 : index
    %c3_437 = arith.constant 3 : index
    %c0_438 = arith.constant 0 : index
    %c138_439 = arith.constant 138 : index
    %1970 = vector.load %arg2[%c0_436, %c3_437, %c0_438, %c138_439] : memref<1x4x4x590xf32, #tpu.memory_space<vmem>>, vector<1x1x4x128xf32>
    %1971 = vector.shape_cast %1970 : vector<1x1x4x128xf32> to vector<4x128xf32>
    %c172 = arith.constant 172 : index
    %1972 = memref.load %arg3[%c172] : memref<528xf32, #tpu.memory_space<smem>>
    %1973 = vector.broadcast %1972 : f32 to vector<4x128xf32>
    %1974 = arith.mulf %1973, %1971 : vector<4x128xf32>
    %1975 = arith.addf %1957, %1974 : vector<4x128xf32>
    %c173 = arith.constant 173 : index
    %1976 = memref.load %arg3[%c173] : memref<528xf32, #tpu.memory_space<smem>>
    %1977 = vector.broadcast %1976 : f32 to vector<4x128xf32>
    %1978 = arith.mulf %1977, %1971 : vector<4x128xf32>
    %1979 = arith.addf %1961, %1978 : vector<4x128xf32>
    %c174 = arith.constant 174 : index
    %1980 = memref.load %arg3[%c174] : memref<528xf32, #tpu.memory_space<smem>>
    %1981 = vector.broadcast %1980 : f32 to vector<4x128xf32>
    %1982 = arith.mulf %1981, %1971 : vector<4x128xf32>
    %1983 = arith.addf %1965, %1982 : vector<4x128xf32>
    %c175 = arith.constant 175 : index
    %1984 = memref.load %arg3[%c175] : memref<528xf32, #tpu.memory_space<smem>>
    %1985 = vector.broadcast %1984 : f32 to vector<4x128xf32>
    %1986 = arith.mulf %1985, %1971 : vector<4x128xf32>
    %1987 = arith.addf %1969, %1986 : vector<4x128xf32>
    %c0_440 = arith.constant 0 : index
    %c3_441 = arith.constant 3 : index
    %c0_442 = arith.constant 0 : index
    %c228_443 = arith.constant 228 : index
    %1988 = vector.load %arg2[%c0_440, %c3_441, %c0_442, %c228_443] : memref<1x4x4x590xf32, #tpu.memory_space<vmem>>, vector<1x1x4x128xf32>
    %1989 = vector.shape_cast %1988 : vector<1x1x4x128xf32> to vector<4x128xf32>
    %c188 = arith.constant 188 : index
    %1990 = memref.load %arg3[%c188] : memref<528xf32, #tpu.memory_space<smem>>
    %1991 = vector.broadcast %1990 : f32 to vector<4x128xf32>
    %1992 = arith.mulf %1991, %1989 : vector<4x128xf32>
    %1993 = arith.addf %1975, %1992 : vector<4x128xf32>
    %c189 = arith.constant 189 : index
    %1994 = memref.load %arg3[%c189] : memref<528xf32, #tpu.memory_space<smem>>
    %1995 = vector.broadcast %1994 : f32 to vector<4x128xf32>
    %1996 = arith.mulf %1995, %1989 : vector<4x128xf32>
    %1997 = arith.addf %1979, %1996 : vector<4x128xf32>
    %c190 = arith.constant 190 : index
    %1998 = memref.load %arg3[%c190] : memref<528xf32, #tpu.memory_space<smem>>
    %1999 = vector.broadcast %1998 : f32 to vector<4x128xf32>
    %2000 = arith.mulf %1999, %1989 : vector<4x128xf32>
    %2001 = arith.addf %1983, %2000 : vector<4x128xf32>
    %c191 = arith.constant 191 : index
    %2002 = memref.load %arg3[%c191] : memref<528xf32, #tpu.memory_space<smem>>
    %2003 = vector.broadcast %2002 : f32 to vector<4x128xf32>
    %2004 = arith.mulf %2003, %1989 : vector<4x128xf32>
    %2005 = arith.addf %1987, %2004 : vector<4x128xf32>
    %c0_444 = arith.constant 0 : index
    %c3_445 = arith.constant 3 : index
    %c0_446 = arith.constant 0 : index
    %c234_447 = arith.constant 234 : index
    %2006 = vector.load %arg2[%c0_444, %c3_445, %c0_446, %c234_447] : memref<1x4x4x590xf32, #tpu.memory_space<vmem>>, vector<1x1x4x128xf32>
    %2007 = vector.shape_cast %2006 : vector<1x1x4x128xf32> to vector<4x128xf32>
    %c204 = arith.constant 204 : index
    %2008 = memref.load %arg3[%c204] : memref<528xf32, #tpu.memory_space<smem>>
    %2009 = vector.broadcast %2008 : f32 to vector<4x128xf32>
    %2010 = arith.mulf %2009, %2007 : vector<4x128xf32>
    %2011 = arith.addf %1993, %2010 : vector<4x128xf32>
    %c205 = arith.constant 205 : index
    %2012 = memref.load %arg3[%c205] : memref<528xf32, #tpu.memory_space<smem>>
    %2013 = vector.broadcast %2012 : f32 to vector<4x128xf32>
    %2014 = arith.mulf %2013, %2007 : vector<4x128xf32>
    %2015 = arith.addf %1997, %2014 : vector<4x128xf32>
    %c206 = arith.constant 206 : index
    %2016 = memref.load %arg3[%c206] : memref<528xf32, #tpu.memory_space<smem>>
    %2017 = vector.broadcast %2016 : f32 to vector<4x128xf32>
    %2018 = arith.mulf %2017, %2007 : vector<4x128xf32>
    %2019 = arith.addf %2001, %2018 : vector<4x128xf32>
    %c207 = arith.constant 207 : index
    %2020 = memref.load %arg3[%c207] : memref<528xf32, #tpu.memory_space<smem>>
    %2021 = vector.broadcast %2020 : f32 to vector<4x128xf32>
    %2022 = arith.mulf %2021, %2007 : vector<4x128xf32>
    %2023 = arith.addf %2005, %2022 : vector<4x128xf32>
    %c0_448 = arith.constant 0 : index
    %c3_449 = arith.constant 3 : index
    %c0_450 = arith.constant 0 : index
    %c324_451 = arith.constant 324 : index
    %2024 = vector.load %arg2[%c0_448, %c3_449, %c0_450, %c324_451] : memref<1x4x4x590xf32, #tpu.memory_space<vmem>>, vector<1x1x4x128xf32>
    %2025 = vector.shape_cast %2024 : vector<1x1x4x128xf32> to vector<4x128xf32>
    %c220 = arith.constant 220 : index
    %2026 = memref.load %arg3[%c220] : memref<528xf32, #tpu.memory_space<smem>>
    %2027 = vector.broadcast %2026 : f32 to vector<4x128xf32>
    %2028 = arith.mulf %2027, %2025 : vector<4x128xf32>
    %2029 = arith.addf %2011, %2028 : vector<4x128xf32>
    %c221 = arith.constant 221 : index
    %2030 = memref.load %arg3[%c221] : memref<528xf32, #tpu.memory_space<smem>>
    %2031 = vector.broadcast %2030 : f32 to vector<4x128xf32>
    %2032 = arith.mulf %2031, %2025 : vector<4x128xf32>
    %2033 = arith.addf %2015, %2032 : vector<4x128xf32>
    %c222 = arith.constant 222 : index
    %2034 = memref.load %arg3[%c222] : memref<528xf32, #tpu.memory_space<smem>>
    %2035 = vector.broadcast %2034 : f32 to vector<4x128xf32>
    %2036 = arith.mulf %2035, %2025 : vector<4x128xf32>
    %2037 = arith.addf %2019, %2036 : vector<4x128xf32>
    %c223 = arith.constant 223 : index
    %2038 = memref.load %arg3[%c223] : memref<528xf32, #tpu.memory_space<smem>>
    %2039 = vector.broadcast %2038 : f32 to vector<4x128xf32>
    %2040 = arith.mulf %2039, %2025 : vector<4x128xf32>
    %2041 = arith.addf %2023, %2040 : vector<4x128xf32>
    %c0_452 = arith.constant 0 : index
    %c3_453 = arith.constant 3 : index
    %c0_454 = arith.constant 0 : index
    %c327_455 = arith.constant 327 : index
    %2042 = vector.load %arg2[%c0_452, %c3_453, %c0_454, %c327_455] : memref<1x4x4x590xf32, #tpu.memory_space<vmem>>, vector<1x1x4x128xf32>
    %2043 = vector.shape_cast %2042 : vector<1x1x4x128xf32> to vector<4x128xf32>
    %c236_456 = arith.constant 236 : index
    %2044 = memref.load %arg3[%c236_456] : memref<528xf32, #tpu.memory_space<smem>>
    %2045 = vector.broadcast %2044 : f32 to vector<4x128xf32>
    %2046 = arith.mulf %2045, %2043 : vector<4x128xf32>
    %2047 = arith.addf %2029, %2046 : vector<4x128xf32>
    %c237 = arith.constant 237 : index
    %2048 = memref.load %arg3[%c237] : memref<528xf32, #tpu.memory_space<smem>>
    %2049 = vector.broadcast %2048 : f32 to vector<4x128xf32>
    %2050 = arith.mulf %2049, %2043 : vector<4x128xf32>
    %2051 = arith.addf %2033, %2050 : vector<4x128xf32>
    %c238_457 = arith.constant 238 : index
    %2052 = memref.load %arg3[%c238_457] : memref<528xf32, #tpu.memory_space<smem>>
    %2053 = vector.broadcast %2052 : f32 to vector<4x128xf32>
    %2054 = arith.mulf %2053, %2043 : vector<4x128xf32>
    %2055 = arith.addf %2037, %2054 : vector<4x128xf32>
    %c239 = arith.constant 239 : index
    %2056 = memref.load %arg3[%c239] : memref<528xf32, #tpu.memory_space<smem>>
    %2057 = vector.broadcast %2056 : f32 to vector<4x128xf32>
    %2058 = arith.mulf %2057, %2043 : vector<4x128xf32>
    %2059 = arith.addf %2041, %2058 : vector<4x128xf32>
    %c0_458 = arith.constant 0 : index
    %c3_459 = arith.constant 3 : index
    %c0_460 = arith.constant 0 : index
    %c330_461 = arith.constant 330 : index
    %2060 = vector.load %arg2[%c0_458, %c3_459, %c0_460, %c330_461] : memref<1x4x4x590xf32, #tpu.memory_space<vmem>>, vector<1x1x4x128xf32>
    %2061 = vector.shape_cast %2060 : vector<1x1x4x128xf32> to vector<4x128xf32>
    %c252 = arith.constant 252 : index
    %2062 = memref.load %arg3[%c252] : memref<528xf32, #tpu.memory_space<smem>>
    %2063 = vector.broadcast %2062 : f32 to vector<4x128xf32>
    %2064 = arith.mulf %2063, %2061 : vector<4x128xf32>
    %2065 = arith.addf %2047, %2064 : vector<4x128xf32>
    %c253 = arith.constant 253 : index
    %2066 = memref.load %arg3[%c253] : memref<528xf32, #tpu.memory_space<smem>>
    %2067 = vector.broadcast %2066 : f32 to vector<4x128xf32>
    %2068 = arith.mulf %2067, %2061 : vector<4x128xf32>
    %2069 = arith.addf %2051, %2068 : vector<4x128xf32>
    %c254 = arith.constant 254 : index
    %2070 = memref.load %arg3[%c254] : memref<528xf32, #tpu.memory_space<smem>>
    %2071 = vector.broadcast %2070 : f32 to vector<4x128xf32>
    %2072 = arith.mulf %2071, %2061 : vector<4x128xf32>
    %2073 = arith.addf %2055, %2072 : vector<4x128xf32>
    %c255 = arith.constant 255 : index
    %2074 = memref.load %arg3[%c255] : memref<528xf32, #tpu.memory_space<smem>>
    %2075 = vector.broadcast %2074 : f32 to vector<4x128xf32>
    %2076 = arith.mulf %2075, %2061 : vector<4x128xf32>
    %2077 = arith.addf %2059, %2076 : vector<4x128xf32>
    %c0_462 = arith.constant 0 : index
    %c3_463 = arith.constant 3 : index
    %c0_464 = arith.constant 0 : index
    %c66_465 = arith.constant 66 : index
    %2078 = vector.load %arg2[%c0_462, %c3_463, %c0_464, %c66_465] : memref<1x4x4x590xf32, #tpu.memory_space<vmem>>, vector<1x1x4x128xf32>
    %2079 = vector.shape_cast %2078 : vector<1x1x4x128xf32> to vector<4x128xf32>
    %c268 = arith.constant 268 : index
    %2080 = memref.load %arg3[%c268] : memref<528xf32, #tpu.memory_space<smem>>
    %2081 = vector.broadcast %2080 : f32 to vector<4x128xf32>
    %2082 = arith.mulf %2081, %2079 : vector<4x128xf32>
    %2083 = arith.addf %2065, %2082 : vector<4x128xf32>
    %c269 = arith.constant 269 : index
    %2084 = memref.load %arg3[%c269] : memref<528xf32, #tpu.memory_space<smem>>
    %2085 = vector.broadcast %2084 : f32 to vector<4x128xf32>
    %2086 = arith.mulf %2085, %2079 : vector<4x128xf32>
    %2087 = arith.addf %2069, %2086 : vector<4x128xf32>
    %c270 = arith.constant 270 : index
    %2088 = memref.load %arg3[%c270] : memref<528xf32, #tpu.memory_space<smem>>
    %2089 = vector.broadcast %2088 : f32 to vector<4x128xf32>
    %2090 = arith.mulf %2089, %2079 : vector<4x128xf32>
    %2091 = arith.addf %2073, %2090 : vector<4x128xf32>
    %c271 = arith.constant 271 : index
    %2092 = memref.load %arg3[%c271] : memref<528xf32, #tpu.memory_space<smem>>
    %2093 = vector.broadcast %2092 : f32 to vector<4x128xf32>
    %2094 = arith.mulf %2093, %2079 : vector<4x128xf32>
    %2095 = arith.addf %2077, %2094 : vector<4x128xf32>
    %c0_466 = arith.constant 0 : index
    %c3_467 = arith.constant 3 : index
    %c0_468 = arith.constant 0 : index
    %c71_469 = arith.constant 71 : index
    %2096 = vector.load %arg2[%c0_466, %c3_467, %c0_468, %c71_469] : memref<1x4x4x590xf32, #tpu.memory_space<vmem>>, vector<1x1x4x128xf32>
    %2097 = vector.shape_cast %2096 : vector<1x1x4x128xf32> to vector<4x128xf32>
    %c284 = arith.constant 284 : index
    %2098 = memref.load %arg3[%c284] : memref<528xf32, #tpu.memory_space<smem>>
    %2099 = vector.broadcast %2098 : f32 to vector<4x128xf32>
    %2100 = arith.mulf %2099, %2097 : vector<4x128xf32>
    %2101 = arith.addf %2083, %2100 : vector<4x128xf32>
    %c285 = arith.constant 285 : index
    %2102 = memref.load %arg3[%c285] : memref<528xf32, #tpu.memory_space<smem>>
    %2103 = vector.broadcast %2102 : f32 to vector<4x128xf32>
    %2104 = arith.mulf %2103, %2097 : vector<4x128xf32>
    %2105 = arith.addf %2087, %2104 : vector<4x128xf32>
    %c286 = arith.constant 286 : index
    %2106 = memref.load %arg3[%c286] : memref<528xf32, #tpu.memory_space<smem>>
    %2107 = vector.broadcast %2106 : f32 to vector<4x128xf32>
    %2108 = arith.mulf %2107, %2097 : vector<4x128xf32>
    %2109 = arith.addf %2091, %2108 : vector<4x128xf32>
    %c287 = arith.constant 287 : index
    %2110 = memref.load %arg3[%c287] : memref<528xf32, #tpu.memory_space<smem>>
    %2111 = vector.broadcast %2110 : f32 to vector<4x128xf32>
    %2112 = arith.mulf %2111, %2097 : vector<4x128xf32>
    %2113 = arith.addf %2095, %2112 : vector<4x128xf32>
    %c0_470 = arith.constant 0 : index
    %c3_471 = arith.constant 3 : index
    %c0_472 = arith.constant 0 : index
    %c76_473 = arith.constant 76 : index
    %2114 = vector.load %arg2[%c0_470, %c3_471, %c0_472, %c76_473] : memref<1x4x4x590xf32, #tpu.memory_space<vmem>>, vector<1x1x4x128xf32>
    %2115 = vector.shape_cast %2114 : vector<1x1x4x128xf32> to vector<4x128xf32>
    %c300 = arith.constant 300 : index
    %2116 = memref.load %arg3[%c300] : memref<528xf32, #tpu.memory_space<smem>>
    %2117 = vector.broadcast %2116 : f32 to vector<4x128xf32>
    %2118 = arith.mulf %2117, %2115 : vector<4x128xf32>
    %2119 = arith.addf %2101, %2118 : vector<4x128xf32>
    %c301 = arith.constant 301 : index
    %2120 = memref.load %arg3[%c301] : memref<528xf32, #tpu.memory_space<smem>>
    %2121 = vector.broadcast %2120 : f32 to vector<4x128xf32>
    %2122 = arith.mulf %2121, %2115 : vector<4x128xf32>
    %2123 = arith.addf %2105, %2122 : vector<4x128xf32>
    %c302 = arith.constant 302 : index
    %2124 = memref.load %arg3[%c302] : memref<528xf32, #tpu.memory_space<smem>>
    %2125 = vector.broadcast %2124 : f32 to vector<4x128xf32>
    %2126 = arith.mulf %2125, %2115 : vector<4x128xf32>
    %2127 = arith.addf %2109, %2126 : vector<4x128xf32>
    %c303 = arith.constant 303 : index
    %2128 = memref.load %arg3[%c303] : memref<528xf32, #tpu.memory_space<smem>>
    %2129 = vector.broadcast %2128 : f32 to vector<4x128xf32>
    %2130 = arith.mulf %2129, %2115 : vector<4x128xf32>
    %2131 = arith.addf %2113, %2130 : vector<4x128xf32>
    %c0_474 = arith.constant 0 : index
    %c3_475 = arith.constant 3 : index
    %c0_476 = arith.constant 0 : index
    %c226_477 = arith.constant 226 : index
    %2132 = vector.load %arg2[%c0_474, %c3_475, %c0_476, %c226_477] : memref<1x4x4x590xf32, #tpu.memory_space<vmem>>, vector<1x1x4x128xf32>
    %2133 = vector.shape_cast %2132 : vector<1x1x4x128xf32> to vector<4x128xf32>
    %c316 = arith.constant 316 : index
    %2134 = memref.load %arg3[%c316] : memref<528xf32, #tpu.memory_space<smem>>
    %2135 = vector.broadcast %2134 : f32 to vector<4x128xf32>
    %2136 = arith.mulf %2135, %2133 : vector<4x128xf32>
    %2137 = arith.addf %2119, %2136 : vector<4x128xf32>
    %c317 = arith.constant 317 : index
    %2138 = memref.load %arg3[%c317] : memref<528xf32, #tpu.memory_space<smem>>
    %2139 = vector.broadcast %2138 : f32 to vector<4x128xf32>
    %2140 = arith.mulf %2139, %2133 : vector<4x128xf32>
    %2141 = arith.addf %2123, %2140 : vector<4x128xf32>
    %c318 = arith.constant 318 : index
    %2142 = memref.load %arg3[%c318] : memref<528xf32, #tpu.memory_space<smem>>
    %2143 = vector.broadcast %2142 : f32 to vector<4x128xf32>
    %2144 = arith.mulf %2143, %2133 : vector<4x128xf32>
    %2145 = arith.addf %2127, %2144 : vector<4x128xf32>
    %c319 = arith.constant 319 : index
    %2146 = memref.load %arg3[%c319] : memref<528xf32, #tpu.memory_space<smem>>
    %2147 = vector.broadcast %2146 : f32 to vector<4x128xf32>
    %2148 = arith.mulf %2147, %2133 : vector<4x128xf32>
    %2149 = arith.addf %2131, %2148 : vector<4x128xf32>
    %c0_478 = arith.constant 0 : index
    %c3_479 = arith.constant 3 : index
    %c0_480 = arith.constant 0 : index
    %c236_481 = arith.constant 236 : index
    %2150 = vector.load %arg2[%c0_478, %c3_479, %c0_480, %c236_481] : memref<1x4x4x590xf32, #tpu.memory_space<vmem>>, vector<1x1x4x128xf32>
    %2151 = vector.shape_cast %2150 : vector<1x1x4x128xf32> to vector<4x128xf32>
    %c332 = arith.constant 332 : index
    %2152 = memref.load %arg3[%c332] : memref<528xf32, #tpu.memory_space<smem>>
    %2153 = vector.broadcast %2152 : f32 to vector<4x128xf32>
    %2154 = arith.mulf %2153, %2151 : vector<4x128xf32>
    %2155 = arith.addf %2137, %2154 : vector<4x128xf32>
    %c333 = arith.constant 333 : index
    %2156 = memref.load %arg3[%c333] : memref<528xf32, #tpu.memory_space<smem>>
    %2157 = vector.broadcast %2156 : f32 to vector<4x128xf32>
    %2158 = arith.mulf %2157, %2151 : vector<4x128xf32>
    %2159 = arith.addf %2141, %2158 : vector<4x128xf32>
    %c334 = arith.constant 334 : index
    %2160 = memref.load %arg3[%c334] : memref<528xf32, #tpu.memory_space<smem>>
    %2161 = vector.broadcast %2160 : f32 to vector<4x128xf32>
    %2162 = arith.mulf %2161, %2151 : vector<4x128xf32>
    %2163 = arith.addf %2145, %2162 : vector<4x128xf32>
    %c335 = arith.constant 335 : index
    %2164 = memref.load %arg3[%c335] : memref<528xf32, #tpu.memory_space<smem>>
    %2165 = vector.broadcast %2164 : f32 to vector<4x128xf32>
    %2166 = arith.mulf %2165, %2151 : vector<4x128xf32>
    %2167 = arith.addf %2149, %2166 : vector<4x128xf32>
    %c0_482 = arith.constant 0 : index
    %c3_483 = arith.constant 3 : index
    %c0_484 = arith.constant 0 : index
    %c386_485 = arith.constant 386 : index
    %2168 = vector.load %arg2[%c0_482, %c3_483, %c0_484, %c386_485] : memref<1x4x4x590xf32, #tpu.memory_space<vmem>>, vector<1x1x4x128xf32>
    %2169 = vector.shape_cast %2168 : vector<1x1x4x128xf32> to vector<4x128xf32>
    %c348 = arith.constant 348 : index
    %2170 = memref.load %arg3[%c348] : memref<528xf32, #tpu.memory_space<smem>>
    %2171 = vector.broadcast %2170 : f32 to vector<4x128xf32>
    %2172 = arith.mulf %2171, %2169 : vector<4x128xf32>
    %2173 = arith.addf %2155, %2172 : vector<4x128xf32>
    %c349 = arith.constant 349 : index
    %2174 = memref.load %arg3[%c349] : memref<528xf32, #tpu.memory_space<smem>>
    %2175 = vector.broadcast %2174 : f32 to vector<4x128xf32>
    %2176 = arith.mulf %2175, %2169 : vector<4x128xf32>
    %2177 = arith.addf %2159, %2176 : vector<4x128xf32>
    %c350 = arith.constant 350 : index
    %2178 = memref.load %arg3[%c350] : memref<528xf32, #tpu.memory_space<smem>>
    %2179 = vector.broadcast %2178 : f32 to vector<4x128xf32>
    %2180 = arith.mulf %2179, %2169 : vector<4x128xf32>
    %2181 = arith.addf %2163, %2180 : vector<4x128xf32>
    %c351 = arith.constant 351 : index
    %2182 = memref.load %arg3[%c351] : memref<528xf32, #tpu.memory_space<smem>>
    %2183 = vector.broadcast %2182 : f32 to vector<4x128xf32>
    %2184 = arith.mulf %2183, %2169 : vector<4x128xf32>
    %2185 = arith.addf %2167, %2184 : vector<4x128xf32>
    %c0_486 = arith.constant 0 : index
    %c3_487 = arith.constant 3 : index
    %c0_488 = arith.constant 0 : index
    %c391_489 = arith.constant 391 : index
    %2186 = vector.load %arg2[%c0_486, %c3_487, %c0_488, %c391_489] : memref<1x4x4x590xf32, #tpu.memory_space<vmem>>, vector<1x1x4x128xf32>
    %2187 = vector.shape_cast %2186 : vector<1x1x4x128xf32> to vector<4x128xf32>
    %c364 = arith.constant 364 : index
    %2188 = memref.load %arg3[%c364] : memref<528xf32, #tpu.memory_space<smem>>
    %2189 = vector.broadcast %2188 : f32 to vector<4x128xf32>
    %2190 = arith.mulf %2189, %2187 : vector<4x128xf32>
    %2191 = arith.addf %2173, %2190 : vector<4x128xf32>
    %c365 = arith.constant 365 : index
    %2192 = memref.load %arg3[%c365] : memref<528xf32, #tpu.memory_space<smem>>
    %2193 = vector.broadcast %2192 : f32 to vector<4x128xf32>
    %2194 = arith.mulf %2193, %2187 : vector<4x128xf32>
    %2195 = arith.addf %2177, %2194 : vector<4x128xf32>
    %c366 = arith.constant 366 : index
    %2196 = memref.load %arg3[%c366] : memref<528xf32, #tpu.memory_space<smem>>
    %2197 = vector.broadcast %2196 : f32 to vector<4x128xf32>
    %2198 = arith.mulf %2197, %2187 : vector<4x128xf32>
    %2199 = arith.addf %2181, %2198 : vector<4x128xf32>
    %c367 = arith.constant 367 : index
    %2200 = memref.load %arg3[%c367] : memref<528xf32, #tpu.memory_space<smem>>
    %2201 = vector.broadcast %2200 : f32 to vector<4x128xf32>
    %2202 = arith.mulf %2201, %2187 : vector<4x128xf32>
    %2203 = arith.addf %2185, %2202 : vector<4x128xf32>
    %c0_490 = arith.constant 0 : index
    %c3_491 = arith.constant 3 : index
    %c0_492 = arith.constant 0 : index
    %c396_493 = arith.constant 396 : index
    %2204 = vector.load %arg2[%c0_490, %c3_491, %c0_492, %c396_493] : memref<1x4x4x590xf32, #tpu.memory_space<vmem>>, vector<1x1x4x128xf32>
    %2205 = vector.shape_cast %2204 : vector<1x1x4x128xf32> to vector<4x128xf32>
    %c380 = arith.constant 380 : index
    %2206 = memref.load %arg3[%c380] : memref<528xf32, #tpu.memory_space<smem>>
    %2207 = vector.broadcast %2206 : f32 to vector<4x128xf32>
    %2208 = arith.mulf %2207, %2205 : vector<4x128xf32>
    %2209 = arith.addf %2191, %2208 : vector<4x128xf32>
    %c381 = arith.constant 381 : index
    %2210 = memref.load %arg3[%c381] : memref<528xf32, #tpu.memory_space<smem>>
    %2211 = vector.broadcast %2210 : f32 to vector<4x128xf32>
    %2212 = arith.mulf %2211, %2205 : vector<4x128xf32>
    %2213 = arith.addf %2195, %2212 : vector<4x128xf32>
    %c382 = arith.constant 382 : index
    %2214 = memref.load %arg3[%c382] : memref<528xf32, #tpu.memory_space<smem>>
    %2215 = vector.broadcast %2214 : f32 to vector<4x128xf32>
    %2216 = arith.mulf %2215, %2205 : vector<4x128xf32>
    %2217 = arith.addf %2199, %2216 : vector<4x128xf32>
    %c383 = arith.constant 383 : index
    %2218 = memref.load %arg3[%c383] : memref<528xf32, #tpu.memory_space<smem>>
    %2219 = vector.broadcast %2218 : f32 to vector<4x128xf32>
    %2220 = arith.mulf %2219, %2205 : vector<4x128xf32>
    %2221 = arith.addf %2203, %2220 : vector<4x128xf32>
    %c0_494 = arith.constant 0 : index
    %c3_495 = arith.constant 3 : index
    %c0_496 = arith.constant 0 : index
    %c0_497 = arith.constant 0 : index
    %2222 = vector.load %arg2[%c0_494, %c3_495, %c0_496, %c0_497] : memref<1x4x4x590xf32, #tpu.memory_space<vmem>>, vector<1x1x4x128xf32>
    %2223 = vector.shape_cast %2222 : vector<1x1x4x128xf32> to vector<4x128xf32>
    %c396_498 = arith.constant 396 : index
    %2224 = memref.load %arg3[%c396_498] : memref<528xf32, #tpu.memory_space<smem>>
    %2225 = vector.broadcast %2224 : f32 to vector<4x128xf32>
    %2226 = arith.mulf %2225, %2223 : vector<4x128xf32>
    %2227 = arith.addf %2209, %2226 : vector<4x128xf32>
    %c397 = arith.constant 397 : index
    %2228 = memref.load %arg3[%c397] : memref<528xf32, #tpu.memory_space<smem>>
    %2229 = vector.broadcast %2228 : f32 to vector<4x128xf32>
    %2230 = arith.mulf %2229, %2223 : vector<4x128xf32>
    %2231 = arith.addf %2213, %2230 : vector<4x128xf32>
    %c398 = arith.constant 398 : index
    %2232 = memref.load %arg3[%c398] : memref<528xf32, #tpu.memory_space<smem>>
    %2233 = vector.broadcast %2232 : f32 to vector<4x128xf32>
    %2234 = arith.mulf %2233, %2223 : vector<4x128xf32>
    %2235 = arith.addf %2217, %2234 : vector<4x128xf32>
    %c399 = arith.constant 399 : index
    %2236 = memref.load %arg3[%c399] : memref<528xf32, #tpu.memory_space<smem>>
    %2237 = vector.broadcast %2236 : f32 to vector<4x128xf32>
    %2238 = arith.mulf %2237, %2223 : vector<4x128xf32>
    %2239 = arith.addf %2221, %2238 : vector<4x128xf32>
    %c0_499 = arith.constant 0 : index
    %c3_500 = arith.constant 3 : index
    %c0_501 = arith.constant 0 : index
    %c7_502 = arith.constant 7 : index
    %2240 = vector.load %arg2[%c0_499, %c3_500, %c0_501, %c7_502] : memref<1x4x4x590xf32, #tpu.memory_space<vmem>>, vector<1x1x4x128xf32>
    %2241 = vector.shape_cast %2240 : vector<1x1x4x128xf32> to vector<4x128xf32>
    %c412 = arith.constant 412 : index
    %2242 = memref.load %arg3[%c412] : memref<528xf32, #tpu.memory_space<smem>>
    %2243 = vector.broadcast %2242 : f32 to vector<4x128xf32>
    %2244 = arith.mulf %2243, %2241 : vector<4x128xf32>
    %2245 = arith.addf %2227, %2244 : vector<4x128xf32>
    %c413 = arith.constant 413 : index
    %2246 = memref.load %arg3[%c413] : memref<528xf32, #tpu.memory_space<smem>>
    %2247 = vector.broadcast %2246 : f32 to vector<4x128xf32>
    %2248 = arith.mulf %2247, %2241 : vector<4x128xf32>
    %2249 = arith.addf %2231, %2248 : vector<4x128xf32>
    %c414 = arith.constant 414 : index
    %2250 = memref.load %arg3[%c414] : memref<528xf32, #tpu.memory_space<smem>>
    %2251 = vector.broadcast %2250 : f32 to vector<4x128xf32>
    %2252 = arith.mulf %2251, %2241 : vector<4x128xf32>
    %2253 = arith.addf %2235, %2252 : vector<4x128xf32>
    %c415 = arith.constant 415 : index
    %2254 = memref.load %arg3[%c415] : memref<528xf32, #tpu.memory_space<smem>>
    %2255 = vector.broadcast %2254 : f32 to vector<4x128xf32>
    %2256 = arith.mulf %2255, %2241 : vector<4x128xf32>
    %2257 = arith.addf %2239, %2256 : vector<4x128xf32>
    %c0_503 = arith.constant 0 : index
    %c3_504 = arith.constant 3 : index
    %c0_505 = arith.constant 0 : index
    %c14_506 = arith.constant 14 : index
    %2258 = vector.load %arg2[%c0_503, %c3_504, %c0_505, %c14_506] : memref<1x4x4x590xf32, #tpu.memory_space<vmem>>, vector<1x1x4x128xf32>
    %2259 = vector.shape_cast %2258 : vector<1x1x4x128xf32> to vector<4x128xf32>
    %c428 = arith.constant 428 : index
    %2260 = memref.load %arg3[%c428] : memref<528xf32, #tpu.memory_space<smem>>
    %2261 = vector.broadcast %2260 : f32 to vector<4x128xf32>
    %2262 = arith.mulf %2261, %2259 : vector<4x128xf32>
    %2263 = arith.addf %2245, %2262 : vector<4x128xf32>
    %c429 = arith.constant 429 : index
    %2264 = memref.load %arg3[%c429] : memref<528xf32, #tpu.memory_space<smem>>
    %2265 = vector.broadcast %2264 : f32 to vector<4x128xf32>
    %2266 = arith.mulf %2265, %2259 : vector<4x128xf32>
    %2267 = arith.addf %2249, %2266 : vector<4x128xf32>
    %c430 = arith.constant 430 : index
    %2268 = memref.load %arg3[%c430] : memref<528xf32, #tpu.memory_space<smem>>
    %2269 = vector.broadcast %2268 : f32 to vector<4x128xf32>
    %2270 = arith.mulf %2269, %2259 : vector<4x128xf32>
    %2271 = arith.addf %2253, %2270 : vector<4x128xf32>
    %c431 = arith.constant 431 : index
    %2272 = memref.load %arg3[%c431] : memref<528xf32, #tpu.memory_space<smem>>
    %2273 = vector.broadcast %2272 : f32 to vector<4x128xf32>
    %2274 = arith.mulf %2273, %2259 : vector<4x128xf32>
    %2275 = arith.addf %2257, %2274 : vector<4x128xf32>
    %c0_507 = arith.constant 0 : index
    %c3_508 = arith.constant 3 : index
    %c0_509 = arith.constant 0 : index
    %c224_510 = arith.constant 224 : index
    %2276 = vector.load %arg2[%c0_507, %c3_508, %c0_509, %c224_510] : memref<1x4x4x590xf32, #tpu.memory_space<vmem>>, vector<1x1x4x128xf32>
    %2277 = vector.shape_cast %2276 : vector<1x1x4x128xf32> to vector<4x128xf32>
    %c444 = arith.constant 444 : index
    %2278 = memref.load %arg3[%c444] : memref<528xf32, #tpu.memory_space<smem>>
    %2279 = vector.broadcast %2278 : f32 to vector<4x128xf32>
    %2280 = arith.mulf %2279, %2277 : vector<4x128xf32>
    %2281 = arith.addf %2263, %2280 : vector<4x128xf32>
    %c445 = arith.constant 445 : index
    %2282 = memref.load %arg3[%c445] : memref<528xf32, #tpu.memory_space<smem>>
    %2283 = vector.broadcast %2282 : f32 to vector<4x128xf32>
    %2284 = arith.mulf %2283, %2277 : vector<4x128xf32>
    %2285 = arith.addf %2267, %2284 : vector<4x128xf32>
    %c446 = arith.constant 446 : index
    %2286 = memref.load %arg3[%c446] : memref<528xf32, #tpu.memory_space<smem>>
    %2287 = vector.broadcast %2286 : f32 to vector<4x128xf32>
    %2288 = arith.mulf %2287, %2277 : vector<4x128xf32>
    %2289 = arith.addf %2271, %2288 : vector<4x128xf32>
    %c447 = arith.constant 447 : index
    %2290 = memref.load %arg3[%c447] : memref<528xf32, #tpu.memory_space<smem>>
    %2291 = vector.broadcast %2290 : f32 to vector<4x128xf32>
    %2292 = arith.mulf %2291, %2277 : vector<4x128xf32>
    %2293 = arith.addf %2275, %2292 : vector<4x128xf32>
    %c0_511 = arith.constant 0 : index
    %c3_512 = arith.constant 3 : index
    %c0_513 = arith.constant 0 : index
    %c238_514 = arith.constant 238 : index
    %2294 = vector.load %arg2[%c0_511, %c3_512, %c0_513, %c238_514] : memref<1x4x4x590xf32, #tpu.memory_space<vmem>>, vector<1x1x4x128xf32>
    %2295 = vector.shape_cast %2294 : vector<1x1x4x128xf32> to vector<4x128xf32>
    %c460 = arith.constant 460 : index
    %2296 = memref.load %arg3[%c460] : memref<528xf32, #tpu.memory_space<smem>>
    %2297 = vector.broadcast %2296 : f32 to vector<4x128xf32>
    %2298 = arith.mulf %2297, %2295 : vector<4x128xf32>
    %2299 = arith.addf %2281, %2298 : vector<4x128xf32>
    %c461 = arith.constant 461 : index
    %2300 = memref.load %arg3[%c461] : memref<528xf32, #tpu.memory_space<smem>>
    %2301 = vector.broadcast %2300 : f32 to vector<4x128xf32>
    %2302 = arith.mulf %2301, %2295 : vector<4x128xf32>
    %2303 = arith.addf %2285, %2302 : vector<4x128xf32>
    %c462_515 = arith.constant 462 : index
    %2304 = memref.load %arg3[%c462_515] : memref<528xf32, #tpu.memory_space<smem>>
    %2305 = vector.broadcast %2304 : f32 to vector<4x128xf32>
    %2306 = arith.mulf %2305, %2295 : vector<4x128xf32>
    %2307 = arith.addf %2289, %2306 : vector<4x128xf32>
    %c463 = arith.constant 463 : index
    %2308 = memref.load %arg3[%c463] : memref<528xf32, #tpu.memory_space<smem>>
    %2309 = vector.broadcast %2308 : f32 to vector<4x128xf32>
    %2310 = arith.mulf %2309, %2295 : vector<4x128xf32>
    %2311 = arith.addf %2293, %2310 : vector<4x128xf32>
    %c0_516 = arith.constant 0 : index
    %c3_517 = arith.constant 3 : index
    %c0_518 = arith.constant 0 : index
    %c448_519 = arith.constant 448 : index
    %2312 = vector.load %arg2[%c0_516, %c3_517, %c0_518, %c448_519] : memref<1x4x4x590xf32, #tpu.memory_space<vmem>>, vector<1x1x4x128xf32>
    %2313 = vector.shape_cast %2312 : vector<1x1x4x128xf32> to vector<4x128xf32>
    %c476 = arith.constant 476 : index
    %2314 = memref.load %arg3[%c476] : memref<528xf32, #tpu.memory_space<smem>>
    %2315 = vector.broadcast %2314 : f32 to vector<4x128xf32>
    %2316 = arith.mulf %2315, %2313 : vector<4x128xf32>
    %2317 = arith.addf %2299, %2316 : vector<4x128xf32>
    %c477 = arith.constant 477 : index
    %2318 = memref.load %arg3[%c477] : memref<528xf32, #tpu.memory_space<smem>>
    %2319 = vector.broadcast %2318 : f32 to vector<4x128xf32>
    %2320 = arith.mulf %2319, %2313 : vector<4x128xf32>
    %2321 = arith.addf %2303, %2320 : vector<4x128xf32>
    %c478 = arith.constant 478 : index
    %2322 = memref.load %arg3[%c478] : memref<528xf32, #tpu.memory_space<smem>>
    %2323 = vector.broadcast %2322 : f32 to vector<4x128xf32>
    %2324 = arith.mulf %2323, %2313 : vector<4x128xf32>
    %2325 = arith.addf %2307, %2324 : vector<4x128xf32>
    %c479 = arith.constant 479 : index
    %2326 = memref.load %arg3[%c479] : memref<528xf32, #tpu.memory_space<smem>>
    %2327 = vector.broadcast %2326 : f32 to vector<4x128xf32>
    %2328 = arith.mulf %2327, %2313 : vector<4x128xf32>
    %2329 = arith.addf %2311, %2328 : vector<4x128xf32>
    %c0_520 = arith.constant 0 : index
    %c3_521 = arith.constant 3 : index
    %c0_522 = arith.constant 0 : index
    %c455_523 = arith.constant 455 : index
    %2330 = vector.load %arg2[%c0_520, %c3_521, %c0_522, %c455_523] : memref<1x4x4x590xf32, #tpu.memory_space<vmem>>, vector<1x1x4x128xf32>
    %2331 = vector.shape_cast %2330 : vector<1x1x4x128xf32> to vector<4x128xf32>
    %c492 = arith.constant 492 : index
    %2332 = memref.load %arg3[%c492] : memref<528xf32, #tpu.memory_space<smem>>
    %2333 = vector.broadcast %2332 : f32 to vector<4x128xf32>
    %2334 = arith.mulf %2333, %2331 : vector<4x128xf32>
    %2335 = arith.addf %2317, %2334 : vector<4x128xf32>
    %c493 = arith.constant 493 : index
    %2336 = memref.load %arg3[%c493] : memref<528xf32, #tpu.memory_space<smem>>
    %2337 = vector.broadcast %2336 : f32 to vector<4x128xf32>
    %2338 = arith.mulf %2337, %2331 : vector<4x128xf32>
    %2339 = arith.addf %2321, %2338 : vector<4x128xf32>
    %c494 = arith.constant 494 : index
    %2340 = memref.load %arg3[%c494] : memref<528xf32, #tpu.memory_space<smem>>
    %2341 = vector.broadcast %2340 : f32 to vector<4x128xf32>
    %2342 = arith.mulf %2341, %2331 : vector<4x128xf32>
    %2343 = arith.addf %2325, %2342 : vector<4x128xf32>
    %c495 = arith.constant 495 : index
    %2344 = memref.load %arg3[%c495] : memref<528xf32, #tpu.memory_space<smem>>
    %2345 = vector.broadcast %2344 : f32 to vector<4x128xf32>
    %2346 = arith.mulf %2345, %2331 : vector<4x128xf32>
    %2347 = arith.addf %2329, %2346 : vector<4x128xf32>
    %c0_524 = arith.constant 0 : index
    %c3_525 = arith.constant 3 : index
    %c0_526 = arith.constant 0 : index
    %c462_527 = arith.constant 462 : index
    %2348 = vector.load %arg2[%c0_524, %c3_525, %c0_526, %c462_527] : memref<1x4x4x590xf32, #tpu.memory_space<vmem>>, vector<1x1x4x128xf32>
    %2349 = vector.shape_cast %2348 : vector<1x1x4x128xf32> to vector<4x128xf32>
    %c508 = arith.constant 508 : index
    %2350 = memref.load %arg3[%c508] : memref<528xf32, #tpu.memory_space<smem>>
    %2351 = vector.broadcast %2350 : f32 to vector<4x128xf32>
    %2352 = arith.mulf %2351, %2349 : vector<4x128xf32>
    %2353 = arith.addf %2335, %2352 : vector<4x128xf32>
    %c509 = arith.constant 509 : index
    %2354 = memref.load %arg3[%c509] : memref<528xf32, #tpu.memory_space<smem>>
    %2355 = vector.broadcast %2354 : f32 to vector<4x128xf32>
    %2356 = arith.mulf %2355, %2349 : vector<4x128xf32>
    %2357 = arith.addf %2339, %2356 : vector<4x128xf32>
    %c510 = arith.constant 510 : index
    %2358 = memref.load %arg3[%c510] : memref<528xf32, #tpu.memory_space<smem>>
    %2359 = vector.broadcast %2358 : f32 to vector<4x128xf32>
    %2360 = arith.mulf %2359, %2349 : vector<4x128xf32>
    %2361 = arith.addf %2343, %2360 : vector<4x128xf32>
    %c511 = arith.constant 511 : index
    %2362 = memref.load %arg3[%c511] : memref<528xf32, #tpu.memory_space<smem>>
    %2363 = vector.broadcast %2362 : f32 to vector<4x128xf32>
    %2364 = arith.mulf %2363, %2349 : vector<4x128xf32>
    %2365 = arith.addf %2347, %2364 : vector<4x128xf32>
    %c0_528 = arith.constant 0 : index
    %c3_529 = arith.constant 3 : index
    %c0_530 = arith.constant 0 : index
    %c231_531 = arith.constant 231 : index
    %2366 = vector.load %arg2[%c0_528, %c3_529, %c0_530, %c231_531] : memref<1x4x4x590xf32, #tpu.memory_space<vmem>>, vector<1x1x4x128xf32>
    %2367 = vector.shape_cast %2366 : vector<1x1x4x128xf32> to vector<4x128xf32>
    %c524 = arith.constant 524 : index
    %2368 = memref.load %arg3[%c524] : memref<528xf32, #tpu.memory_space<smem>>
    %2369 = vector.broadcast %2368 : f32 to vector<4x128xf32>
    %2370 = arith.mulf %2369, %2367 : vector<4x128xf32>
    %2371 = arith.addf %2353, %2370 : vector<4x128xf32>
    %c525 = arith.constant 525 : index
    %2372 = memref.load %arg3[%c525] : memref<528xf32, #tpu.memory_space<smem>>
    %2373 = vector.broadcast %2372 : f32 to vector<4x128xf32>
    %2374 = arith.mulf %2373, %2367 : vector<4x128xf32>
    %2375 = arith.addf %2357, %2374 : vector<4x128xf32>
    %c526 = arith.constant 526 : index
    %2376 = memref.load %arg3[%c526] : memref<528xf32, #tpu.memory_space<smem>>
    %2377 = vector.broadcast %2376 : f32 to vector<4x128xf32>
    %2378 = arith.mulf %2377, %2367 : vector<4x128xf32>
    %2379 = arith.addf %2361, %2378 : vector<4x128xf32>
    %c527 = arith.constant 527 : index
    %2380 = memref.load %arg3[%c527] : memref<528xf32, #tpu.memory_space<smem>>
    %2381 = vector.broadcast %2380 : f32 to vector<4x128xf32>
    %2382 = arith.mulf %2381, %2367 : vector<4x128xf32>
    %2383 = arith.addf %2365, %2382 : vector<4x128xf32>
    %c0_532 = arith.constant 0 : index
    %c0_533 = arith.constant 0 : index
    %c0_534 = arith.constant 0 : index
    %c0_535 = arith.constant 0 : index
    %2384 = vector.load %arg5[%c0_532, %c0_533, %c0_534, %c0_535] : memref<1x4x4x128xf32, #tpu.memory_space<vmem>>, vector<1x1x4x128xf32>
    %2385 = vector.shape_cast %2384 : vector<1x1x4x128xf32> to vector<4x128xf32>
    %2386 = vector.shape_cast %2371 : vector<4x128xf32> to vector<1x1x4x128xf32>
    tpu.vector_store %arg5[%c0_532, %c0_533, %c0_534, %c0_535], %2386 {strides = array<i32>} : memref<1x4x4x128xf32, #tpu.memory_space<vmem>>, vector<1x1x4x128xf32>,
    %c0_536 = arith.constant 0 : index
    %c1_537 = arith.constant 1 : index
    %c0_538 = arith.constant 0 : index
    %c0_539 = arith.constant 0 : index
    %2387 = vector.load %arg5[%c0_536, %c1_537, %c0_538, %c0_539] : memref<1x4x4x128xf32, #tpu.memory_space<vmem>>, vector<1x1x4x128xf32>
    %2388 = vector.shape_cast %2387 : vector<1x1x4x128xf32> to vector<4x128xf32>
    %2389 = vector.shape_cast %2375 : vector<4x128xf32> to vector<1x1x4x128xf32>
    tpu.vector_store %arg5[%c0_536, %c1_537, %c0_538, %c0_539], %2389 {strides = array<i32>} : memref<1x4x4x128xf32, #tpu.memory_space<vmem>>, vector<1x1x4x128xf32>,
    %c0_540 = arith.constant 0 : index
    %c2_541 = arith.constant 2 : index
    %c0_542 = arith.constant 0 : index
    %c0_543 = arith.constant 0 : index
    %2390 = vector.load %arg5[%c0_540, %c2_541, %c0_542, %c0_543] : memref<1x4x4x128xf32, #tpu.memory_space<vmem>>, vector<1x1x4x128xf32>
    %2391 = vector.shape_cast %2390 : vector<1x1x4x128xf32> to vector<4x128xf32>
    %2392 = vector.shape_cast %2379 : vector<4x128xf32> to vector<1x1x4x128xf32>
    tpu.vector_store %arg5[%c0_540, %c2_541, %c0_542, %c0_543], %2392 {strides = array<i32>} : memref<1x4x4x128xf32, #tpu.memory_space<vmem>>, vector<1x1x4x128xf32>,
    %c0_544 = arith.constant 0 : index
    %c3_545 = arith.constant 3 : index
    %c0_546 = arith.constant 0 : index
    %c0_547 = arith.constant 0 : index
    %2393 = vector.load %arg5[%c0_544, %c3_545, %c0_546, %c0_547] : memref<1x4x4x128xf32, #tpu.memory_space<vmem>>, vector<1x1x4x128xf32>
    %2394 = vector.shape_cast %2393 : vector<1x1x4x128xf32> to vector<4x128xf32>
    %2395 = vector.shape_cast %2383 : vector<4x128xf32> to vector<1x1x4x128xf32>
    tpu.vector_store %arg5[%c0_544, %c3_545, %c0_546, %c0_547], %2395 {strides = array<i32>} : memref<1x4x4x128xf32, #tpu.memory_space<vmem>>, vector<1x1x4x128xf32>,
    return
  }
  func.func @transform_0(%arg0: i32, %arg1: i32) -> (i32, i32, i32, i32) {
    %c0_i32 = arith.constant 0 : i32
    %c0_i32_0 = arith.constant 0 : i32
    %c0_i32_1 = arith.constant 0 : i32
    return %arg0, %c0_i32, %arg1, %c0_i32_0 : i32, i32, i32, i32
  }
  func.func @transform_1(%arg0: i32, %arg1: i32) -> i32 {
    %c0_i32 = arith.constant 0 : i32
    %c0_i32_0 = arith.constant 0 : i32
    return %c0_i32 : i32
  }
  func.func @transform_2(%arg0: i32, %arg1: i32) -> i32 {
    %c0_i32 = arith.constant 0 : i32
    %c0_i32_0 = arith.constant 0 : i32
    return %c0_i32 : i32
  }
  func.func @transform_3(%arg0: i32, %arg1: i32) -> (i32, i32, i32, i32) {
    %c0_i32 = arith.constant 0 : i32
    %c0_i32_0 = arith.constant 0 : i32
    %c0_i32_1 = arith.constant 0 : i32
    return %arg0, %c0_i32, %arg1, %c0_i32_0 : i32, i32, i32, i32
  }
}

</mosaic_0001>

<llo_original>
// kernel: tpu_custom_call.1
$region0: #{tpu_custom_call.1}
  #allocation0 [shape = 'u32[]', space=smem, size = 0x4, offset = 0x4, fixed_abs, tag = 'smem constant byte address 0x4 - core index']
  #allocation1 [shape = 'u32[144,128]{1,0:T(1,128)}', space=vmem, size = 0x12000, scoped, tag = 'internal scratch']
  %s0 = inlined_call_operand.hbm [shape: f32[2,4,4,590], index: 0, kind: input, shape index: {}]
  %s1 = inlined_call_operand.hbm [shape: f32[528], index: 1, kind: input, shape index: {}]
  %s2 = inlined_call_operand.vmem [shape: f32[4], index: 2, kind: input, shape index: {}]
  %s3 = inlined_call_operand.hbm [shape: f32[2,4,4,128], index: 3, kind: output, shape index: {}]
  %s4 = sld [smem:[#allocation0]]
  $region57: #{tpu_custom_call.1} parent=0
    _
  %s6 = ssub.s32 1, %s4
  %s7 = scalar_select 0, %s6, %s4
  $region1: #{tpu_custom_call.1} parent=0
    #allocation2 [shape = 'u8[81920]{0}', space=vmem, size = 0x14000, scoped, tag = 'input window, operand 0']
    #allocation3 [shape = 's32[2]{0}', space=sflag, size = 0x8, scoped, tag = 'scoped memory for tpu_custom_call.1']
    #allocation4 [shape = 's32[2]{0}', space=sflag, size = 0x8, scoped, tag = 'scoped memory for tpu_custom_call.1']
    #allocation5 [shape = 's32[2]{0}', space=sflag, size = 0x8, scoped, tag = 'scoped memory for tpu_custom_call.1']
    #allocation6 [shape = 's32[2]{0}', space=sflag, size = 0x8, scoped, tag = 'scoped memory for tpu_custom_call.1']
    #allocation7 [shape = 'u8[2560]{0}', space=smem, size = 0xa00, scoped, tag = 'input window, operand 1, single buffered']
    #allocation8 [shape = 'u8[512]{0}', space=smem, size = 0x200, scoped, tag = 'input window, operand 2, single buffered']
    #allocation9 [shape = 'u8[16384]{0}', space=vmem, size = 0x4000, scoped, tag = 'output window, operand 0']
    %8 = vsyncpa [#allocation3], 0
    %s9 = scalar_lea.sflag [#allocation3], 1
    %10 = vsyncpa %s9, 0
    %11 = vsyncpa [#allocation5], 0
    %12 = vsyncpa [#allocation6], 0
    %13 = vsyncpa [#allocation4], 0
    %s14 = scalar_lea.sflag [#allocation4], 1
    %15 = vsyncpa %s14, 0
    loop: start=0, step=1, limit=4
    $region2: #{tpu_custom_call.1} parent=1 // loop_pre_header
      _
    $region3: #{tpu_custom_call.1} parent=1 // loop_header
      %s17 = sphi 0, %s21
      %p18 = scmp.ge.s32.totalorder %s17, 4
      %s24 = sphi 0, %s36
      %s25 = sphi 0, %s32
      %s26 = sphi 0, %s24
      %s27 = sphi 0, %s25
      %s28 = sphi 0, %s26
      %s29 = sphi 0, %s27
      %s41 = sphi 0, %s43
      %s44 = sphi 0, %s41
      %s45 = sphi 0, %s44
      %s61 = sphi 0, %s45
      %s65 = sphi 0, %s65
      %s67 = sphi 0, %s65
      %s68 = sphi 0, %s67
      %s82 = sphi 0, %s68
      %s86 = sphi 0, %s86
      %s88 = sphi 0, %s86
      %s89 = sphi 0, %s88
      %s103 = sphi 0, %s89
      %s111 = sphi 0, %s113
      %s114 = sphi 0, %s111
      %s115 = sphi 0, %s114
      %s131 = sphi 0, %s115
    $region4: #{tpu_custom_call.1} parent=1 // loop_header_branch
      %20 = sbr.rel (%p18) target = $region8
    $region5: #{tpu_custom_call.1} parent=1 // loop_body
      %s22 = ssub.s32 %s17, 1
      %s23 = ssub.s32 %s17, 2
      %s30 = sadd.s32 1, %s25
      %p31 = scmp.ge.s32.totalorder %s30, 1
      %s32 = scalar_select %p31, 0, %s30
      %s33 = sadd.s32 1, %s24
      %s34 = scalar_select %p31, %s33, %s24
      %p35 = scmp.ge.s32.totalorder %s34, 2
      %s36 = scalar_select %p35, 0, %s34
      %s37 = ssub.s32 %s24, %s36
      %s38 = ssub.s32 %s25, %s32
      %s39 = sor.u32 %s37, %s38
      %p40 = scmp.eq.s32.totalorder %s39, 0
      %s42 = sadd.s32 %s41, 1
      %s43 = scalar_select %p40, %s41, %s42
      %p46 = pneg %p40
      %p47 = scmp.eq.s32.totalorder %s17, 1
      %p48 = por %p46, %p47
      %p49 = scmp.ne.s32.totalorder %s41, %s44
      %p50 = scmp.eq.s32.totalorder %s17, 0
      %p51 = por %p49, %p50
      %p52 = scmp.ne.s32.totalorder %s41, %s44
      %p53 = scmp.eq.s32.totalorder %s22, 1
      %p54 = por %p52, %p53
      %p55 = scmp.ne.s32.totalorder %s44, %s45
      %p56 = scmp.eq.s32.totalorder %s22, 0
      %p57 = por %p55, %p56
      %p58 = scmp.ne.s32.totalorder %s44, %s45
      %p59 = scmp.eq.s32.totalorder %s23, 1
      %p60 = por %p58, %p59
      %p62 = scmp.ne.s32.totalorder %s45, %s61
      %p63 = scmp.eq.s32.totalorder %s23, 0
      %p64 = por %p62, %p63
      %s66 = sadd.s32 %s65, 1
      %p69 = scmp.eq.s32.totalorder %s17, 1
      %p70 = scmp.ne.s32.totalorder %s65, %s67
      %p71 = scmp.eq.s32.totalorder %s17, 0
      %p72 = por %p70, %p71
      %p73 = scmp.ne.s32.totalorder %s65, %s67
      %p74 = scmp.eq.s32.totalorder %s22, 1
      %p75 = por %p73, %p74
      %p76 = scmp.ne.s32.totalorder %s67, %s68
      %p77 = scmp.eq.s32.totalorder %s22, 0
      %p78 = por %p76, %p77
      %p79 = scmp.ne.s32.totalorder %s67, %s68
      %p80 = scmp.eq.s32.totalorder %s23, 1
      %p81 = por %p79, %p80
      %p83 = scmp.ne.s32.totalorder %s68, %s82
      %p84 = scmp.eq.s32.totalorder %s23, 0
      %p85 = por %p83, %p84
      %s87 = sadd.s32 %s86, 1
      %p90 = scmp.eq.s32.totalorder %s17, 1
      %p91 = scmp.ne.s32.totalorder %s86, %s88
      %p92 = scmp.eq.s32.totalorder %s17, 0
      %p93 = por %p91, %p92
      %p94 = scmp.ne.s32.totalorder %s86, %s88
      %p95 = scmp.eq.s32.totalorder %s22, 1
      %p96 = por %p94, %p95
      %p97 = scmp.ne.s32.totalorder %s88, %s89
      %p98 = scmp.eq.s32.totalorder %s22, 0
      %p99 = por %p97, %p98
      %p100 = scmp.ne.s32.totalorder %s88, %s89
      %p101 = scmp.eq.s32.totalorder %s23, 1
      %p102 = por %p100, %p101
      %p104 = scmp.ne.s32.totalorder %s89, %s103
      %p105 = scmp.eq.s32.totalorder %s23, 0
      %p106 = por %p104, %p105
      %s107 = ssub.s32 %s24, %s36
      %s108 = ssub.s32 %s25, %s32
      %s109 = sor.u32 %s107, %s108
      %p110 = scmp.eq.s32.totalorder %s109, 0
      %s112 = sadd.s32 %s111, 1
      %s113 = scalar_select %p110, %s111, %s112
      %p116 = pneg %p110
      %p117 = scmp.eq.s32.totalorder %s17, 1
      %p118 = por %p116, %p117
      %p119 = scmp.ne.s32.totalorder %s111, %s114
      %p120 = scmp.eq.s32.totalorder %s17, 0
      %p121 = por %p119, %p120
      %p122 = scmp.ne.s32.totalorder %s111, %s114
      %p123 = scmp.eq.s32.totalorder %s22, 1
      %p124 = por %p122, %p123
      %p125 = scmp.ne.s32.totalorder %s114, %s115
      %p126 = scmp.eq.s32.totalorder %s22, 0
      %p127 = por %p125, %p126
      %p128 = scmp.ne.s32.totalorder %s114, %s115
      %p129 = scmp.eq.s32.totalorder %s23, 1
      %p130 = por %p128, %p129
      %p132 = scmp.ne.s32.totalorder %s115, %s131
      %p133 = scmp.eq.s32.totalorder %s23, 0
      %p134 = por %p132, %p133
      %p135 = scmp.le.s32.totalorder 1, %s17
      %p136 = scmp.lt.s32.totalorder %s17, 3
      %p137 = pnand %p135, %p136
      %p138 = pneg %p137
      // Predicated region
      $region9: #{tpu_custom_call.1} parent=5 // pred_check
        _
      $region10: #{tpu_custom_call.1} parent=5 // pred_check_branch
        %140 = sbr.rel (%p137) target = $region12
      $region11: #{tpu_custom_call.1} parent=5 // pred_region
        %s141 = ssub.s32 %s17, 1
        // Predicated region
        $region13: #{tpu_custom_call.1} parent=11 // pred_check
          %p142 = pneg %p78
        $region14: #{tpu_custom_call.1} parent=11 // pred_check_branch
          %144 = sbr.rel (%p142) target = $region16
        $region15: #{tpu_custom_call.1} parent=11 // pred_region
          %s146 = ssub.s32 80, 80
          %147 = vsyncadd [#allocation5], %s146
          %150 = dma.hbm_to_smem %s1, 80, [#allocation7], [#allocation5]
        $region16: #{tpu_custom_call.1} parent=11 // pred_fallthru
          _
        // Predicated region
        $region17: #{tpu_custom_call.1} parent=11 // pred_check
          %p151 = pneg %p99
        $region18: #{tpu_custom_call.1} parent=11 // pred_check_branch
          %153 = sbr.rel (%p151) target = $region20
        $region19: #{tpu_custom_call.1} parent=11 // pred_region
          %s155 = ssub.s32 16, 16
          %156 = vsyncadd [#allocation6], %s155
          %s158 = sshll.u32 %s2, 4
          %s159 = int_to_ptr.vmem [resolvable:$true] %s158
          %161 = dma.vmem_to_smem %s159, 16, [#allocation8], [#allocation6]
        $region20: #{tpu_custom_call.1} parent=11 // pred_fallthru
          _
      $region12: #{tpu_custom_call.1} parent=5 // pred_fallthru
        _
      %p162 = scmp.lt.s32.totalorder %s17, 2
      // Predicated region
      $region21: #{tpu_custom_call.1} parent=5 // pred_check
        %p163 = pneg %p162
      $region22: #{tpu_custom_call.1} parent=5 // pred_check_branch
        %165 = sbr.rel (%p163) target = $region24
      $region23: #{tpu_custom_call.1} parent=5 // pred_region
        // Predicated region
        $region25: #{tpu_custom_call.1} parent=23 // pred_check
          %p166 = pneg %p51
        $region26: #{tpu_custom_call.1} parent=23 // pred_check_branch
          %168 = sbr.rel (%p166) target = $region28
        $region27: #{tpu_custom_call.1} parent=23 // pred_region
          %s169 = sand.u32 %s41, 1
          %s170 = scalar_lea.sflag [#allocation3], %s169
          %s171 = sand.u32 %s41, 1
          %s172 = smul.addr %s171, 80
          %s173 = scalar_lea.vmem [#allocation2], %s172
          %s175 = ssub.s32 1280, 1280
          %176 = vsyncadd %s170, %s175
          %s177 = smul.addr %s25, 5
          %s178 = smul.addr %s24, 20
          %s179 = sadd.s32 %s177, %s178
          %s180 = smul.addr %s179, 64
          %s181 = scalar_lea.hbm %s0, %s180
          %s182 = sshll.u32 %s173, 4
          %s183 = int_to_ptr.vmem [resolvable:$true] %s182
          %188 = dma.hbm_to_vmem [thread:$0]  %s181, 1280, %s183, %s170, 320, 320, 20
        $region28: #{tpu_custom_call.1} parent=23 // pred_fallthru
          _
      $region24: #{tpu_custom_call.1} parent=5 // pred_fallthru
        _
      %p189 = scmp.le.s32.totalorder 1, %s17
      %p190 = scmp.lt.s32.totalorder %s17, 3
      %p191 = pnand %p189, %p190
      %p192 = pneg %p191
      // Predicated region
      $region29: #{tpu_custom_call.1} parent=5 // pred_check
        _
      $region30: #{tpu_custom_call.1} parent=5 // pred_check_branch
        %194 = sbr.rel (%p191) target = $region32
      $region31: #{tpu_custom_call.1} parent=5 // pred_region
        %s195 = ssub.s32 %s17, 1
        %s196 = sand.u32 %s44, 1
        %s197 = scalar_lea.sflag [#allocation3], %s196
        %s198 = sand.u32 %s44, 1
        %s199 = smul.addr %s198, 80
        %s200 = scalar_lea.vmem [#allocation2], %s199
        // Predicated region
        $region33: #{tpu_custom_call.1} parent=31 // pred_check
          %p201 = pneg %p57
        $region34: #{tpu_custom_call.1} parent=31 // pred_check_branch
          %203 = sbr.rel (%p201) target = $region36
        $region35: #{tpu_custom_call.1} parent=31 // pred_region
          %204 = dma.done %s197, 1280
        $region36: #{tpu_custom_call.1} parent=31 // pred_fallthru
          _
        // Predicated region
        $region37: #{tpu_custom_call.1} parent=31 // pred_check
          %p205 = pneg %p78
        $region38: #{tpu_custom_call.1} parent=31 // pred_check_branch
          %207 = sbr.rel (%p205) target = $region40
        $region39: #{tpu_custom_call.1} parent=31 // pred_region
          %208 = dma.done [#allocation5], 80
        $region40: #{tpu_custom_call.1} parent=31 // pred_fallthru
          _
        // Predicated region
        $region41: #{tpu_custom_call.1} parent=31 // pred_check
          %p209 = pneg %p99
        $region42: #{tpu_custom_call.1} parent=31 // pred_check_branch
          %211 = sbr.rel (%p209) target = $region44
        $region43: #{tpu_custom_call.1} parent=31 // pred_region
          %212 = dma.done [#allocation6], 16
        $region44: #{tpu_custom_call.1} parent=31 // pred_fallthru
          _
        %213 = sfence
        %s214 = sand.u32 %s44, 1
        %s215 = scalar_lea.sflag [#allocation3], %s214
        %s216 = sand.u32 %s44, 1
        %s217 = smul.addr %s216, 80
        %s218 = scalar_lea.vmem [#allocation2], %s217
        %p219 = pneg %p57
        %p220 = pneg %p54
        %p221 = pneg %p78
        %p222 = pneg %p75
        %p223 = pneg %p99
        %p224 = pneg %p96
        %p225 = pneg %p127
        %p226 = pneg %p124
        %s227 = sand.u32 %s114, 1
        %s228 = scalar_lea.sflag [#allocation4], %s227
        %s229 = sand.u32 %s114, 1
        %s230 = smul.addr %s229, 16
        %s231 = scalar_lea.vmem [#allocation9], %s230
        %s232 = sld [smem:[#allocation8]]
        %v233 = vstv %s232
        %s234 = sld [smem:[#allocation8 + $0x1]]
        %v235 = vstv %s234
        %s236 = sld [smem:[#allocation8 + $0x2]]
        %v237 = vstv %s236
        %s238 = sld [smem:[#allocation8 + $0x3]]
        %v239 = vstv %s238
        %v240 = vld [vmem:[%s200 + $0x4] sm:$0xff]
        %s241 = sld [smem:[#allocation7]]
        %v242 = vstv %s241
        %v243 = vmul.f32 %v242, %v240
        %v244 = vadd.f32 %v233, %v243
        %s245 = sld [smem:[#allocation7 + $0x1]]
        %v246 = vstv %s245
        %v247 = vmul.f32 %v246, %v240
        %v248 = vadd.f32 %v235, %v247
        %s249 = sld [smem:[#allocation7 + $0x2]]
        %v250 = vstv %s249
        %v251 = vmul.f32 %v250, %v240
        %v252 = vadd.f32 %v237, %v251
        %s253 = sld [smem:[#allocation7 + $0x3]]
        %v254 = vstv %s253
        %v255 = vmul.f32 %v254, %v240
        %v256 = vadd.f32 %v239, %v255
        %s257 = sld [smem:[#allocation7 + $0x10]]
        %v258 = vstv %s257
        %v259 = vmul.f32 %v258, %v240
        %261 = vrot.lane.b32.xlu0 %v259, 127
        %v262 = vpop.permute.xlu0 %261
        %v263 = vrot.slane %v262, 4
        %vm264 = vcmask 1039360
        %v265 = vsel %vm264, %v262, %v263
        %v267 = vadd.f32 %v244, %v265
        %s268 = sld [smem:[#allocation7 + $0x11]]
        %v269 = vstv %s268
        %v270 = vmul.f32 %v269, %v240
        %272 = vrot.lane.b32.xlu0 %v270, 127
        %v273 = vpop.permute.xlu0 %272
        %v274 = vrot.slane %v273, 4
        %v275 = vsel %vm264, %v273, %v274
        %v277 = vadd.f32 %v248, %v275
        %s278 = sld [smem:[#allocation7 + $0x12]]
        %v279 = vstv %s278
        %v280 = vmul.f32 %v279, %v240
        %282 = vrot.lane.b32.xlu0 %v280, 127
        %v283 = vpop.permute.xlu0 %282
        %v284 = vrot.slane %v283, 4
        %v285 = vsel %vm264, %v283, %v284
        %v287 = vadd.f32 %v252, %v285
        %s288 = sld [smem:[#allocation7 + $0x13]]
        %v289 = vstv %s288
        %v290 = vmul.f32 %v289, %v240
        %292 = vrot.lane.b32.xlu0 %v290, 127
        %v293 = vpop.permute.xlu0 %292
        %v294 = vrot.slane %v293, 4
        %v295 = vsel %vm264, %v293, %v294
        %v297 = vadd.f32 %v256, %v295
        %s298 = sld [smem:[#allocation7 + $0x20]]
        %v299 = vstv %s298
        %v300 = vmul.f32 %v299, %v240
        %302 = vrot.lane.b32.xlu0 %v300, 126
        %v303 = vpop.permute.xlu0 %302
        %v304 = vrot.slane %v303, 4
        %vm305 = vcmask 1031168
        %v306 = vsel %vm305, %v303, %v304
        %v308 = vadd.f32 %v267, %v306
        %s309 = sld [smem:[#allocation7 + $0x21]]
        %v310 = vstv %s309
        %v311 = vmul.f32 %v310, %v240
        %313 = vrot.lane.b32.xlu0 %v311, 126
        %v314 = vpop.permute.xlu0 %313
        %v315 = vrot.slane %v314, 4
        %v316 = vsel %vm305, %v314, %v315
        %v318 = vadd.f32 %v277, %v316
        %s319 = sld [smem:[#allocation7 + $0x22]]
        %v320 = vstv %s319
        %v321 = vmul.f32 %v320, %v240
        %323 = vrot.lane.b32.xlu0 %v321, 126
        %v324 = vpop.permute.xlu0 %323
        %v325 = vrot.slane %v324, 4
        %v326 = vsel %vm305, %v324, %v325
        %v328 = vadd.f32 %v287, %v326
        %s329 = sld [smem:[#allocation7 + $0x23]]
        %v330 = vstv %s329
        %v331 = vmul.f32 %v330, %v240
        %333 = vrot.lane.b32.xlu0 %v331, 126
        %v334 = vpop.permute.xlu0 %333
        %v335 = vrot.slane %v334, 4
        %v336 = vsel %vm305, %v334, %v335
        %v338 = vadd.f32 %v297, %v336
        %s339 = sld [smem:[#allocation7 + $0x30]]
        %v340 = vstv %s339
        %v341 = vmul.f32 %v340, %v240
        %343 = vrot.lane.b32.xlu0 %v341, 96
        %v344 = vpop.permute.xlu0 %343
        %v345 = vrot.slane %v344, 4
        %vm346 = vcmask 785408
        %v347 = vsel %vm346, %v344, %v345
        %v349 = vadd.f32 %v308, %v347
        %s350 = sld [smem:[#allocation7 + $0x31]]
        %v351 = vstv %s350
        %v352 = vmul.f32 %v351, %v240
        %354 = vrot.lane.b32.xlu0 %v352, 96
        %v355 = vpop.permute.xlu0 %354
        %v356 = vrot.slane %v355, 4
        %v357 = vsel %vm346, %v355, %v356
        %v359 = vadd.f32 %v318, %v357
        %s360 = sld [smem:[#allocation7 + $0x32]]
        %v361 = vstv %s360
        %v362 = vmul.f32 %v361, %v240
        %364 = vrot.lane.b32.xlu0 %v362, 96
        %v365 = vpop.permute.xlu0 %364
        %v366 = vrot.slane %v365, 4
        %v367 = vsel %vm346, %v365, %v366
        %v369 = vadd.f32 %v328, %v367
        %s370 = sld [smem:[#allocation7 + $0x33]]
        %v371 = vstv %s370
        %v372 = vmul.f32 %v371, %v240
        %374 = vrot.lane.b32.xlu0 %v372, 96
        %v375 = vpop.permute.xlu0 %374
        %v376 = vrot.slane %v375, 4
        %v377 = vsel %vm346, %v375, %v376
        %v379 = vadd.f32 %v338, %v377
        %s380 = sld [smem:[#allocation7 + $0x40]]
        %v381 = vstv %s380
        %v382 = vmul.f32 %v381, %v240
        %384 = vrot.lane.b32.xlu0 %v382, 94
        %v385 = vpop.permute.xlu0 %384
        %v386 = vrot.slane %v385, 4
        %vm387 = vcmask 769024
        %v388 = vsel %vm387, %v385, %v386
        %v390 = vadd.f32 %v349, %v388
        %s391 = sld [smem:[#allocation7 + $0x41]]
        %v392 = vstv %s391
        %v393 = vmul.f32 %v392, %v240
        %395 = vrot.lane.b32.xlu0 %v393, 94
        %v396 = vpop.permute.xlu0 %395
        %v397 = vrot.slane %v396, 4
        %v398 = vsel %vm387, %v396, %v397
        %v400 = vadd.f32 %v359, %v398
        %s401 = sld [smem:[#allocation7 + $0x42]]
        %v402 = vstv %s401
        %v403 = vmul.f32 %v402, %v240
        %405 = vrot.lane.b32.xlu0 %v403, 94
        %v406 = vpop.permute.xlu0 %405
        %v407 = vrot.slane %v406, 4
        %v408 = vsel %vm387, %v406, %v407
        %v410 = vadd.f32 %v369, %v408
        %s411 = sld [smem:[#allocation7 + $0x43]]
        %v412 = vstv %s411
        %v413 = vmul.f32 %v412, %v240
        %415 = vrot.lane.b32.xlu0 %v413, 94
        %v416 = vpop.permute.xlu0 %415
        %v417 = vrot.slane %v416, 4
        %v418 = vsel %vm387, %v416, %v417
        %v420 = vadd.f32 %v379, %v418
        %v421 = vld [vmem:[%s200 + $0x8] sm:$0xff]
        %s422 = sld [smem:[#allocation7 + $0x50]]
        %v423 = vstv %s422
        %v424 = vmul.f32 %v423, %v421
        %426 = vrot.lane.b32.xlu0 %v424, 64
        %v427 = vpop.permute.xlu0 %426
        %v428 = vrot.slane %v427, 4
        %vm429 = vcmask 523264
        %v430 = vsel %vm429, %v428, %v427
        %v432 = vadd.f32 %v390, %v430
        %s433 = sld [smem:[#allocation7 + $0x51]]
        %v434 = vstv %s433
        %v435 = vmul.f32 %v434, %v421
        %437 = vrot.lane.b32.xlu0 %v435, 64
        %v438 = vpop.permute.xlu0 %437
        %v439 = vrot.slane %v438, 4
        %v440 = vsel %vm429, %v439, %v438
        %v442 = vadd.f32 %v400, %v440
        %s443 = sld [smem:[#allocation7 + $0x52]]
        %v444 = vstv %s443
        %v445 = vmul.f32 %v444, %v421
        %447 = vrot.lane.b32.xlu0 %v445, 64
        %v448 = vpop.permute.xlu0 %447
        %v449 = vrot.slane %v448, 4
        %v450 = vsel %vm429, %v449, %v448
        %v452 = vadd.f32 %v410, %v450
        %s453 = sld [smem:[#allocation7 + $0x53]]
        %v454 = vstv %s453
        %v455 = vmul.f32 %v454, %v421
        %457 = vrot.lane.b32.xlu0 %v455, 64
        %v458 = vpop.permute.xlu0 %457
        %v459 = vrot.slane %v458, 4
        %v460 = vsel %vm429, %v459, %v458
        %v462 = vadd.f32 %v420, %v460
        %s463 = sld [smem:[#allocation7 + $0x60]]
        %v464 = vstv %s463
        %v465 = vmul.f32 %v464, %v421
        %467 = vrot.lane.b32.xlu0 %v465, 63
        %v468 = vpop.permute.xlu0 %467
        %v469 = vrot.slane %v468, 4
        %vm470 = vcmask 515072
        %v471 = vsel %vm470, %v469, %v468
        %v473 = vadd.f32 %v432, %v471
        %s474 = sld [smem:[#allocation7 + $0x61]]
        %v475 = vstv %s474
        %v476 = vmul.f32 %v475, %v421
        %478 = vrot.lane.b32.xlu0 %v476, 63
        %v479 = vpop.permute.xlu0 %478
        %v480 = vrot.slane %v479, 4
        %v481 = vsel %vm470, %v480, %v479
        %v483 = vadd.f32 %v442, %v481
        %s484 = sld [smem:[#allocation7 + $0x62]]
        %v485 = vstv %s484
        %v486 = vmul.f32 %v485, %v421
        %488 = vrot.lane.b32.xlu0 %v486, 63
        %v489 = vpop.permute.xlu0 %488
        %v490 = vrot.slane %v489, 4
        %v491 = vsel %vm470, %v490, %v489
        %v493 = vadd.f32 %v452, %v491
        %s494 = sld [smem:[#allocation7 + $0x63]]
        %v495 = vstv %s494
        %v496 = vmul.f32 %v495, %v421
        %498 = vrot.lane.b32.xlu0 %v496, 63
        %v499 = vpop.permute.xlu0 %498
        %v500 = vrot.slane %v499, 4
        %v501 = vsel %vm470, %v500, %v499
        %v503 = vadd.f32 %v462, %v501
        %s504 = sld [smem:[#allocation7 + $0x70]]
        %v505 = vstv %s504
        %v506 = vmul.f32 %v505, %v421
        %508 = vrot.lane.b32.xlu0 %v506, 62
        %v509 = vpop.permute.xlu0 %508
        %v510 = vrot.slane %v509, 4
        %vm511 = vcmask 506880
        %v512 = vsel %vm511, %v510, %v509
        %v514 = vadd.f32 %v473, %v512
        %s515 = sld [smem:[#allocation7 + $0x71]]
        %v516 = vstv %s515
        %v517 = vmul.f32 %v516, %v421
        %519 = vrot.lane.b32.xlu0 %v517, 62
        %v520 = vpop.permute.xlu0 %519
        %v521 = vrot.slane %v520, 4
        %v522 = vsel %vm511, %v521, %v520
        %v524 = vadd.f32 %v483, %v522
        %s525 = sld [smem:[#allocation7 + $0x72]]
        %v526 = vstv %s525
        %v527 = vmul.f32 %v526, %v421
        %529 = vrot.lane.b32.xlu0 %v527, 62
        %v530 = vpop.permute.xlu0 %529
        %v531 = vrot.slane %v530, 4
        %v532 = vsel %vm511, %v531, %v530
        %v534 = vadd.f32 %v493, %v532
        %s535 = sld [smem:[#allocation7 + $0x73]]
        %v536 = vstv %s535
        %v537 = vmul.f32 %v536, %v421
        %539 = vrot.lane.b32.xlu0 %v537, 62
        %v540 = vpop.permute.xlu0 %539
        %v541 = vrot.slane %v540, 4
        %v542 = vsel %vm511, %v541, %v540
        %v544 = vadd.f32 %v503, %v542
        %s545 = sld [smem:[#allocation7 + $0x80]]
        %v546 = vstv %s545
        %v547 = vmul.f32 %v546, %v240
        %549 = vrot.lane.b32.xlu0 %v547, 66
        %v550 = vpop.permute.xlu0 %549
        %v551 = vrot.slane %v550, 4
        %vm552 = vcmask 539648
        %v553 = vsel %vm552, %v551, %v550
        %v555 = vadd.f32 %v514, %v553
        %s556 = sld [smem:[#allocation7 + $0x81]]
        %v557 = vstv %s556
        %v558 = vmul.f32 %v557, %v240
        %560 = vrot.lane.b32.xlu0 %v558, 66
        %v561 = vpop.permute.xlu0 %560
        %v562 = vrot.slane %v561, 4
        %v563 = vsel %vm552, %v562, %v561
        %v565 = vadd.f32 %v524, %v563
        %s566 = sld [smem:[#allocation7 + $0x82]]
        %v567 = vstv %s566
        %v568 = vmul.f32 %v567, %v240
        %570 = vrot.lane.b32.xlu0 %v568, 66
        %v571 = vpop.permute.xlu0 %570
        %v572 = vrot.slane %v571, 4
        %v573 = vsel %vm552, %v572, %v571
        %v575 = vadd.f32 %v534, %v573
        %s576 = sld [smem:[#allocation7 + $0x83]]
        %v577 = vstv %s576
        %v578 = vmul.f32 %v577, %v240
        %580 = vrot.lane.b32.xlu0 %v578, 66
        %v581 = vpop.permute.xlu0 %580
        %v582 = vrot.slane %v581, 4
        %v583 = vsel %vm552, %v582, %v581
        %v585 = vadd.f32 %v544, %v583
        %s586 = sld [smem:[#allocation7 + $0x90]]
        %v587 = vstv %s586
        %v588 = vmul.f32 %v587, %v240
        %590 = vrot.lane.b32.xlu0 %v588, 63
        %v591 = vpop.permute.xlu0 %590
        %v592 = vrot.slane %v591, 4
        %v593 = vsel %vm470, %v592, %v591
        %v595 = vadd.f32 %v555, %v593
        %s596 = sld [smem:[#allocation7 + $0x91]]
        %v597 = vstv %s596
        %v598 = vmul.f32 %v597, %v240
        %600 = vrot.lane.b32.xlu0 %v598, 63
        %v601 = vpop.permute.xlu0 %600
        %v602 = vrot.slane %v601, 4
        %v603 = vsel %vm470, %v602, %v601
        %v605 = vadd.f32 %v565, %v603
        %s606 = sld [smem:[#allocation7 + $0x92]]
        %v607 = vstv %s606
        %v608 = vmul.f32 %v607, %v240
        %610 = vrot.lane.b32.xlu0 %v608, 63
        %v611 = vpop.permute.xlu0 %610
        %v612 = vrot.slane %v611, 4
        %v613 = vsel %vm470, %v612, %v611
        %v615 = vadd.f32 %v575, %v613
        %s616 = sld [smem:[#allocation7 + $0x93]]
        %v617 = vstv %s616
        %v618 = vmul.f32 %v617, %v240
        %620 = vrot.lane.b32.xlu0 %v618, 63
        %v621 = vpop.permute.xlu0 %620
        %v622 = vrot.slane %v621, 4
        %v623 = vsel %vm470, %v622, %v621
        %v625 = vadd.f32 %v585, %v623
        %s626 = sld [smem:[#allocation7 + $0xa0]]
        %v627 = vstv %s626
        %v628 = vmul.f32 %v627, %v240
        %630 = vrot.lane.b32.xlu0 %v628, 60
        %v631 = vpop.permute.xlu0 %630
        %v632 = vrot.slane %v631, 4
        %vm633 = vcmask 490496
        %v634 = vsel %vm633, %v632, %v631
        %v636 = vadd.f32 %v595, %v634
        %s637 = sld [smem:[#allocation7 + $0xa1]]
        %v638 = vstv %s637
        %v639 = vmul.f32 %v638, %v240
        %641 = vrot.lane.b32.xlu0 %v639, 60
        %v642 = vpop.permute.xlu0 %641
        %v643 = vrot.slane %v642, 4
        %v644 = vsel %vm633, %v643, %v642
        %v646 = vadd.f32 %v605, %v644
        %s647 = sld [smem:[#allocation7 + $0xa2]]
        %v648 = vstv %s647
        %v649 = vmul.f32 %v648, %v240
        %651 = vrot.lane.b32.xlu0 %v649, 60
        %v652 = vpop.permute.xlu0 %651
        %v653 = vrot.slane %v652, 4
        %v654 = vsel %vm633, %v653, %v652
        %v656 = vadd.f32 %v615, %v654
        %s657 = sld [smem:[#allocation7 + $0xa3]]
        %v658 = vstv %s657
        %v659 = vmul.f32 %v658, %v240
        %661 = vrot.lane.b32.xlu0 %v659, 60
        %v662 = vpop.permute.xlu0 %661
        %v663 = vrot.slane %v662, 4
        %v664 = vsel %vm633, %v663, %v662
        %v666 = vadd.f32 %v625, %v664
        %s667 = sld [smem:[#allocation7 + $0xb0]]
        %v668 = vstv %s667
        %v669 = vmul.f32 %v668, %v240
        %671 = vrot.lane.b32.xlu0 %v669, 98
        %v672 = vpop.permute.xlu0 %671
        %v673 = vrot.slane %v672, 4
        %vm674 = vcmask 801792
        %v675 = vsel %vm674, %v672, %v673
        %v677 = vadd.f32 %v636, %v675
        %s678 = sld [smem:[#allocation7 + $0xb1]]
        %v679 = vstv %s678
        %v680 = vmul.f32 %v679, %v240
        %682 = vrot.lane.b32.xlu0 %v680, 98
        %v683 = vpop.permute.xlu0 %682
        %v684 = vrot.slane %v683, 4
        %v685 = vsel %vm674, %v683, %v684
        %v687 = vadd.f32 %v646, %v685
        %s688 = sld [smem:[#allocation7 + $0xb2]]
        %v689 = vstv %s688
        %v690 = vmul.f32 %v689, %v240
        %692 = vrot.lane.b32.xlu0 %v690, 98
        %v693 = vpop.permute.xlu0 %692
        %v694 = vrot.slane %v693, 4
        %v695 = vsel %vm674, %v693, %v694
        %v697 = vadd.f32 %v656, %v695
        %s698 = sld [smem:[#allocation7 + $0xb3]]
        %v699 = vstv %s698
        %v700 = vmul.f32 %v699, %v240
        %702 = vrot.lane.b32.xlu0 %v700, 98
        %v703 = vpop.permute.xlu0 %702
        %v704 = vrot.slane %v703, 4
        %v705 = vsel %vm674, %v703, %v704
        %v707 = vadd.f32 %v666, %v705
        %s708 = sld [smem:[#allocation7 + $0xc0]]
        %v709 = vstv %s708
        %v710 = vmul.f32 %v709, %v240
        %712 = vrot.lane.b32.xlu0 %v710, 92
        %v713 = vpop.permute.xlu0 %712
        %v714 = vrot.slane %v713, 4
        %vm715 = vcmask 752640
        %v716 = vsel %vm715, %v713, %v714
        %v718 = vadd.f32 %v677, %v716
        %s719 = sld [smem:[#allocation7 + $0xc1]]
        %v720 = vstv %s719
        %v721 = vmul.f32 %v720, %v240
        %723 = vrot.lane.b32.xlu0 %v721, 92
        %v724 = vpop.permute.xlu0 %723
        %v725 = vrot.slane %v724, 4
        %v726 = vsel %vm715, %v724, %v725
        %v728 = vadd.f32 %v687, %v726
        %s729 = sld [smem:[#allocation7 + $0xc2]]
        %v730 = vstv %s729
        %v731 = vmul.f32 %v730, %v240
        %733 = vrot.lane.b32.xlu0 %v731, 92
        %v734 = vpop.permute.xlu0 %733
        %v735 = vrot.slane %v734, 4
        %v736 = vsel %vm715, %v734, %v735
        %v738 = vadd.f32 %v697, %v736
        %s739 = sld [smem:[#allocation7 + $0xc3]]
        %v740 = vstv %s739
        %v741 = vmul.f32 %v740, %v240
        %743 = vrot.lane.b32.xlu0 %v741, 92
        %v744 = vpop.permute.xlu0 %743
        %v745 = vrot.slane %v744, 4
        %v746 = vsel %vm715, %v744, %v745
        %v748 = vadd.f32 %v707, %v746
        %s749 = sld [smem:[#allocation7 + $0xd0]]
        %v750 = vstv %s749
        %v751 = vmul.f32 %v750, %v421
        %753 = vrot.lane.b32.xlu0 %v751, 2
        %v754 = vpop.permute.xlu0 %753
        %v755 = vrot.slane %v754, 4
        %vm756 = vcmask 15360
        %v757 = vsel %vm756, %v755, %v754
        %v759 = vadd.f32 %v718, %v757
        %s760 = sld [smem:[#allocation7 + $0xd1]]
        %v761 = vstv %s760
        %v762 = vmul.f32 %v761, %v421
        %764 = vrot.lane.b32.xlu0 %v762, 2
        %v765 = vpop.permute.xlu0 %764
        %v766 = vrot.slane %v765, 4
        %v767 = vsel %vm756, %v766, %v765
        %v769 = vadd.f32 %v728, %v767
        %s770 = sld [smem:[#allocation7 + $0xd2]]
        %v771 = vstv %s770
        %v772 = vmul.f32 %v771, %v421
        %774 = vrot.lane.b32.xlu0 %v772, 2
        %v775 = vpop.permute.xlu0 %774
        %v776 = vrot.slane %v775, 4
        %v777 = vsel %vm756, %v776, %v775
        %v779 = vadd.f32 %v738, %v777
        %s780 = sld [smem:[#allocation7 + $0xd3]]
        %v781 = vstv %s780
        %v782 = vmul.f32 %v781, %v421
        %784 = vrot.lane.b32.xlu0 %v782, 2
        %v785 = vpop.permute.xlu0 %784
        %v786 = vrot.slane %v785, 4
        %v787 = vsel %vm756, %v786, %v785
        %v789 = vadd.f32 %v748, %v787
        %s790 = sld [smem:[#allocation7 + $0xe0]]
        %v791 = vstv %s790
        %v792 = vmul.f32 %v791, %v421
        %794 = vrot.lane.b32.xlu0 %v792, 127
        %v795 = vpop.permute.xlu0 %794
        %v796 = vrot.slane %v795, 4
        %v797 = vsel %vm264, %v795, %v796
        %v799 = vadd.f32 %v759, %v797
        %s800 = sld [smem:[#allocation7 + $0xe1]]
        %v801 = vstv %s800
        %v802 = vmul.f32 %v801, %v421
        %804 = vrot.lane.b32.xlu0 %v802, 127
        %v805 = vpop.permute.xlu0 %804
        %v806 = vrot.slane %v805, 4
        %v807 = vsel %vm264, %v805, %v806
        %v809 = vadd.f32 %v769, %v807
        %s810 = sld [smem:[#allocation7 + $0xe2]]
        %v811 = vstv %s810
        %v812 = vmul.f32 %v811, %v421
        %814 = vrot.lane.b32.xlu0 %v812, 127
        %v815 = vpop.permute.xlu0 %814
        %v816 = vrot.slane %v815, 4
        %v817 = vsel %vm264, %v815, %v816
        %v819 = vadd.f32 %v779, %v817
        %s820 = sld [smem:[#allocation7 + $0xe3]]
        %v821 = vstv %s820
        %v822 = vmul.f32 %v821, %v421
        %824 = vrot.lane.b32.xlu0 %v822, 127
        %v825 = vpop.permute.xlu0 %824
        %v826 = vrot.slane %v825, 4
        %v827 = vsel %vm264, %v825, %v826
        %v829 = vadd.f32 %v789, %v827
        %s830 = sld [smem:[#allocation7 + $0xf0]]
        %v831 = vstv %s830
        %v832 = vmul.f32 %v831, %v421
        %834 = vrot.lane.b32.xlu0 %v832, 124
        %v835 = vpop.permute.xlu0 %834
        %v836 = vrot.slane %v835, 4
        %vm837 = vcmask 1014784
        %v838 = vsel %vm837, %v835, %v836
        %v840 = vadd.f32 %v799, %v838
        %s841 = sld [smem:[#allocation7 + $0xf1]]
        %v842 = vstv %s841
        %v843 = vmul.f32 %v842, %v421
        %845 = vrot.lane.b32.xlu0 %v843, 124
        %v846 = vpop.permute.xlu0 %845
        %v847 = vrot.slane %v846, 4
        %v848 = vsel %vm837, %v846, %v847
        %v850 = vadd.f32 %v809, %v848
        %s851 = sld [smem:[#allocation7 + $0xf2]]
        %v852 = vstv %s851
        %v853 = vmul.f32 %v852, %v421
        %855 = vrot.lane.b32.xlu0 %v853, 124
        %v856 = vpop.permute.xlu0 %855
        %v857 = vrot.slane %v856, 4
        %v858 = vsel %vm837, %v856, %v857
        %v860 = vadd.f32 %v819, %v858
        %s861 = sld [smem:[#allocation7 + $0xf3]]
        %v862 = vstv %s861
        %v863 = vmul.f32 %v862, %v421
        %865 = vrot.lane.b32.xlu0 %v863, 124
        %v866 = vpop.permute.xlu0 %865
        %v867 = vrot.slane %v866, 4
        %v868 = vsel %vm837, %v866, %v867
        %v870 = vadd.f32 %v829, %v868
        %v871 = vld [vmem:[%s200] sm:$0xff]
        %s872 = sld [smem:[#allocation7 + $0x100]]
        %v873 = vstv %s872
        %v874 = vmul.f32 %v873, %v871
        %876 = vrot.lane.b32.xlu0 %v874, 4
        %v877 = vpop.permute.xlu0 %876
        %v878 = vrot.slane %v877, 4
        %vm879 = vcmask 31744
        %v880 = vsel %vm879, %v878, %v877
        %v882 = vadd.f32 %v840, %v880
        %s883 = sld [smem:[#allocation7 + $0x101]]
        %v884 = vstv %s883
        %v885 = vmul.f32 %v884, %v871
        %887 = vrot.lane.b32.xlu0 %v885, 4
        %v888 = vpop.permute.xlu0 %887
        %v889 = vrot.slane %v888, 4
        %v890 = vsel %vm879, %v889, %v888
        %v892 = vadd.f32 %v850, %v890
        %s893 = sld [smem:[#allocation7 + $0x102]]
        %v894 = vstv %s893
        %v895 = vmul.f32 %v894, %v871
        %897 = vrot.lane.b32.xlu0 %v895, 4
        %v898 = vpop.permute.xlu0 %897
        %v899 = vrot.slane %v898, 4
        %v900 = vsel %vm879, %v899, %v898
        %v902 = vadd.f32 %v860, %v900
        %s903 = sld [smem:[#allocation7 + $0x103]]
        %v904 = vstv %s903
        %v905 = vmul.f32 %v904, %v871
        %907 = vrot.lane.b32.xlu0 %v905, 4
        %v908 = vpop.permute.xlu0 %907
        %v909 = vrot.slane %v908, 4
        %v910 = vsel %vm879, %v909, %v908
        %v912 = vadd.f32 %v870, %v910
        %s913 = sld [smem:[#allocation7 + $0x110]]
        %v914 = vstv %s913
        %v915 = vmul.f32 %v914, %v871
        %917 = vrot.lane.b32.xlu0 %v915, 127
        %v918 = vpop.permute.xlu0 %917
        %v919 = vrot.slane %v918, 4
        %v920 = vsel %vm264, %v918, %v919
        %v922 = vadd.f32 %v882, %v920
        %s923 = sld [smem:[#allocation7 + $0x111]]
        %v924 = vstv %s923
        %v925 = vmul.f32 %v924, %v871
        %927 = vrot.lane.b32.xlu0 %v925, 127
        %v928 = vpop.permute.xlu0 %927
        %v929 = vrot.slane %v928, 4
        %v930 = vsel %vm264, %v928, %v929
        %v932 = vadd.f32 %v892, %v930
        %s933 = sld [smem:[#allocation7 + $0x112]]
        %v934 = vstv %s933
        %v935 = vmul.f32 %v934, %v871
        %937 = vrot.lane.b32.xlu0 %v935, 127
        %v938 = vpop.permute.xlu0 %937
        %v939 = vrot.slane %v938, 4
        %v940 = vsel %vm264, %v938, %v939
        %v942 = vadd.f32 %v902, %v940
        %s943 = sld [smem:[#allocation7 + $0x113]]
        %v944 = vstv %s943
        %v945 = vmul.f32 %v944, %v871
        %947 = vrot.lane.b32.xlu0 %v945, 127
        %v948 = vpop.permute.xlu0 %947
        %v949 = vrot.slane %v948, 4
        %v950 = vsel %vm264, %v948, %v949
        %v952 = vadd.f32 %v912, %v950
        %s953 = sld [smem:[#allocation7 + $0x120]]
        %v954 = vstv %s953
        %v955 = vmul.f32 %v954, %v871
        %957 = vrot.lane.b32.xlu0 %v955, 122
        %v958 = vpop.permute.xlu0 %957
        %v959 = vrot.slane %v958, 4
        %vm960 = vcmask 998400
        %v961 = vsel %vm960, %v958, %v959
        %v963 = vadd.f32 %v922, %v961
        %s964 = sld [smem:[#allocation7 + $0x121]]
        %v965 = vstv %s964
        %v966 = vmul.f32 %v965, %v871
        %968 = vrot.lane.b32.xlu0 %v966, 122
        %v969 = vpop.permute.xlu0 %968
        %v970 = vrot.slane %v969, 4
        %v971 = vsel %vm960, %v969, %v970
        %v973 = vadd.f32 %v932, %v971
        %s974 = sld [smem:[#allocation7 + $0x122]]
        %v975 = vstv %s974
        %v976 = vmul.f32 %v975, %v871
        %978 = vrot.lane.b32.xlu0 %v976, 122
        %v979 = vpop.permute.xlu0 %978
        %v980 = vrot.slane %v979, 4
        %v981 = vsel %vm960, %v979, %v980
        %v983 = vadd.f32 %v942, %v981
        %s984 = sld [smem:[#allocation7 + $0x123]]
        %v985 = vstv %s984
        %v986 = vmul.f32 %v985, %v871
        %988 = vrot.lane.b32.xlu0 %v986, 122
        %v989 = vpop.permute.xlu0 %988
        %v990 = vrot.slane %v989, 4
        %v991 = vsel %vm960, %v989, %v990
        %v993 = vadd.f32 %v952, %v991
        %s994 = sld [smem:[#allocation7 + $0x130]]
        %v995 = vstv %s994
        %v996 = vmul.f32 %v995, %v240
        %998 = vrot.lane.b32.xlu0 %v996, 100
        %v999 = vpop.permute.xlu0 %998
        %v1000 = vrot.slane %v999, 4
        %vm1001 = vcmask 818176
        %v1002 = vsel %vm1001, %v999, %v1000
        %v1004 = vadd.f32 %v963, %v1002
        %s1005 = sld [smem:[#allocation7 + $0x131]]
        %v1006 = vstv %s1005
        %v1007 = vmul.f32 %v1006, %v240
        %1009 = vrot.lane.b32.xlu0 %v1007, 100
        %v1010 = vpop.permute.xlu0 %1009
        %v1011 = vrot.slane %v1010, 4
        %v1012 = vsel %vm1001, %v1010, %v1011
        %v1014 = vadd.f32 %v973, %v1012
        %s1015 = sld [smem:[#allocation7 + $0x132]]
        %v1016 = vstv %s1015
        %v1017 = vmul.f32 %v1016, %v240
        %1019 = vrot.lane.b32.xlu0 %v1017, 100
        %v1020 = vpop.permute.xlu0 %1019
        %v1021 = vrot.slane %v1020, 4
        %v1022 = vsel %vm1001, %v1020, %v1021
        %v1024 = vadd.f32 %v983, %v1022
        %s1025 = sld [smem:[#allocation7 + $0x133]]
        %v1026 = vstv %s1025
        %v1027 = vmul.f32 %v1026, %v240
        %1029 = vrot.lane.b32.xlu0 %v1027, 100
        %v1030 = vpop.permute.xlu0 %1029
        %v1031 = vrot.slane %v1030, 4
        %v1032 = vsel %vm1001, %v1030, %v1031
        %v1034 = vadd.f32 %v993, %v1032
        %s1035 = sld [smem:[#allocation7 + $0x140]]
        %v1036 = vstv %s1035
        %v1037 = vmul.f32 %v1036, %v240
        %1039 = vrot.lane.b32.xlu0 %v1037, 90
        %v1040 = vpop.permute.xlu0 %1039
        %v1041 = vrot.slane %v1040, 4
        %vm1042 = vcmask 736256
        %v1043 = vsel %vm1042, %v1040, %v1041
        %v1045 = vadd.f32 %v1004, %v1043
        %s1046 = sld [smem:[#allocation7 + $0x141]]
        %v1047 = vstv %s1046
        %v1048 = vmul.f32 %v1047, %v240
        %1050 = vrot.lane.b32.xlu0 %v1048, 90
        %v1051 = vpop.permute.xlu0 %1050
        %v1052 = vrot.slane %v1051, 4
        %v1053 = vsel %vm1042, %v1051, %v1052
        %v1055 = vadd.f32 %v1014, %v1053
        %s1056 = sld [smem:[#allocation7 + $0x142]]
        %v1057 = vstv %s1056
        %v1058 = vmul.f32 %v1057, %v240
        %1060 = vrot.lane.b32.xlu0 %v1058, 90
        %v1061 = vpop.permute.xlu0 %1060
        %v1062 = vrot.slane %v1061, 4
        %v1063 = vsel %vm1042, %v1061, %v1062
        %v1065 = vadd.f32 %v1024, %v1063
        %s1066 = sld [smem:[#allocation7 + $0x143]]
        %v1067 = vstv %s1066
        %v1068 = vmul.f32 %v1067, %v240
        %1070 = vrot.lane.b32.xlu0 %v1068, 90
        %v1071 = vpop.permute.xlu0 %1070
        %v1072 = vrot.slane %v1071, 4
        %v1073 = vsel %vm1042, %v1071, %v1072
        %v1075 = vadd.f32 %v1034, %v1073
        %v1076 = vld [vmem:[%s200 + $0xc] sm:$0xff]
        %s1077 = sld [smem:[#allocation7 + $0x150]]
        %v1078 = vstv %s1077
        %v1079 = vmul.f32 %v1078, %v1076
        %1081 = vrot.lane.b32.xlu0 %v1079, 68
        %v1082 = vpop.permute.xlu0 %1081
        %v1083 = vrot.slane %v1082, 4
        %vm1084 = vcmask 556032
        %v1085 = vsel %vm1084, %v1083, %v1082
        %v1087 = vadd.f32 %v1045, %v1085
        %s1088 = sld [smem:[#allocation7 + $0x151]]
        %v1089 = vstv %s1088
        %v1090 = vmul.f32 %v1089, %v1076
        %1092 = vrot.lane.b32.xlu0 %v1090, 68
        %v1093 = vpop.permute.xlu0 %1092
        %v1094 = vrot.slane %v1093, 4
        %v1095 = vsel %vm1084, %v1094, %v1093
        %v1097 = vadd.f32 %v1055, %v1095
        %s1098 = sld [smem:[#allocation7 + $0x152]]
        %v1099 = vstv %s1098
        %v1100 = vmul.f32 %v1099, %v1076
        %1102 = vrot.lane.b32.xlu0 %v1100, 68
        %v1103 = vpop.permute.xlu0 %1102
        %v1104 = vrot.slane %v1103, 4
        %v1105 = vsel %vm1084, %v1104, %v1103
        %v1107 = vadd.f32 %v1065, %v1105
        %s1108 = sld [smem:[#allocation7 + $0x153]]
        %v1109 = vstv %s1108
        %v1110 = vmul.f32 %v1109, %v1076
        %1112 = vrot.lane.b32.xlu0 %v1110, 68
        %v1113 = vpop.permute.xlu0 %1112
        %v1114 = vrot.slane %v1113, 4
        %v1115 = vsel %vm1084, %v1114, %v1113
        %v1117 = vadd.f32 %v1075, %v1115
        %s1118 = sld [smem:[#allocation7 + $0x160]]
        %v1119 = vstv %s1118
        %v1120 = vmul.f32 %v1119, %v1076
        %1122 = vrot.lane.b32.xlu0 %v1120, 63
        %v1123 = vpop.permute.xlu0 %1122
        %v1124 = vrot.slane %v1123, 4
        %v1125 = vsel %vm470, %v1124, %v1123
        %v1127 = vadd.f32 %v1087, %v1125
        %s1128 = sld [smem:[#allocation7 + $0x161]]
        %v1129 = vstv %s1128
        %v1130 = vmul.f32 %v1129, %v1076
        %1132 = vrot.lane.b32.xlu0 %v1130, 63
        %v1133 = vpop.permute.xlu0 %1132
        %v1134 = vrot.slane %v1133, 4
        %v1135 = vsel %vm470, %v1134, %v1133
        %v1137 = vadd.f32 %v1097, %v1135
        %s1138 = sld [smem:[#allocation7 + $0x162]]
        %v1139 = vstv %s1138
        %v1140 = vmul.f32 %v1139, %v1076
        %1142 = vrot.lane.b32.xlu0 %v1140, 63
        %v1143 = vpop.permute.xlu0 %1142
        %v1144 = vrot.slane %v1143, 4
        %v1145 = vsel %vm470, %v1144, %v1143
        %v1147 = vadd.f32 %v1107, %v1145
        %s1148 = sld [smem:[#allocation7 + $0x163]]
        %v1149 = vstv %s1148
        %v1150 = vmul.f32 %v1149, %v1076
        %1152 = vrot.lane.b32.xlu0 %v1150, 63
        %v1153 = vpop.permute.xlu0 %1152
        %v1154 = vrot.slane %v1153, 4
        %v1155 = vsel %vm470, %v1154, %v1153
        %v1157 = vadd.f32 %v1117, %v1155
        %s1158 = sld [smem:[#allocation7 + $0x170]]
        %v1159 = vstv %s1158
        %v1160 = vmul.f32 %v1159, %v1076
        %1162 = vrot.lane.b32.xlu0 %v1160, 58
        %v1163 = vpop.permute.xlu0 %1162
        %v1164 = vrot.slane %v1163, 4
        %vm1165 = vcmask 474112
        %v1166 = vsel %vm1165, %v1164, %v1163
        %v1168 = vadd.f32 %v1127, %v1166
        %s1169 = sld [smem:[#allocation7 + $0x171]]
        %v1170 = vstv %s1169
        %v1171 = vmul.f32 %v1170, %v1076
        %1173 = vrot.lane.b32.xlu0 %v1171, 58
        %v1174 = vpop.permute.xlu0 %1173
        %v1175 = vrot.slane %v1174, 4
        %v1176 = vsel %vm1165, %v1175, %v1174
        %v1178 = vadd.f32 %v1137, %v1176
        %s1179 = sld [smem:[#allocation7 + $0x172]]
        %v1180 = vstv %s1179
        %v1181 = vmul.f32 %v1180, %v1076
        %1183 = vrot.lane.b32.xlu0 %v1181, 58
        %v1184 = vpop.permute.xlu0 %1183
        %v1185 = vrot.slane %v1184, 4
        %v1186 = vsel %vm1165, %v1185, %v1184
        %v1188 = vadd.f32 %v1147, %v1186
        %s1189 = sld [smem:[#allocation7 + $0x173]]
        %v1190 = vstv %s1189
        %v1191 = vmul.f32 %v1190, %v1076
        %1193 = vrot.lane.b32.xlu0 %v1191, 58
        %v1194 = vpop.permute.xlu0 %1193
        %v1195 = vrot.slane %v1194, 4
        %v1196 = vsel %vm1165, %v1195, %v1194
        %v1198 = vadd.f32 %v1157, %v1196
        %v1199 = vld [vmem:[%s200] sm:$0xf]
        %s1200 = sld [smem:[#allocation7 + $0x180]]
        %v1201 = vstv %s1200
        %v1202 = vmul.f32 %v1201, %v1199
        %1204 = vrot.lane.b32.xlu0 %v1202, 70
        %v1205 = vpop.permute.xlu0 %1204
        %v1206 = vrot.slane %v1205, 4
        %vm1207 = vcmask 572416
        %v1208 = vsel %vm1207, %v1206, %v1205
        %v1210 = vadd.f32 %v1168, %v1208
        %s1211 = sld [smem:[#allocation7 + $0x181]]
        %v1212 = vstv %s1211
        %v1213 = vmul.f32 %v1212, %v1199
        %1215 = vrot.lane.b32.xlu0 %v1213, 70
        %v1216 = vpop.permute.xlu0 %1215
        %v1217 = vrot.slane %v1216, 4
        %v1218 = vsel %vm1207, %v1217, %v1216
        %v1220 = vadd.f32 %v1178, %v1218
        %s1221 = sld [smem:[#allocation7 + $0x182]]
        %v1222 = vstv %s1221
        %v1223 = vmul.f32 %v1222, %v1199
        %1225 = vrot.lane.b32.xlu0 %v1223, 70
        %v1226 = vpop.permute.xlu0 %1225
        %v1227 = vrot.slane %v1226, 4
        %v1228 = vsel %vm1207, %v1227, %v1226
        %v1230 = vadd.f32 %v1188, %v1228
        %s1231 = sld [smem:[#allocation7 + $0x183]]
        %v1232 = vstv %s1231
        %v1233 = vmul.f32 %v1232, %v1199
        %1235 = vrot.lane.b32.xlu0 %v1233, 70
        %v1236 = vpop.permute.xlu0 %1235
        %v1237 = vrot.slane %v1236, 4
        %v1238 = vsel %vm1207, %v1237, %v1236
        %v1240 = vadd.f32 %v1198, %v1238
        %s1241 = sld [smem:[#allocation7 + $0x190]]
        %v1242 = vstv %s1241
        %v1243 = vmul.f32 %v1242, %v871
        %1245 = vrot.lane.b32.xlu0 %v1243, 63
        %v1246 = vpop.permute.xlu0 %1245
        %v1247 = vrot.slane %v1246, 4
        %v1248 = vsel %vm470, %v1247, %v1246
        %v1250 = vadd.f32 %v1210, %v1248
        %s1251 = sld [smem:[#allocation7 + $0x191]]
        %v1252 = vstv %s1251
        %v1253 = vmul.f32 %v1252, %v871
        %1255 = vrot.lane.b32.xlu0 %v1253, 63
        %v1256 = vpop.permute.xlu0 %1255
        %v1257 = vrot.slane %v1256, 4
        %v1258 = vsel %vm470, %v1257, %v1256
        %v1260 = vadd.f32 %v1220, %v1258
        %s1261 = sld [smem:[#allocation7 + $0x192]]
        %v1262 = vstv %s1261
        %v1263 = vmul.f32 %v1262, %v871
        %1265 = vrot.lane.b32.xlu0 %v1263, 63
        %v1266 = vpop.permute.xlu0 %1265
        %v1267 = vrot.slane %v1266, 4
        %v1268 = vsel %vm470, %v1267, %v1266
        %v1270 = vadd.f32 %v1230, %v1268
        %s1271 = sld [smem:[#allocation7 + $0x193]]
        %v1272 = vstv %s1271
        %v1273 = vmul.f32 %v1272, %v871
        %1275 = vrot.lane.b32.xlu0 %v1273, 63
        %v1276 = vpop.permute.xlu0 %1275
        %v1277 = vrot.slane %v1276, 4
        %v1278 = vsel %vm470, %v1277, %v1276
        %v1280 = vadd.f32 %v1240, %v1278
        %s1281 = sld [smem:[#allocation7 + $0x1a0]]
        %v1282 = vstv %s1281
        %v1283 = vmul.f32 %v1282, %v871
        %1285 = vrot.lane.b32.xlu0 %v1283, 56
        %v1286 = vpop.permute.xlu0 %1285
        %v1287 = vrot.slane %v1286, 4
        %vm1288 = vcmask 457728
        %v1289 = vsel %vm1288, %v1287, %v1286
        %v1291 = vadd.f32 %v1250, %v1289
        %s1292 = sld [smem:[#allocation7 + $0x1a1]]
        %v1293 = vstv %s1292
        %v1294 = vmul.f32 %v1293, %v871
        %1296 = vrot.lane.b32.xlu0 %v1294, 56
        %v1297 = vpop.permute.xlu0 %1296
        %v1298 = vrot.slane %v1297, 4
        %v1299 = vsel %vm1288, %v1298, %v1297
        %v1301 = vadd.f32 %v1260, %v1299
        %s1302 = sld [smem:[#allocation7 + $0x1a2]]
        %v1303 = vstv %s1302
        %v1304 = vmul.f32 %v1303, %v871
        %1306 = vrot.lane.b32.xlu0 %v1304, 56
        %v1307 = vpop.permute.xlu0 %1306
        %v1308 = vrot.slane %v1307, 4
        %v1309 = vsel %vm1288, %v1308, %v1307
        %v1311 = vadd.f32 %v1270, %v1309
        %s1312 = sld [smem:[#allocation7 + $0x1a3]]
        %v1313 = vstv %s1312
        %v1314 = vmul.f32 %v1313, %v871
        %1316 = vrot.lane.b32.xlu0 %v1314, 56
        %v1317 = vpop.permute.xlu0 %1316
        %v1318 = vrot.slane %v1317, 4
        %v1319 = vsel %vm1288, %v1318, %v1317
        %v1321 = vadd.f32 %v1280, %v1319
        %s1322 = sld [smem:[#allocation7 + $0x1b0]]
        %v1323 = vstv %s1322
        %v1324 = vmul.f32 %v1323, %v240
        %1326 = vrot.lane.b32.xlu0 %v1324, 102
        %v1327 = vpop.permute.xlu0 %1326
        %v1328 = vrot.slane %v1327, 4
        %vm1329 = vcmask 834560
        %v1330 = vsel %vm1329, %v1327, %v1328
        %v1332 = vadd.f32 %v1291, %v1330
        %s1333 = sld [smem:[#allocation7 + $0x1b1]]
        %v1334 = vstv %s1333
        %v1335 = vmul.f32 %v1334, %v240
        %1337 = vrot.lane.b32.xlu0 %v1335, 102
        %v1338 = vpop.permute.xlu0 %1337
        %v1339 = vrot.slane %v1338, 4
        %v1340 = vsel %vm1329, %v1338, %v1339
        %v1342 = vadd.f32 %v1301, %v1340
        %s1343 = sld [smem:[#allocation7 + $0x1b2]]
        %v1344 = vstv %s1343
        %v1345 = vmul.f32 %v1344, %v240
        %1347 = vrot.lane.b32.xlu0 %v1345, 102
        %v1348 = vpop.permute.xlu0 %1347
        %v1349 = vrot.slane %v1348, 4
        %v1350 = vsel %vm1329, %v1348, %v1349
        %v1352 = vadd.f32 %v1311, %v1350
        %s1353 = sld [smem:[#allocation7 + $0x1b3]]
        %v1354 = vstv %s1353
        %v1355 = vmul.f32 %v1354, %v240
        %1357 = vrot.lane.b32.xlu0 %v1355, 102
        %v1358 = vpop.permute.xlu0 %1357
        %v1359 = vrot.slane %v1358, 4
        %v1360 = vsel %vm1329, %v1358, %v1359
        %v1362 = vadd.f32 %v1321, %v1360
        %s1363 = sld [smem:[#allocation7 + $0x1c0]]
        %v1364 = vstv %s1363
        %v1365 = vmul.f32 %v1364, %v240
        %1367 = vrot.lane.b32.xlu0 %v1365, 88
        %v1368 = vpop.permute.xlu0 %1367
        %v1369 = vrot.slane %v1368, 4
        %vm1370 = vcmask 719872
        %v1371 = vsel %vm1370, %v1368, %v1369
        %v1373 = vadd.f32 %v1332, %v1371
        %s1374 = sld [smem:[#allocation7 + $0x1c1]]
        %v1375 = vstv %s1374
        %v1376 = vmul.f32 %v1375, %v240
        %1378 = vrot.lane.b32.xlu0 %v1376, 88
        %v1379 = vpop.permute.xlu0 %1378
        %v1380 = vrot.slane %v1379, 4
        %v1381 = vsel %vm1370, %v1379, %v1380
        %v1383 = vadd.f32 %v1342, %v1381
        %s1384 = sld [smem:[#allocation7 + $0x1c2]]
        %v1385 = vstv %s1384
        %v1386 = vmul.f32 %v1385, %v240
        %1388 = vrot.lane.b32.xlu0 %v1386, 88
        %v1389 = vpop.permute.xlu0 %1388
        %v1390 = vrot.slane %v1389, 4
        %v1391 = vsel %vm1370, %v1389, %v1390
        %v1393 = vadd.f32 %v1352, %v1391
        %s1394 = sld [smem:[#allocation7 + $0x1c3]]
        %v1395 = vstv %s1394
        %v1396 = vmul.f32 %v1395, %v240
        %1398 = vrot.lane.b32.xlu0 %v1396, 88
        %v1399 = vpop.permute.xlu0 %1398
        %v1400 = vrot.slane %v1399, 4
        %v1401 = vsel %vm1370, %v1399, %v1400
        %v1403 = vadd.f32 %v1362, %v1401
        %s1404 = sld [smem:[#allocation7 + $0x1d0]]
        %v1405 = vstv %s1404
        %v1406 = vmul.f32 %v1405, %v1076
        %1408 = vrot.lane.b32.xlu0 %v1406, 6
        %v1409 = vpop.permute.xlu0 %1408
        %v1410 = vrot.slane %v1409, 4
        %vm1411 = vcmask 48128
        %v1412 = vsel %vm1411, %v1410, %v1409
        %v1414 = vadd.f32 %v1373, %v1412
        %s1415 = sld [smem:[#allocation7 + $0x1d1]]
        %v1416 = vstv %s1415
        %v1417 = vmul.f32 %v1416, %v1076
        %1419 = vrot.lane.b32.xlu0 %v1417, 6
        %v1420 = vpop.permute.xlu0 %1419
        %v1421 = vrot.slane %v1420, 4
        %v1422 = vsel %vm1411, %v1421, %v1420
        %v1424 = vadd.f32 %v1383, %v1422
        %s1425 = sld [smem:[#allocation7 + $0x1d2]]
        %v1426 = vstv %s1425
        %v1427 = vmul.f32 %v1426, %v1076
        %1429 = vrot.lane.b32.xlu0 %v1427, 6
        %v1430 = vpop.permute.xlu0 %1429
        %v1431 = vrot.slane %v1430, 4
        %v1432 = vsel %vm1411, %v1431, %v1430
        %v1434 = vadd.f32 %v1393, %v1432
        %s1435 = sld [smem:[#allocation7 + $0x1d3]]
        %v1436 = vstv %s1435
        %v1437 = vmul.f32 %v1436, %v1076
        %1439 = vrot.lane.b32.xlu0 %v1437, 6
        %v1440 = vpop.permute.xlu0 %1439
        %v1441 = vrot.slane %v1440, 4
        %v1442 = vsel %vm1411, %v1441, %v1440
        %v1444 = vadd.f32 %v1403, %v1442
        %s1445 = sld [smem:[#allocation7 + $0x1e0]]
        %v1446 = vstv %s1445
        %v1447 = vmul.f32 %v1446, %v1076
        %1449 = vrot.lane.b32.xlu0 %v1447, 127
        %v1450 = vpop.permute.xlu0 %1449
        %v1451 = vrot.slane %v1450, 4
        %v1452 = vsel %vm264, %v1450, %v1451
        %v1454 = vadd.f32 %v1414, %v1452
        %s1455 = sld [smem:[#allocation7 + $0x1e1]]
        %v1456 = vstv %s1455
        %v1457 = vmul.f32 %v1456, %v1076
        %1459 = vrot.lane.b32.xlu0 %v1457, 127
        %v1460 = vpop.permute.xlu0 %1459
        %v1461 = vrot.slane %v1460, 4
        %v1462 = vsel %vm264, %v1460, %v1461
        %v1464 = vadd.f32 %v1424, %v1462
        %s1465 = sld [smem:[#allocation7 + $0x1e2]]
        %v1466 = vstv %s1465
        %v1467 = vmul.f32 %v1466, %v1076
        %1469 = vrot.lane.b32.xlu0 %v1467, 127
        %v1470 = vpop.permute.xlu0 %1469
        %v1471 = vrot.slane %v1470, 4
        %v1472 = vsel %vm264, %v1470, %v1471
        %v1474 = vadd.f32 %v1434, %v1472
        %s1475 = sld [smem:[#allocation7 + $0x1e3]]
        %v1476 = vstv %s1475
        %v1477 = vmul.f32 %v1476, %v1076
        %1479 = vrot.lane.b32.xlu0 %v1477, 127
        %v1480 = vpop.permute.xlu0 %1479
        %v1481 = vrot.slane %v1480, 4
        %v1482 = vsel %vm264, %v1480, %v1481
        %v1484 = vadd.f32 %v1444, %v1482
        %s1485 = sld [smem:[#allocation7 + $0x1f0]]
        %v1486 = vstv %s1485
        %v1487 = vmul.f32 %v1486, %v1076
        %1489 = vrot.lane.b32.xlu0 %v1487, 120
        %v1490 = vpop.permute.xlu0 %1489
        %v1491 = vrot.slane %v1490, 4
        %vm1492 = vcmask 982016
        %v1493 = vsel %vm1492, %v1490, %v1491
        %v1495 = vadd.f32 %v1454, %v1493
        %s1496 = sld [smem:[#allocation7 + $0x1f1]]
        %v1497 = vstv %s1496
        %v1498 = vmul.f32 %v1497, %v1076
        %1500 = vrot.lane.b32.xlu0 %v1498, 120
        %v1501 = vpop.permute.xlu0 %1500
        %v1502 = vrot.slane %v1501, 4
        %v1503 = vsel %vm1492, %v1501, %v1502
        %v1505 = vadd.f32 %v1464, %v1503
        %s1506 = sld [smem:[#allocation7 + $0x1f2]]
        %v1507 = vstv %s1506
        %v1508 = vmul.f32 %v1507, %v1076
        %1510 = vrot.lane.b32.xlu0 %v1508, 120
        %v1511 = vpop.permute.xlu0 %1510
        %v1512 = vrot.slane %v1511, 4
        %v1513 = vsel %vm1492, %v1511, %v1512
        %v1515 = vadd.f32 %v1474, %v1513
        %s1516 = sld [smem:[#allocation7 + $0x1f3]]
        %v1517 = vstv %s1516
        %v1518 = vmul.f32 %v1517, %v1076
        %1520 = vrot.lane.b32.xlu0 %v1518, 120
        %v1521 = vpop.permute.xlu0 %1520
        %v1522 = vrot.slane %v1521, 4
        %v1523 = vsel %vm1492, %v1521, %v1522
        %v1525 = vadd.f32 %v1484, %v1523
        %s1526 = sld [smem:[#allocation7 + $0x200]]
        %v1527 = vstv %s1526
        %v1528 = vmul.f32 %v1527, %v240
        %1530 = vrot.lane.b32.xlu0 %v1528, 95
        %v1531 = vpop.permute.xlu0 %1530
        %v1532 = vrot.slane %v1531, 4
        %vm1533 = vcmask 777216
        %v1534 = vsel %vm1533, %v1531, %v1532
        %v1536 = vadd.f32 %v1495, %v1534
        %s1537 = sld [smem:[#allocation7 + $0x201]]
        %v1538 = vstv %s1537
        %v1539 = vmul.f32 %v1538, %v240
        %1541 = vrot.lane.b32.xlu0 %v1539, 95
        %v1542 = vpop.permute.xlu0 %1541
        %v1543 = vrot.slane %v1542, 4
        %v1544 = vsel %vm1533, %v1542, %v1543
        %v1546 = vadd.f32 %v1505, %v1544
        %s1547 = sld [smem:[#allocation7 + $0x202]]
        %v1548 = vstv %s1547
        %v1549 = vmul.f32 %v1548, %v240
        %1551 = vrot.lane.b32.xlu0 %v1549, 95
        %v1552 = vpop.permute.xlu0 %1551
        %v1553 = vrot.slane %v1552, 4
        %v1554 = vsel %vm1533, %v1552, %v1553
        %v1556 = vadd.f32 %v1515, %v1554
        %s1557 = sld [smem:[#allocation7 + $0x203]]
        %v1558 = vstv %s1557
        %v1559 = vmul.f32 %v1558, %v240
        %1561 = vrot.lane.b32.xlu0 %v1559, 95
        %v1562 = vpop.permute.xlu0 %1561
        %v1563 = vrot.slane %v1562, 4
        %v1564 = vsel %vm1533, %v1562, %v1563
        %v1566 = vadd.f32 %v1525, %v1564
        %s1567 = scalar_lea.vmem %s200, 20 [#allocation2]
        %v1568 = vld [vmem:[%s1567 + $0x4] sm:$0xff]
        %s1569 = sld [smem:[#allocation7 + $0x4]]
        %v1570 = vstv %s1569
        %v1571 = vmul.f32 %v1570, %v1568
        %v1572 = vadd.f32 %v1536, %v1571
        %s1573 = sld [smem:[#allocation7 + $0x5]]
        %v1574 = vstv %s1573
        %v1575 = vmul.f32 %v1574, %v1568
        %v1576 = vadd.f32 %v1546, %v1575
        %s1577 = sld [smem:[#allocation7 + $0x6]]
        %v1578 = vstv %s1577
        %v1579 = vmul.f32 %v1578, %v1568
        %v1580 = vadd.f32 %v1556, %v1579
        %s1581 = sld [smem:[#allocation7 + $0x7]]
        %v1582 = vstv %s1581
        %v1583 = vmul.f32 %v1582, %v1568
        %v1584 = vadd.f32 %v1566, %v1583
        %s1585 = sld [smem:[#allocation7 + $0x14]]
        %v1586 = vstv %s1585
        %v1587 = vmul.f32 %v1586, %v1568
        %1589 = vrot.lane.b32.xlu0 %v1587, 127
        %v1590 = vpop.permute.xlu0 %1589
        %v1591 = vrot.slane %v1590, 4
        %v1592 = vsel %vm264, %v1590, %v1591
        %v1594 = vadd.f32 %v1572, %v1592
        %s1595 = sld [smem:[#allocation7 + $0x15]]
        %v1596 = vstv %s1595
        %v1597 = vmul.f32 %v1596, %v1568
        %1599 = vrot.lane.b32.xlu0 %v1597, 127
        %v1600 = vpop.permute.xlu0 %1599
        %v1601 = vrot.slane %v1600, 4
        %v1602 = vsel %vm264, %v1600, %v1601
        %v1604 = vadd.f32 %v1576, %v1602
        %s1605 = sld [smem:[#allocation7 + $0x16]]
        %v1606 = vstv %s1605
        %v1607 = vmul.f32 %v1606, %v1568
        %1609 = vrot.lane.b32.xlu0 %v1607, 127
        %v1610 = vpop.permute.xlu0 %1609
        %v1611 = vrot.slane %v1610, 4
        %v1612 = vsel %vm264, %v1610, %v1611
        %v1614 = vadd.f32 %v1580, %v1612
        %s1615 = sld [smem:[#allocation7 + $0x17]]
        %v1616 = vstv %s1615
        %v1617 = vmul.f32 %v1616, %v1568
        %1619 = vrot.lane.b32.xlu0 %v1617, 127
        %v1620 = vpop.permute.xlu0 %1619
        %v1621 = vrot.slane %v1620, 4
        %v1622 = vsel %vm264, %v1620, %v1621
        %v1624 = vadd.f32 %v1584, %v1622
        %s1625 = sld [smem:[#allocation7 + $0x24]]
        %v1626 = vstv %s1625
        %v1627 = vmul.f32 %v1626, %v1568
        %1629 = vrot.lane.b32.xlu0 %v1627, 126
        %v1630 = vpop.permute.xlu0 %1629
        %v1631 = vrot.slane %v1630, 4
        %v1632 = vsel %vm305, %v1630, %v1631
        %v1634 = vadd.f32 %v1594, %v1632
        %s1635 = sld [smem:[#allocation7 + $0x25]]
        %v1636 = vstv %s1635
        %v1637 = vmul.f32 %v1636, %v1568
        %1639 = vrot.lane.b32.xlu0 %v1637, 126
        %v1640 = vpop.permute.xlu0 %1639
        %v1641 = vrot.slane %v1640, 4
        %v1642 = vsel %vm305, %v1640, %v1641
        %v1644 = vadd.f32 %v1604, %v1642
        %s1645 = sld [smem:[#allocation7 + $0x26]]
        %v1646 = vstv %s1645
        %v1647 = vmul.f32 %v1646, %v1568
        %1649 = vrot.lane.b32.xlu0 %v1647, 126
        %v1650 = vpop.permute.xlu0 %1649
        %v1651 = vrot.slane %v1650, 4
        %v1652 = vsel %vm305, %v1650, %v1651
        %v1654 = vadd.f32 %v1614, %v1652
        %s1655 = sld [smem:[#allocation7 + $0x27]]
        %v1656 = vstv %s1655
        %v1657 = vmul.f32 %v1656, %v1568
        %1659 = vrot.lane.b32.xlu0 %v1657, 126
        %v1660 = vpop.permute.xlu0 %1659
        %v1661 = vrot.slane %v1660, 4
        %v1662 = vsel %vm305, %v1660, %v1661
        %v1664 = vadd.f32 %v1624, %v1662
        %s1665 = sld [smem:[#allocation7 + $0x34]]
        %v1666 = vstv %s1665
        %v1667 = vmul.f32 %v1666, %v1568
        %1669 = vrot.lane.b32.xlu0 %v1667, 96
        %v1670 = vpop.permute.xlu0 %1669
        %v1671 = vrot.slane %v1670, 4
        %v1672 = vsel %vm346, %v1670, %v1671
        %v1674 = vadd.f32 %v1634, %v1672
        %s1675 = sld [smem:[#allocation7 + $0x35]]
        %v1676 = vstv %s1675
        %v1677 = vmul.f32 %v1676, %v1568
        %1679 = vrot.lane.b32.xlu0 %v1677, 96
        %v1680 = vpop.permute.xlu0 %1679
        %v1681 = vrot.slane %v1680, 4
        %v1682 = vsel %vm346, %v1680, %v1681
        %v1684 = vadd.f32 %v1644, %v1682
        %s1685 = sld [smem:[#allocation7 + $0x36]]
        %v1686 = vstv %s1685
        %v1687 = vmul.f32 %v1686, %v1568
        %1689 = vrot.lane.b32.xlu0 %v1687, 96
        %v1690 = vpop.permute.xlu0 %1689
        %v1691 = vrot.slane %v1690, 4
        %v1692 = vsel %vm346, %v1690, %v1691
        %v1694 = vadd.f32 %v1654, %v1692
        %s1695 = sld [smem:[#allocation7 + $0x37]]
        %v1696 = vstv %s1695
        %v1697 = vmul.f32 %v1696, %v1568
        %1699 = vrot.lane.b32.xlu0 %v1697, 96
        %v1700 = vpop.permute.xlu0 %1699
        %v1701 = vrot.slane %v1700, 4
        %v1702 = vsel %vm346, %v1700, %v1701
        %v1704 = vadd.f32 %v1664, %v1702
        %s1705 = sld [smem:[#allocation7 + $0x44]]
        %v1706 = vstv %s1705
        %v1707 = vmul.f32 %v1706, %v1568
        %1709 = vrot.lane.b32.xlu0 %v1707, 94
        %v1710 = vpop.permute.xlu0 %1709
        %v1711 = vrot.slane %v1710, 4
        %v1712 = vsel %vm387, %v1710, %v1711
        %v1714 = vadd.f32 %v1674, %v1712
        %s1715 = sld [smem:[#allocation7 + $0x45]]
        %v1716 = vstv %s1715
        %v1717 = vmul.f32 %v1716, %v1568
        %1719 = vrot.lane.b32.xlu0 %v1717, 94
        %v1720 = vpop.permute.xlu0 %1719
        %v1721 = vrot.slane %v1720, 4
        %v1722 = vsel %vm387, %v1720, %v1721
        %v1724 = vadd.f32 %v1684, %v1722
        %s1725 = sld [smem:[#allocation7 + $0x46]]
        %v1726 = vstv %s1725
        %v1727 = vmul.f32 %v1726, %v1568
        %1729 = vrot.lane.b32.xlu0 %v1727, 94
        %v1730 = vpop.permute.xlu0 %1729
        %v1731 = vrot.slane %v1730, 4
        %v1732 = vsel %vm387, %v1730, %v1731
        %v1734 = vadd.f32 %v1694, %v1732
        %s1735 = sld [smem:[#allocation7 + $0x47]]
        %v1736 = vstv %s1735
        %v1737 = vmul.f32 %v1736, %v1568
        %1739 = vrot.lane.b32.xlu0 %v1737, 94
        %v1740 = vpop.permute.xlu0 %1739
        %v1741 = vrot.slane %v1740, 4
        %v1742 = vsel %vm387, %v1740, %v1741
        %v1744 = vadd.f32 %v1704, %v1742
        %v1745 = vld [vmem:[%s1567 + $0x8] sm:$0xff]
        %s1746 = sld [smem:[#allocation7 + $0x54]]
        %v1747 = vstv %s1746
        %v1748 = vmul.f32 %v1747, %v1745
        %1750 = vrot.lane.b32.xlu0 %v1748, 64
        %v1751 = vpop.permute.xlu0 %1750
        %v1752 = vrot.slane %v1751, 4
        %v1753 = vsel %vm429, %v1752, %v1751
        %v1755 = vadd.f32 %v1714, %v1753
        %s1756 = sld [smem:[#allocation7 + $0x55]]
        %v1757 = vstv %s1756
        %v1758 = vmul.f32 %v1757, %v1745
        %1760 = vrot.lane.b32.xlu0 %v1758, 64
        %v1761 = vpop.permute.xlu0 %1760
        %v1762 = vrot.slane %v1761, 4
        %v1763 = vsel %vm429, %v1762, %v1761
        %v1765 = vadd.f32 %v1724, %v1763
        %s1766 = sld [smem:[#allocation7 + $0x56]]
        %v1767 = vstv %s1766
        %v1768 = vmul.f32 %v1767, %v1745
        %1770 = vrot.lane.b32.xlu0 %v1768, 64
        %v1771 = vpop.permute.xlu0 %1770
        %v1772 = vrot.slane %v1771, 4
        %v1773 = vsel %vm429, %v1772, %v1771
        %v1775 = vadd.f32 %v1734, %v1773
        %s1776 = sld [smem:[#allocation7 + $0x57]]
        %v1777 = vstv %s1776
        %v1778 = vmul.f32 %v1777, %v1745
        %1780 = vrot.lane.b32.xlu0 %v1778, 64
        %v1781 = vpop.permute.xlu0 %1780
        %v1782 = vrot.slane %v1781, 4
        %v1783 = vsel %vm429, %v1782, %v1781
        %v1785 = vadd.f32 %v1744, %v1783
        %s1786 = sld [smem:[#allocation7 + $0x64]]
        %v1787 = vstv %s1786
        %v1788 = vmul.f32 %v1787, %v1745
        %1790 = vrot.lane.b32.xlu0 %v1788, 63
        %v1791 = vpop.permute.xlu0 %1790
        %v1792 = vrot.slane %v1791, 4
        %v1793 = vsel %vm470, %v1792, %v1791
        %v1795 = vadd.f32 %v1755, %v1793
        %s1796 = sld [smem:[#allocation7 + $0x65]]
        %v1797 = vstv %s1796
        %v1798 = vmul.f32 %v1797, %v1745
        %1800 = vrot.lane.b32.xlu0 %v1798, 63
        %v1801 = vpop.permute.xlu0 %1800
        %v1802 = vrot.slane %v1801, 4
        %v1803 = vsel %vm470, %v1802, %v1801
        %v1805 = vadd.f32 %v1765, %v1803
        %s1806 = sld [smem:[#allocation7 + $0x66]]
        %v1807 = vstv %s1806
        %v1808 = vmul.f32 %v1807, %v1745
        %1810 = vrot.lane.b32.xlu0 %v1808, 63
        %v1811 = vpop.permute.xlu0 %1810
        %v1812 = vrot.slane %v1811, 4
        %v1813 = vsel %vm470, %v1812, %v1811
        %v1815 = vadd.f32 %v1775, %v1813
        %s1816 = sld [smem:[#allocation7 + $0x67]]
        %v1817 = vstv %s1816
        %v1818 = vmul.f32 %v1817, %v1745
        %1820 = vrot.lane.b32.xlu0 %v1818, 63
        %v1821 = vpop.permute.xlu0 %1820
        %v1822 = vrot.slane %v1821, 4
        %v1823 = vsel %vm470, %v1822, %v1821
        %v1825 = vadd.f32 %v1785, %v1823
        %s1826 = sld [smem:[#allocation7 + $0x74]]
        %v1827 = vstv %s1826
        %v1828 = vmul.f32 %v1827, %v1745
        %1830 = vrot.lane.b32.xlu0 %v1828, 62
        %v1831 = vpop.permute.xlu0 %1830
        %v1832 = vrot.slane %v1831, 4
        %v1833 = vsel %vm511, %v1832, %v1831
        %v1835 = vadd.f32 %v1795, %v1833
        %s1836 = sld [smem:[#allocation7 + $0x75]]
        %v1837 = vstv %s1836
        %v1838 = vmul.f32 %v1837, %v1745
        %1840 = vrot.lane.b32.xlu0 %v1838, 62
        %v1841 = vpop.permute.xlu0 %1840
        %v1842 = vrot.slane %v1841, 4
        %v1843 = vsel %vm511, %v1842, %v1841
        %v1845 = vadd.f32 %v1805, %v1843
        %s1846 = sld [smem:[#allocation7 + $0x76]]
        %v1847 = vstv %s1846
        %v1848 = vmul.f32 %v1847, %v1745
        %1850 = vrot.lane.b32.xlu0 %v1848, 62
        %v1851 = vpop.permute.xlu0 %1850
        %v1852 = vrot.slane %v1851, 4
        %v1853 = vsel %vm511, %v1852, %v1851
        %v1855 = vadd.f32 %v1815, %v1853
        %s1856 = sld [smem:[#allocation7 + $0x77]]
        %v1857 = vstv %s1856
        %v1858 = vmul.f32 %v1857, %v1745
        %1860 = vrot.lane.b32.xlu0 %v1858, 62
        %v1861 = vpop.permute.xlu0 %1860
        %v1862 = vrot.slane %v1861, 4
        %v1863 = vsel %vm511, %v1862, %v1861
        %v1865 = vadd.f32 %v1825, %v1863
        %s1866 = sld [smem:[#allocation7 + $0x84]]
        %v1867 = vstv %s1866
        %v1868 = vmul.f32 %v1867, %v1568
        %1870 = vrot.lane.b32.xlu0 %v1868, 66
        %v1871 = vpop.permute.xlu0 %1870
        %v1872 = vrot.slane %v1871, 4
        %v1873 = vsel %vm552, %v1872, %v1871
        %v1875 = vadd.f32 %v1835, %v1873
        %s1876 = sld [smem:[#allocation7 + $0x85]]
        %v1877 = vstv %s1876
        %v1878 = vmul.f32 %v1877, %v1568
        %1880 = vrot.lane.b32.xlu0 %v1878, 66
        %v1881 = vpop.permute.xlu0 %1880
        %v1882 = vrot.slane %v1881, 4
        %v1883 = vsel %vm552, %v1882, %v1881
        %v1885 = vadd.f32 %v1845, %v1883
        %s1886 = sld [smem:[#allocation7 + $0x86]]
        %v1887 = vstv %s1886
        %v1888 = vmul.f32 %v1887, %v1568
        %1890 = vrot.lane.b32.xlu0 %v1888, 66
        %v1891 = vpop.permute.xlu0 %1890
        %v1892 = vrot.slane %v1891, 4
        %v1893 = vsel %vm552, %v1892, %v1891
        %v1895 = vadd.f32 %v1855, %v1893
        %s1896 = sld [smem:[#allocation7 + $0x87]]
        %v1897 = vstv %s1896
        %v1898 = vmul.f32 %v1897, %v1568
        %1900 = vrot.lane.b32.xlu0 %v1898, 66
        %v1901 = vpop.permute.xlu0 %1900
        %v1902 = vrot.slane %v1901, 4
        %v1903 = vsel %vm552, %v1902, %v1901
        %v1905 = vadd.f32 %v1865, %v1903
        %s1906 = sld [smem:[#allocation7 + $0x94]]
        %v1907 = vstv %s1906
        %v1908 = vmul.f32 %v1907, %v1568
        %1910 = vrot.lane.b32.xlu0 %v1908, 63
        %v1911 = vpop.permute.xlu0 %1910
        %v1912 = vrot.slane %v1911, 4
        %v1913 = vsel %vm470, %v1912, %v1911
        %v1915 = vadd.f32 %v1875, %v1913
        %s1916 = sld [smem:[#allocation7 + $0x95]]
        %v1917 = vstv %s1916
        %v1918 = vmul.f32 %v1917, %v1568
        %1920 = vrot.lane.b32.xlu0 %v1918, 63
        %v1921 = vpop.permute.xlu0 %1920
        %v1922 = vrot.slane %v1921, 4
        %v1923 = vsel %vm470, %v1922, %v1921
        %v1925 = vadd.f32 %v1885, %v1923
        %s1926 = sld [smem:[#allocation7 + $0x96]]
        %v1927 = vstv %s1926
        %v1928 = vmul.f32 %v1927, %v1568
        %1930 = vrot.lane.b32.xlu0 %v1928, 63
        %v1931 = vpop.permute.xlu0 %1930
        %v1932 = vrot.slane %v1931, 4
        %v1933 = vsel %vm470, %v1932, %v1931
        %v1935 = vadd.f32 %v1895, %v1933
        %s1936 = sld [smem:[#allocation7 + $0x97]]
        %v1937 = vstv %s1936
        %v1938 = vmul.f32 %v1937, %v1568
        %1940 = vrot.lane.b32.xlu0 %v1938, 63
        %v1941 = vpop.permute.xlu0 %1940
        %v1942 = vrot.slane %v1941, 4
        %v1943 = vsel %vm470, %v1942, %v1941
        %v1945 = vadd.f32 %v1905, %v1943
        %s1946 = sld [smem:[#allocation7 + $0xa4]]
        %v1947 = vstv %s1946
        %v1948 = vmul.f32 %v1947, %v1568
        %1950 = vrot.lane.b32.xlu0 %v1948, 60
        %v1951 = vpop.permute.xlu0 %1950
        %v1952 = vrot.slane %v1951, 4
        %v1953 = vsel %vm633, %v1952, %v1951
        %v1955 = vadd.f32 %v1915, %v1953
        %s1956 = sld [smem:[#allocation7 + $0xa5]]
        %v1957 = vstv %s1956
        %v1958 = vmul.f32 %v1957, %v1568
        %1960 = vrot.lane.b32.xlu0 %v1958, 60
        %v1961 = vpop.permute.xlu0 %1960
        %v1962 = vrot.slane %v1961, 4
        %v1963 = vsel %vm633, %v1962, %v1961
        %v1965 = vadd.f32 %v1925, %v1963
        %s1966 = sld [smem:[#allocation7 + $0xa6]]
        %v1967 = vstv %s1966
        %v1968 = vmul.f32 %v1967, %v1568
        %1970 = vrot.lane.b32.xlu0 %v1968, 60
        %v1971 = vpop.permute.xlu0 %1970
        %v1972 = vrot.slane %v1971, 4
        %v1973 = vsel %vm633, %v1972, %v1971
        %v1975 = vadd.f32 %v1935, %v1973
        %s1976 = sld [smem:[#allocation7 + $0xa7]]
        %v1977 = vstv %s1976
        %v1978 = vmul.f32 %v1977, %v1568
        %1980 = vrot.lane.b32.xlu0 %v1978, 60
        %v1981 = vpop.permute.xlu0 %1980
        %v1982 = vrot.slane %v1981, 4
        %v1983 = vsel %vm633, %v1982, %v1981
        %v1985 = vadd.f32 %v1945, %v1983
        %s1986 = sld [smem:[#allocation7 + $0xb4]]
        %v1987 = vstv %s1986
        %v1988 = vmul.f32 %v1987, %v1568
        %1990 = vrot.lane.b32.xlu0 %v1988, 98
        %v1991 = vpop.permute.xlu0 %1990
        %v1992 = vrot.slane %v1991, 4
        %v1993 = vsel %vm674, %v1991, %v1992
        %v1995 = vadd.f32 %v1955, %v1993
        %s1996 = sld [smem:[#allocation7 + $0xb5]]
        %v1997 = vstv %s1996
        %v1998 = vmul.f32 %v1997, %v1568
        %2000 = vrot.lane.b32.xlu0 %v1998, 98
        %v2001 = vpop.permute.xlu0 %2000
        %v2002 = vrot.slane %v2001, 4
        %v2003 = vsel %vm674, %v2001, %v2002
        %v2005 = vadd.f32 %v1965, %v2003
        %s2006 = sld [smem:[#allocation7 + $0xb6]]
        %v2007 = vstv %s2006
        %v2008 = vmul.f32 %v2007, %v1568
        %2010 = vrot.lane.b32.xlu0 %v2008, 98
        %v2011 = vpop.permute.xlu0 %2010
        %v2012 = vrot.slane %v2011, 4
        %v2013 = vsel %vm674, %v2011, %v2012
        %v2015 = vadd.f32 %v1975, %v2013
        %s2016 = sld [smem:[#allocation7 + $0xb7]]
        %v2017 = vstv %s2016
        %v2018 = vmul.f32 %v2017, %v1568
        %2020 = vrot.lane.b32.xlu0 %v2018, 98
        %v2021 = vpop.permute.xlu0 %2020
        %v2022 = vrot.slane %v2021, 4
        %v2023 = vsel %vm674, %v2021, %v2022
        %v2025 = vadd.f32 %v1985, %v2023
        %s2026 = sld [smem:[#allocation7 + $0xc4]]
        %v2027 = vstv %s2026
        %v2028 = vmul.f32 %v2027, %v1568
        %2030 = vrot.lane.b32.xlu0 %v2028, 92
        %v2031 = vpop.permute.xlu0 %2030
        %v2032 = vrot.slane %v2031, 4
        %v2033 = vsel %vm715, %v2031, %v2032
        %v2035 = vadd.f32 %v1995, %v2033
        %s2036 = sld [smem:[#allocation7 + $0xc5]]
        %v2037 = vstv %s2036
        %v2038 = vmul.f32 %v2037, %v1568
        %2040 = vrot.lane.b32.xlu0 %v2038, 92
        %v2041 = vpop.permute.xlu0 %2040
        %v2042 = vrot.slane %v2041, 4
        %v2043 = vsel %vm715, %v2041, %v2042
        %v2045 = vadd.f32 %v2005, %v2043
        %s2046 = sld [smem:[#allocation7 + $0xc6]]
        %v2047 = vstv %s2046
        %v2048 = vmul.f32 %v2047, %v1568
        %2050 = vrot.lane.b32.xlu0 %v2048, 92
        %v2051 = vpop.permute.xlu0 %2050
        %v2052 = vrot.slane %v2051, 4
        %v2053 = vsel %vm715, %v2051, %v2052
        %v2055 = vadd.f32 %v2015, %v2053
        %s2056 = sld [smem:[#allocation7 + $0xc7]]
        %v2057 = vstv %s2056
        %v2058 = vmul.f32 %v2057, %v1568
        %2060 = vrot.lane.b32.xlu0 %v2058, 92
        %v2061 = vpop.permute.xlu0 %2060
        %v2062 = vrot.slane %v2061, 4
        %v2063 = vsel %vm715, %v2061, %v2062
        %v2065 = vadd.f32 %v2025, %v2063
        %s2066 = sld [smem:[#allocation7 + $0xd4]]
        %v2067 = vstv %s2066
        %v2068 = vmul.f32 %v2067, %v1745
        %2070 = vrot.lane.b32.xlu0 %v2068, 2
        %v2071 = vpop.permute.xlu0 %2070
        %v2072 = vrot.slane %v2071, 4
        %v2073 = vsel %vm756, %v2072, %v2071
        %v2075 = vadd.f32 %v2035, %v2073
        %s2076 = sld [smem:[#allocation7 + $0xd5]]
        %v2077 = vstv %s2076
        %v2078 = vmul.f32 %v2077, %v1745
        %2080 = vrot.lane.b32.xlu0 %v2078, 2
        %v2081 = vpop.permute.xlu0 %2080
        %v2082 = vrot.slane %v2081, 4
        %v2083 = vsel %vm756, %v2082, %v2081
        %v2085 = vadd.f32 %v2045, %v2083
        %s2086 = sld [smem:[#allocation7 + $0xd6]]
        %v2087 = vstv %s2086
        %v2088 = vmul.f32 %v2087, %v1745
        %2090 = vrot.lane.b32.xlu0 %v2088, 2
        %v2091 = vpop.permute.xlu0 %2090
        %v2092 = vrot.slane %v2091, 4
        %v2093 = vsel %vm756, %v2092, %v2091
        %v2095 = vadd.f32 %v2055, %v2093
        %s2096 = sld [smem:[#allocation7 + $0xd7]]
        %v2097 = vstv %s2096
        %v2098 = vmul.f32 %v2097, %v1745
        %2100 = vrot.lane.b32.xlu0 %v2098, 2
        %v2101 = vpop.permute.xlu0 %2100
        %v2102 = vrot.slane %v2101, 4
        %v2103 = vsel %vm756, %v2102, %v2101
        %v2105 = vadd.f32 %v2065, %v2103
        %s2106 = sld [smem:[#allocation7 + $0xe4]]
        %v2107 = vstv %s2106
        %v2108 = vmul.f32 %v2107, %v1745
        %2110 = vrot.lane.b32.xlu0 %v2108, 127
        %v2111 = vpop.permute.xlu0 %2110
        %v2112 = vrot.slane %v2111, 4
        %v2113 = vsel %vm264, %v2111, %v2112
        %v2115 = vadd.f32 %v2075, %v2113
        %s2116 = sld [smem:[#allocation7 + $0xe5]]
        %v2117 = vstv %s2116
        %v2118 = vmul.f32 %v2117, %v1745
        %2120 = vrot.lane.b32.xlu0 %v2118, 127
        %v2121 = vpop.permute.xlu0 %2120
        %v2122 = vrot.slane %v2121, 4
        %v2123 = vsel %vm264, %v2121, %v2122
        %v2125 = vadd.f32 %v2085, %v2123
        %s2126 = sld [smem:[#allocation7 + $0xe6]]
        %v2127 = vstv %s2126
        %v2128 = vmul.f32 %v2127, %v1745
        %2130 = vrot.lane.b32.xlu0 %v2128, 127
        %v2131 = vpop.permute.xlu0 %2130
        %v2132 = vrot.slane %v2131, 4
        %v2133 = vsel %vm264, %v2131, %v2132
        %v2135 = vadd.f32 %v2095, %v2133
        %s2136 = sld [smem:[#allocation7 + $0xe7]]
        %v2137 = vstv %s2136
        %v2138 = vmul.f32 %v2137, %v1745
        %2140 = vrot.lane.b32.xlu0 %v2138, 127
        %v2141 = vpop.permute.xlu0 %2140
        %v2142 = vrot.slane %v2141, 4
        %v2143 = vsel %vm264, %v2141, %v2142
        %v2145 = vadd.f32 %v2105, %v2143
        %s2146 = sld [smem:[#allocation7 + $0xf4]]
        %v2147 = vstv %s2146
        %v2148 = vmul.f32 %v2147, %v1745
        %2150 = vrot.lane.b32.xlu0 %v2148, 124
        %v2151 = vpop.permute.xlu0 %2150
        %v2152 = vrot.slane %v2151, 4
        %v2153 = vsel %vm837, %v2151, %v2152
        %v2155 = vadd.f32 %v2115, %v2153
        %s2156 = sld [smem:[#allocation7 + $0xf5]]
        %v2157 = vstv %s2156
        %v2158 = vmul.f32 %v2157, %v1745
        %2160 = vrot.lane.b32.xlu0 %v2158, 124
        %v2161 = vpop.permute.xlu0 %2160
        %v2162 = vrot.slane %v2161, 4
        %v2163 = vsel %vm837, %v2161, %v2162
        %v2165 = vadd.f32 %v2125, %v2163
        %s2166 = sld [smem:[#allocation7 + $0xf6]]
        %v2167 = vstv %s2166
        %v2168 = vmul.f32 %v2167, %v1745
        %2170 = vrot.lane.b32.xlu0 %v2168, 124
        %v2171 = vpop.permute.xlu0 %2170
        %v2172 = vrot.slane %v2171, 4
        %v2173 = vsel %vm837, %v2171, %v2172
        %v2175 = vadd.f32 %v2135, %v2173
        %s2176 = sld [smem:[#allocation7 + $0xf7]]
        %v2177 = vstv %s2176
        %v2178 = vmul.f32 %v2177, %v1745
        %2180 = vrot.lane.b32.xlu0 %v2178, 124
        %v2181 = vpop.permute.xlu0 %2180
        %v2182 = vrot.slane %v2181, 4
        %v2183 = vsel %vm837, %v2181, %v2182
        %v2185 = vadd.f32 %v2145, %v2183
        %v2186 = vld [vmem:[%s1567] sm:$0xff]
        %s2187 = sld [smem:[#allocation7 + $0x104]]
        %v2188 = vstv %s2187
        %v2189 = vmul.f32 %v2188, %v2186
        %2191 = vrot.lane.b32.xlu0 %v2189, 4
        %v2192 = vpop.permute.xlu0 %2191
        %v2193 = vrot.slane %v2192, 4
        %v2194 = vsel %vm879, %v2193, %v2192
        %v2196 = vadd.f32 %v2155, %v2194
        %s2197 = sld [smem:[#allocation7 + $0x105]]
        %v2198 = vstv %s2197
        %v2199 = vmul.f32 %v2198, %v2186
        %2201 = vrot.lane.b32.xlu0 %v2199, 4
        %v2202 = vpop.permute.xlu0 %2201
        %v2203 = vrot.slane %v2202, 4
        %v2204 = vsel %vm879, %v2203, %v2202
        %v2206 = vadd.f32 %v2165, %v2204
        %s2207 = sld [smem:[#allocation7 + $0x106]]
        %v2208 = vstv %s2207
        %v2209 = vmul.f32 %v2208, %v2186
        %2211 = vrot.lane.b32.xlu0 %v2209, 4
        %v2212 = vpop.permute.xlu0 %2211
        %v2213 = vrot.slane %v2212, 4
        %v2214 = vsel %vm879, %v2213, %v2212
        %v2216 = vadd.f32 %v2175, %v2214
        %s2217 = sld [smem:[#allocation7 + $0x107]]
        %v2218 = vstv %s2217
        %v2219 = vmul.f32 %v2218, %v2186
        %2221 = vrot.lane.b32.xlu0 %v2219, 4
        %v2222 = vpop.permute.xlu0 %2221
        %v2223 = vrot.slane %v2222, 4
        %v2224 = vsel %vm879, %v2223, %v2222
        %v2226 = vadd.f32 %v2185, %v2224
        %s2227 = sld [smem:[#allocation7 + $0x114]]
        %v2228 = vstv %s2227
        %v2229 = vmul.f32 %v2228, %v2186
        %2231 = vrot.lane.b32.xlu0 %v2229, 127
        %v2232 = vpop.permute.xlu0 %2231
        %v2233 = vrot.slane %v2232, 4
        %v2234 = vsel %vm264, %v2232, %v2233
        %v2236 = vadd.f32 %v2196, %v2234
        %s2237 = sld [smem:[#allocation7 + $0x115]]
        %v2238 = vstv %s2237
        %v2239 = vmul.f32 %v2238, %v2186
        %2241 = vrot.lane.b32.xlu0 %v2239, 127
        %v2242 = vpop.permute.xlu0 %2241
        %v2243 = vrot.slane %v2242, 4
        %v2244 = vsel %vm264, %v2242, %v2243
        %v2246 = vadd.f32 %v2206, %v2244
        %s2247 = sld [smem:[#allocation7 + $0x116]]
        %v2248 = vstv %s2247
        %v2249 = vmul.f32 %v2248, %v2186
        %2251 = vrot.lane.b32.xlu0 %v2249, 127
        %v2252 = vpop.permute.xlu0 %2251
        %v2253 = vrot.slane %v2252, 4
        %v2254 = vsel %vm264, %v2252, %v2253
        %v2256 = vadd.f32 %v2216, %v2254
        %s2257 = sld [smem:[#allocation7 + $0x117]]
        %v2258 = vstv %s2257
        %v2259 = vmul.f32 %v2258, %v2186
        %2261 = vrot.lane.b32.xlu0 %v2259, 127
        %v2262 = vpop.permute.xlu0 %2261
        %v2263 = vrot.slane %v2262, 4
        %v2264 = vsel %vm264, %v2262, %v2263
        %v2266 = vadd.f32 %v2226, %v2264
        %s2267 = sld [smem:[#allocation7 + $0x124]]
        %v2268 = vstv %s2267
        %v2269 = vmul.f32 %v2268, %v2186
        %2271 = vrot.lane.b32.xlu0 %v2269, 122
        %v2272 = vpop.permute.xlu0 %2271
        %v2273 = vrot.slane %v2272, 4
        %v2274 = vsel %vm960, %v2272, %v2273
        %v2276 = vadd.f32 %v2236, %v2274
        %s2277 = sld [smem:[#allocation7 + $0x125]]
        %v2278 = vstv %s2277
        %v2279 = vmul.f32 %v2278, %v2186
        %2281 = vrot.lane.b32.xlu0 %v2279, 122
        %v2282 = vpop.permute.xlu0 %2281
        %v2283 = vrot.slane %v2282, 4
        %v2284 = vsel %vm960, %v2282, %v2283
        %v2286 = vadd.f32 %v2246, %v2284
        %s2287 = sld [smem:[#allocation7 + $0x126]]
        %v2288 = vstv %s2287
        %v2289 = vmul.f32 %v2288, %v2186
        %2291 = vrot.lane.b32.xlu0 %v2289, 122
        %v2292 = vpop.permute.xlu0 %2291
        %v2293 = vrot.slane %v2292, 4
        %v2294 = vsel %vm960, %v2292, %v2293
        %v2296 = vadd.f32 %v2256, %v2294
        %s2297 = sld [smem:[#allocation7 + $0x127]]
        %v2298 = vstv %s2297
        %v2299 = vmul.f32 %v2298, %v2186
        %2301 = vrot.lane.b32.xlu0 %v2299, 122
        %v2302 = vpop.permute.xlu0 %2301
        %v2303 = vrot.slane %v2302, 4
        %v2304 = vsel %vm960, %v2302, %v2303
        %v2306 = vadd.f32 %v2266, %v2304
        %s2307 = sld [smem:[#allocation7 + $0x134]]
        %v2308 = vstv %s2307
        %v2309 = vmul.f32 %v2308, %v1568
        %2311 = vrot.lane.b32.xlu0 %v2309, 100
        %v2312 = vpop.permute.xlu0 %2311
        %v2313 = vrot.slane %v2312, 4
        %v2314 = vsel %vm1001, %v2312, %v2313
        %v2316 = vadd.f32 %v2276, %v2314
        %s2317 = sld [smem:[#allocation7 + $0x135]]
        %v2318 = vstv %s2317
        %v2319 = vmul.f32 %v2318, %v1568
        %2321 = vrot.lane.b32.xlu0 %v2319, 100
        %v2322 = vpop.permute.xlu0 %2321
        %v2323 = vrot.slane %v2322, 4
        %v2324 = vsel %vm1001, %v2322, %v2323
        %v2326 = vadd.f32 %v2286, %v2324
        %s2327 = sld [smem:[#allocation7 + $0x136]]
        %v2328 = vstv %s2327
        %v2329 = vmul.f32 %v2328, %v1568
        %2331 = vrot.lane.b32.xlu0 %v2329, 100
        %v2332 = vpop.permute.xlu0 %2331
        %v2333 = vrot.slane %v2332, 4
        %v2334 = vsel %vm1001, %v2332, %v2333
        %v2336 = vadd.f32 %v2296, %v2334
        %s2337 = sld [smem:[#allocation7 + $0x137]]
        %v2338 = vstv %s2337
        %v2339 = vmul.f32 %v2338, %v1568
        %2341 = vrot.lane.b32.xlu0 %v2339, 100
        %v2342 = vpop.permute.xlu0 %2341
        %v2343 = vrot.slane %v2342, 4
        %v2344 = vsel %vm1001, %v2342, %v2343
        %v2346 = vadd.f32 %v2306, %v2344
        %s2347 = sld [smem:[#allocation7 + $0x144]]
        %v2348 = vstv %s2347
        %v2349 = vmul.f32 %v2348, %v1568
        %2351 = vrot.lane.b32.xlu0 %v2349, 90
        %v2352 = vpop.permute.xlu0 %2351
        %v2353 = vrot.slane %v2352, 4
        %v2354 = vsel %vm1042, %v2352, %v2353
        %v2356 = vadd.f32 %v2316, %v2354
        %s2357 = sld [smem:[#allocation7 + $0x145]]
        %v2358 = vstv %s2357
        %v2359 = vmul.f32 %v2358, %v1568
        %2361 = vrot.lane.b32.xlu0 %v2359, 90
        %v2362 = vpop.permute.xlu0 %2361
        %v2363 = vrot.slane %v2362, 4
        %v2364 = vsel %vm1042, %v2362, %v2363
        %v2366 = vadd.f32 %v2326, %v2364
        %s2367 = sld [smem:[#allocation7 + $0x146]]
        %v2368 = vstv %s2367
        %v2369 = vmul.f32 %v2368, %v1568
        %2371 = vrot.lane.b32.xlu0 %v2369, 90
        %v2372 = vpop.permute.xlu0 %2371
        %v2373 = vrot.slane %v2372, 4
        %v2374 = vsel %vm1042, %v2372, %v2373
        %v2376 = vadd.f32 %v2336, %v2374
        %s2377 = sld [smem:[#allocation7 + $0x147]]
        %v2378 = vstv %s2377
        %v2379 = vmul.f32 %v2378, %v1568
        %2381 = vrot.lane.b32.xlu0 %v2379, 90
        %v2382 = vpop.permute.xlu0 %2381
        %v2383 = vrot.slane %v2382, 4
        %v2384 = vsel %vm1042, %v2382, %v2383
        %v2386 = vadd.f32 %v2346, %v2384
        %v2387 = vld [vmem:[%s1567 + $0xc] sm:$0xff]
        %s2388 = sld [smem:[#allocation7 + $0x154]]
        %v2389 = vstv %s2388
        %v2390 = vmul.f32 %v2389, %v2387
        %2392 = vrot.lane.b32.xlu0 %v2390, 68
        %v2393 = vpop.permute.xlu0 %2392
        %v2394 = vrot.slane %v2393, 4
        %v2395 = vsel %vm1084, %v2394, %v2393
        %v2397 = vadd.f32 %v2356, %v2395
        %s2398 = sld [smem:[#allocation7 + $0x155]]
        %v2399 = vstv %s2398
        %v2400 = vmul.f32 %v2399, %v2387
        %2402 = vrot.lane.b32.xlu0 %v2400, 68
        %v2403 = vpop.permute.xlu0 %2402
        %v2404 = vrot.slane %v2403, 4
        %v2405 = vsel %vm1084, %v2404, %v2403
        %v2407 = vadd.f32 %v2366, %v2405
        %s2408 = sld [smem:[#allocation7 + $0x156]]
        %v2409 = vstv %s2408
        %v2410 = vmul.f32 %v2409, %v2387
        %2412 = vrot.lane.b32.xlu0 %v2410, 68
        %v2413 = vpop.permute.xlu0 %2412
        %v2414 = vrot.slane %v2413, 4
        %v2415 = vsel %vm1084, %v2414, %v2413
        %v2417 = vadd.f32 %v2376, %v2415
        %s2418 = sld [smem:[#allocation7 + $0x157]]
        %v2419 = vstv %s2418
        %v2420 = vmul.f32 %v2419, %v2387
        %2422 = vrot.lane.b32.xlu0 %v2420, 68
        %v2423 = vpop.permute.xlu0 %2422
        %v2424 = vrot.slane %v2423, 4
        %v2425 = vsel %vm1084, %v2424, %v2423
        %v2427 = vadd.f32 %v2386, %v2425
        %s2428 = sld [smem:[#allocation7 + $0x164]]
        %v2429 = vstv %s2428
        %v2430 = vmul.f32 %v2429, %v2387
        %2432 = vrot.lane.b32.xlu0 %v2430, 63
        %v2433 = vpop.permute.xlu0 %2432
        %v2434 = vrot.slane %v2433, 4
        %v2435 = vsel %vm470, %v2434, %v2433
        %v2437 = vadd.f32 %v2397, %v2435
        %s2438 = sld [smem:[#allocation7 + $0x165]]
        %v2439 = vstv %s2438
        %v2440 = vmul.f32 %v2439, %v2387
        %2442 = vrot.lane.b32.xlu0 %v2440, 63
        %v2443 = vpop.permute.xlu0 %2442
        %v2444 = vrot.slane %v2443, 4
        %v2445 = vsel %vm470, %v2444, %v2443
        %v2447 = vadd.f32 %v2407, %v2445
        %s2448 = sld [smem:[#allocation7 + $0x166]]
        %v2449 = vstv %s2448
        %v2450 = vmul.f32 %v2449, %v2387
        %2452 = vrot.lane.b32.xlu0 %v2450, 63
        %v2453 = vpop.permute.xlu0 %2452
        %v2454 = vrot.slane %v2453, 4
        %v2455 = vsel %vm470, %v2454, %v2453
        %v2457 = vadd.f32 %v2417, %v2455
        %s2458 = sld [smem:[#allocation7 + $0x167]]
        %v2459 = vstv %s2458
        %v2460 = vmul.f32 %v2459, %v2387
        %2462 = vrot.lane.b32.xlu0 %v2460, 63
        %v2463 = vpop.permute.xlu0 %2462
        %v2464 = vrot.slane %v2463, 4
        %v2465 = vsel %vm470, %v2464, %v2463
        %v2467 = vadd.f32 %v2427, %v2465
        %s2468 = sld [smem:[#allocation7 + $0x174]]
        %v2469 = vstv %s2468
        %v2470 = vmul.f32 %v2469, %v2387
        %2472 = vrot.lane.b32.xlu0 %v2470, 58
        %v2473 = vpop.permute.xlu0 %2472
        %v2474 = vrot.slane %v2473, 4
        %v2475 = vsel %vm1165, %v2474, %v2473
        %v2477 = vadd.f32 %v2437, %v2475
        %s2478 = sld [smem:[#allocation7 + $0x175]]
        %v2479 = vstv %s2478
        %v2480 = vmul.f32 %v2479, %v2387
        %2482 = vrot.lane.b32.xlu0 %v2480, 58
        %v2483 = vpop.permute.xlu0 %2482
        %v2484 = vrot.slane %v2483, 4
        %v2485 = vsel %vm1165, %v2484, %v2483
        %v2487 = vadd.f32 %v2447, %v2485
        %s2488 = sld [smem:[#allocation7 + $0x176]]
        %v2489 = vstv %s2488
        %v2490 = vmul.f32 %v2489, %v2387
        %2492 = vrot.lane.b32.xlu0 %v2490, 58
        %v2493 = vpop.permute.xlu0 %2492
        %v2494 = vrot.slane %v2493, 4
        %v2495 = vsel %vm1165, %v2494, %v2493
        %v2497 = vadd.f32 %v2457, %v2495
        %s2498 = sld [smem:[#allocation7 + $0x177]]
        %v2499 = vstv %s2498
        %v2500 = vmul.f32 %v2499, %v2387
        %2502 = vrot.lane.b32.xlu0 %v2500, 58
        %v2503 = vpop.permute.xlu0 %2502
        %v2504 = vrot.slane %v2503, 4
        %v2505 = vsel %vm1165, %v2504, %v2503
        %v2507 = vadd.f32 %v2467, %v2505
        %v2508 = vld [vmem:[%s1567] sm:$0xf]
        %s2509 = sld [smem:[#allocation7 + $0x184]]
        %v2510 = vstv %s2509
        %v2511 = vmul.f32 %v2510, %v2508
        %2513 = vrot.lane.b32.xlu0 %v2511, 70
        %v2514 = vpop.permute.xlu0 %2513
        %v2515 = vrot.slane %v2514, 4
        %v2516 = vsel %vm1207, %v2515, %v2514
        %v2518 = vadd.f32 %v2477, %v2516
        %s2519 = sld [smem:[#allocation7 + $0x185]]
        %v2520 = vstv %s2519
        %v2521 = vmul.f32 %v2520, %v2508
        %2523 = vrot.lane.b32.xlu0 %v2521, 70
        %v2524 = vpop.permute.xlu0 %2523
        %v2525 = vrot.slane %v2524, 4
        %v2526 = vsel %vm1207, %v2525, %v2524
        %v2528 = vadd.f32 %v2487, %v2526
        %s2529 = sld [smem:[#allocation7 + $0x186]]
        %v2530 = vstv %s2529
        %v2531 = vmul.f32 %v2530, %v2508
        %2533 = vrot.lane.b32.xlu0 %v2531, 70
        %v2534 = vpop.permute.xlu0 %2533
        %v2535 = vrot.slane %v2534, 4
        %v2536 = vsel %vm1207, %v2535, %v2534
        %v2538 = vadd.f32 %v2497, %v2536
        %s2539 = sld [smem:[#allocation7 + $0x187]]
        %v2540 = vstv %s2539
        %v2541 = vmul.f32 %v2540, %v2508
        %2543 = vrot.lane.b32.xlu0 %v2541, 70
        %v2544 = vpop.permute.xlu0 %2543
        %v2545 = vrot.slane %v2544, 4
        %v2546 = vsel %vm1207, %v2545, %v2544
        %v2548 = vadd.f32 %v2507, %v2546
        %s2549 = sld [smem:[#allocation7 + $0x194]]
        %v2550 = vstv %s2549
        %v2551 = vmul.f32 %v2550, %v2186
        %2553 = vrot.lane.b32.xlu0 %v2551, 63
        %v2554 = vpop.permute.xlu0 %2553
        %v2555 = vrot.slane %v2554, 4
        %v2556 = vsel %vm470, %v2555, %v2554
        %v2558 = vadd.f32 %v2518, %v2556
        %s2559 = sld [smem:[#allocation7 + $0x195]]
        %v2560 = vstv %s2559
        %v2561 = vmul.f32 %v2560, %v2186
        %2563 = vrot.lane.b32.xlu0 %v2561, 63
        %v2564 = vpop.permute.xlu0 %2563
        %v2565 = vrot.slane %v2564, 4
        %v2566 = vsel %vm470, %v2565, %v2564
        %v2568 = vadd.f32 %v2528, %v2566
        %s2569 = sld [smem:[#allocation7 + $0x196]]
        %v2570 = vstv %s2569
        %v2571 = vmul.f32 %v2570, %v2186
        %2573 = vrot.lane.b32.xlu0 %v2571, 63
        %v2574 = vpop.permute.xlu0 %2573
        %v2575 = vrot.slane %v2574, 4
        %v2576 = vsel %vm470, %v2575, %v2574
        %v2578 = vadd.f32 %v2538, %v2576
        %s2579 = sld [smem:[#allocation7 + $0x197]]
        %v2580 = vstv %s2579
        %v2581 = vmul.f32 %v2580, %v2186
        %2583 = vrot.lane.b32.xlu0 %v2581, 63
        %v2584 = vpop.permute.xlu0 %2583
        %v2585 = vrot.slane %v2584, 4
        %v2586 = vsel %vm470, %v2585, %v2584
        %v2588 = vadd.f32 %v2548, %v2586
        %s2589 = sld [smem:[#allocation7 + $0x1a4]]
        %v2590 = vstv %s2589
        %v2591 = vmul.f32 %v2590, %v2186
        %2593 = vrot.lane.b32.xlu0 %v2591, 56
        %v2594 = vpop.permute.xlu0 %2593
        %v2595 = vrot.slane %v2594, 4
        %v2596 = vsel %vm1288, %v2595, %v2594
        %v2598 = vadd.f32 %v2558, %v2596
        %s2599 = sld [smem:[#allocation7 + $0x1a5]]
        %v2600 = vstv %s2599
        %v2601 = vmul.f32 %v2600, %v2186
        %2603 = vrot.lane.b32.xlu0 %v2601, 56
        %v2604 = vpop.permute.xlu0 %2603
        %v2605 = vrot.slane %v2604, 4
        %v2606 = vsel %vm1288, %v2605, %v2604
        %v2608 = vadd.f32 %v2568, %v2606
        %s2609 = sld [smem:[#allocation7 + $0x1a6]]
        %v2610 = vstv %s2609
        %v2611 = vmul.f32 %v2610, %v2186
        %2613 = vrot.lane.b32.xlu0 %v2611, 56
        %v2614 = vpop.permute.xlu0 %2613
        %v2615 = vrot.slane %v2614, 4
        %v2616 = vsel %vm1288, %v2615, %v2614
        %v2618 = vadd.f32 %v2578, %v2616
        %s2619 = sld [smem:[#allocation7 + $0x1a7]]
        %v2620 = vstv %s2619
        %v2621 = vmul.f32 %v2620, %v2186
        %2623 = vrot.lane.b32.xlu0 %v2621, 56
        %v2624 = vpop.permute.xlu0 %2623
        %v2625 = vrot.slane %v2624, 4
        %v2626 = vsel %vm1288, %v2625, %v2624
        %v2628 = vadd.f32 %v2588, %v2626
        %s2629 = sld [smem:[#allocation7 + $0x1b4]]
        %v2630 = vstv %s2629
        %v2631 = vmul.f32 %v2630, %v1568
        %2633 = vrot.lane.b32.xlu0 %v2631, 102
        %v2634 = vpop.permute.xlu0 %2633
        %v2635 = vrot.slane %v2634, 4
        %v2636 = vsel %vm1329, %v2634, %v2635
        %v2638 = vadd.f32 %v2598, %v2636
        %s2639 = sld [smem:[#allocation7 + $0x1b5]]
        %v2640 = vstv %s2639
        %v2641 = vmul.f32 %v2640, %v1568
        %2643 = vrot.lane.b32.xlu0 %v2641, 102
        %v2644 = vpop.permute.xlu0 %2643
        %v2645 = vrot.slane %v2644, 4
        %v2646 = vsel %vm1329, %v2644, %v2645
        %v2648 = vadd.f32 %v2608, %v2646
        %s2649 = sld [smem:[#allocation7 + $0x1b6]]
        %v2650 = vstv %s2649
        %v2651 = vmul.f32 %v2650, %v1568
        %2653 = vrot.lane.b32.xlu0 %v2651, 102
        %v2654 = vpop.permute.xlu0 %2653
        %v2655 = vrot.slane %v2654, 4
        %v2656 = vsel %vm1329, %v2654, %v2655
        %v2658 = vadd.f32 %v2618, %v2656
        %s2659 = sld [smem:[#allocation7 + $0x1b7]]
        %v2660 = vstv %s2659
        %v2661 = vmul.f32 %v2660, %v1568
        %2663 = vrot.lane.b32.xlu0 %v2661, 102
        %v2664 = vpop.permute.xlu0 %2663
        %v2665 = vrot.slane %v2664, 4
        %v2666 = vsel %vm1329, %v2664, %v2665
        %v2668 = vadd.f32 %v2628, %v2666
        %s2669 = sld [smem:[#allocation7 + $0x1c4]]
        %v2670 = vstv %s2669
        %v2671 = vmul.f32 %v2670, %v1568
        %2673 = vrot.lane.b32.xlu0 %v2671, 88
        %v2674 = vpop.permute.xlu0 %2673
        %v2675 = vrot.slane %v2674, 4
        %v2676 = vsel %vm1370, %v2674, %v2675
        %v2678 = vadd.f32 %v2638, %v2676
        %s2679 = sld [smem:[#allocation7 + $0x1c5]]
        %v2680 = vstv %s2679
        %v2681 = vmul.f32 %v2680, %v1568
        %2683 = vrot.lane.b32.xlu0 %v2681, 88
        %v2684 = vpop.permute.xlu0 %2683
        %v2685 = vrot.slane %v2684, 4
        %v2686 = vsel %vm1370, %v2684, %v2685
        %v2688 = vadd.f32 %v2648, %v2686
        %s2689 = sld [smem:[#allocation7 + $0x1c6]]
        %v2690 = vstv %s2689
        %v2691 = vmul.f32 %v2690, %v1568
        %2693 = vrot.lane.b32.xlu0 %v2691, 88
        %v2694 = vpop.permute.xlu0 %2693
        %v2695 = vrot.slane %v2694, 4
        %v2696 = vsel %vm1370, %v2694, %v2695
        %v2698 = vadd.f32 %v2658, %v2696
        %s2699 = sld [smem:[#allocation7 + $0x1c7]]
        %v2700 = vstv %s2699
        %v2701 = vmul.f32 %v2700, %v1568
        %2703 = vrot.lane.b32.xlu0 %v2701, 88
        %v2704 = vpop.permute.xlu0 %2703
        %v2705 = vrot.slane %v2704, 4
        %v2706 = vsel %vm1370, %v2704, %v2705
        %v2708 = vadd.f32 %v2668, %v2706
        %s2709 = sld [smem:[#allocation7 + $0x1d4]]
        %v2710 = vstv %s2709
        %v2711 = vmul.f32 %v2710, %v2387
        %2713 = vrot.lane.b32.xlu0 %v2711, 6
        %v2714 = vpop.permute.xlu0 %2713
        %v2715 = vrot.slane %v2714, 4
        %v2716 = vsel %vm1411, %v2715, %v2714
        %v2718 = vadd.f32 %v2678, %v2716
        %s2719 = sld [smem:[#allocation7 + $0x1d5]]
        %v2720 = vstv %s2719
        %v2721 = vmul.f32 %v2720, %v2387
        %2723 = vrot.lane.b32.xlu0 %v2721, 6
        %v2724 = vpop.permute.xlu0 %2723
        %v2725 = vrot.slane %v2724, 4
        %v2726 = vsel %vm1411, %v2725, %v2724
        %v2728 = vadd.f32 %v2688, %v2726
        %s2729 = sld [smem:[#allocation7 + $0x1d6]]
        %v2730 = vstv %s2729
        %v2731 = vmul.f32 %v2730, %v2387
        %2733 = vrot.lane.b32.xlu0 %v2731, 6
        %v2734 = vpop.permute.xlu0 %2733
        %v2735 = vrot.slane %v2734, 4
        %v2736 = vsel %vm1411, %v2735, %v2734
        %v2738 = vadd.f32 %v2698, %v2736
        %s2739 = sld [smem:[#allocation7 + $0x1d7]]
        %v2740 = vstv %s2739
        %v2741 = vmul.f32 %v2740, %v2387
        %2743 = vrot.lane.b32.xlu0 %v2741, 6
        %v2744 = vpop.permute.xlu0 %2743
        %v2745 = vrot.slane %v2744, 4
        %v2746 = vsel %vm1411, %v2745, %v2744
        %v2748 = vadd.f32 %v2708, %v2746
        %s2749 = sld [smem:[#allocation7 + $0x1e4]]
        %v2750 = vstv %s2749
        %v2751 = vmul.f32 %v2750, %v2387
        %2753 = vrot.lane.b32.xlu0 %v2751, 127
        %v2754 = vpop.permute.xlu0 %2753
        %v2755 = vrot.slane %v2754, 4
        %v2756 = vsel %vm264, %v2754, %v2755
        %v2758 = vadd.f32 %v2718, %v2756
        %s2759 = sld [smem:[#allocation7 + $0x1e5]]
        %v2760 = vstv %s2759
        %v2761 = vmul.f32 %v2760, %v2387
        %2763 = vrot.lane.b32.xlu0 %v2761, 127
        %v2764 = vpop.permute.xlu0 %2763
        %v2765 = vrot.slane %v2764, 4
        %v2766 = vsel %vm264, %v2764, %v2765
        %v2768 = vadd.f32 %v2728, %v2766
        %s2769 = sld [smem:[#allocation7 + $0x1e6]]
        %v2770 = vstv %s2769
        %v2771 = vmul.f32 %v2770, %v2387
        %2773 = vrot.lane.b32.xlu0 %v2771, 127
        %v2774 = vpop.permute.xlu0 %2773
        %v2775 = vrot.slane %v2774, 4
        %v2776 = vsel %vm264, %v2774, %v2775
        %v2778 = vadd.f32 %v2738, %v2776
        %s2779 = sld [smem:[#allocation7 + $0x1e7]]
        %v2780 = vstv %s2779
        %v2781 = vmul.f32 %v2780, %v2387
        %2783 = vrot.lane.b32.xlu0 %v2781, 127
        %v2784 = vpop.permute.xlu0 %2783
        %v2785 = vrot.slane %v2784, 4
        %v2786 = vsel %vm264, %v2784, %v2785
        %v2788 = vadd.f32 %v2748, %v2786
        %s2789 = sld [smem:[#allocation7 + $0x1f4]]
        %v2790 = vstv %s2789
        %v2791 = vmul.f32 %v2790, %v2387
        %2793 = vrot.lane.b32.xlu0 %v2791, 120
        %v2794 = vpop.permute.xlu0 %2793
        %v2795 = vrot.slane %v2794, 4
        %v2796 = vsel %vm1492, %v2794, %v2795
        %v2798 = vadd.f32 %v2758, %v2796
        %s2799 = sld [smem:[#allocation7 + $0x1f5]]
        %v2800 = vstv %s2799
        %v2801 = vmul.f32 %v2800, %v2387
        %2803 = vrot.lane.b32.xlu0 %v2801, 120
        %v2804 = vpop.permute.xlu0 %2803
        %v2805 = vrot.slane %v2804, 4
        %v2806 = vsel %vm1492, %v2804, %v2805
        %v2808 = vadd.f32 %v2768, %v2806
        %s2809 = sld [smem:[#allocation7 + $0x1f6]]
        %v2810 = vstv %s2809
        %v2811 = vmul.f32 %v2810, %v2387
        %2813 = vrot.lane.b32.xlu0 %v2811, 120
        %v2814 = vpop.permute.xlu0 %2813
        %v2815 = vrot.slane %v2814, 4
        %v2816 = vsel %vm1492, %v2814, %v2815
        %v2818 = vadd.f32 %v2778, %v2816
        %s2819 = sld [smem:[#allocation7 + $0x1f7]]
        %v2820 = vstv %s2819
        %v2821 = vmul.f32 %v2820, %v2387
        %2823 = vrot.lane.b32.xlu0 %v2821, 120
        %v2824 = vpop.permute.xlu0 %2823
        %v2825 = vrot.slane %v2824, 4
        %v2826 = vsel %vm1492, %v2824, %v2825
        %v2828 = vadd.f32 %v2788, %v2826
        %s2829 = sld [smem:[#allocation7 + $0x204]]
        %v2830 = vstv %s2829
        %v2831 = vmul.f32 %v2830, %v1568
        %2833 = vrot.lane.b32.xlu0 %v2831, 95
        %v2834 = vpop.permute.xlu0 %2833
        %v2835 = vrot.slane %v2834, 4
        %v2836 = vsel %vm1533, %v2834, %v2835
        %v2838 = vadd.f32 %v2798, %v2836
        %s2839 = sld [smem:[#allocation7 + $0x205]]
        %v2840 = vstv %s2839
        %v2841 = vmul.f32 %v2840, %v1568
        %2843 = vrot.lane.b32.xlu0 %v2841, 95
        %v2844 = vpop.permute.xlu0 %2843
        %v2845 = vrot.slane %v2844, 4
        %v2846 = vsel %vm1533, %v2844, %v2845
        %v2848 = vadd.f32 %v2808, %v2846
        %s2849 = sld [smem:[#allocation7 + $0x206]]
        %v2850 = vstv %s2849
        %v2851 = vmul.f32 %v2850, %v1568
        %2853 = vrot.lane.b32.xlu0 %v2851, 95
        %v2854 = vpop.permute.xlu0 %2853
        %v2855 = vrot.slane %v2854, 4
        %v2856 = vsel %vm1533, %v2854, %v2855
        %v2858 = vadd.f32 %v2818, %v2856
        %s2859 = sld [smem:[#allocation7 + $0x207]]
        %v2860 = vstv %s2859
        %v2861 = vmul.f32 %v2860, %v1568
        %2863 = vrot.lane.b32.xlu0 %v2861, 95
        %v2864 = vpop.permute.xlu0 %2863
        %v2865 = vrot.slane %v2864, 4
        %v2866 = vsel %vm1533, %v2864, %v2865
        %v2868 = vadd.f32 %v2828, %v2866
        %s2869 = scalar_lea.vmem %s200, 40 [#allocation2]
        %v2870 = vld [vmem:[%s2869 + $0x4] sm:$0xff]
        %s2871 = sld [smem:[#allocation7 + $0x8]]
        %v2872 = vstv %s2871
        %v2873 = vmul.f32 %v2872, %v2870
        %v2874 = vadd.f32 %v2838, %v2873
        %s2875 = sld [smem:[#allocation7 + $0x9]]
        %v2876 = vstv %s2875
        %v2877 = vmul.f32 %v2876, %v2870
        %v2878 = vadd.f32 %v2848, %v2877
        %s2879 = sld [smem:[#allocation7 + $0xa]]
        %v2880 = vstv %s2879
        %v2881 = vmul.f32 %v2880, %v2870
        %v2882 = vadd.f32 %v2858, %v2881
        %s2883 = sld [smem:[#allocation7 + $0xb]]
        %v2884 = vstv %s2883
        %v2885 = vmul.f32 %v2884, %v2870
        %v2886 = vadd.f32 %v2868, %v2885
        %s2887 = sld [smem:[#allocation7 + $0x18]]
        %v2888 = vstv %s2887
        %v2889 = vmul.f32 %v2888, %v2870
        %2891 = vrot.lane.b32.xlu0 %v2889, 127
        %v2892 = vpop.permute.xlu0 %2891
        %v2893 = vrot.slane %v2892, 4
        %v2894 = vsel %vm264, %v2892, %v2893
        %v2896 = vadd.f32 %v2874, %v2894
        %s2897 = sld [smem:[#allocation7 + $0x19]]
        %v2898 = vstv %s2897
        %v2899 = vmul.f32 %v2898, %v2870
        %2901 = vrot.lane.b32.xlu0 %v2899, 127
        %v2902 = vpop.permute.xlu0 %2901
        %v2903 = vrot.slane %v2902, 4
        %v2904 = vsel %vm264, %v2902, %v2903
        %v2906 = vadd.f32 %v2878, %v2904
        %s2907 = sld [smem:[#allocation7 + $0x1a]]
        %v2908 = vstv %s2907
        %v2909 = vmul.f32 %v2908, %v2870
        %2911 = vrot.lane.b32.xlu0 %v2909, 127
        %v2912 = vpop.permute.xlu0 %2911
        %v2913 = vrot.slane %v2912, 4
        %v2914 = vsel %vm264, %v2912, %v2913
        %v2916 = vadd.f32 %v2882, %v2914
        %s2917 = sld [smem:[#allocation7 + $0x1b]]
        %v2918 = vstv %s2917
        %v2919 = vmul.f32 %v2918, %v2870
        %2921 = vrot.lane.b32.xlu0 %v2919, 127
        %v2922 = vpop.permute.xlu0 %2921
        %v2923 = vrot.slane %v2922, 4
        %v2924 = vsel %vm264, %v2922, %v2923
        %v2926 = vadd.f32 %v2886, %v2924
        %s2927 = sld [smem:[#allocation7 + $0x28]]
        %v2928 = vstv %s2927
        %v2929 = vmul.f32 %v2928, %v2870
        %2931 = vrot.lane.b32.xlu0 %v2929, 126
        %v2932 = vpop.permute.xlu0 %2931
        %v2933 = vrot.slane %v2932, 4
        %v2934 = vsel %vm305, %v2932, %v2933
        %v2936 = vadd.f32 %v2896, %v2934
        %s2937 = sld [smem:[#allocation7 + $0x29]]
        %v2938 = vstv %s2937
        %v2939 = vmul.f32 %v2938, %v2870
        %2941 = vrot.lane.b32.xlu0 %v2939, 126
        %v2942 = vpop.permute.xlu0 %2941
        %v2943 = vrot.slane %v2942, 4
        %v2944 = vsel %vm305, %v2942, %v2943
        %v2946 = vadd.f32 %v2906, %v2944
        %s2947 = sld [smem:[#allocation7 + $0x2a]]
        %v2948 = vstv %s2947
        %v2949 = vmul.f32 %v2948, %v2870
        %2951 = vrot.lane.b32.xlu0 %v2949, 126
        %v2952 = vpop.permute.xlu0 %2951
        %v2953 = vrot.slane %v2952, 4
        %v2954 = vsel %vm305, %v2952, %v2953
        %v2956 = vadd.f32 %v2916, %v2954
        %s2957 = sld [smem:[#allocation7 + $0x2b]]
        %v2958 = vstv %s2957
        %v2959 = vmul.f32 %v2958, %v2870
        %2961 = vrot.lane.b32.xlu0 %v2959, 126
        %v2962 = vpop.permute.xlu0 %2961
        %v2963 = vrot.slane %v2962, 4
        %v2964 = vsel %vm305, %v2962, %v2963
        %v2966 = vadd.f32 %v2926, %v2964
        %s2967 = sld [smem:[#allocation7 + $0x38]]
        %v2968 = vstv %s2967
        %v2969 = vmul.f32 %v2968, %v2870
        %2971 = vrot.lane.b32.xlu0 %v2969, 96
        %v2972 = vpop.permute.xlu0 %2971
        %v2973 = vrot.slane %v2972, 4
        %v2974 = vsel %vm346, %v2972, %v2973
        %v2976 = vadd.f32 %v2936, %v2974
        %s2977 = sld [smem:[#allocation7 + $0x39]]
        %v2978 = vstv %s2977
        %v2979 = vmul.f32 %v2978, %v2870
        %2981 = vrot.lane.b32.xlu0 %v2979, 96
        %v2982 = vpop.permute.xlu0 %2981
        %v2983 = vrot.slane %v2982, 4
        %v2984 = vsel %vm346, %v2982, %v2983
        %v2986 = vadd.f32 %v2946, %v2984
        %s2987 = sld [smem:[#allocation7 + $0x3a]]
        %v2988 = vstv %s2987
        %v2989 = vmul.f32 %v2988, %v2870
        %2991 = vrot.lane.b32.xlu0 %v2989, 96
        %v2992 = vpop.permute.xlu0 %2991
        %v2993 = vrot.slane %v2992, 4
        %v2994 = vsel %vm346, %v2992, %v2993
        %v2996 = vadd.f32 %v2956, %v2994
        %s2997 = sld [smem:[#allocation7 + $0x3b]]
        %v2998 = vstv %s2997
        %v2999 = vmul.f32 %v2998, %v2870
        %3001 = vrot.lane.b32.xlu0 %v2999, 96
        %v3002 = vpop.permute.xlu0 %3001
        %v3003 = vrot.slane %v3002, 4
        %v3004 = vsel %vm346, %v3002, %v3003
        %v3006 = vadd.f32 %v2966, %v3004
        %s3007 = sld [smem:[#allocation7 + $0x48]]
        %v3008 = vstv %s3007
        %v3009 = vmul.f32 %v3008, %v2870
        %3011 = vrot.lane.b32.xlu0 %v3009, 94
        %v3012 = vpop.permute.xlu0 %3011
        %v3013 = vrot.slane %v3012, 4
        %v3014 = vsel %vm387, %v3012, %v3013
        %v3016 = vadd.f32 %v2976, %v3014
        %s3017 = sld [smem:[#allocation7 + $0x49]]
        %v3018 = vstv %s3017
        %v3019 = vmul.f32 %v3018, %v2870
        %3021 = vrot.lane.b32.xlu0 %v3019, 94
        %v3022 = vpop.permute.xlu0 %3021
        %v3023 = vrot.slane %v3022, 4
        %v3024 = vsel %vm387, %v3022, %v3023
        %v3026 = vadd.f32 %v2986, %v3024
        %s3027 = sld [smem:[#allocation7 + $0x4a]]
        %v3028 = vstv %s3027
        %v3029 = vmul.f32 %v3028, %v2870
        %3031 = vrot.lane.b32.xlu0 %v3029, 94
        %v3032 = vpop.permute.xlu0 %3031
        %v3033 = vrot.slane %v3032, 4
        %v3034 = vsel %vm387, %v3032, %v3033
        %v3036 = vadd.f32 %v2996, %v3034
        %s3037 = sld [smem:[#allocation7 + $0x4b]]
        %v3038 = vstv %s3037
        %v3039 = vmul.f32 %v3038, %v2870
        %3041 = vrot.lane.b32.xlu0 %v3039, 94
        %v3042 = vpop.permute.xlu0 %3041
        %v3043 = vrot.slane %v3042, 4
        %v3044 = vsel %vm387, %v3042, %v3043
        %v3046 = vadd.f32 %v3006, %v3044
        %v3047 = vld [vmem:[%s2869 + $0x8] sm:$0xff]
        %s3048 = sld [smem:[#allocation7 + $0x58]]
        %v3049 = vstv %s3048
        %v3050 = vmul.f32 %v3049, %v3047
        %3052 = vrot.lane.b32.xlu0 %v3050, 64
        %v3053 = vpop.permute.xlu0 %3052
        %v3054 = vrot.slane %v3053, 4
        %v3055 = vsel %vm429, %v3054, %v3053
        %v3057 = vadd.f32 %v3016, %v3055
        %s3058 = sld [smem:[#allocation7 + $0x59]]
        %v3059 = vstv %s3058
        %v3060 = vmul.f32 %v3059, %v3047
        %3062 = vrot.lane.b32.xlu0 %v3060, 64
        %v3063 = vpop.permute.xlu0 %3062
        %v3064 = vrot.slane %v3063, 4
        %v3065 = vsel %vm429, %v3064, %v3063
        %v3067 = vadd.f32 %v3026, %v3065
        %s3068 = sld [smem:[#allocation7 + $0x5a]]
        %v3069 = vstv %s3068
        %v3070 = vmul.f32 %v3069, %v3047
        %3072 = vrot.lane.b32.xlu0 %v3070, 64
        %v3073 = vpop.permute.xlu0 %3072
        %v3074 = vrot.slane %v3073, 4
        %v3075 = vsel %vm429, %v3074, %v3073
        %v3077 = vadd.f32 %v3036, %v3075
        %s3078 = sld [smem:[#allocation7 + $0x5b]]
        %v3079 = vstv %s3078
        %v3080 = vmul.f32 %v3079, %v3047
        %3082 = vrot.lane.b32.xlu0 %v3080, 64
        %v3083 = vpop.permute.xlu0 %3082
        %v3084 = vrot.slane %v3083, 4
        %v3085 = vsel %vm429, %v3084, %v3083
        %v3087 = vadd.f32 %v3046, %v3085
        %s3088 = sld [smem:[#allocation7 + $0x68]]
        %v3089 = vstv %s3088
        %v3090 = vmul.f32 %v3089, %v3047
        %3092 = vrot.lane.b32.xlu0 %v3090, 63
        %v3093 = vpop.permute.xlu0 %3092
        %v3094 = vrot.slane %v3093, 4
        %v3095 = vsel %vm470, %v3094, %v3093
        %v3097 = vadd.f32 %v3057, %v3095
        %s3098 = sld [smem:[#allocation7 + $0x69]]
        %v3099 = vstv %s3098
        %v3100 = vmul.f32 %v3099, %v3047
        %3102 = vrot.lane.b32.xlu0 %v3100, 63
        %v3103 = vpop.permute.xlu0 %3102
        %v3104 = vrot.slane %v3103, 4
        %v3105 = vsel %vm470, %v3104, %v3103
        %v3107 = vadd.f32 %v3067, %v3105
        %s3108 = sld [smem:[#allocation7 + $0x6a]]
        %v3109 = vstv %s3108
        %v3110 = vmul.f32 %v3109, %v3047
        %3112 = vrot.lane.b32.xlu0 %v3110, 63
        %v3113 = vpop.permute.xlu0 %3112
        %v3114 = vrot.slane %v3113, 4
        %v3115 = vsel %vm470, %v3114, %v3113
        %v3117 = vadd.f32 %v3077, %v3115
        %s3118 = sld [smem:[#allocation7 + $0x6b]]
        %v3119 = vstv %s3118
        %v3120 = vmul.f32 %v3119, %v3047
        %3122 = vrot.lane.b32.xlu0 %v3120, 63
        %v3123 = vpop.permute.xlu0 %3122
        %v3124 = vrot.slane %v3123, 4
        %v3125 = vsel %vm470, %v3124, %v3123
        %v3127 = vadd.f32 %v3087, %v3125
        %s3128 = sld [smem:[#allocation7 + $0x78]]
        %v3129 = vstv %s3128
        %v3130 = vmul.f32 %v3129, %v3047
        %3132 = vrot.lane.b32.xlu0 %v3130, 62
        %v3133 = vpop.permute.xlu0 %3132
        %v3134 = vrot.slane %v3133, 4
        %v3135 = vsel %vm511, %v3134, %v3133
        %v3137 = vadd.f32 %v3097, %v3135
        %s3138 = sld [smem:[#allocation7 + $0x79]]
        %v3139 = vstv %s3138
        %v3140 = vmul.f32 %v3139, %v3047
        %3142 = vrot.lane.b32.xlu0 %v3140, 62
        %v3143 = vpop.permute.xlu0 %3142
        %v3144 = vrot.slane %v3143, 4
        %v3145 = vsel %vm511, %v3144, %v3143
        %v3147 = vadd.f32 %v3107, %v3145
        %s3148 = sld [smem:[#allocation7 + $0x7a]]
        %v3149 = vstv %s3148
        %v3150 = vmul.f32 %v3149, %v3047
        %3152 = vrot.lane.b32.xlu0 %v3150, 62
        %v3153 = vpop.permute.xlu0 %3152
        %v3154 = vrot.slane %v3153, 4
        %v3155 = vsel %vm511, %v3154, %v3153
        %v3157 = vadd.f32 %v3117, %v3155
        %s3158 = sld [smem:[#allocation7 + $0x7b]]
        %v3159 = vstv %s3158
        %v3160 = vmul.f32 %v3159, %v3047
        %3162 = vrot.lane.b32.xlu0 %v3160, 62
        %v3163 = vpop.permute.xlu0 %3162
        %v3164 = vrot.slane %v3163, 4
        %v3165 = vsel %vm511, %v3164, %v3163
        %v3167 = vadd.f32 %v3127, %v3165
        %s3168 = sld [smem:[#allocation7 + $0x88]]
        %v3169 = vstv %s3168
        %v3170 = vmul.f32 %v3169, %v2870
        %3172 = vrot.lane.b32.xlu0 %v3170, 66
        %v3173 = vpop.permute.xlu0 %3172
        %v3174 = vrot.slane %v3173, 4
        %v3175 = vsel %vm552, %v3174, %v3173
        %v3177 = vadd.f32 %v3137, %v3175
        %s3178 = sld [smem:[#allocation7 + $0x89]]
        %v3179 = vstv %s3178
        %v3180 = vmul.f32 %v3179, %v2870
        %3182 = vrot.lane.b32.xlu0 %v3180, 66
        %v3183 = vpop.permute.xlu0 %3182
        %v3184 = vrot.slane %v3183, 4
        %v3185 = vsel %vm552, %v3184, %v3183
        %v3187 = vadd.f32 %v3147, %v3185
        %s3188 = sld [smem:[#allocation7 + $0x8a]]
        %v3189 = vstv %s3188
        %v3190 = vmul.f32 %v3189, %v2870
        %3192 = vrot.lane.b32.xlu0 %v3190, 66
        %v3193 = vpop.permute.xlu0 %3192
        %v3194 = vrot.slane %v3193, 4
        %v3195 = vsel %vm552, %v3194, %v3193
        %v3197 = vadd.f32 %v3157, %v3195
        %s3198 = sld [smem:[#allocation7 + $0x8b]]
        %v3199 = vstv %s3198
        %v3200 = vmul.f32 %v3199, %v2870
        %3202 = vrot.lane.b32.xlu0 %v3200, 66
        %v3203 = vpop.permute.xlu0 %3202
        %v3204 = vrot.slane %v3203, 4
        %v3205 = vsel %vm552, %v3204, %v3203
        %v3207 = vadd.f32 %v3167, %v3205
        %s3208 = sld [smem:[#allocation7 + $0x98]]
        %v3209 = vstv %s3208
        %v3210 = vmul.f32 %v3209, %v2870
        %3212 = vrot.lane.b32.xlu0 %v3210, 63
        %v3213 = vpop.permute.xlu0 %3212
        %v3214 = vrot.slane %v3213, 4
        %v3215 = vsel %vm470, %v3214, %v3213
        %v3217 = vadd.f32 %v3177, %v3215
        %s3218 = sld [smem:[#allocation7 + $0x99]]
        %v3219 = vstv %s3218
        %v3220 = vmul.f32 %v3219, %v2870
        %3222 = vrot.lane.b32.xlu0 %v3220, 63
        %v3223 = vpop.permute.xlu0 %3222
        %v3224 = vrot.slane %v3223, 4
        %v3225 = vsel %vm470, %v3224, %v3223
        %v3227 = vadd.f32 %v3187, %v3225
        %s3228 = sld [smem:[#allocation7 + $0x9a]]
        %v3229 = vstv %s3228
        %v3230 = vmul.f32 %v3229, %v2870
        %3232 = vrot.lane.b32.xlu0 %v3230, 63
        %v3233 = vpop.permute.xlu0 %3232
        %v3234 = vrot.slane %v3233, 4
        %v3235 = vsel %vm470, %v3234, %v3233
        %v3237 = vadd.f32 %v3197, %v3235
        %s3238 = sld [smem:[#allocation7 + $0x9b]]
        %v3239 = vstv %s3238
        %v3240 = vmul.f32 %v3239, %v2870
        %3242 = vrot.lane.b32.xlu0 %v3240, 63
        %v3243 = vpop.permute.xlu0 %3242
        %v3244 = vrot.slane %v3243, 4
        %v3245 = vsel %vm470, %v3244, %v3243
        %v3247 = vadd.f32 %v3207, %v3245
        %s3248 = sld [smem:[#allocation7 + $0xa8]]
        %v3249 = vstv %s3248
        %v3250 = vmul.f32 %v3249, %v2870
        %3252 = vrot.lane.b32.xlu0 %v3250, 60
        %v3253 = vpop.permute.xlu0 %3252
        %v3254 = vrot.slane %v3253, 4
        %v3255 = vsel %vm633, %v3254, %v3253
        %v3257 = vadd.f32 %v3217, %v3255
        %s3258 = sld [smem:[#allocation7 + $0xa9]]
        %v3259 = vstv %s3258
        %v3260 = vmul.f32 %v3259, %v2870
        %3262 = vrot.lane.b32.xlu0 %v3260, 60
        %v3263 = vpop.permute.xlu0 %3262
        %v3264 = vrot.slane %v3263, 4
        %v3265 = vsel %vm633, %v3264, %v3263
        %v3267 = vadd.f32 %v3227, %v3265
        %s3268 = sld [smem:[#allocation7 + $0xaa]]
        %v3269 = vstv %s3268
        %v3270 = vmul.f32 %v3269, %v2870
        %3272 = vrot.lane.b32.xlu0 %v3270, 60
        %v3273 = vpop.permute.xlu0 %3272
        %v3274 = vrot.slane %v3273, 4
        %v3275 = vsel %vm633, %v3274, %v3273
        %v3277 = vadd.f32 %v3237, %v3275
        %s3278 = sld [smem:[#allocation7 + $0xab]]
        %v3279 = vstv %s3278
        %v3280 = vmul.f32 %v3279, %v2870
        %3282 = vrot.lane.b32.xlu0 %v3280, 60
        %v3283 = vpop.permute.xlu0 %3282
        %v3284 = vrot.slane %v3283, 4
        %v3285 = vsel %vm633, %v3284, %v3283
        %v3287 = vadd.f32 %v3247, %v3285
        %s3288 = sld [smem:[#allocation7 + $0xb8]]
        %v3289 = vstv %s3288
        %v3290 = vmul.f32 %v3289, %v2870
        %3292 = vrot.lane.b32.xlu0 %v3290, 98
        %v3293 = vpop.permute.xlu0 %3292
        %v3294 = vrot.slane %v3293, 4
        %v3295 = vsel %vm674, %v3293, %v3294
        %v3297 = vadd.f32 %v3257, %v3295
        %s3298 = sld [smem:[#allocation7 + $0xb9]]
        %v3299 = vstv %s3298
        %v3300 = vmul.f32 %v3299, %v2870
        %3302 = vrot.lane.b32.xlu0 %v3300, 98
        %v3303 = vpop.permute.xlu0 %3302
        %v3304 = vrot.slane %v3303, 4
        %v3305 = vsel %vm674, %v3303, %v3304
        %v3307 = vadd.f32 %v3267, %v3305
        %s3308 = sld [smem:[#allocation7 + $0xba]]
        %v3309 = vstv %s3308
        %v3310 = vmul.f32 %v3309, %v2870
        %3312 = vrot.lane.b32.xlu0 %v3310, 98
        %v3313 = vpop.permute.xlu0 %3312
        %v3314 = vrot.slane %v3313, 4
        %v3315 = vsel %vm674, %v3313, %v3314
        %v3317 = vadd.f32 %v3277, %v3315
        %s3318 = sld [smem:[#allocation7 + $0xbb]]
        %v3319 = vstv %s3318
        %v3320 = vmul.f32 %v3319, %v2870
        %3322 = vrot.lane.b32.xlu0 %v3320, 98
        %v3323 = vpop.permute.xlu0 %3322
        %v3324 = vrot.slane %v3323, 4
        %v3325 = vsel %vm674, %v3323, %v3324
        %v3327 = vadd.f32 %v3287, %v3325
        %s3328 = sld [smem:[#allocation7 + $0xc8]]
        %v3329 = vstv %s3328
        %v3330 = vmul.f32 %v3329, %v2870
        %3332 = vrot.lane.b32.xlu0 %v3330, 92
        %v3333 = vpop.permute.xlu0 %3332
        %v3334 = vrot.slane %v3333, 4
        %v3335 = vsel %vm715, %v3333, %v3334
        %v3337 = vadd.f32 %v3297, %v3335
        %s3338 = sld [smem:[#allocation7 + $0xc9]]
        %v3339 = vstv %s3338
        %v3340 = vmul.f32 %v3339, %v2870
        %3342 = vrot.lane.b32.xlu0 %v3340, 92
        %v3343 = vpop.permute.xlu0 %3342
        %v3344 = vrot.slane %v3343, 4
        %v3345 = vsel %vm715, %v3343, %v3344
        %v3347 = vadd.f32 %v3307, %v3345
        %s3348 = sld [smem:[#allocation7 + $0xca]]
        %v3349 = vstv %s3348
        %v3350 = vmul.f32 %v3349, %v2870
        %3352 = vrot.lane.b32.xlu0 %v3350, 92
        %v3353 = vpop.permute.xlu0 %3352
        %v3354 = vrot.slane %v3353, 4
        %v3355 = vsel %vm715, %v3353, %v3354
        %v3357 = vadd.f32 %v3317, %v3355
        %s3358 = sld [smem:[#allocation7 + $0xcb]]
        %v3359 = vstv %s3358
        %v3360 = vmul.f32 %v3359, %v2870
        %3362 = vrot.lane.b32.xlu0 %v3360, 92
        %v3363 = vpop.permute.xlu0 %3362
        %v3364 = vrot.slane %v3363, 4
        %v3365 = vsel %vm715, %v3363, %v3364
        %v3367 = vadd.f32 %v3327, %v3365
        %s3368 = sld [smem:[#allocation7 + $0xd8]]
        %v3369 = vstv %s3368
        %v3370 = vmul.f32 %v3369, %v3047
        %3372 = vrot.lane.b32.xlu0 %v3370, 2
        %v3373 = vpop.permute.xlu0 %3372
        %v3374 = vrot.slane %v3373, 4
        %v3375 = vsel %vm756, %v3374, %v3373
        %v3377 = vadd.f32 %v3337, %v3375
        %s3378 = sld [smem:[#allocation7 + $0xd9]]
        %v3379 = vstv %s3378
        %v3380 = vmul.f32 %v3379, %v3047
        %3382 = vrot.lane.b32.xlu0 %v3380, 2
        %v3383 = vpop.permute.xlu0 %3382
        %v3384 = vrot.slane %v3383, 4
        %v3385 = vsel %vm756, %v3384, %v3383
        %v3387 = vadd.f32 %v3347, %v3385
        %s3388 = sld [smem:[#allocation7 + $0xda]]
        %v3389 = vstv %s3388
        %v3390 = vmul.f32 %v3389, %v3047
        %3392 = vrot.lane.b32.xlu0 %v3390, 2
        %v3393 = vpop.permute.xlu0 %3392
        %v3394 = vrot.slane %v3393, 4
        %v3395 = vsel %vm756, %v3394, %v3393
        %v3397 = vadd.f32 %v3357, %v3395
        %s3398 = sld [smem:[#allocation7 + $0xdb]]
        %v3399 = vstv %s3398
        %v3400 = vmul.f32 %v3399, %v3047
        %3402 = vrot.lane.b32.xlu0 %v3400, 2
        %v3403 = vpop.permute.xlu0 %3402
        %v3404 = vrot.slane %v3403, 4
        %v3405 = vsel %vm756, %v3404, %v3403
        %v3407 = vadd.f32 %v3367, %v3405
        %s3408 = sld [smem:[#allocation7 + $0xe8]]
        %v3409 = vstv %s3408
        %v3410 = vmul.f32 %v3409, %v3047
        %3412 = vrot.lane.b32.xlu0 %v3410, 127
        %v3413 = vpop.permute.xlu0 %3412
        %v3414 = vrot.slane %v3413, 4
        %v3415 = vsel %vm264, %v3413, %v3414
        %v3417 = vadd.f32 %v3377, %v3415
        %s3418 = sld [smem:[#allocation7 + $0xe9]]
        %v3419 = vstv %s3418
        %v3420 = vmul.f32 %v3419, %v3047
        %3422 = vrot.lane.b32.xlu0 %v3420, 127
        %v3423 = vpop.permute.xlu0 %3422
        %v3424 = vrot.slane %v3423, 4
        %v3425 = vsel %vm264, %v3423, %v3424
        %v3427 = vadd.f32 %v3387, %v3425
        %s3428 = sld [smem:[#allocation7 + $0xea]]
        %v3429 = vstv %s3428
        %v3430 = vmul.f32 %v3429, %v3047
        %3432 = vrot.lane.b32.xlu0 %v3430, 127
        %v3433 = vpop.permute.xlu0 %3432
        %v3434 = vrot.slane %v3433, 4
        %v3435 = vsel %vm264, %v3433, %v3434
        %v3437 = vadd.f32 %v3397, %v3435
        %s3438 = sld [smem:[#allocation7 + $0xeb]]
        %v3439 = vstv %s3438
        %v3440 = vmul.f32 %v3439, %v3047
        %3442 = vrot.lane.b32.xlu0 %v3440, 127
        %v3443 = vpop.permute.xlu0 %3442
        %v3444 = vrot.slane %v3443, 4
        %v3445 = vsel %vm264, %v3443, %v3444
        %v3447 = vadd.f32 %v3407, %v3445
        %s3448 = sld [smem:[#allocation7 + $0xf8]]
        %v3449 = vstv %s3448
        %v3450 = vmul.f32 %v3449, %v3047
        %3452 = vrot.lane.b32.xlu0 %v3450, 124
        %v3453 = vpop.permute.xlu0 %3452
        %v3454 = vrot.slane %v3453, 4
        %v3455 = vsel %vm837, %v3453, %v3454
        %v3457 = vadd.f32 %v3417, %v3455
        %s3458 = sld [smem:[#allocation7 + $0xf9]]
        %v3459 = vstv %s3458
        %v3460 = vmul.f32 %v3459, %v3047
        %3462 = vrot.lane.b32.xlu0 %v3460, 124
        %v3463 = vpop.permute.xlu0 %3462
        %v3464 = vrot.slane %v3463, 4
        %v3465 = vsel %vm837, %v3463, %v3464
        %v3467 = vadd.f32 %v3427, %v3465
        %s3468 = sld [smem:[#allocation7 + $0xfa]]
        %v3469 = vstv %s3468
        %v3470 = vmul.f32 %v3469, %v3047
        %3472 = vrot.lane.b32.xlu0 %v3470, 124
        %v3473 = vpop.permute.xlu0 %3472
        %v3474 = vrot.slane %v3473, 4
        %v3475 = vsel %vm837, %v3473, %v3474
        %v3477 = vadd.f32 %v3437, %v3475
        %s3478 = sld [smem:[#allocation7 + $0xfb]]
        %v3479 = vstv %s3478
        %v3480 = vmul.f32 %v3479, %v3047
        %3482 = vrot.lane.b32.xlu0 %v3480, 124
        %v3483 = vpop.permute.xlu0 %3482
        %v3484 = vrot.slane %v3483, 4
        %v3485 = vsel %vm837, %v3483, %v3484
        %v3487 = vadd.f32 %v3447, %v3485
        %v3488 = vld [vmem:[%s2869] sm:$0xff]
        %s3489 = sld [smem:[#allocation7 + $0x108]]
        %v3490 = vstv %s3489
        %v3491 = vmul.f32 %v3490, %v3488
        %3493 = vrot.lane.b32.xlu0 %v3491, 4
        %v3494 = vpop.permute.xlu0 %3493
        %v3495 = vrot.slane %v3494, 4
        %v3496 = vsel %vm879, %v3495, %v3494
        %v3498 = vadd.f32 %v3457, %v3496
        %s3499 = sld [smem:[#allocation7 + $0x109]]
        %v3500 = vstv %s3499
        %v3501 = vmul.f32 %v3500, %v3488
        %3503 = vrot.lane.b32.xlu0 %v3501, 4
        %v3504 = vpop.permute.xlu0 %3503
        %v3505 = vrot.slane %v3504, 4
        %v3506 = vsel %vm879, %v3505, %v3504
        %v3508 = vadd.f32 %v3467, %v3506
        %s3509 = sld [smem:[#allocation7 + $0x10a]]
        %v3510 = vstv %s3509
        %v3511 = vmul.f32 %v3510, %v3488
        %3513 = vrot.lane.b32.xlu0 %v3511, 4
        %v3514 = vpop.permute.xlu0 %3513
        %v3515 = vrot.slane %v3514, 4
        %v3516 = vsel %vm879, %v3515, %v3514
        %v3518 = vadd.f32 %v3477, %v3516
        %s3519 = sld [smem:[#allocation7 + $0x10b]]
        %v3520 = vstv %s3519
        %v3521 = vmul.f32 %v3520, %v3488
        %3523 = vrot.lane.b32.xlu0 %v3521, 4
        %v3524 = vpop.permute.xlu0 %3523
        %v3525 = vrot.slane %v3524, 4
        %v3526 = vsel %vm879, %v3525, %v3524
        %v3528 = vadd.f32 %v3487, %v3526
        %s3529 = sld [smem:[#allocation7 + $0x118]]
        %v3530 = vstv %s3529
        %v3531 = vmul.f32 %v3530, %v3488
        %3533 = vrot.lane.b32.xlu0 %v3531, 127
        %v3534 = vpop.permute.xlu0 %3533
        %v3535 = vrot.slane %v3534, 4
        %v3536 = vsel %vm264, %v3534, %v3535
        %v3538 = vadd.f32 %v3498, %v3536
        %s3539 = sld [smem:[#allocation7 + $0x119]]
        %v3540 = vstv %s3539
        %v3541 = vmul.f32 %v3540, %v3488
        %3543 = vrot.lane.b32.xlu0 %v3541, 127
        %v3544 = vpop.permute.xlu0 %3543
        %v3545 = vrot.slane %v3544, 4
        %v3546 = vsel %vm264, %v3544, %v3545
        %v3548 = vadd.f32 %v3508, %v3546
        %s3549 = sld [smem:[#allocation7 + $0x11a]]
        %v3550 = vstv %s3549
        %v3551 = vmul.f32 %v3550, %v3488
        %3553 = vrot.lane.b32.xlu0 %v3551, 127
        %v3554 = vpop.permute.xlu0 %3553
        %v3555 = vrot.slane %v3554, 4
        %v3556 = vsel %vm264, %v3554, %v3555
        %v3558 = vadd.f32 %v3518, %v3556
        %s3559 = sld [smem:[#allocation7 + $0x11b]]
        %v3560 = vstv %s3559
        %v3561 = vmul.f32 %v3560, %v3488
        %3563 = vrot.lane.b32.xlu0 %v3561, 127
        %v3564 = vpop.permute.xlu0 %3563
        %v3565 = vrot.slane %v3564, 4
        %v3566 = vsel %vm264, %v3564, %v3565
        %v3568 = vadd.f32 %v3528, %v3566
        %s3569 = sld [smem:[#allocation7 + $0x128]]
        %v3570 = vstv %s3569
        %v3571 = vmul.f32 %v3570, %v3488
        %3573 = vrot.lane.b32.xlu0 %v3571, 122
        %v3574 = vpop.permute.xlu0 %3573
        %v3575 = vrot.slane %v3574, 4
        %v3576 = vsel %vm960, %v3574, %v3575
        %v3578 = vadd.f32 %v3538, %v3576
        %s3579 = sld [smem:[#allocation7 + $0x129]]
        %v3580 = vstv %s3579
        %v3581 = vmul.f32 %v3580, %v3488
        %3583 = vrot.lane.b32.xlu0 %v3581, 122
        %v3584 = vpop.permute.xlu0 %3583
        %v3585 = vrot.slane %v3584, 4
        %v3586 = vsel %vm960, %v3584, %v3585
        %v3588 = vadd.f32 %v3548, %v3586
        %s3589 = sld [smem:[#allocation7 + $0x12a]]
        %v3590 = vstv %s3589
        %v3591 = vmul.f32 %v3590, %v3488
        %3593 = vrot.lane.b32.xlu0 %v3591, 122
        %v3594 = vpop.permute.xlu0 %3593
        %v3595 = vrot.slane %v3594, 4
        %v3596 = vsel %vm960, %v3594, %v3595
        %v3598 = vadd.f32 %v3558, %v3596
        %s3599 = sld [smem:[#allocation7 + $0x12b]]
        %v3600 = vstv %s3599
        %v3601 = vmul.f32 %v3600, %v3488
        %3603 = vrot.lane.b32.xlu0 %v3601, 122
        %v3604 = vpop.permute.xlu0 %3603
        %v3605 = vrot.slane %v3604, 4
        %v3606 = vsel %vm960, %v3604, %v3605
        %v3608 = vadd.f32 %v3568, %v3606
        %s3609 = sld [smem:[#allocation7 + $0x138]]
        %v3610 = vstv %s3609
        %v3611 = vmul.f32 %v3610, %v2870
        %3613 = vrot.lane.b32.xlu0 %v3611, 100
        %v3614 = vpop.permute.xlu0 %3613
        %v3615 = vrot.slane %v3614, 4
        %v3616 = vsel %vm1001, %v3614, %v3615
        %v3618 = vadd.f32 %v3578, %v3616
        %s3619 = sld [smem:[#allocation7 + $0x139]]
        %v3620 = vstv %s3619
        %v3621 = vmul.f32 %v3620, %v2870
        %3623 = vrot.lane.b32.xlu0 %v3621, 100
        %v3624 = vpop.permute.xlu0 %3623
        %v3625 = vrot.slane %v3624, 4
        %v3626 = vsel %vm1001, %v3624, %v3625
        %v3628 = vadd.f32 %v3588, %v3626
        %s3629 = sld [smem:[#allocation7 + $0x13a]]
        %v3630 = vstv %s3629
        %v3631 = vmul.f32 %v3630, %v2870
        %3633 = vrot.lane.b32.xlu0 %v3631, 100
        %v3634 = vpop.permute.xlu0 %3633
        %v3635 = vrot.slane %v3634, 4
        %v3636 = vsel %vm1001, %v3634, %v3635
        %v3638 = vadd.f32 %v3598, %v3636
        %s3639 = sld [smem:[#allocation7 + $0x13b]]
        %v3640 = vstv %s3639
        %v3641 = vmul.f32 %v3640, %v2870
        %3643 = vrot.lane.b32.xlu0 %v3641, 100
        %v3644 = vpop.permute.xlu0 %3643
        %v3645 = vrot.slane %v3644, 4
        %v3646 = vsel %vm1001, %v3644, %v3645
        %v3648 = vadd.f32 %v3608, %v3646
        %s3649 = sld [smem:[#allocation7 + $0x148]]
        %v3650 = vstv %s3649
        %v3651 = vmul.f32 %v3650, %v2870
        %3653 = vrot.lane.b32.xlu0 %v3651, 90
        %v3654 = vpop.permute.xlu0 %3653
        %v3655 = vrot.slane %v3654, 4
        %v3656 = vsel %vm1042, %v3654, %v3655
        %v3658 = vadd.f32 %v3618, %v3656
        %s3659 = sld [smem:[#allocation7 + $0x149]]
        %v3660 = vstv %s3659
        %v3661 = vmul.f32 %v3660, %v2870
        %3663 = vrot.lane.b32.xlu0 %v3661, 90
        %v3664 = vpop.permute.xlu0 %3663
        %v3665 = vrot.slane %v3664, 4
        %v3666 = vsel %vm1042, %v3664, %v3665
        %v3668 = vadd.f32 %v3628, %v3666
        %s3669 = sld [smem:[#allocation7 + $0x14a]]
        %v3670 = vstv %s3669
        %v3671 = vmul.f32 %v3670, %v2870
        %3673 = vrot.lane.b32.xlu0 %v3671, 90
        %v3674 = vpop.permute.xlu0 %3673
        %v3675 = vrot.slane %v3674, 4
        %v3676 = vsel %vm1042, %v3674, %v3675
        %v3678 = vadd.f32 %v3638, %v3676
        %s3679 = sld [smem:[#allocation7 + $0x14b]]
        %v3680 = vstv %s3679
        %v3681 = vmul.f32 %v3680, %v2870
        %3683 = vrot.lane.b32.xlu0 %v3681, 90
        %v3684 = vpop.permute.xlu0 %3683
        %v3685 = vrot.slane %v3684, 4
        %v3686 = vsel %vm1042, %v3684, %v3685
        %v3688 = vadd.f32 %v3648, %v3686
        %v3689 = vld [vmem:[%s2869 + $0xc] sm:$0xff]
        %s3690 = sld [smem:[#allocation7 + $0x158]]
        %v3691 = vstv %s3690
        %v3692 = vmul.f32 %v3691, %v3689
        %3694 = vrot.lane.b32.xlu0 %v3692, 68
        %v3695 = vpop.permute.xlu0 %3694
        %v3696 = vrot.slane %v3695, 4
        %v3697 = vsel %vm1084, %v3696, %v3695
        %v3699 = vadd.f32 %v3658, %v3697
        %s3700 = sld [smem:[#allocation7 + $0x159]]
        %v3701 = vstv %s3700
        %v3702 = vmul.f32 %v3701, %v3689
        %3704 = vrot.lane.b32.xlu0 %v3702, 68
        %v3705 = vpop.permute.xlu0 %3704
        %v3706 = vrot.slane %v3705, 4
        %v3707 = vsel %vm1084, %v3706, %v3705
        %v3709 = vadd.f32 %v3668, %v3707
        %s3710 = sld [smem:[#allocation7 + $0x15a]]
        %v3711 = vstv %s3710
        %v3712 = vmul.f32 %v3711, %v3689
        %3714 = vrot.lane.b32.xlu0 %v3712, 68
        %v3715 = vpop.permute.xlu0 %3714
        %v3716 = vrot.slane %v3715, 4
        %v3717 = vsel %vm1084, %v3716, %v3715
        %v3719 = vadd.f32 %v3678, %v3717
        %s3720 = sld [smem:[#allocation7 + $0x15b]]
        %v3721 = vstv %s3720
        %v3722 = vmul.f32 %v3721, %v3689
        %3724 = vrot.lane.b32.xlu0 %v3722, 68
        %v3725 = vpop.permute.xlu0 %3724
        %v3726 = vrot.slane %v3725, 4
        %v3727 = vsel %vm1084, %v3726, %v3725
        %v3729 = vadd.f32 %v3688, %v3727
        %s3730 = sld [smem:[#allocation7 + $0x168]]
        %v3731 = vstv %s3730
        %v3732 = vmul.f32 %v3731, %v3689
        %3734 = vrot.lane.b32.xlu0 %v3732, 63
        %v3735 = vpop.permute.xlu0 %3734
        %v3736 = vrot.slane %v3735, 4
        %v3737 = vsel %vm470, %v3736, %v3735
        %v3739 = vadd.f32 %v3699, %v3737
        %s3740 = sld [smem:[#allocation7 + $0x169]]
        %v3741 = vstv %s3740
        %v3742 = vmul.f32 %v3741, %v3689
        %3744 = vrot.lane.b32.xlu0 %v3742, 63
        %v3745 = vpop.permute.xlu0 %3744
        %v3746 = vrot.slane %v3745, 4
        %v3747 = vsel %vm470, %v3746, %v3745
        %v3749 = vadd.f32 %v3709, %v3747
        %s3750 = sld [smem:[#allocation7 + $0x16a]]
        %v3751 = vstv %s3750
        %v3752 = vmul.f32 %v3751, %v3689
        %3754 = vrot.lane.b32.xlu0 %v3752, 63
        %v3755 = vpop.permute.xlu0 %3754
        %v3756 = vrot.slane %v3755, 4
        %v3757 = vsel %vm470, %v3756, %v3755
        %v3759 = vadd.f32 %v3719, %v3757
        %s3760 = sld [smem:[#allocation7 + $0x16b]]
        %v3761 = vstv %s3760
        %v3762 = vmul.f32 %v3761, %v3689
        %3764 = vrot.lane.b32.xlu0 %v3762, 63
        %v3765 = vpop.permute.xlu0 %3764
        %v3766 = vrot.slane %v3765, 4
        %v3767 = vsel %vm470, %v3766, %v3765
        %v3769 = vadd.f32 %v3729, %v3767
        %s3770 = sld [smem:[#allocation7 + $0x178]]
        %v3771 = vstv %s3770
        %v3772 = vmul.f32 %v3771, %v3689
        %3774 = vrot.lane.b32.xlu0 %v3772, 58
        %v3775 = vpop.permute.xlu0 %3774
        %v3776 = vrot.slane %v3775, 4
        %v3777 = vsel %vm1165, %v3776, %v3775
        %v3779 = vadd.f32 %v3739, %v3777
        %s3780 = sld [smem:[#allocation7 + $0x179]]
        %v3781 = vstv %s3780
        %v3782 = vmul.f32 %v3781, %v3689
        %3784 = vrot.lane.b32.xlu0 %v3782, 58
        %v3785 = vpop.permute.xlu0 %3784
        %v3786 = vrot.slane %v3785, 4
        %v3787 = vsel %vm1165, %v3786, %v3785
        %v3789 = vadd.f32 %v3749, %v3787
        %s3790 = sld [smem:[#allocation7 + $0x17a]]
        %v3791 = vstv %s3790
        %v3792 = vmul.f32 %v3791, %v3689
        %3794 = vrot.lane.b32.xlu0 %v3792, 58
        %v3795 = vpop.permute.xlu0 %3794
        %v3796 = vrot.slane %v3795, 4
        %v3797 = vsel %vm1165, %v3796, %v3795
        %v3799 = vadd.f32 %v3759, %v3797
        %s3800 = sld [smem:[#allocation7 + $0x17b]]
        %v3801 = vstv %s3800
        %v3802 = vmul.f32 %v3801, %v3689
        %3804 = vrot.lane.b32.xlu0 %v3802, 58
        %v3805 = vpop.permute.xlu0 %3804
        %v3806 = vrot.slane %v3805, 4
        %v3807 = vsel %vm1165, %v3806, %v3805
        %v3809 = vadd.f32 %v3769, %v3807
        %v3810 = vld [vmem:[%s2869] sm:$0xf]
        %s3811 = sld [smem:[#allocation7 + $0x188]]
        %v3812 = vstv %s3811
        %v3813 = vmul.f32 %v3812, %v3810
        %3815 = vrot.lane.b32.xlu0 %v3813, 70
        %v3816 = vpop.permute.xlu0 %3815
        %v3817 = vrot.slane %v3816, 4
        %v3818 = vsel %vm1207, %v3817, %v3816
        %v3820 = vadd.f32 %v3779, %v3818
        %s3821 = sld [smem:[#allocation7 + $0x189]]
        %v3822 = vstv %s3821
        %v3823 = vmul.f32 %v3822, %v3810
        %3825 = vrot.lane.b32.xlu0 %v3823, 70
        %v3826 = vpop.permute.xlu0 %3825
        %v3827 = vrot.slane %v3826, 4
        %v3828 = vsel %vm1207, %v3827, %v3826
        %v3830 = vadd.f32 %v3789, %v3828
        %s3831 = sld [smem:[#allocation7 + $0x18a]]
        %v3832 = vstv %s3831
        %v3833 = vmul.f32 %v3832, %v3810
        %3835 = vrot.lane.b32.xlu0 %v3833, 70
        %v3836 = vpop.permute.xlu0 %3835
        %v3837 = vrot.slane %v3836, 4
        %v3838 = vsel %vm1207, %v3837, %v3836
        %v3840 = vadd.f32 %v3799, %v3838
        %s3841 = sld [smem:[#allocation7 + $0x18b]]
        %v3842 = vstv %s3841
        %v3843 = vmul.f32 %v3842, %v3810
        %3845 = vrot.lane.b32.xlu0 %v3843, 70
        %v3846 = vpop.permute.xlu0 %3845
        %v3847 = vrot.slane %v3846, 4
        %v3848 = vsel %vm1207, %v3847, %v3846
        %v3850 = vadd.f32 %v3809, %v3848
        %s3851 = sld [smem:[#allocation7 + $0x198]]
        %v3852 = vstv %s3851
        %v3853 = vmul.f32 %v3852, %v3488
        %3855 = vrot.lane.b32.xlu0 %v3853, 63
        %v3856 = vpop.permute.xlu0 %3855
        %v3857 = vrot.slane %v3856, 4
        %v3858 = vsel %vm470, %v3857, %v3856
        %v3860 = vadd.f32 %v3820, %v3858
        %s3861 = sld [smem:[#allocation7 + $0x199]]
        %v3862 = vstv %s3861
        %v3863 = vmul.f32 %v3862, %v3488
        %3865 = vrot.lane.b32.xlu0 %v3863, 63
        %v3866 = vpop.permute.xlu0 %3865
        %v3867 = vrot.slane %v3866, 4
        %v3868 = vsel %vm470, %v3867, %v3866
        %v3870 = vadd.f32 %v3830, %v3868
        %s3871 = sld [smem:[#allocation7 + $0x19a]]
        %v3872 = vstv %s3871
        %v3873 = vmul.f32 %v3872, %v3488
        %3875 = vrot.lane.b32.xlu0 %v3873, 63
        %v3876 = vpop.permute.xlu0 %3875
        %v3877 = vrot.slane %v3876, 4
        %v3878 = vsel %vm470, %v3877, %v3876
        %v3880 = vadd.f32 %v3840, %v3878
        %s3881 = sld [smem:[#allocation7 + $0x19b]]
        %v3882 = vstv %s3881
        %v3883 = vmul.f32 %v3882, %v3488
        %3885 = vrot.lane.b32.xlu0 %v3883, 63
        %v3886 = vpop.permute.xlu0 %3885
        %v3887 = vrot.slane %v3886, 4
        %v3888 = vsel %vm470, %v3887, %v3886
        %v3890 = vadd.f32 %v3850, %v3888
        %s3891 = sld [smem:[#allocation7 + $0x1a8]]
        %v3892 = vstv %s3891
        %v3893 = vmul.f32 %v3892, %v3488
        %3895 = vrot.lane.b32.xlu0 %v3893, 56
        %v3896 = vpop.permute.xlu0 %3895
        %v3897 = vrot.slane %v3896, 4
        %v3898 = vsel %vm1288, %v3897, %v3896
        %v3900 = vadd.f32 %v3860, %v3898
        %s3901 = sld [smem:[#allocation7 + $0x1a9]]
        %v3902 = vstv %s3901
        %v3903 = vmul.f32 %v3902, %v3488
        %3905 = vrot.lane.b32.xlu0 %v3903, 56
        %v3906 = vpop.permute.xlu0 %3905
        %v3907 = vrot.slane %v3906, 4
        %v3908 = vsel %vm1288, %v3907, %v3906
        %v3910 = vadd.f32 %v3870, %v3908
        %s3911 = sld [smem:[#allocation7 + $0x1aa]]
        %v3912 = vstv %s3911
        %v3913 = vmul.f32 %v3912, %v3488
        %3915 = vrot.lane.b32.xlu0 %v3913, 56
        %v3916 = vpop.permute.xlu0 %3915
        %v3917 = vrot.slane %v3916, 4
        %v3918 = vsel %vm1288, %v3917, %v3916
        %v3920 = vadd.f32 %v3880, %v3918
        %s3921 = sld [smem:[#allocation7 + $0x1ab]]
        %v3922 = vstv %s3921
        %v3923 = vmul.f32 %v3922, %v3488
        %3925 = vrot.lane.b32.xlu0 %v3923, 56
        %v3926 = vpop.permute.xlu0 %3925
        %v3927 = vrot.slane %v3926, 4
        %v3928 = vsel %vm1288, %v3927, %v3926
        %v3930 = vadd.f32 %v3890, %v3928
        %s3931 = sld [smem:[#allocation7 + $0x1b8]]
        %v3932 = vstv %s3931
        %v3933 = vmul.f32 %v3932, %v2870
        %3935 = vrot.lane.b32.xlu0 %v3933, 102
        %v3936 = vpop.permute.xlu0 %3935
        %v3937 = vrot.slane %v3936, 4
        %v3938 = vsel %vm1329, %v3936, %v3937
        %v3940 = vadd.f32 %v3900, %v3938
        %s3941 = sld [smem:[#allocation7 + $0x1b9]]
        %v3942 = vstv %s3941
        %v3943 = vmul.f32 %v3942, %v2870
        %3945 = vrot.lane.b32.xlu0 %v3943, 102
        %v3946 = vpop.permute.xlu0 %3945
        %v3947 = vrot.slane %v3946, 4
        %v3948 = vsel %vm1329, %v3946, %v3947
        %v3950 = vadd.f32 %v3910, %v3948
        %s3951 = sld [smem:[#allocation7 + $0x1ba]]
        %v3952 = vstv %s3951
        %v3953 = vmul.f32 %v3952, %v2870
        %3955 = vrot.lane.b32.xlu0 %v3953, 102
        %v3956 = vpop.permute.xlu0 %3955
        %v3957 = vrot.slane %v3956, 4
        %v3958 = vsel %vm1329, %v3956, %v3957
        %v3960 = vadd.f32 %v3920, %v3958
        %s3961 = sld [smem:[#allocation7 + $0x1bb]]
        %v3962 = vstv %s3961
        %v3963 = vmul.f32 %v3962, %v2870
        %3965 = vrot.lane.b32.xlu0 %v3963, 102
        %v3966 = vpop.permute.xlu0 %3965
        %v3967 = vrot.slane %v3966, 4
        %v3968 = vsel %vm1329, %v3966, %v3967
        %v3970 = vadd.f32 %v3930, %v3968
        %s3971 = sld [smem:[#allocation7 + $0x1c8]]
        %v3972 = vstv %s3971
        %v3973 = vmul.f32 %v3972, %v2870
        %3975 = vrot.lane.b32.xlu0 %v3973, 88
        %v3976 = vpop.permute.xlu0 %3975
        %v3977 = vrot.slane %v3976, 4
        %v3978 = vsel %vm1370, %v3976, %v3977
        %v3980 = vadd.f32 %v3940, %v3978
        %s3981 = sld [smem:[#allocation7 + $0x1c9]]
        %v3982 = vstv %s3981
        %v3983 = vmul.f32 %v3982, %v2870
        %3985 = vrot.lane.b32.xlu0 %v3983, 88
        %v3986 = vpop.permute.xlu0 %3985
        %v3987 = vrot.slane %v3986, 4
        %v3988 = vsel %vm1370, %v3986, %v3987
        %v3990 = vadd.f32 %v3950, %v3988
        %s3991 = sld [smem:[#allocation7 + $0x1ca]]
        %v3992 = vstv %s3991
        %v3993 = vmul.f32 %v3992, %v2870
        %3995 = vrot.lane.b32.xlu0 %v3993, 88
        %v3996 = vpop.permute.xlu0 %3995
        %v3997 = vrot.slane %v3996, 4
        %v3998 = vsel %vm1370, %v3996, %v3997
        %v4000 = vadd.f32 %v3960, %v3998
        %s4001 = sld [smem:[#allocation7 + $0x1cb]]
        %v4002 = vstv %s4001
        %v4003 = vmul.f32 %v4002, %v2870
        %4005 = vrot.lane.b32.xlu0 %v4003, 88
        %v4006 = vpop.permute.xlu0 %4005
        %v4007 = vrot.slane %v4006, 4
        %v4008 = vsel %vm1370, %v4006, %v4007
        %v4010 = vadd.f32 %v3970, %v4008
        %s4011 = sld [smem:[#allocation7 + $0x1d8]]
        %v4012 = vstv %s4011
        %v4013 = vmul.f32 %v4012, %v3689
        %4015 = vrot.lane.b32.xlu0 %v4013, 6
        %v4016 = vpop.permute.xlu0 %4015
        %v4017 = vrot.slane %v4016, 4
        %v4018 = vsel %vm1411, %v4017, %v4016
        %v4020 = vadd.f32 %v3980, %v4018
        %s4021 = sld [smem:[#allocation7 + $0x1d9]]
        %v4022 = vstv %s4021
        %v4023 = vmul.f32 %v4022, %v3689
        %4025 = vrot.lane.b32.xlu0 %v4023, 6
        %v4026 = vpop.permute.xlu0 %4025
        %v4027 = vrot.slane %v4026, 4
        %v4028 = vsel %vm1411, %v4027, %v4026
        %v4030 = vadd.f32 %v3990, %v4028
        %s4031 = sld [smem:[#allocation7 + $0x1da]]
        %v4032 = vstv %s4031
        %v4033 = vmul.f32 %v4032, %v3689
        %4035 = vrot.lane.b32.xlu0 %v4033, 6
        %v4036 = vpop.permute.xlu0 %4035
        %v4037 = vrot.slane %v4036, 4
        %v4038 = vsel %vm1411, %v4037, %v4036
        %v4040 = vadd.f32 %v4000, %v4038
        %s4041 = sld [smem:[#allocation7 + $0x1db]]
        %v4042 = vstv %s4041
        %v4043 = vmul.f32 %v4042, %v3689
        %4045 = vrot.lane.b32.xlu0 %v4043, 6
        %v4046 = vpop.permute.xlu0 %4045
        %v4047 = vrot.slane %v4046, 4
        %v4048 = vsel %vm1411, %v4047, %v4046
        %v4050 = vadd.f32 %v4010, %v4048
        %s4051 = sld [smem:[#allocation7 + $0x1e8]]
        %v4052 = vstv %s4051
        %v4053 = vmul.f32 %v4052, %v3689
        %4055 = vrot.lane.b32.xlu0 %v4053, 127
        %v4056 = vpop.permute.xlu0 %4055
        %v4057 = vrot.slane %v4056, 4
        %v4058 = vsel %vm264, %v4056, %v4057
        %v4060 = vadd.f32 %v4020, %v4058
        %s4061 = sld [smem:[#allocation7 + $0x1e9]]
        %v4062 = vstv %s4061
        %v4063 = vmul.f32 %v4062, %v3689
        %4065 = vrot.lane.b32.xlu0 %v4063, 127
        %v4066 = vpop.permute.xlu0 %4065
        %v4067 = vrot.slane %v4066, 4
        %v4068 = vsel %vm264, %v4066, %v4067
        %v4070 = vadd.f32 %v4030, %v4068
        %s4071 = sld [smem:[#allocation7 + $0x1ea]]
        %v4072 = vstv %s4071
        %v4073 = vmul.f32 %v4072, %v3689
        %4075 = vrot.lane.b32.xlu0 %v4073, 127
        %v4076 = vpop.permute.xlu0 %4075
        %v4077 = vrot.slane %v4076, 4
        %v4078 = vsel %vm264, %v4076, %v4077
        %v4080 = vadd.f32 %v4040, %v4078
        %s4081 = sld [smem:[#allocation7 + $0x1eb]]
        %v4082 = vstv %s4081
        %v4083 = vmul.f32 %v4082, %v3689
        %4085 = vrot.lane.b32.xlu0 %v4083, 127
        %v4086 = vpop.permute.xlu0 %4085
        %v4087 = vrot.slane %v4086, 4
        %v4088 = vsel %vm264, %v4086, %v4087
        %v4090 = vadd.f32 %v4050, %v4088
        %s4091 = sld [smem:[#allocation7 + $0x1f8]]
        %v4092 = vstv %s4091
        %v4093 = vmul.f32 %v4092, %v3689
        %4095 = vrot.lane.b32.xlu0 %v4093, 120
        %v4096 = vpop.permute.xlu0 %4095
        %v4097 = vrot.slane %v4096, 4
        %v4098 = vsel %vm1492, %v4096, %v4097
        %v4100 = vadd.f32 %v4060, %v4098
        %s4101 = sld [smem:[#allocation7 + $0x1f9]]
        %v4102 = vstv %s4101
        %v4103 = vmul.f32 %v4102, %v3689
        %4105 = vrot.lane.b32.xlu0 %v4103, 120
        %v4106 = vpop.permute.xlu0 %4105
        %v4107 = vrot.slane %v4106, 4
        %v4108 = vsel %vm1492, %v4106, %v4107
        %v4110 = vadd.f32 %v4070, %v4108
        %s4111 = sld [smem:[#allocation7 + $0x1fa]]
        %v4112 = vstv %s4111
        %v4113 = vmul.f32 %v4112, %v3689
        %4115 = vrot.lane.b32.xlu0 %v4113, 120
        %v4116 = vpop.permute.xlu0 %4115
        %v4117 = vrot.slane %v4116, 4
        %v4118 = vsel %vm1492, %v4116, %v4117
        %v4120 = vadd.f32 %v4080, %v4118
        %s4121 = sld [smem:[#allocation7 + $0x1fb]]
        %v4122 = vstv %s4121
        %v4123 = vmul.f32 %v4122, %v3689
        %4125 = vrot.lane.b32.xlu0 %v4123, 120
        %v4126 = vpop.permute.xlu0 %4125
        %v4127 = vrot.slane %v4126, 4
        %v4128 = vsel %vm1492, %v4126, %v4127
        %v4130 = vadd.f32 %v4090, %v4128
        %s4131 = sld [smem:[#allocation7 + $0x208]]
        %v4132 = vstv %s4131
        %v4133 = vmul.f32 %v4132, %v2870
        %4135 = vrot.lane.b32.xlu0 %v4133, 95
        %v4136 = vpop.permute.xlu0 %4135
        %v4137 = vrot.slane %v4136, 4
        %v4138 = vsel %vm1533, %v4136, %v4137
        %v4140 = vadd.f32 %v4100, %v4138
        %s4141 = sld [smem:[#allocation7 + $0x209]]
        %v4142 = vstv %s4141
        %v4143 = vmul.f32 %v4142, %v2870
        %4145 = vrot.lane.b32.xlu0 %v4143, 95
        %v4146 = vpop.permute.xlu0 %4145
        %v4147 = vrot.slane %v4146, 4
        %v4148 = vsel %vm1533, %v4146, %v4147
        %v4150 = vadd.f32 %v4110, %v4148
        %s4151 = sld [smem:[#allocation7 + $0x20a]]
        %v4152 = vstv %s4151
        %v4153 = vmul.f32 %v4152, %v2870
        %4155 = vrot.lane.b32.xlu0 %v4153, 95
        %v4156 = vpop.permute.xlu0 %4155
        %v4157 = vrot.slane %v4156, 4
        %v4158 = vsel %vm1533, %v4156, %v4157
        %v4160 = vadd.f32 %v4120, %v4158
        %s4161 = sld [smem:[#allocation7 + $0x20b]]
        %v4162 = vstv %s4161
        %v4163 = vmul.f32 %v4162, %v2870
        %4165 = vrot.lane.b32.xlu0 %v4163, 95
        %v4166 = vpop.permute.xlu0 %4165
        %v4167 = vrot.slane %v4166, 4
        %v4168 = vsel %vm1533, %v4166, %v4167
        %v4170 = vadd.f32 %v4130, %v4168
        %s4171 = scalar_lea.vmem %s200, 60 [#allocation2]
        %v4172 = vld [vmem:[%s4171 + $0x4] sm:$0xff]
        %s4173 = sld [smem:[#allocation7 + $0xc]]
        %v4174 = vstv %s4173
        %v4175 = vmul.f32 %v4174, %v4172
        %v4176 = vadd.f32 %v4140, %v4175
        %s4177 = sld [smem:[#allocation7 + $0xd]]
        %v4178 = vstv %s4177
        %v4179 = vmul.f32 %v4178, %v4172
        %v4180 = vadd.f32 %v4150, %v4179
        %s4181 = sld [smem:[#allocation7 + $0xe]]
        %v4182 = vstv %s4181
        %v4183 = vmul.f32 %v4182, %v4172
        %v4184 = vadd.f32 %v4160, %v4183
        %s4185 = sld [smem:[#allocation7 + $0xf]]
        %v4186 = vstv %s4185
        %v4187 = vmul.f32 %v4186, %v4172
        %v4188 = vadd.f32 %v4170, %v4187
        %s4189 = sld [smem:[#allocation7 + $0x1c]]
        %v4190 = vstv %s4189
        %v4191 = vmul.f32 %v4190, %v4172
        %4193 = vrot.lane.b32.xlu0 %v4191, 127
        %v4194 = vpop.permute.xlu0 %4193
        %v4195 = vrot.slane %v4194, 4
        %v4196 = vsel %vm264, %v4194, %v4195
        %v4198 = vadd.f32 %v4176, %v4196
        %s4199 = sld [smem:[#allocation7 + $0x1d]]
        %v4200 = vstv %s4199
        %v4201 = vmul.f32 %v4200, %v4172
        %4203 = vrot.lane.b32.xlu0 %v4201, 127
        %v4204 = vpop.permute.xlu0 %4203
        %v4205 = vrot.slane %v4204, 4
        %v4206 = vsel %vm264, %v4204, %v4205
        %v4208 = vadd.f32 %v4180, %v4206
        %s4209 = sld [smem:[#allocation7 + $0x1e]]
        %v4210 = vstv %s4209
        %v4211 = vmul.f32 %v4210, %v4172
        %4213 = vrot.lane.b32.xlu0 %v4211, 127
        %v4214 = vpop.permute.xlu0 %4213
        %v4215 = vrot.slane %v4214, 4
        %v4216 = vsel %vm264, %v4214, %v4215
        %v4218 = vadd.f32 %v4184, %v4216
        %s4219 = sld [smem:[#allocation7 + $0x1f]]
        %v4220 = vstv %s4219
        %v4221 = vmul.f32 %v4220, %v4172
        %4223 = vrot.lane.b32.xlu0 %v4221, 127
        %v4224 = vpop.permute.xlu0 %4223
        %v4225 = vrot.slane %v4224, 4
        %v4226 = vsel %vm264, %v4224, %v4225
        %v4228 = vadd.f32 %v4188, %v4226
        %s4229 = sld [smem:[#allocation7 + $0x2c]]
        %v4230 = vstv %s4229
        %v4231 = vmul.f32 %v4230, %v4172
        %4233 = vrot.lane.b32.xlu0 %v4231, 126
        %v4234 = vpop.permute.xlu0 %4233
        %v4235 = vrot.slane %v4234, 4
        %v4236 = vsel %vm305, %v4234, %v4235
        %v4238 = vadd.f32 %v4198, %v4236
        %s4239 = sld [smem:[#allocation7 + $0x2d]]
        %v4240 = vstv %s4239
        %v4241 = vmul.f32 %v4240, %v4172
        %4243 = vrot.lane.b32.xlu0 %v4241, 126
        %v4244 = vpop.permute.xlu0 %4243
        %v4245 = vrot.slane %v4244, 4
        %v4246 = vsel %vm305, %v4244, %v4245
        %v4248 = vadd.f32 %v4208, %v4246
        %s4249 = sld [smem:[#allocation7 + $0x2e]]
        %v4250 = vstv %s4249
        %v4251 = vmul.f32 %v4250, %v4172
        %4253 = vrot.lane.b32.xlu0 %v4251, 126
        %v4254 = vpop.permute.xlu0 %4253
        %v4255 = vrot.slane %v4254, 4
        %v4256 = vsel %vm305, %v4254, %v4255
        %v4258 = vadd.f32 %v4218, %v4256
        %s4259 = sld [smem:[#allocation7 + $0x2f]]
        %v4260 = vstv %s4259
        %v4261 = vmul.f32 %v4260, %v4172
        %4263 = vrot.lane.b32.xlu0 %v4261, 126
        %v4264 = vpop.permute.xlu0 %4263
        %v4265 = vrot.slane %v4264, 4
        %v4266 = vsel %vm305, %v4264, %v4265
        %v4268 = vadd.f32 %v4228, %v4266
        %s4269 = sld [smem:[#allocation7 + $0x3c]]
        %v4270 = vstv %s4269
        %v4271 = vmul.f32 %v4270, %v4172
        %4273 = vrot.lane.b32.xlu0 %v4271, 96
        %v4274 = vpop.permute.xlu0 %4273
        %v4275 = vrot.slane %v4274, 4
        %v4276 = vsel %vm346, %v4274, %v4275
        %v4278 = vadd.f32 %v4238, %v4276
        %s4279 = sld [smem:[#allocation7 + $0x3d]]
        %v4280 = vstv %s4279
        %v4281 = vmul.f32 %v4280, %v4172
        %4283 = vrot.lane.b32.xlu0 %v4281, 96
        %v4284 = vpop.permute.xlu0 %4283
        %v4285 = vrot.slane %v4284, 4
        %v4286 = vsel %vm346, %v4284, %v4285
        %v4288 = vadd.f32 %v4248, %v4286
        %s4289 = sld [smem:[#allocation7 + $0x3e]]
        %v4290 = vstv %s4289
        %v4291 = vmul.f32 %v4290, %v4172
        %4293 = vrot.lane.b32.xlu0 %v4291, 96
        %v4294 = vpop.permute.xlu0 %4293
        %v4295 = vrot.slane %v4294, 4
        %v4296 = vsel %vm346, %v4294, %v4295
        %v4298 = vadd.f32 %v4258, %v4296
        %s4299 = sld [smem:[#allocation7 + $0x3f]]
        %v4300 = vstv %s4299
        %v4301 = vmul.f32 %v4300, %v4172
        %4303 = vrot.lane.b32.xlu0 %v4301, 96
        %v4304 = vpop.permute.xlu0 %4303
        %v4305 = vrot.slane %v4304, 4
        %v4306 = vsel %vm346, %v4304, %v4305
        %v4308 = vadd.f32 %v4268, %v4306
        %s4309 = sld [smem:[#allocation7 + $0x4c]]
        %v4310 = vstv %s4309
        %v4311 = vmul.f32 %v4310, %v4172
        %4313 = vrot.lane.b32.xlu0 %v4311, 94
        %v4314 = vpop.permute.xlu0 %4313
        %v4315 = vrot.slane %v4314, 4
        %v4316 = vsel %vm387, %v4314, %v4315
        %v4318 = vadd.f32 %v4278, %v4316
        %s4319 = sld [smem:[#allocation7 + $0x4d]]
        %v4320 = vstv %s4319
        %v4321 = vmul.f32 %v4320, %v4172
        %4323 = vrot.lane.b32.xlu0 %v4321, 94
        %v4324 = vpop.permute.xlu0 %4323
        %v4325 = vrot.slane %v4324, 4
        %v4326 = vsel %vm387, %v4324, %v4325
        %v4328 = vadd.f32 %v4288, %v4326
        %s4329 = sld [smem:[#allocation7 + $0x4e]]
        %v4330 = vstv %s4329
        %v4331 = vmul.f32 %v4330, %v4172
        %4333 = vrot.lane.b32.xlu0 %v4331, 94
        %v4334 = vpop.permute.xlu0 %4333
        %v4335 = vrot.slane %v4334, 4
        %v4336 = vsel %vm387, %v4334, %v4335
        %v4338 = vadd.f32 %v4298, %v4336
        %s4339 = sld [smem:[#allocation7 + $0x4f]]
        %v4340 = vstv %s4339
        %v4341 = vmul.f32 %v4340, %v4172
        %4343 = vrot.lane.b32.xlu0 %v4341, 94
        %v4344 = vpop.permute.xlu0 %4343
        %v4345 = vrot.slane %v4344, 4
        %v4346 = vsel %vm387, %v4344, %v4345
        %v4348 = vadd.f32 %v4308, %v4346
        %v4349 = vld [vmem:[%s4171 + $0x8] sm:$0xff]
        %s4350 = sld [smem:[#allocation7 + $0x5c]]
        %v4351 = vstv %s4350
        %v4352 = vmul.f32 %v4351, %v4349
        %4354 = vrot.lane.b32.xlu0 %v4352, 64
        %v4355 = vpop.permute.xlu0 %4354
        %v4356 = vrot.slane %v4355, 4
        %v4357 = vsel %vm429, %v4356, %v4355
        %v4359 = vadd.f32 %v4318, %v4357
        %s4360 = sld [smem:[#allocation7 + $0x5d]]
        %v4361 = vstv %s4360
        %v4362 = vmul.f32 %v4361, %v4349
        %4364 = vrot.lane.b32.xlu0 %v4362, 64
        %v4365 = vpop.permute.xlu0 %4364
        %v4366 = vrot.slane %v4365, 4
        %v4367 = vsel %vm429, %v4366, %v4365
        %v4369 = vadd.f32 %v4328, %v4367
        %s4370 = sld [smem:[#allocation7 + $0x5e]]
        %v4371 = vstv %s4370
        %v4372 = vmul.f32 %v4371, %v4349
        %4374 = vrot.lane.b32.xlu0 %v4372, 64
        %v4375 = vpop.permute.xlu0 %4374
        %v4376 = vrot.slane %v4375, 4
        %v4377 = vsel %vm429, %v4376, %v4375
        %v4379 = vadd.f32 %v4338, %v4377
        %s4380 = sld [smem:[#allocation7 + $0x5f]]
        %v4381 = vstv %s4380
        %v4382 = vmul.f32 %v4381, %v4349
        %4384 = vrot.lane.b32.xlu0 %v4382, 64
        %v4385 = vpop.permute.xlu0 %4384
        %v4386 = vrot.slane %v4385, 4
        %v4387 = vsel %vm429, %v4386, %v4385
        %v4389 = vadd.f32 %v4348, %v4387
        %s4390 = sld [smem:[#allocation7 + $0x6c]]
        %v4391 = vstv %s4390
        %v4392 = vmul.f32 %v4391, %v4349
        %4394 = vrot.lane.b32.xlu0 %v4392, 63
        %v4395 = vpop.permute.xlu0 %4394
        %v4396 = vrot.slane %v4395, 4
        %v4397 = vsel %vm470, %v4396, %v4395
        %v4399 = vadd.f32 %v4359, %v4397
        %s4400 = sld [smem:[#allocation7 + $0x6d]]
        %v4401 = vstv %s4400
        %v4402 = vmul.f32 %v4401, %v4349
        %4404 = vrot.lane.b32.xlu0 %v4402, 63
        %v4405 = vpop.permute.xlu0 %4404
        %v4406 = vrot.slane %v4405, 4
        %v4407 = vsel %vm470, %v4406, %v4405
        %v4409 = vadd.f32 %v4369, %v4407
        %s4410 = sld [smem:[#allocation7 + $0x6e]]
        %v4411 = vstv %s4410
        %v4412 = vmul.f32 %v4411, %v4349
        %4414 = vrot.lane.b32.xlu0 %v4412, 63
        %v4415 = vpop.permute.xlu0 %4414
        %v4416 = vrot.slane %v4415, 4
        %v4417 = vsel %vm470, %v4416, %v4415
        %v4419 = vadd.f32 %v4379, %v4417
        %s4420 = sld [smem:[#allocation7 + $0x6f]]
        %v4421 = vstv %s4420
        %v4422 = vmul.f32 %v4421, %v4349
        %4424 = vrot.lane.b32.xlu0 %v4422, 63
        %v4425 = vpop.permute.xlu0 %4424
        %v4426 = vrot.slane %v4425, 4
        %v4427 = vsel %vm470, %v4426, %v4425
        %v4429 = vadd.f32 %v4389, %v4427
        %s4430 = sld [smem:[#allocation7 + $0x7c]]
        %v4431 = vstv %s4430
        %v4432 = vmul.f32 %v4431, %v4349
        %4434 = vrot.lane.b32.xlu0 %v4432, 62
        %v4435 = vpop.permute.xlu0 %4434
        %v4436 = vrot.slane %v4435, 4
        %v4437 = vsel %vm511, %v4436, %v4435
        %v4439 = vadd.f32 %v4399, %v4437
        %s4440 = sld [smem:[#allocation7 + $0x7d]]
        %v4441 = vstv %s4440
        %v4442 = vmul.f32 %v4441, %v4349
        %4444 = vrot.lane.b32.xlu0 %v4442, 62
        %v4445 = vpop.permute.xlu0 %4444
        %v4446 = vrot.slane %v4445, 4
        %v4447 = vsel %vm511, %v4446, %v4445
        %v4449 = vadd.f32 %v4409, %v4447
        %s4450 = sld [smem:[#allocation7 + $0x7e]]
        %v4451 = vstv %s4450
        %v4452 = vmul.f32 %v4451, %v4349
        %4454 = vrot.lane.b32.xlu0 %v4452, 62
        %v4455 = vpop.permute.xlu0 %4454
        %v4456 = vrot.slane %v4455, 4
        %v4457 = vsel %vm511, %v4456, %v4455
        %v4459 = vadd.f32 %v4419, %v4457
        %s4460 = sld [smem:[#allocation7 + $0x7f]]
        %v4461 = vstv %s4460
        %v4462 = vmul.f32 %v4461, %v4349
        %4464 = vrot.lane.b32.xlu0 %v4462, 62
        %v4465 = vpop.permute.xlu0 %4464
        %v4466 = vrot.slane %v4465, 4
        %v4467 = vsel %vm511, %v4466, %v4465
        %v4469 = vadd.f32 %v4429, %v4467
        %s4470 = sld [smem:[#allocation7 + $0x8c]]
        %v4471 = vstv %s4470
        %v4472 = vmul.f32 %v4471, %v4172
        %4474 = vrot.lane.b32.xlu0 %v4472, 66
        %v4475 = vpop.permute.xlu0 %4474
        %v4476 = vrot.slane %v4475, 4
        %v4477 = vsel %vm552, %v4476, %v4475
        %v4479 = vadd.f32 %v4439, %v4477
        %s4480 = sld [smem:[#allocation7 + $0x8d]]
        %v4481 = vstv %s4480
        %v4482 = vmul.f32 %v4481, %v4172
        %4484 = vrot.lane.b32.xlu0 %v4482, 66
        %v4485 = vpop.permute.xlu0 %4484
        %v4486 = vrot.slane %v4485, 4
        %v4487 = vsel %vm552, %v4486, %v4485
        %v4489 = vadd.f32 %v4449, %v4487
        %s4490 = sld [smem:[#allocation7 + $0x8e]]
        %v4491 = vstv %s4490
        %v4492 = vmul.f32 %v4491, %v4172
        %4494 = vrot.lane.b32.xlu0 %v4492, 66
        %v4495 = vpop.permute.xlu0 %4494
        %v4496 = vrot.slane %v4495, 4
        %v4497 = vsel %vm552, %v4496, %v4495
        %v4499 = vadd.f32 %v4459, %v4497
        %s4500 = sld [smem:[#allocation7 + $0x8f]]
        %v4501 = vstv %s4500
        %v4502 = vmul.f32 %v4501, %v4172
        %4504 = vrot.lane.b32.xlu0 %v4502, 66
        %v4505 = vpop.permute.xlu0 %4504
        %v4506 = vrot.slane %v4505, 4
        %v4507 = vsel %vm552, %v4506, %v4505
        %v4509 = vadd.f32 %v4469, %v4507
        %s4510 = sld [smem:[#allocation7 + $0x9c]]
        %v4511 = vstv %s4510
        %v4512 = vmul.f32 %v4511, %v4172
        %4514 = vrot.lane.b32.xlu0 %v4512, 63
        %v4515 = vpop.permute.xlu0 %4514
        %v4516 = vrot.slane %v4515, 4
        %v4517 = vsel %vm470, %v4516, %v4515
        %v4519 = vadd.f32 %v4479, %v4517
        %s4520 = sld [smem:[#allocation7 + $0x9d]]
        %v4521 = vstv %s4520
        %v4522 = vmul.f32 %v4521, %v4172
        %4524 = vrot.lane.b32.xlu0 %v4522, 63
        %v4525 = vpop.permute.xlu0 %4524
        %v4526 = vrot.slane %v4525, 4
        %v4527 = vsel %vm470, %v4526, %v4525
        %v4529 = vadd.f32 %v4489, %v4527
        %s4530 = sld [smem:[#allocation7 + $0x9e]]
        %v4531 = vstv %s4530
        %v4532 = vmul.f32 %v4531, %v4172
        %4534 = vrot.lane.b32.xlu0 %v4532, 63
        %v4535 = vpop.permute.xlu0 %4534
        %v4536 = vrot.slane %v4535, 4
        %v4537 = vsel %vm470, %v4536, %v4535
        %v4539 = vadd.f32 %v4499, %v4537
        %s4540 = sld [smem:[#allocation7 + $0x9f]]
        %v4541 = vstv %s4540
        %v4542 = vmul.f32 %v4541, %v4172
        %4544 = vrot.lane.b32.xlu0 %v4542, 63
        %v4545 = vpop.permute.xlu0 %4544
        %v4546 = vrot.slane %v4545, 4
        %v4547 = vsel %vm470, %v4546, %v4545
        %v4549 = vadd.f32 %v4509, %v4547
        %s4550 = sld [smem:[#allocation7 + $0xac]]
        %v4551 = vstv %s4550
        %v4552 = vmul.f32 %v4551, %v4172
        %4554 = vrot.lane.b32.xlu0 %v4552, 60
        %v4555 = vpop.permute.xlu0 %4554
        %v4556 = vrot.slane %v4555, 4
        %v4557 = vsel %vm633, %v4556, %v4555
        %v4559 = vadd.f32 %v4519, %v4557
        %s4560 = sld [smem:[#allocation7 + $0xad]]
        %v4561 = vstv %s4560
        %v4562 = vmul.f32 %v4561, %v4172
        %4564 = vrot.lane.b32.xlu0 %v4562, 60
        %v4565 = vpop.permute.xlu0 %4564
        %v4566 = vrot.slane %v4565, 4
        %v4567 = vsel %vm633, %v4566, %v4565
        %v4569 = vadd.f32 %v4529, %v4567
        %s4570 = sld [smem:[#allocation7 + $0xae]]
        %v4571 = vstv %s4570
        %v4572 = vmul.f32 %v4571, %v4172
        %4574 = vrot.lane.b32.xlu0 %v4572, 60
        %v4575 = vpop.permute.xlu0 %4574
        %v4576 = vrot.slane %v4575, 4
        %v4577 = vsel %vm633, %v4576, %v4575
        %v4579 = vadd.f32 %v4539, %v4577
        %s4580 = sld [smem:[#allocation7 + $0xaf]]
        %v4581 = vstv %s4580
        %v4582 = vmul.f32 %v4581, %v4172
        %4584 = vrot.lane.b32.xlu0 %v4582, 60
        %v4585 = vpop.permute.xlu0 %4584
        %v4586 = vrot.slane %v4585, 4
        %v4587 = vsel %vm633, %v4586, %v4585
        %v4589 = vadd.f32 %v4549, %v4587
        %s4590 = sld [smem:[#allocation7 + $0xbc]]
        %v4591 = vstv %s4590
        %v4592 = vmul.f32 %v4591, %v4172
        %4594 = vrot.lane.b32.xlu0 %v4592, 98
        %v4595 = vpop.permute.xlu0 %4594
        %v4596 = vrot.slane %v4595, 4
        %v4597 = vsel %vm674, %v4595, %v4596
        %v4599 = vadd.f32 %v4559, %v4597
        %s4600 = sld [smem:[#allocation7 + $0xbd]]
        %v4601 = vstv %s4600
        %v4602 = vmul.f32 %v4601, %v4172
        %4604 = vrot.lane.b32.xlu0 %v4602, 98
        %v4605 = vpop.permute.xlu0 %4604
        %v4606 = vrot.slane %v4605, 4
        %v4607 = vsel %vm674, %v4605, %v4606
        %v4609 = vadd.f32 %v4569, %v4607
        %s4610 = sld [smem:[#allocation7 + $0xbe]]
        %v4611 = vstv %s4610
        %v4612 = vmul.f32 %v4611, %v4172
        %4614 = vrot.lane.b32.xlu0 %v4612, 98
        %v4615 = vpop.permute.xlu0 %4614
        %v4616 = vrot.slane %v4615, 4
        %v4617 = vsel %vm674, %v4615, %v4616
        %v4619 = vadd.f32 %v4579, %v4617
        %s4620 = sld [smem:[#allocation7 + $0xbf]]
        %v4621 = vstv %s4620
        %v4622 = vmul.f32 %v4621, %v4172
        %4624 = vrot.lane.b32.xlu0 %v4622, 98
        %v4625 = vpop.permute.xlu0 %4624
        %v4626 = vrot.slane %v4625, 4
        %v4627 = vsel %vm674, %v4625, %v4626
        %v4629 = vadd.f32 %v4589, %v4627
        %s4630 = sld [smem:[#allocation7 + $0xcc]]
        %v4631 = vstv %s4630
        %v4632 = vmul.f32 %v4631, %v4172
        %4634 = vrot.lane.b32.xlu0 %v4632, 92
        %v4635 = vpop.permute.xlu0 %4634
        %v4636 = vrot.slane %v4635, 4
        %v4637 = vsel %vm715, %v4635, %v4636
        %v4639 = vadd.f32 %v4599, %v4637
        %s4640 = sld [smem:[#allocation7 + $0xcd]]
        %v4641 = vstv %s4640
        %v4642 = vmul.f32 %v4641, %v4172
        %4644 = vrot.lane.b32.xlu0 %v4642, 92
        %v4645 = vpop.permute.xlu0 %4644
        %v4646 = vrot.slane %v4645, 4
        %v4647 = vsel %vm715, %v4645, %v4646
        %v4649 = vadd.f32 %v4609, %v4647
        %s4650 = sld [smem:[#allocation7 + $0xce]]
        %v4651 = vstv %s4650
        %v4652 = vmul.f32 %v4651, %v4172
        %4654 = vrot.lane.b32.xlu0 %v4652, 92
        %v4655 = vpop.permute.xlu0 %4654
        %v4656 = vrot.slane %v4655, 4
        %v4657 = vsel %vm715, %v4655, %v4656
        %v4659 = vadd.f32 %v4619, %v4657
        %s4660 = sld [smem:[#allocation7 + $0xcf]]
        %v4661 = vstv %s4660
        %v4662 = vmul.f32 %v4661, %v4172
        %4664 = vrot.lane.b32.xlu0 %v4662, 92
        %v4665 = vpop.permute.xlu0 %4664
        %v4666 = vrot.slane %v4665, 4
        %v4667 = vsel %vm715, %v4665, %v4666
        %v4669 = vadd.f32 %v4629, %v4667
        %s4670 = sld [smem:[#allocation7 + $0xdc]]
        %v4671 = vstv %s4670
        %v4672 = vmul.f32 %v4671, %v4349
        %4674 = vrot.lane.b32.xlu0 %v4672, 2
        %v4675 = vpop.permute.xlu0 %4674
        %v4676 = vrot.slane %v4675, 4
        %v4677 = vsel %vm756, %v4676, %v4675
        %v4679 = vadd.f32 %v4639, %v4677
        %s4680 = sld [smem:[#allocation7 + $0xdd]]
        %v4681 = vstv %s4680
        %v4682 = vmul.f32 %v4681, %v4349
        %4684 = vrot.lane.b32.xlu0 %v4682, 2
        %v4685 = vpop.permute.xlu0 %4684
        %v4686 = vrot.slane %v4685, 4
        %v4687 = vsel %vm756, %v4686, %v4685
        %v4689 = vadd.f32 %v4649, %v4687
        %s4690 = sld [smem:[#allocation7 + $0xde]]
        %v4691 = vstv %s4690
        %v4692 = vmul.f32 %v4691, %v4349
        %4694 = vrot.lane.b32.xlu0 %v4692, 2
        %v4695 = vpop.permute.xlu0 %4694
        %v4696 = vrot.slane %v4695, 4
        %v4697 = vsel %vm756, %v4696, %v4695
        %v4699 = vadd.f32 %v4659, %v4697
        %s4700 = sld [smem:[#allocation7 + $0xdf]]
        %v4701 = vstv %s4700
        %v4702 = vmul.f32 %v4701, %v4349
        %4704 = vrot.lane.b32.xlu0 %v4702, 2
        %v4705 = vpop.permute.xlu0 %4704
        %v4706 = vrot.slane %v4705, 4
        %v4707 = vsel %vm756, %v4706, %v4705
        %v4709 = vadd.f32 %v4669, %v4707
        %s4710 = sld [smem:[#allocation7 + $0xec]]
        %v4711 = vstv %s4710
        %v4712 = vmul.f32 %v4711, %v4349
        %4714 = vrot.lane.b32.xlu0 %v4712, 127
        %v4715 = vpop.permute.xlu0 %4714
        %v4716 = vrot.slane %v4715, 4
        %v4717 = vsel %vm264, %v4715, %v4716
        %v4719 = vadd.f32 %v4679, %v4717
        %s4720 = sld [smem:[#allocation7 + $0xed]]
        %v4721 = vstv %s4720
        %v4722 = vmul.f32 %v4721, %v4349
        %4724 = vrot.lane.b32.xlu0 %v4722, 127
        %v4725 = vpop.permute.xlu0 %4724
        %v4726 = vrot.slane %v4725, 4
        %v4727 = vsel %vm264, %v4725, %v4726
        %v4729 = vadd.f32 %v4689, %v4727
        %s4730 = sld [smem:[#allocation7 + $0xee]]
        %v4731 = vstv %s4730
        %v4732 = vmul.f32 %v4731, %v4349
        %4734 = vrot.lane.b32.xlu0 %v4732, 127
        %v4735 = vpop.permute.xlu0 %4734
        %v4736 = vrot.slane %v4735, 4
        %v4737 = vsel %vm264, %v4735, %v4736
        %v4739 = vadd.f32 %v4699, %v4737
        %s4740 = sld [smem:[#allocation7 + $0xef]]
        %v4741 = vstv %s4740
        %v4742 = vmul.f32 %v4741, %v4349
        %4744 = vrot.lane.b32.xlu0 %v4742, 127
        %v4745 = vpop.permute.xlu0 %4744
        %v4746 = vrot.slane %v4745, 4
        %v4747 = vsel %vm264, %v4745, %v4746
        %v4749 = vadd.f32 %v4709, %v4747
        %s4750 = sld [smem:[#allocation7 + $0xfc]]
        %v4751 = vstv %s4750
        %v4752 = vmul.f32 %v4751, %v4349
        %4754 = vrot.lane.b32.xlu0 %v4752, 124
        %v4755 = vpop.permute.xlu0 %4754
        %v4756 = vrot.slane %v4755, 4
        %v4757 = vsel %vm837, %v4755, %v4756
        %v4759 = vadd.f32 %v4719, %v4757
        %s4760 = sld [smem:[#allocation7 + $0xfd]]
        %v4761 = vstv %s4760
        %v4762 = vmul.f32 %v4761, %v4349
        %4764 = vrot.lane.b32.xlu0 %v4762, 124
        %v4765 = vpop.permute.xlu0 %4764
        %v4766 = vrot.slane %v4765, 4
        %v4767 = vsel %vm837, %v4765, %v4766
        %v4769 = vadd.f32 %v4729, %v4767
        %s4770 = sld [smem:[#allocation7 + $0xfe]]
        %v4771 = vstv %s4770
        %v4772 = vmul.f32 %v4771, %v4349
        %4774 = vrot.lane.b32.xlu0 %v4772, 124
        %v4775 = vpop.permute.xlu0 %4774
        %v4776 = vrot.slane %v4775, 4
        %v4777 = vsel %vm837, %v4775, %v4776
        %v4779 = vadd.f32 %v4739, %v4777
        %s4780 = sld [smem:[#allocation7 + $0xff]]
        %v4781 = vstv %s4780
        %v4782 = vmul.f32 %v4781, %v4349
        %4784 = vrot.lane.b32.xlu0 %v4782, 124
        %v4785 = vpop.permute.xlu0 %4784
        %v4786 = vrot.slane %v4785, 4
        %v4787 = vsel %vm837, %v4785, %v4786
        %v4789 = vadd.f32 %v4749, %v4787
        %v4790 = vld [vmem:[%s4171] sm:$0xff]
        %s4791 = sld [smem:[#allocation7 + $0x10c]]
        %v4792 = vstv %s4791
        %v4793 = vmul.f32 %v4792, %v4790
        %4795 = vrot.lane.b32.xlu0 %v4793, 4
        %v4796 = vpop.permute.xlu0 %4795
        %v4797 = vrot.slane %v4796, 4
        %v4798 = vsel %vm879, %v4797, %v4796
        %v4800 = vadd.f32 %v4759, %v4798
        %s4801 = sld [smem:[#allocation7 + $0x10d]]
        %v4802 = vstv %s4801
        %v4803 = vmul.f32 %v4802, %v4790
        %4805 = vrot.lane.b32.xlu0 %v4803, 4
        %v4806 = vpop.permute.xlu0 %4805
        %v4807 = vrot.slane %v4806, 4
        %v4808 = vsel %vm879, %v4807, %v4806
        %v4810 = vadd.f32 %v4769, %v4808
        %s4811 = sld [smem:[#allocation7 + $0x10e]]
        %v4812 = vstv %s4811
        %v4813 = vmul.f32 %v4812, %v4790
        %4815 = vrot.lane.b32.xlu0 %v4813, 4
        %v4816 = vpop.permute.xlu0 %4815
        %v4817 = vrot.slane %v4816, 4
        %v4818 = vsel %vm879, %v4817, %v4816
        %v4820 = vadd.f32 %v4779, %v4818
        %s4821 = sld [smem:[#allocation7 + $0x10f]]
        %v4822 = vstv %s4821
        %v4823 = vmul.f32 %v4822, %v4790
        %4825 = vrot.lane.b32.xlu0 %v4823, 4
        %v4826 = vpop.permute.xlu0 %4825
        %v4827 = vrot.slane %v4826, 4
        %v4828 = vsel %vm879, %v4827, %v4826
        %v4830 = vadd.f32 %v4789, %v4828
        %s4831 = sld [smem:[#allocation7 + $0x11c]]
        %v4832 = vstv %s4831
        %v4833 = vmul.f32 %v4832, %v4790
        %4835 = vrot.lane.b32.xlu0 %v4833, 127
        %v4836 = vpop.permute.xlu0 %4835
        %v4837 = vrot.slane %v4836, 4
        %v4838 = vsel %vm264, %v4836, %v4837
        %v4840 = vadd.f32 %v4800, %v4838
        %s4841 = sld [smem:[#allocation7 + $0x11d]]
        %v4842 = vstv %s4841
        %v4843 = vmul.f32 %v4842, %v4790
        %4845 = vrot.lane.b32.xlu0 %v4843, 127
        %v4846 = vpop.permute.xlu0 %4845
        %v4847 = vrot.slane %v4846, 4
        %v4848 = vsel %vm264, %v4846, %v4847
        %v4850 = vadd.f32 %v4810, %v4848
        %s4851 = sld [smem:[#allocation7 + $0x11e]]
        %v4852 = vstv %s4851
        %v4853 = vmul.f32 %v4852, %v4790
        %4855 = vrot.lane.b32.xlu0 %v4853, 127
        %v4856 = vpop.permute.xlu0 %4855
        %v4857 = vrot.slane %v4856, 4
        %v4858 = vsel %vm264, %v4856, %v4857
        %v4860 = vadd.f32 %v4820, %v4858
        %s4861 = sld [smem:[#allocation7 + $0x11f]]
        %v4862 = vstv %s4861
        %v4863 = vmul.f32 %v4862, %v4790
        %4865 = vrot.lane.b32.xlu0 %v4863, 127
        %v4866 = vpop.permute.xlu0 %4865
        %v4867 = vrot.slane %v4866, 4
        %v4868 = vsel %vm264, %v4866, %v4867
        %v4870 = vadd.f32 %v4830, %v4868
        %s4871 = sld [smem:[#allocation7 + $0x12c]]
        %v4872 = vstv %s4871
        %v4873 = vmul.f32 %v4872, %v4790
        %4875 = vrot.lane.b32.xlu0 %v4873, 122
        %v4876 = vpop.permute.xlu0 %4875
        %v4877 = vrot.slane %v4876, 4
        %v4878 = vsel %vm960, %v4876, %v4877
        %v4880 = vadd.f32 %v4840, %v4878
        %s4881 = sld [smem:[#allocation7 + $0x12d]]
        %v4882 = vstv %s4881
        %v4883 = vmul.f32 %v4882, %v4790
        %4885 = vrot.lane.b32.xlu0 %v4883, 122
        %v4886 = vpop.permute.xlu0 %4885
        %v4887 = vrot.slane %v4886, 4
        %v4888 = vsel %vm960, %v4886, %v4887
        %v4890 = vadd.f32 %v4850, %v4888
        %s4891 = sld [smem:[#allocation7 + $0x12e]]
        %v4892 = vstv %s4891
        %v4893 = vmul.f32 %v4892, %v4790
        %4895 = vrot.lane.b32.xlu0 %v4893, 122
        %v4896 = vpop.permute.xlu0 %4895
        %v4897 = vrot.slane %v4896, 4
        %v4898 = vsel %vm960, %v4896, %v4897
        %v4900 = vadd.f32 %v4860, %v4898
        %s4901 = sld [smem:[#allocation7 + $0x12f]]
        %v4902 = vstv %s4901
        %v4903 = vmul.f32 %v4902, %v4790
        %4905 = vrot.lane.b32.xlu0 %v4903, 122
        %v4906 = vpop.permute.xlu0 %4905
        %v4907 = vrot.slane %v4906, 4
        %v4908 = vsel %vm960, %v4906, %v4907
        %v4910 = vadd.f32 %v4870, %v4908
        %s4911 = sld [smem:[#allocation7 + $0x13c]]
        %v4912 = vstv %s4911
        %v4913 = vmul.f32 %v4912, %v4172
        %4915 = vrot.lane.b32.xlu0 %v4913, 100
        %v4916 = vpop.permute.xlu0 %4915
        %v4917 = vrot.slane %v4916, 4
        %v4918 = vsel %vm1001, %v4916, %v4917
        %v4920 = vadd.f32 %v4880, %v4918
        %s4921 = sld [smem:[#allocation7 + $0x13d]]
        %v4922 = vstv %s4921
        %v4923 = vmul.f32 %v4922, %v4172
        %4925 = vrot.lane.b32.xlu0 %v4923, 100
        %v4926 = vpop.permute.xlu0 %4925
        %v4927 = vrot.slane %v4926, 4
        %v4928 = vsel %vm1001, %v4926, %v4927
        %v4930 = vadd.f32 %v4890, %v4928
        %s4931 = sld [smem:[#allocation7 + $0x13e]]
        %v4932 = vstv %s4931
        %v4933 = vmul.f32 %v4932, %v4172
        %4935 = vrot.lane.b32.xlu0 %v4933, 100
        %v4936 = vpop.permute.xlu0 %4935
        %v4937 = vrot.slane %v4936, 4
        %v4938 = vsel %vm1001, %v4936, %v4937
        %v4940 = vadd.f32 %v4900, %v4938
        %s4941 = sld [smem:[#allocation7 + $0x13f]]
        %v4942 = vstv %s4941
        %v4943 = vmul.f32 %v4942, %v4172
        %4945 = vrot.lane.b32.xlu0 %v4943, 100
        %v4946 = vpop.permute.xlu0 %4945
        %v4947 = vrot.slane %v4946, 4
        %v4948 = vsel %vm1001, %v4946, %v4947
        %v4950 = vadd.f32 %v4910, %v4948
        %s4951 = sld [smem:[#allocation7 + $0x14c]]
        %v4952 = vstv %s4951
        %v4953 = vmul.f32 %v4952, %v4172
        %4955 = vrot.lane.b32.xlu0 %v4953, 90
        %v4956 = vpop.permute.xlu0 %4955
        %v4957 = vrot.slane %v4956, 4
        %v4958 = vsel %vm1042, %v4956, %v4957
        %v4960 = vadd.f32 %v4920, %v4958
        %s4961 = sld [smem:[#allocation7 + $0x14d]]
        %v4962 = vstv %s4961
        %v4963 = vmul.f32 %v4962, %v4172
        %4965 = vrot.lane.b32.xlu0 %v4963, 90
        %v4966 = vpop.permute.xlu0 %4965
        %v4967 = vrot.slane %v4966, 4
        %v4968 = vsel %vm1042, %v4966, %v4967
        %v4970 = vadd.f32 %v4930, %v4968
        %s4971 = sld [smem:[#allocation7 + $0x14e]]
        %v4972 = vstv %s4971
        %v4973 = vmul.f32 %v4972, %v4172
        %4975 = vrot.lane.b32.xlu0 %v4973, 90
        %v4976 = vpop.permute.xlu0 %4975
        %v4977 = vrot.slane %v4976, 4
        %v4978 = vsel %vm1042, %v4976, %v4977
        %v4980 = vadd.f32 %v4940, %v4978
        %s4981 = sld [smem:[#allocation7 + $0x14f]]
        %v4982 = vstv %s4981
        %v4983 = vmul.f32 %v4982, %v4172
        %4985 = vrot.lane.b32.xlu0 %v4983, 90
        %v4986 = vpop.permute.xlu0 %4985
        %v4987 = vrot.slane %v4986, 4
        %v4988 = vsel %vm1042, %v4986, %v4987
        %v4990 = vadd.f32 %v4950, %v4988
        %v4991 = vld [vmem:[%s4171 + $0xc] sm:$0xff]
        %s4992 = sld [smem:[#allocation7 + $0x15c]]
        %v4993 = vstv %s4992
        %v4994 = vmul.f32 %v4993, %v4991
        %4996 = vrot.lane.b32.xlu0 %v4994, 68
        %v4997 = vpop.permute.xlu0 %4996
        %v4998 = vrot.slane %v4997, 4
        %v4999 = vsel %vm1084, %v4998, %v4997
        %v5001 = vadd.f32 %v4960, %v4999
        %s5002 = sld [smem:[#allocation7 + $0x15d]]
        %v5003 = vstv %s5002
        %v5004 = vmul.f32 %v5003, %v4991
        %5006 = vrot.lane.b32.xlu0 %v5004, 68
        %v5007 = vpop.permute.xlu0 %5006
        %v5008 = vrot.slane %v5007, 4
        %v5009 = vsel %vm1084, %v5008, %v5007
        %v5011 = vadd.f32 %v4970, %v5009
        %s5012 = sld [smem:[#allocation7 + $0x15e]]
        %v5013 = vstv %s5012
        %v5014 = vmul.f32 %v5013, %v4991
        %5016 = vrot.lane.b32.xlu0 %v5014, 68
        %v5017 = vpop.permute.xlu0 %5016
        %v5018 = vrot.slane %v5017, 4
        %v5019 = vsel %vm1084, %v5018, %v5017
        %v5021 = vadd.f32 %v4980, %v5019
        %s5022 = sld [smem:[#allocation7 + $0x15f]]
        %v5023 = vstv %s5022
        %v5024 = vmul.f32 %v5023, %v4991
        %5026 = vrot.lane.b32.xlu0 %v5024, 68
        %v5027 = vpop.permute.xlu0 %5026
        %v5028 = vrot.slane %v5027, 4
        %v5029 = vsel %vm1084, %v5028, %v5027
        %v5031 = vadd.f32 %v4990, %v5029
        %s5032 = sld [smem:[#allocation7 + $0x16c]]
        %v5033 = vstv %s5032
        %v5034 = vmul.f32 %v5033, %v4991
        %5036 = vrot.lane.b32.xlu0 %v5034, 63
        %v5037 = vpop.permute.xlu0 %5036
        %v5038 = vrot.slane %v5037, 4
        %v5039 = vsel %vm470, %v5038, %v5037
        %v5041 = vadd.f32 %v5001, %v5039
        %s5042 = sld [smem:[#allocation7 + $0x16d]]
        %v5043 = vstv %s5042
        %v5044 = vmul.f32 %v5043, %v4991
        %5046 = vrot.lane.b32.xlu0 %v5044, 63
        %v5047 = vpop.permute.xlu0 %5046
        %v5048 = vrot.slane %v5047, 4
        %v5049 = vsel %vm470, %v5048, %v5047
        %v5051 = vadd.f32 %v5011, %v5049
        %s5052 = sld [smem:[#allocation7 + $0x16e]]
        %v5053 = vstv %s5052
        %v5054 = vmul.f32 %v5053, %v4991
        %5056 = vrot.lane.b32.xlu0 %v5054, 63
        %v5057 = vpop.permute.xlu0 %5056
        %v5058 = vrot.slane %v5057, 4
        %v5059 = vsel %vm470, %v5058, %v5057
        %v5061 = vadd.f32 %v5021, %v5059
        %s5062 = sld [smem:[#allocation7 + $0x16f]]
        %v5063 = vstv %s5062
        %v5064 = vmul.f32 %v5063, %v4991
        %5066 = vrot.lane.b32.xlu0 %v5064, 63
        %v5067 = vpop.permute.xlu0 %5066
        %v5068 = vrot.slane %v5067, 4
        %v5069 = vsel %vm470, %v5068, %v5067
        %v5071 = vadd.f32 %v5031, %v5069
        %s5072 = sld [smem:[#allocation7 + $0x17c]]
        %v5073 = vstv %s5072
        %v5074 = vmul.f32 %v5073, %v4991
        %5076 = vrot.lane.b32.xlu0 %v5074, 58
        %v5077 = vpop.permute.xlu0 %5076
        %v5078 = vrot.slane %v5077, 4
        %v5079 = vsel %vm1165, %v5078, %v5077
        %v5081 = vadd.f32 %v5041, %v5079
        %s5082 = sld [smem:[#allocation7 + $0x17d]]
        %v5083 = vstv %s5082
        %v5084 = vmul.f32 %v5083, %v4991
        %5086 = vrot.lane.b32.xlu0 %v5084, 58
        %v5087 = vpop.permute.xlu0 %5086
        %v5088 = vrot.slane %v5087, 4
        %v5089 = vsel %vm1165, %v5088, %v5087
        %v5091 = vadd.f32 %v5051, %v5089
        %s5092 = sld [smem:[#allocation7 + $0x17e]]
        %v5093 = vstv %s5092
        %v5094 = vmul.f32 %v5093, %v4991
        %5096 = vrot.lane.b32.xlu0 %v5094, 58
        %v5097 = vpop.permute.xlu0 %5096
        %v5098 = vrot.slane %v5097, 4
        %v5099 = vsel %vm1165, %v5098, %v5097
        %v5101 = vadd.f32 %v5061, %v5099
        %s5102 = sld [smem:[#allocation7 + $0x17f]]
        %v5103 = vstv %s5102
        %v5104 = vmul.f32 %v5103, %v4991
        %5106 = vrot.lane.b32.xlu0 %v5104, 58
        %v5107 = vpop.permute.xlu0 %5106
        %v5108 = vrot.slane %v5107, 4
        %v5109 = vsel %vm1165, %v5108, %v5107
        %v5111 = vadd.f32 %v5071, %v5109
        %v5112 = vld [vmem:[%s4171] sm:$0xf]
        %s5113 = sld [smem:[#allocation7 + $0x18c]]
        %v5114 = vstv %s5113
        %v5115 = vmul.f32 %v5114, %v5112
        %5117 = vrot.lane.b32.xlu0 %v5115, 70
        %v5118 = vpop.permute.xlu0 %5117
        %v5119 = vrot.slane %v5118, 4
        %v5120 = vsel %vm1207, %v5119, %v5118
        %v5122 = vadd.f32 %v5081, %v5120
        %s5123 = sld [smem:[#allocation7 + $0x18d]]
        %v5124 = vstv %s5123
        %v5125 = vmul.f32 %v5124, %v5112
        %5127 = vrot.lane.b32.xlu0 %v5125, 70
        %v5128 = vpop.permute.xlu0 %5127
        %v5129 = vrot.slane %v5128, 4
        %v5130 = vsel %vm1207, %v5129, %v5128
        %v5132 = vadd.f32 %v5091, %v5130
        %s5133 = sld [smem:[#allocation7 + $0x18e]]
        %v5134 = vstv %s5133
        %v5135 = vmul.f32 %v5134, %v5112
        %5137 = vrot.lane.b32.xlu0 %v5135, 70
        %v5138 = vpop.permute.xlu0 %5137
        %v5139 = vrot.slane %v5138, 4
        %v5140 = vsel %vm1207, %v5139, %v5138
        %v5142 = vadd.f32 %v5101, %v5140
        %s5143 = sld [smem:[#allocation7 + $0x18f]]
        %v5144 = vstv %s5143
        %v5145 = vmul.f32 %v5144, %v5112
        %5147 = vrot.lane.b32.xlu0 %v5145, 70
        %v5148 = vpop.permute.xlu0 %5147
        %v5149 = vrot.slane %v5148, 4
        %v5150 = vsel %vm1207, %v5149, %v5148
        %v5152 = vadd.f32 %v5111, %v5150
        %s5153 = sld [smem:[#allocation7 + $0x19c]]
        %v5154 = vstv %s5153
        %v5155 = vmul.f32 %v5154, %v4790
        %5157 = vrot.lane.b32.xlu0 %v5155, 63
        %v5158 = vpop.permute.xlu0 %5157
        %v5159 = vrot.slane %v5158, 4
        %v5160 = vsel %vm470, %v5159, %v5158
        %v5162 = vadd.f32 %v5122, %v5160
        %s5163 = sld [smem:[#allocation7 + $0x19d]]
        %v5164 = vstv %s5163
        %v5165 = vmul.f32 %v5164, %v4790
        %5167 = vrot.lane.b32.xlu0 %v5165, 63
        %v5168 = vpop.permute.xlu0 %5167
        %v5169 = vrot.slane %v5168, 4
        %v5170 = vsel %vm470, %v5169, %v5168
        %v5172 = vadd.f32 %v5132, %v5170
        %s5173 = sld [smem:[#allocation7 + $0x19e]]
        %v5174 = vstv %s5173
        %v5175 = vmul.f32 %v5174, %v4790
        %5177 = vrot.lane.b32.xlu0 %v5175, 63
        %v5178 = vpop.permute.xlu0 %5177
        %v5179 = vrot.slane %v5178, 4
        %v5180 = vsel %vm470, %v5179, %v5178
        %v5182 = vadd.f32 %v5142, %v5180
        %s5183 = sld [smem:[#allocation7 + $0x19f]]
        %v5184 = vstv %s5183
        %v5185 = vmul.f32 %v5184, %v4790
        %5187 = vrot.lane.b32.xlu0 %v5185, 63
        %v5188 = vpop.permute.xlu0 %5187
        %v5189 = vrot.slane %v5188, 4
        %v5190 = vsel %vm470, %v5189, %v5188
        %v5192 = vadd.f32 %v5152, %v5190
        %s5193 = sld [smem:[#allocation7 + $0x1ac]]
        %v5194 = vstv %s5193
        %v5195 = vmul.f32 %v5194, %v4790
        %5197 = vrot.lane.b32.xlu0 %v5195, 56
        %v5198 = vpop.permute.xlu0 %5197
        %v5199 = vrot.slane %v5198, 4
        %v5200 = vsel %vm1288, %v5199, %v5198
        %v5202 = vadd.f32 %v5162, %v5200
        %s5203 = sld [smem:[#allocation7 + $0x1ad]]
        %v5204 = vstv %s5203
        %v5205 = vmul.f32 %v5204, %v4790
        %5207 = vrot.lane.b32.xlu0 %v5205, 56
        %v5208 = vpop.permute.xlu0 %5207
        %v5209 = vrot.slane %v5208, 4
        %v5210 = vsel %vm1288, %v5209, %v5208
        %v5212 = vadd.f32 %v5172, %v5210
        %s5213 = sld [smem:[#allocation7 + $0x1ae]]
        %v5214 = vstv %s5213
        %v5215 = vmul.f32 %v5214, %v4790
        %5217 = vrot.lane.b32.xlu0 %v5215, 56
        %v5218 = vpop.permute.xlu0 %5217
        %v5219 = vrot.slane %v5218, 4
        %v5220 = vsel %vm1288, %v5219, %v5218
        %v5222 = vadd.f32 %v5182, %v5220
        %s5223 = sld [smem:[#allocation7 + $0x1af]]
        %v5224 = vstv %s5223
        %v5225 = vmul.f32 %v5224, %v4790
        %5227 = vrot.lane.b32.xlu0 %v5225, 56
        %v5228 = vpop.permute.xlu0 %5227
        %v5229 = vrot.slane %v5228, 4
        %v5230 = vsel %vm1288, %v5229, %v5228
        %v5232 = vadd.f32 %v5192, %v5230
        %s5233 = sld [smem:[#allocation7 + $0x1bc]]
        %v5234 = vstv %s5233
        %v5235 = vmul.f32 %v5234, %v4172
        %5237 = vrot.lane.b32.xlu0 %v5235, 102
        %v5238 = vpop.permute.xlu0 %5237
        %v5239 = vrot.slane %v5238, 4
        %v5240 = vsel %vm1329, %v5238, %v5239
        %v5242 = vadd.f32 %v5202, %v5240
        %s5243 = sld [smem:[#allocation7 + $0x1bd]]
        %v5244 = vstv %s5243
        %v5245 = vmul.f32 %v5244, %v4172
        %5247 = vrot.lane.b32.xlu0 %v5245, 102
        %v5248 = vpop.permute.xlu0 %5247
        %v5249 = vrot.slane %v5248, 4
        %v5250 = vsel %vm1329, %v5248, %v5249
        %v5252 = vadd.f32 %v5212, %v5250
        %s5253 = sld [smem:[#allocation7 + $0x1be]]
        %v5254 = vstv %s5253
        %v5255 = vmul.f32 %v5254, %v4172
        %5257 = vrot.lane.b32.xlu0 %v5255, 102
        %v5258 = vpop.permute.xlu0 %5257
        %v5259 = vrot.slane %v5258, 4
        %v5260 = vsel %vm1329, %v5258, %v5259
        %v5262 = vadd.f32 %v5222, %v5260
        %s5263 = sld [smem:[#allocation7 + $0x1bf]]
        %v5264 = vstv %s5263
        %v5265 = vmul.f32 %v5264, %v4172
        %5267 = vrot.lane.b32.xlu0 %v5265, 102
        %v5268 = vpop.permute.xlu0 %5267
        %v5269 = vrot.slane %v5268, 4
        %v5270 = vsel %vm1329, %v5268, %v5269
        %v5272 = vadd.f32 %v5232, %v5270
        %s5273 = sld [smem:[#allocation7 + $0x1cc]]
        %v5274 = vstv %s5273
        %v5275 = vmul.f32 %v5274, %v4172
        %5277 = vrot.lane.b32.xlu0 %v5275, 88
        %v5278 = vpop.permute.xlu0 %5277
        %v5279 = vrot.slane %v5278, 4
        %v5280 = vsel %vm1370, %v5278, %v5279
        %v5282 = vadd.f32 %v5242, %v5280
        %s5283 = sld [smem:[#allocation7 + $0x1cd]]
        %v5284 = vstv %s5283
        %v5285 = vmul.f32 %v5284, %v4172
        %5287 = vrot.lane.b32.xlu0 %v5285, 88
        %v5288 = vpop.permute.xlu0 %5287
        %v5289 = vrot.slane %v5288, 4
        %v5290 = vsel %vm1370, %v5288, %v5289
        %v5292 = vadd.f32 %v5252, %v5290
        %s5293 = sld [smem:[#allocation7 + $0x1ce]]
        %v5294 = vstv %s5293
        %v5295 = vmul.f32 %v5294, %v4172
        %5297 = vrot.lane.b32.xlu0 %v5295, 88
        %v5298 = vpop.permute.xlu0 %5297
        %v5299 = vrot.slane %v5298, 4
        %v5300 = vsel %vm1370, %v5298, %v5299
        %v5302 = vadd.f32 %v5262, %v5300
        %s5303 = sld [smem:[#allocation7 + $0x1cf]]
        %v5304 = vstv %s5303
        %v5305 = vmul.f32 %v5304, %v4172
        %5307 = vrot.lane.b32.xlu0 %v5305, 88
        %v5308 = vpop.permute.xlu0 %5307
        %v5309 = vrot.slane %v5308, 4
        %v5310 = vsel %vm1370, %v5308, %v5309
        %v5312 = vadd.f32 %v5272, %v5310
        %s5313 = sld [smem:[#allocation7 + $0x1dc]]
        %v5314 = vstv %s5313
        %v5315 = vmul.f32 %v5314, %v4991
        %5317 = vrot.lane.b32.xlu0 %v5315, 6
        %v5318 = vpop.permute.xlu0 %5317
        %v5319 = vrot.slane %v5318, 4
        %v5320 = vsel %vm1411, %v5319, %v5318
        %v5322 = vadd.f32 %v5282, %v5320
        %s5323 = sld [smem:[#allocation7 + $0x1dd]]
        %v5324 = vstv %s5323
        %v5325 = vmul.f32 %v5324, %v4991
        %5327 = vrot.lane.b32.xlu0 %v5325, 6
        %v5328 = vpop.permute.xlu0 %5327
        %v5329 = vrot.slane %v5328, 4
        %v5330 = vsel %vm1411, %v5329, %v5328
        %v5332 = vadd.f32 %v5292, %v5330
        %s5333 = sld [smem:[#allocation7 + $0x1de]]
        %v5334 = vstv %s5333
        %v5335 = vmul.f32 %v5334, %v4991
        %5337 = vrot.lane.b32.xlu0 %v5335, 6
        %v5338 = vpop.permute.xlu0 %5337
        %v5339 = vrot.slane %v5338, 4
        %v5340 = vsel %vm1411, %v5339, %v5338
        %v5342 = vadd.f32 %v5302, %v5340
        %s5343 = sld [smem:[#allocation7 + $0x1df]]
        %v5344 = vstv %s5343
        %v5345 = vmul.f32 %v5344, %v4991
        %5347 = vrot.lane.b32.xlu0 %v5345, 6
        %v5348 = vpop.permute.xlu0 %5347
        %v5349 = vrot.slane %v5348, 4
        %v5350 = vsel %vm1411, %v5349, %v5348
        %v5352 = vadd.f32 %v5312, %v5350
        %s5353 = sld [smem:[#allocation7 + $0x1ec]]
        %v5354 = vstv %s5353
        %v5355 = vmul.f32 %v5354, %v4991
        %5357 = vrot.lane.b32.xlu0 %v5355, 127
        %v5358 = vpop.permute.xlu0 %5357
        %v5359 = vrot.slane %v5358, 4
        %v5360 = vsel %vm264, %v5358, %v5359
        %v5362 = vadd.f32 %v5322, %v5360
        %s5363 = sld [smem:[#allocation7 + $0x1ed]]
        %v5364 = vstv %s5363
        %v5365 = vmul.f32 %v5364, %v4991
        %5367 = vrot.lane.b32.xlu0 %v5365, 127
        %v5368 = vpop.permute.xlu0 %5367
        %v5369 = vrot.slane %v5368, 4
        %v5370 = vsel %vm264, %v5368, %v5369
        %v5372 = vadd.f32 %v5332, %v5370
        %s5373 = sld [smem:[#allocation7 + $0x1ee]]
        %v5374 = vstv %s5373
        %v5375 = vmul.f32 %v5374, %v4991
        %5377 = vrot.lane.b32.xlu0 %v5375, 127
        %v5378 = vpop.permute.xlu0 %5377
        %v5379 = vrot.slane %v5378, 4
        %v5380 = vsel %vm264, %v5378, %v5379
        %v5382 = vadd.f32 %v5342, %v5380
        %s5383 = sld [smem:[#allocation7 + $0x1ef]]
        %v5384 = vstv %s5383
        %v5385 = vmul.f32 %v5384, %v4991
        %5387 = vrot.lane.b32.xlu0 %v5385, 127
        %v5388 = vpop.permute.xlu0 %5387
        %v5389 = vrot.slane %v5388, 4
        %v5390 = vsel %vm264, %v5388, %v5389
        %v5392 = vadd.f32 %v5352, %v5390
        %s5393 = sld [smem:[#allocation7 + $0x1fc]]
        %v5394 = vstv %s5393
        %v5395 = vmul.f32 %v5394, %v4991
        %5397 = vrot.lane.b32.xlu0 %v5395, 120
        %v5398 = vpop.permute.xlu0 %5397
        %v5399 = vrot.slane %v5398, 4
        %v5400 = vsel %vm1492, %v5398, %v5399
        %v5402 = vadd.f32 %v5362, %v5400
        %s5403 = sld [smem:[#allocation7 + $0x1fd]]
        %v5404 = vstv %s5403
        %v5405 = vmul.f32 %v5404, %v4991
        %5407 = vrot.lane.b32.xlu0 %v5405, 120
        %v5408 = vpop.permute.xlu0 %5407
        %v5409 = vrot.slane %v5408, 4
        %v5410 = vsel %vm1492, %v5408, %v5409
        %v5412 = vadd.f32 %v5372, %v5410
        %s5413 = sld [smem:[#allocation7 + $0x1fe]]
        %v5414 = vstv %s5413
        %v5415 = vmul.f32 %v5414, %v4991
        %5417 = vrot.lane.b32.xlu0 %v5415, 120
        %v5418 = vpop.permute.xlu0 %5417
        %v5419 = vrot.slane %v5418, 4
        %v5420 = vsel %vm1492, %v5418, %v5419
        %v5422 = vadd.f32 %v5382, %v5420
        %s5423 = sld [smem:[#allocation7 + $0x1ff]]
        %v5424 = vstv %s5423
        %v5425 = vmul.f32 %v5424, %v4991
        %5427 = vrot.lane.b32.xlu0 %v5425, 120
        %v5428 = vpop.permute.xlu0 %5427
        %v5429 = vrot.slane %v5428, 4
        %v5430 = vsel %vm1492, %v5428, %v5429
        %v5432 = vadd.f32 %v5392, %v5430
        %s5433 = sld [smem:[#allocation7 + $0x20c]]
        %v5434 = vstv %s5433
        %v5435 = vmul.f32 %v5434, %v4172
        %5437 = vrot.lane.b32.xlu0 %v5435, 95
        %v5438 = vpop.permute.xlu0 %5437
        %v5439 = vrot.slane %v5438, 4
        %v5440 = vsel %vm1533, %v5438, %v5439
        %v5442 = vadd.f32 %v5402, %v5440
        %s5443 = sld [smem:[#allocation7 + $0x20d]]
        %v5444 = vstv %s5443
        %v5445 = vmul.f32 %v5444, %v4172
        %5447 = vrot.lane.b32.xlu0 %v5445, 95
        %v5448 = vpop.permute.xlu0 %5447
        %v5449 = vrot.slane %v5448, 4
        %v5450 = vsel %vm1533, %v5448, %v5449
        %v5452 = vadd.f32 %v5412, %v5450
        %s5453 = sld [smem:[#allocation7 + $0x20e]]
        %v5454 = vstv %s5453
        %v5455 = vmul.f32 %v5454, %v4172
        %5457 = vrot.lane.b32.xlu0 %v5455, 95
        %v5458 = vpop.permute.xlu0 %5457
        %v5459 = vrot.slane %v5458, 4
        %v5460 = vsel %vm1533, %v5458, %v5459
        %v5462 = vadd.f32 %v5422, %v5460
        %s5463 = sld [smem:[#allocation7 + $0x20f]]
        %v5464 = vstv %s5463
        %v5465 = vmul.f32 %v5464, %v4172
        %5467 = vrot.lane.b32.xlu0 %v5465, 95
        %v5468 = vpop.permute.xlu0 %5467
        %v5469 = vrot.slane %v5468, 4
        %v5470 = vsel %vm1533, %v5468, %v5469
        %v5472 = vadd.f32 %v5432, %v5470
        %v5474 = vcombine.high %v5442, %v5442
        %5475 = vrot.lane.b32.xlu0 %v5442, 58
        %v5476 = vpop.permute.xlu0 %5475
        %5477 = vrot.lane.b32.xlu0 %v5474, 58
        %v5478 = vpop.permute.xlu0 %5477
        %v5479 = vsel %vm1165, %v5476, %v5478
        %5481 = vst [vmem:[%s231] sm:$0xf] %v5479
        %v5483 = vcombine.high %v5452, %v5452
        %5484 = vrot.lane.b32.xlu0 %v5452, 58
        %v5485 = vpop.permute.xlu0 %5484
        %5486 = vrot.lane.b32.xlu0 %v5483, 58
        %v5487 = vpop.permute.xlu0 %5486
        %v5488 = vsel %vm1165, %v5485, %v5487
        %s5490 = scalar_lea.vmem %s231, 4 [#allocation9]
        %5491 = vst [vmem:[%s5490] sm:$0xf] %v5488
        %v5493 = vcombine.high %v5462, %v5462
        %5494 = vrot.lane.b32.xlu0 %v5462, 58
        %v5495 = vpop.permute.xlu0 %5494
        %5496 = vrot.lane.b32.xlu0 %v5493, 58
        %v5497 = vpop.permute.xlu0 %5496
        %v5498 = vsel %vm1165, %v5495, %v5497
        %s5500 = scalar_lea.vmem %s231, 8 [#allocation9]
        %5501 = vst [vmem:[%s5500] sm:$0xf] %v5498
        %v5503 = vcombine.high %v5472, %v5472
        %5504 = vrot.lane.b32.xlu0 %v5472, 58
        %v5505 = vpop.permute.xlu0 %5504
        %5506 = vrot.lane.b32.xlu0 %v5503, 58
        %v5507 = vpop.permute.xlu0 %5506
        %v5508 = vsel %vm1165, %v5505, %v5507
        %s5510 = scalar_lea.vmem %s231, 12 [#allocation9]
        %5511 = vst [vmem:[%s5510] sm:$0xf] %v5508
        %s5512 = sand.u32 %s114, 1
        %s5513 = scalar_lea.sflag [#allocation4], %s5512
        %s5514 = sand.u32 %s114, 1
        %s5515 = smul.addr %s5514, 16
        %s5516 = scalar_lea.vmem [#allocation9], %s5515
        // Predicated region
        $region45: #{tpu_custom_call.1} parent=31 // pred_check
          %p5517 = pneg %p124
        $region46: #{tpu_custom_call.1} parent=31 // pred_check_branch
          %5519 = sbr.rel (%p5517) target = $region48
        $region47: #{tpu_custom_call.1} parent=31 // pred_region
          %s5521 = ssub.s32 256, 256
          %5522 = vsyncadd %s5513, %s5521
          %s5523 = smul.addr %s26, 4
          %s5524 = sadd.s32 %s27, %s5523
          %s5525 = smul.addr %s5524, 64
          %s5526 = scalar_lea.hbm %s3, %s5525
          %s5527 = sshll.u32 %s5516, 4
          %s5528 = int_to_ptr.vmem [resolvable:$true] %s5527
          %5533 = dma.vmem_to_hbm [thread:$0]  %s5528, 256, %s5526, %s5513, 64, 64, 4
        $region48: #{tpu_custom_call.1} parent=31 // pred_fallthru
          _
      $region32: #{tpu_custom_call.1} parent=5 // pred_fallthru
        _
      %p5534 = scmp.le.s32.totalorder 2, %s17
      // Predicated region
      $region49: #{tpu_custom_call.1} parent=5 // pred_check
        %p5535 = pneg %p5534
      $region50: #{tpu_custom_call.1} parent=5 // pred_check_branch
        %5537 = sbr.rel (%p5535) target = $region52
      $region51: #{tpu_custom_call.1} parent=5 // pred_region
        %s5538 = ssub.s32 %s17, 2
        // Predicated region
        $region53: #{tpu_custom_call.1} parent=51 // pred_check
          %p5539 = pneg %p130
        $region54: #{tpu_custom_call.1} parent=51 // pred_check_branch
          %5541 = sbr.rel (%p5539) target = $region56
        $region55: #{tpu_custom_call.1} parent=51 // pred_region
          %s5542 = sand.u32 %s115, 1
          %s5543 = scalar_lea.sflag [#allocation4], %s5542
          %s5544 = sand.u32 %s115, 1
          %s5545 = smul.addr %s5544, 16
          %s5546 = scalar_lea.vmem [#allocation9], %s5545
          %5547 = dma.done %s5543, 256
        $region56: #{tpu_custom_call.1} parent=51 // pred_fallthru
          _
      $region52: #{tpu_custom_call.1} parent=5 // pred_fallthru
        _
    $region6: #{tpu_custom_call.1} parent=1 // loop_footer
      %s21 = sadd.s32 1, %s17
    $region7: #{tpu_custom_call.1} parent=1 // loop_footer_branch
      %16 = sbr.rel target = $region3
    $region8: #{tpu_custom_call.1} parent=1 // loop_exit
      _
    %5548 = vsyncpa [#allocation3], 1
    %s5549 = scalar_lea.sflag [#allocation3], 1
    %5550 = vsyncpa %s5549, 1
    %5551 = vsyncpa [#allocation4], 1
    %s5552 = scalar_lea.sflag [#allocation4], 1
    %5553 = vsyncpa %s5552, 1
    %5554 = vsyncpa [#allocation5], 1
    %s5555 = scalar_lea.sflag [#allocation5], 1
    %5556 = vsyncpa %s5555, 1
    %5557 = vsyncpa [#allocation6], 1
    %s5558 = scalar_lea.sflag [#allocation6], 1
    %5559 = vsyncpa %s5558, 1

</llo_original>
